<compile_context>
chip_gen: v6e
topology: v6e:2x2x1
jax: 0.10.0
libtpu: 0.0.40
codegen_flags: <defaults>
</compile_context>

<pallas_src>
import functools

import numpy as np
import jax
import jax.numpy as jnp
from jax import lax
from jax.experimental import pallas as pl
from jax.experimental.pallas import tpu as pltpu

EPS = 1e-5  # PyTorch BatchNorm1d default eps


def init_params(key):
    """Deterministic synthetic parameters matching the PyTorch module's shapes."""
    ks = jax.random.split(key, 9)
    n = lambda k, shape: 0.1 * jax.random.normal(k, shape, jnp.float32)
    u = lambda k, shape: jax.random.uniform(k, shape, jnp.float32, 0.5, 1.5)

    def conv_block(k0, c_out, c_in, ksize):
        k = jax.random.split(k0, 6)
        return dict(w=n(k[0], (c_out, c_in, ksize)), b=n(k[1], (c_out,)),
                    gamma=u(k[2], (c_out,)), beta=n(k[3], (c_out,)),
                    mean=n(k[4], (c_out,)), var=u(k[5], (c_out,)))

    return {
        "conv1": conv_block(ks[0], 32, 1, 5),
        "conv2": conv_block(ks[1], 64, 32, 5),
        "conv3": conv_block(ks[2], 128, 64, 3),
        "fc1": dict(w=n(ks[3], (256, 128)), b=n(ks[4], (256,))),
        "fc2": dict(w=n(ks[5], (128, 256)), b=n(ks[6], (128,))),
        "fc3": dict(w=n(ks[7], (2, 128)), b=n(ks[8], (2,))),
    }


# --------------------------------------------------------------------------- #
# Fused kernel: conv stack + adaptive average pool + FC head for one batch tile.
# --------------------------------------------------------------------------- #
def _conv_fc_kernel(x_ref, vm_ref,
                    w1_ref, b1_ref, s1_ref, t1_ref,
                    w2_ref, b2_ref, s2_ref, t2_ref,
                    w3_ref, b3_ref, s3_ref, t3_ref,
                    f1w_ref, f1b_ref, f2w_ref, f2b_ref, f3w_ref, f3b_ref,
                    out_ref,
                    h1_buf, h2_buf, xcol,
                    *, tb, t_len, ws, gp, n):
    f32 = jnp.float32
    bf16 = jnp.bfloat16
    valid = vm_ref[...] != 0.0                         # (1, n) bool, per-column

    def act(y, b_ref, sc_ref, sh_ref):
        # conv bias -> ReLU -> eval-mode BatchNorm (folded scale/shift), then
        # force the per-sample halo/pad columns to exact zero so the next layer
        # sees proper zero padding (where(), not *, so scratch garbage / NaN in
        # the guard bands can never leak into valid columns).
        z = jnp.maximum(y + b_ref[...], 0.0) * sc_ref[...] + sh_ref[...]
        return jnp.where(valid, z, 0.0)

    # ---- Conv1d(1,32,k5,s1,p2): all 4 output phases in one (128,8)@(8,n) GEMM.
    # The 8 rows of x_ref are the distinct shifted input slabs (built host-side).
    y1 = jnp.dot(w1_ref[...], x_ref[0], preferred_element_type=f32)      # (128,n)
    a1 = act(y1, b1_ref, s1_ref, t1_ref)
    for r in range(4):
        h1_buf[r, :, gp:gp + n] = a1[32 * r:32 * (r + 1), :].astype(bf16)

    # ---- Conv1d(32,64,k5,s2,p2): 2 output phases, deep-K (=160) im2col GEMMs.
    for r in range(2):
        for k in range(5):
            d = 2 * r + k - 2
            q, s = d % 4, d // 4                        # input phase, column shift
            xcol[32 * k:32 * (k + 1), :] = h1_buf[q, :, gp + s:gp + s + n]
        y2 = jnp.dot(w2_ref[...], xcol[0:160, :], preferred_element_type=f32)
        h2_buf[r, :, gp:gp + n] = act(y2, b2_ref, s2_ref, t2_ref).astype(bf16)

    # ---- Conv1d(64,128,k3,s2,p1): single output phase, deep-K (=192) GEMM.
    for k in range(3):
        d = k - 1
        q, s = d % 2, d // 2
        xcol[64 * k:64 * (k + 1), :] = h2_buf[q, :, gp + s:gp + s + n]
    y3 = jnp.dot(w3_ref[...], xcol[...], preferred_element_type=f32)     # (128,n)
    a3 = act(y3, b3_ref, s3_ref, t3_ref)

    # ---- AdaptiveAvgPool1d(1): per-sample lane-range sums (XLU), no MXU work.
    cols = [jnp.sum(a3[:, i * ws:(i + 1) * ws], axis=1, keepdims=True)
            for i in range(tb)]
    feats = jnp.concatenate(cols, axis=1) * (1.0 / t_len)                # (128,tb)

    # ---- FC head (eval mode: Dropout = identity), channel-major GEMMs.
    z = jnp.dot(f1w_ref[...], feats, preferred_element_type=f32) + f1b_ref[...]
    z = jnp.maximum(z, 0.0)
    z = jnp.dot(f2w_ref[...], z, preferred_element_type=f32) + f2b_ref[...]
    z = jnp.maximum(z, 0.0)
    out_ref[0] = jnp.dot(f3w_ref[...], z, preferred_element_type=f32) + f3b_ref[...]


def arrhythmia_forward_pallas(x, params, *, batch_tile=16):
    """x: (B, L) float32 ECG.  Returns logits (B, 2).  Requires L % 4 == 0."""
    B, L0 = x.shape
    if L0 % 4 != 0:
        # TODO(synk): general lengths need ragged-tail handling of the polyphase split.
        raise ValueError("ecg_length must be a multiple of 4 (module default 1000 is).")
    f32, bf16 = jnp.float32, jnp.bfloat16
    x = x.astype(f32)

    T = L0 // 4                                   # time positions per polyphase stream
    Ws = ((T + 2 + 127) // 128) * 128             # per-sample segment (lane aligned)
    GP = 128                                      # guard band (values never consumed)
    tb = int(batch_tile)
    nt = -(-B // tb)
    Bp = nt * tb
    N = tb * Ws                                   # GEMM N axis = whole batch tile
    Wf = N + 2 * GP

    # ---- fold eval-mode BatchNorm into scale/shift -----------------------------
    def bn_affine(p):
        sc = p["gamma"] / jnp.sqrt(p["var"] + EPS)
        return sc, p["beta"] - p["mean"] * sc

    # conv1: fuse its 4 polyphase output blocks into one (128, 8) weight.
    w1 = params["conv1"]["w"]                                            # (32,1,5)
    W1c = jnp.concatenate(
        [jnp.zeros((32, 8), f32).at[:, r:r + 5].set(w1[:, 0, :]) for r in range(4)],
        axis=0)                                                          # (128, 8)
    sc1, sh1 = bn_affine(params["conv1"])
    b1c = jnp.tile(params["conv1"]["b"], 4)[:, None]
    sc1c = jnp.tile(sc1, 4)[:, None]
    sh1c = jnp.tile(sh1, 4)[:, None]

    def pack(w):                                  # (Co, Ci, K) -> (Co, K*Ci), tap-major
        co, ci, k = w.shape
        return jnp.transpose(w, (0, 2, 1)).reshape(co, k * ci)

    W2p = pack(params["conv2"]["w"])                                     # (64, 160)
    sc2, sh2 = bn_affine(params["conv2"])
    W3p = pack(params["conv3"]["w"])                                     # (128, 192)
    sc3, sh3 = bn_affine(params["conv3"])

    # ---- host-side polyphase / segment layout of the input (cheap XLA glue) ----
    if Bp != B:
        x = jnp.concatenate([x, jnp.zeros((Bp - B, L0), f32)], axis=0)
    xpad = jnp.pad(x, ((0, 0), (2, 2)))           # conv1 zero padding (pad=2)
    # 8 distinct shifted slabs: slab j, position t = x_orig[4t + j - 2] (zero OOB).
    xslab = jnp.stack([xpad[:, j:j + 4 * T:4] for j in range(8)], axis=1)  # (Bp,8,T)
    xseg = jnp.zeros((Bp, 8, Ws), f32).at[:, :, 1:1 + T].set(xslab)
    xin = (xseg.reshape(nt, tb, 8, Ws).transpose(0, 2, 1, 3)
               .reshape(nt, 8, N))                                       # f32
    vmask = jnp.zeros((tb, Ws), f32).at[:, 1:1 + T].set(1.0).reshape(1, N)

    consts = [
        W1c, b1c, sc1c, sh1c,                                            # conv1 (f32)
        W2p.astype(bf16), params["conv2"]["b"][:, None], sc2[:, None], sh2[:, None],
        W3p.astype(bf16), params["conv3"]["b"][:, None], sc3[:, None], sh3[:, None],
        params["fc1"]["w"], params["fc1"]["b"][:, None],
        params["fc2"]["w"], params["fc2"]["b"][:, None],
        params["fc3"]["w"], params["fc3"]["b"][:, None],
    ]

    def const_spec(a):
        zeros = (0,) * a.ndim
        return pl.BlockSpec(a.shape, lambda i, _z=zeros: _z)

    kernel = functools.partial(_conv_fc_kernel, tb=tb, t_len=T, ws=Ws, gp=GP, n=N)
    out = pl.pallas_call(
        kernel,
        out_shape=jax.ShapeDtypeStruct((nt, 2, tb), jnp.float32),
        grid=(nt,),
        in_specs=[pl.BlockSpec((1, 8, N), lambda i: (i, 0, 0)),
                  const_spec(vmask)] + [const_spec(a) for a in consts],
        out_specs=pl.BlockSpec((1, 2, tb), lambda i: (i, 0, 0)),
        scratch_shapes=[pltpu.VMEM((4, 32, Wf), bf16),    # h1 polyphase streams
                        pltpu.VMEM((2, 64, Wf), bf16),    # h2 polyphase streams
                        pltpu.VMEM((192, N), bf16)],      # reused im2col operand
        compiler_params=pltpu.CompilerParams(dimension_semantics=("parallel",)),
    )(xin, vmask, *consts)

    # (nt, 2, tb) channel-major logits -> (B, 2); drop batch padding.
    return out.transpose(0, 2, 1).reshape(Bp, 2)[:B]


def reference_forward(x, params):
    """Pure-JAX reference matching PyTorch eval-mode semantics (f32, HIGHEST)."""
    hp = lax.Precision.HIGHEST
    h = x[:, None, :].astype(jnp.float32)                     # (B, 1, L) = NCW
    for name, stride, pad in (("conv1", 1, 2), ("conv2", 2, 2), ("conv3", 2, 1)):
        p = params[name]
        h = lax.conv_general_dilated(h, p["w"], (stride,), [(pad, pad)],
                                     dimension_numbers=("NCH", "OIH", "NCH"),
                                     precision=hp)
        h = jnp.maximum(h + p["b"][None, :, None], 0.0)
        h = (h - p["mean"][None, :, None]) / jnp.sqrt(p["var"][None, :, None] + EPS)
        h = h * p["gamma"][None, :, None] + p["beta"][None, :, None]
    feat = jnp.mean(h, axis=2)                                # (B, 128)
    f = jnp.maximum(jnp.dot(feat, params["fc1"]["w"].T, precision=hp)
                    + params["fc1"]["b"], 0.0)
    f = jnp.maximum(jnp.dot(f, params["fc2"]["w"].T, precision=hp)
                    + params["fc2"]["b"], 0.0)
    return jnp.dot(f, params["fc3"]["w"].T, precision=hp) + params["fc3"]["b"]


if __name__ == "__main__":
    key = jax.random.PRNGKey(0)
    pkey, xkey, xkey2 = jax.random.split(key, 3)
    params = init_params(pkey)

    # Small shapes; B=3 is not a multiple of batch_tile (exercises batch padding).
    x_small = jax.random.normal(xkey, (3, 64), jnp.float32)
    out_small = jax.block_until_ready(
        arrhythmia_forward_pallas(x_small, params, batch_tile=8))
    assert out_small.shape == (3, 2)
    ref_small = reference_forward(x_small, params)
    np.testing.assert_allclose(np.asarray(out_small), np.asarray(ref_small),
                               rtol=2e-2, atol=2e-2)   # bf16 conv2/conv3 operands

    # Module-default ECG length (L = 1000).
    x_full = jax.random.normal(xkey2, (2, 1000), jnp.float32)
    out_full = jax.block_until_ready(
        arrhythmia_forward_pallas(x_full, params, batch_tile=16))
    assert out_full.shape == (2, 2)
    ref_full = reference_forward(x_full, params)
    np.testing.assert_allclose(np.asarray(out_full), np.asarray(ref_full),
                               rtol=2e-2, atol=2e-2)

    print("KERNEL_OK")
</pallas_src>

<mosaic_0001>
module attributes {stable_mosaic.version = 11 : i64} {
  func.func @_conv_fc_kernel(%arg0: i32, %arg1: memref<1x8x1024xf32, #tpu.memory_space<vmem>>, %arg2: memref<1x1024xf32, #tpu.memory_space<vmem>>, %arg3: memref<128x8xf32, #tpu.memory_space<vmem>>, %arg4: memref<128x1xf32, #tpu.memory_space<vmem>>, %arg5: memref<128x1xf32, #tpu.memory_space<vmem>>, %arg6: memref<128x1xf32, #tpu.memory_space<vmem>>, %arg7: memref<64x160xbf16, #tpu.memory_space<vmem>>, %arg8: memref<64x1xf32, #tpu.memory_space<vmem>>, %arg9: memref<64x1xf32, #tpu.memory_space<vmem>>, %arg10: memref<64x1xf32, #tpu.memory_space<vmem>>, %arg11: memref<128x192xbf16, #tpu.memory_space<vmem>>, %arg12: memref<128x1xf32, #tpu.memory_space<vmem>>, %arg13: memref<128x1xf32, #tpu.memory_space<vmem>>, %arg14: memref<128x1xf32, #tpu.memory_space<vmem>>, %arg15: memref<256x128xf32, #tpu.memory_space<vmem>>, %arg16: memref<256x1xf32, #tpu.memory_space<vmem>>, %arg17: memref<128x256xf32, #tpu.memory_space<vmem>>, %arg18: memref<128x1xf32, #tpu.memory_space<vmem>>, %arg19: memref<2x128xf32, #tpu.memory_space<vmem>>, %arg20: memref<2x1xf32, #tpu.memory_space<vmem>>, %arg21: memref<1x2x8xf32, #tpu.memory_space<vmem>>, %arg22: memref<4x32x1280xbf16, #tpu.memory_space<vmem>>, %arg23: memref<2x64x1280xbf16, #tpu.memory_space<vmem>>, %arg24: memref<192x1024xbf16, #tpu.memory_space<vmem>>) attributes {dimension_semantics = [#tpu.dimension_semantics<parallel>], iteration_bounds = array<i64: 1>, scalar_prefetch = 0 : i64, scratch_operands = 3 : i64, tpu.core_type = #tpu.core_type<tc>, window_params = [{transform_indices = @transform_0, window_bounds = array<i64: 1, 8, 1024>}, {pipeline_mode = #tpu.pipeline_mode<synchronous>, transform_indices = @transform_1, window_bounds = array<i64: 1, 1024>}, {pipeline_mode = #tpu.pipeline_mode<synchronous>, transform_indices = @transform_2, window_bounds = array<i64: 128, 8>}, {pipeline_mode = #tpu.pipeline_mode<synchronous>, transform_indices = @transform_3, window_bounds = array<i64: 128, 1>}, {pipeline_mode = #tpu.pipeline_mode<synchronous>, transform_indices = @transform_4, window_bounds = array<i64: 128, 1>}, {pipeline_mode = #tpu.pipeline_mode<synchronous>, transform_indices = @transform_5, window_bounds = array<i64: 128, 1>}, {pipeline_mode = #tpu.pipeline_mode<synchronous>, transform_indices = @transform_6, window_bounds = array<i64: 64, 160>}, {pipeline_mode = #tpu.pipeline_mode<synchronous>, transform_indices = @transform_7, window_bounds = array<i64: 64, 1>}, {pipeline_mode = #tpu.pipeline_mode<synchronous>, transform_indices = @transform_8, window_bounds = array<i64: 64, 1>}, {pipeline_mode = #tpu.pipeline_mode<synchronous>, transform_indices = @transform_9, window_bounds = array<i64: 64, 1>}, {pipeline_mode = #tpu.pipeline_mode<synchronous>, transform_indices = @transform_10, window_bounds = array<i64: 128, 192>}, {pipeline_mode = #tpu.pipeline_mode<synchronous>, transform_indices = @transform_11, window_bounds = array<i64: 128, 1>}, {pipeline_mode = #tpu.pipeline_mode<synchronous>, transform_indices = @transform_12, window_bounds = array<i64: 128, 1>}, {pipeline_mode = #tpu.pipeline_mode<synchronous>, transform_indices = @transform_13, window_bounds = array<i64: 128, 1>}, {pipeline_mode = #tpu.pipeline_mode<synchronous>, transform_indices = @transform_14, window_bounds = array<i64: 256, 128>}, {pipeline_mode = #tpu.pipeline_mode<synchronous>, transform_indices = @transform_15, window_bounds = array<i64: 256, 1>}, {pipeline_mode = #tpu.pipeline_mode<synchronous>, transform_indices = @transform_16, window_bounds = array<i64: 128, 256>}, {pipeline_mode = #tpu.pipeline_mode<synchronous>, transform_indices = @transform_17, window_bounds = array<i64: 128, 1>}, {pipeline_mode = #tpu.pipeline_mode<synchronous>, transform_indices = @transform_18, window_bounds = array<i64: 2, 128>}, {pipeline_mode = #tpu.pipeline_mode<synchronous>, transform_indices = @transform_19, window_bounds = array<i64: 2, 1>}, {transform_indices = @transform_20, window_bounds = array<i64: 1, 2, 8>}]} {
    %c0 = arith.constant 0 : index
    %c0_0 = arith.constant 0 : index
    %0 = vector.load %arg2[%c0, %c0_0] : memref<1x1024xf32, #tpu.memory_space<vmem>>, vector<1x1024xf32>
    %cst = arith.constant 0.000000e+00 : f32
    %1 = vector.broadcast %cst : f32 to vector<1x1024xf32>
    %2 = arith.cmpf one, %0, %1 : vector<1x1024xf32>
    %c0_1 = arith.constant 0 : index
    %c0_2 = arith.constant 0 : index
    %3 = vector.load %arg3[%c0_1, %c0_2] : memref<128x8xf32, #tpu.memory_space<vmem>>, vector<128x8xf32>
    %c0_3 = arith.constant 0 : index
    %c0_4 = arith.constant 0 : index
    %c0_5 = arith.constant 0 : index
    %4 = vector.load %arg1[%c0_3, %c0_4, %c0_5] : memref<1x8x1024xf32, #tpu.memory_space<vmem>>, vector<1x8x1024xf32>
    %5 = vector.shape_cast %4 : vector<1x8x1024xf32> to vector<8x1024xf32>
    %cst_6 = arith.constant dense<0.000000e+00> : vector<128x1024xf32>
    %6 = tpu.matmul %3, %5, %cst_6 {dimension_numbers = #tpu.dot_dimension_numbers<[1], [0], [0], [1], [0, 0, 1, 1], [], []>} : vector<128x8xf32>, vector<8x1024xf32>, vector<128x1024xf32> -> vector<128x1024xf32>
    %c0_7 = arith.constant 0 : index
    %c0_8 = arith.constant 0 : index
    %7 = vector.load %arg4[%c0_7, %c0_8] : memref<128x1xf32, #tpu.memory_space<vmem>>, vector<128x1xf32>
    %8 = vector.broadcast %7 : vector<128x1xf32> to vector<128x1024xf32>
    %9 = arith.addf %6, %8 : vector<128x1024xf32>
    %cst_9 = arith.constant 0.000000e+00 : f32
    %10 = vector.broadcast %cst_9 : f32 to vector<128x1024xf32>
    %11 = arith.maximumf %9, %10 : vector<128x1024xf32>
    %c0_10 = arith.constant 0 : index
    %c0_11 = arith.constant 0 : index
    %12 = vector.load %arg5[%c0_10, %c0_11] : memref<128x1xf32, #tpu.memory_space<vmem>>, vector<128x1xf32>
    %13 = vector.broadcast %12 : vector<128x1xf32> to vector<128x1024xf32>
    %14 = arith.mulf %11, %13 : vector<128x1024xf32>
    %c0_12 = arith.constant 0 : index
    %c0_13 = arith.constant 0 : index
    %15 = vector.load %arg6[%c0_12, %c0_13] : memref<128x1xf32, #tpu.memory_space<vmem>>, vector<128x1xf32>
    %16 = vector.broadcast %15 : vector<128x1xf32> to vector<128x1024xf32>
    %17 = arith.addf %14, %16 : vector<128x1024xf32>
    %cst_14 = arith.constant 0.000000e+00 : f32
    %18 = vector.shape_cast %2 : vector<1x1024xi1> to vector<1x1024xi1>
    %19 = vector.broadcast %18 : vector<1x1024xi1> to vector<128x1024xi1>
    %20 = vector.broadcast %cst_14 : f32 to vector<128x1024xf32>
    %21 = arith.select %19, %17, %20 : vector<128x1024xi1>, vector<128x1024xf32>
    %22 = vector.extract_strided_slice %21 {offsets = [0, 0], sizes = [32, 1024], strides = [1, 1]} : vector<128x1024xf32> to vector<32x1024xf32>
    %23 = arith.truncf %22 : vector<32x1024xf32> to vector<32x1024xbf16>
    %c0_15 = arith.constant 0 : index
    %c0_16 = arith.constant 0 : index
    %c128 = arith.constant 128 : index
    %24 = vector.load %arg22[%c0_15, %c0_16, %c128] : memref<4x32x1280xbf16, #tpu.memory_space<vmem>>, vector<1x32x1024xbf16>
    %25 = vector.shape_cast %24 : vector<1x32x1024xbf16> to vector<32x1024xbf16>
    %26 = vector.shape_cast %23 : vector<32x1024xbf16> to vector<1x32x1024xbf16>
    tpu.vector_store %arg22[%c0_15, %c0_16, %c128], %26 {strides = array<i32>} : memref<4x32x1280xbf16, #tpu.memory_space<vmem>>, vector<1x32x1024xbf16>,
    %27 = vector.extract_strided_slice %21 {offsets = [32, 0], sizes = [32, 1024], strides = [1, 1]} : vector<128x1024xf32> to vector<32x1024xf32>
    %28 = arith.truncf %27 : vector<32x1024xf32> to vector<32x1024xbf16>
    %c1 = arith.constant 1 : index
    %c0_17 = arith.constant 0 : index
    %c128_18 = arith.constant 128 : index
    %29 = vector.load %arg22[%c1, %c0_17, %c128_18] : memref<4x32x1280xbf16, #tpu.memory_space<vmem>>, vector<1x32x1024xbf16>
    %30 = vector.shape_cast %29 : vector<1x32x1024xbf16> to vector<32x1024xbf16>
    %31 = vector.shape_cast %28 : vector<32x1024xbf16> to vector<1x32x1024xbf16>
    tpu.vector_store %arg22[%c1, %c0_17, %c128_18], %31 {strides = array<i32>} : memref<4x32x1280xbf16, #tpu.memory_space<vmem>>, vector<1x32x1024xbf16>,
    %32 = vector.extract_strided_slice %21 {offsets = [64, 0], sizes = [32, 1024], strides = [1, 1]} : vector<128x1024xf32> to vector<32x1024xf32>
    %33 = arith.truncf %32 : vector<32x1024xf32> to vector<32x1024xbf16>
    %c2 = arith.constant 2 : index
    %c0_19 = arith.constant 0 : index
    %c128_20 = arith.constant 128 : index
    %34 = vector.load %arg22[%c2, %c0_19, %c128_20] : memref<4x32x1280xbf16, #tpu.memory_space<vmem>>, vector<1x32x1024xbf16>
    %35 = vector.shape_cast %34 : vector<1x32x1024xbf16> to vector<32x1024xbf16>
    %36 = vector.shape_cast %33 : vector<32x1024xbf16> to vector<1x32x1024xbf16>
    tpu.vector_store %arg22[%c2, %c0_19, %c128_20], %36 {strides = array<i32>} : memref<4x32x1280xbf16, #tpu.memory_space<vmem>>, vector<1x32x1024xbf16>,
    %37 = vector.extract_strided_slice %21 {offsets = [96, 0], sizes = [32, 1024], strides = [1, 1]} : vector<128x1024xf32> to vector<32x1024xf32>
    %38 = arith.truncf %37 : vector<32x1024xf32> to vector<32x1024xbf16>
    %c3 = arith.constant 3 : index
    %c0_21 = arith.constant 0 : index
    %c128_22 = arith.constant 128 : index
    %39 = vector.load %arg22[%c3, %c0_21, %c128_22] : memref<4x32x1280xbf16, #tpu.memory_space<vmem>>, vector<1x32x1024xbf16>
    %40 = vector.shape_cast %39 : vector<1x32x1024xbf16> to vector<32x1024xbf16>
    %41 = vector.shape_cast %38 : vector<32x1024xbf16> to vector<1x32x1024xbf16>
    tpu.vector_store %arg22[%c3, %c0_21, %c128_22], %41 {strides = array<i32>} : memref<4x32x1280xbf16, #tpu.memory_space<vmem>>, vector<1x32x1024xbf16>,
    %c2_23 = arith.constant 2 : index
    %c0_24 = arith.constant 0 : index
    %c127 = arith.constant 127 : index
    %42 = vector.load %arg22[%c2_23, %c0_24, %c127] : memref<4x32x1280xbf16, #tpu.memory_space<vmem>>, vector<1x32x1024xbf16>
    %43 = vector.shape_cast %42 : vector<1x32x1024xbf16> to vector<32x1024xbf16>
    %c0_25 = arith.constant 0 : index
    %c0_26 = arith.constant 0 : index
    %44 = vector.load %arg24[%c0_25, %c0_26] : memref<192x1024xbf16, #tpu.memory_space<vmem>>, vector<32x1024xbf16>
    tpu.vector_store %arg24[%c0_25, %c0_26], %43 {strides = array<i32>} : memref<192x1024xbf16, #tpu.memory_space<vmem>>, vector<32x1024xbf16>,
    %c3_27 = arith.constant 3 : index
    %c0_28 = arith.constant 0 : index
    %c127_29 = arith.constant 127 : index
    %45 = vector.load %arg22[%c3_27, %c0_28, %c127_29] : memref<4x32x1280xbf16, #tpu.memory_space<vmem>>, vector<1x32x1024xbf16>
    %46 = vector.shape_cast %45 : vector<1x32x1024xbf16> to vector<32x1024xbf16>
    %c32 = arith.constant 32 : index
    %c0_30 = arith.constant 0 : index
    %47 = vector.load %arg24[%c32, %c0_30] : memref<192x1024xbf16, #tpu.memory_space<vmem>>, vector<32x1024xbf16>
    tpu.vector_store %arg24[%c32, %c0_30], %46 {strides = array<i32>} : memref<192x1024xbf16, #tpu.memory_space<vmem>>, vector<32x1024xbf16>,
    %c0_31 = arith.constant 0 : index
    %c0_32 = arith.constant 0 : index
    %c128_33 = arith.constant 128 : index
    %48 = vector.load %arg22[%c0_31, %c0_32, %c128_33] : memref<4x32x1280xbf16, #tpu.memory_space<vmem>>, vector<1x32x1024xbf16>
    %49 = vector.shape_cast %48 : vector<1x32x1024xbf16> to vector<32x1024xbf16>
    %c64 = arith.constant 64 : index
    %c0_34 = arith.constant 0 : index
    %50 = vector.load %arg24[%c64, %c0_34] : memref<192x1024xbf16, #tpu.memory_space<vmem>>, vector<32x1024xbf16>
    tpu.vector_store %arg24[%c64, %c0_34], %49 {strides = array<i32>} : memref<192x1024xbf16, #tpu.memory_space<vmem>>, vector<32x1024xbf16>,
    %c1_35 = arith.constant 1 : index
    %c0_36 = arith.constant 0 : index
    %c128_37 = arith.constant 128 : index
    %51 = vector.load %arg22[%c1_35, %c0_36, %c128_37] : memref<4x32x1280xbf16, #tpu.memory_space<vmem>>, vector<1x32x1024xbf16>
    %52 = vector.shape_cast %51 : vector<1x32x1024xbf16> to vector<32x1024xbf16>
    %c96 = arith.constant 96 : index
    %c0_38 = arith.constant 0 : index
    %53 = vector.load %arg24[%c96, %c0_38] : memref<192x1024xbf16, #tpu.memory_space<vmem>>, vector<32x1024xbf16>
    tpu.vector_store %arg24[%c96, %c0_38], %52 {strides = array<i32>} : memref<192x1024xbf16, #tpu.memory_space<vmem>>, vector<32x1024xbf16>,
    %c2_39 = arith.constant 2 : index
    %c0_40 = arith.constant 0 : index
    %c128_41 = arith.constant 128 : index
    %54 = vector.load %arg22[%c2_39, %c0_40, %c128_41] : memref<4x32x1280xbf16, #tpu.memory_space<vmem>>, vector<1x32x1024xbf16>
    %55 = vector.shape_cast %54 : vector<1x32x1024xbf16> to vector<32x1024xbf16>
    %c128_42 = arith.constant 128 : index
    %c0_43 = arith.constant 0 : index
    %56 = vector.load %arg24[%c128_42, %c0_43] : memref<192x1024xbf16, #tpu.memory_space<vmem>>, vector<32x1024xbf16>
    tpu.vector_store %arg24[%c128_42, %c0_43], %55 {strides = array<i32>} : memref<192x1024xbf16, #tpu.memory_space<vmem>>, vector<32x1024xbf16>,
    %c0_44 = arith.constant 0 : index
    %c0_45 = arith.constant 0 : index
    %57 = vector.load %arg7[%c0_44, %c0_45] : memref<64x160xbf16, #tpu.memory_space<vmem>>, vector<64x160xbf16>
    %c0_46 = arith.constant 0 : index
    %c0_47 = arith.constant 0 : index
    %58 = vector.load %arg24[%c0_46, %c0_47] : memref<192x1024xbf16, #tpu.memory_space<vmem>>, vector<160x1024xbf16>
    %cst_48 = arith.constant dense<0.000000e+00> : vector<64x1024xf32>
    %59 = tpu.matmul %57, %58, %cst_48 {dimension_numbers = #tpu.dot_dimension_numbers<[1], [0], [0], [1], [0, 0, 1, 1], [], []>} : vector<64x160xbf16>, vector<160x1024xbf16>, vector<64x1024xf32> -> vector<64x1024xf32>
    %c0_49 = arith.constant 0 : index
    %c0_50 = arith.constant 0 : index
    %60 = vector.load %arg8[%c0_49, %c0_50] : memref<64x1xf32, #tpu.memory_space<vmem>>, vector<64x1xf32>
    %61 = vector.broadcast %60 : vector<64x1xf32> to vector<64x1024xf32>
    %62 = arith.addf %59, %61 : vector<64x1024xf32>
    %cst_51 = arith.constant 0.000000e+00 : f32
    %63 = vector.broadcast %cst_51 : f32 to vector<64x1024xf32>
    %64 = arith.maximumf %62, %63 : vector<64x1024xf32>
    %c0_52 = arith.constant 0 : index
    %c0_53 = arith.constant 0 : index
    %65 = vector.load %arg9[%c0_52, %c0_53] : memref<64x1xf32, #tpu.memory_space<vmem>>, vector<64x1xf32>
    %66 = vector.broadcast %65 : vector<64x1xf32> to vector<64x1024xf32>
    %67 = arith.mulf %64, %66 : vector<64x1024xf32>
    %c0_54 = arith.constant 0 : index
    %c0_55 = arith.constant 0 : index
    %68 = vector.load %arg10[%c0_54, %c0_55] : memref<64x1xf32, #tpu.memory_space<vmem>>, vector<64x1xf32>
    %69 = vector.broadcast %68 : vector<64x1xf32> to vector<64x1024xf32>
    %70 = arith.addf %67, %69 : vector<64x1024xf32>
    %cst_56 = arith.constant 0.000000e+00 : f32
    %71 = vector.shape_cast %2 : vector<1x1024xi1> to vector<1x1024xi1>
    %72 = vector.broadcast %71 : vector<1x1024xi1> to vector<64x1024xi1>
    %73 = vector.broadcast %cst_56 : f32 to vector<64x1024xf32>
    %74 = arith.select %72, %70, %73 : vector<64x1024xi1>, vector<64x1024xf32>
    %75 = arith.truncf %74 : vector<64x1024xf32> to vector<64x1024xbf16>
    %c0_57 = arith.constant 0 : index
    %c0_58 = arith.constant 0 : index
    %c128_59 = arith.constant 128 : index
    %76 = vector.load %arg23[%c0_57, %c0_58, %c128_59] : memref<2x64x1280xbf16, #tpu.memory_space<vmem>>, vector<1x64x1024xbf16>
    %77 = vector.shape_cast %76 : vector<1x64x1024xbf16> to vector<64x1024xbf16>
    %78 = vector.shape_cast %75 : vector<64x1024xbf16> to vector<1x64x1024xbf16>
    tpu.vector_store %arg23[%c0_57, %c0_58, %c128_59], %78 {strides = array<i32>} : memref<2x64x1280xbf16, #tpu.memory_space<vmem>>, vector<1x64x1024xbf16>,
    %c0_60 = arith.constant 0 : index
    %c0_61 = arith.constant 0 : index
    %c128_62 = arith.constant 128 : index
    %79 = vector.load %arg22[%c0_60, %c0_61, %c128_62] : memref<4x32x1280xbf16, #tpu.memory_space<vmem>>, vector<1x32x1024xbf16>
    %80 = vector.shape_cast %79 : vector<1x32x1024xbf16> to vector<32x1024xbf16>
    %c0_63 = arith.constant 0 : index
    %c0_64 = arith.constant 0 : index
    %81 = vector.load %arg24[%c0_63, %c0_64] : memref<192x1024xbf16, #tpu.memory_space<vmem>>, vector<32x1024xbf16>
    tpu.vector_store %arg24[%c0_63, %c0_64], %80 {strides = array<i32>} : memref<192x1024xbf16, #tpu.memory_space<vmem>>, vector<32x1024xbf16>,
    %c1_65 = arith.constant 1 : index
    %c0_66 = arith.constant 0 : index
    %c128_67 = arith.constant 128 : index
    %82 = vector.load %arg22[%c1_65, %c0_66, %c128_67] : memref<4x32x1280xbf16, #tpu.memory_space<vmem>>, vector<1x32x1024xbf16>
    %83 = vector.shape_cast %82 : vector<1x32x1024xbf16> to vector<32x1024xbf16>
    %c32_68 = arith.constant 32 : index
    %c0_69 = arith.constant 0 : index
    %84 = vector.load %arg24[%c32_68, %c0_69] : memref<192x1024xbf16, #tpu.memory_space<vmem>>, vector<32x1024xbf16>
    tpu.vector_store %arg24[%c32_68, %c0_69], %83 {strides = array<i32>} : memref<192x1024xbf16, #tpu.memory_space<vmem>>, vector<32x1024xbf16>,
    %c2_70 = arith.constant 2 : index
    %c0_71 = arith.constant 0 : index
    %c128_72 = arith.constant 128 : index
    %85 = vector.load %arg22[%c2_70, %c0_71, %c128_72] : memref<4x32x1280xbf16, #tpu.memory_space<vmem>>, vector<1x32x1024xbf16>
    %86 = vector.shape_cast %85 : vector<1x32x1024xbf16> to vector<32x1024xbf16>
    %c64_73 = arith.constant 64 : index
    %c0_74 = arith.constant 0 : index
    %87 = vector.load %arg24[%c64_73, %c0_74] : memref<192x1024xbf16, #tpu.memory_space<vmem>>, vector<32x1024xbf16>
    tpu.vector_store %arg24[%c64_73, %c0_74], %86 {strides = array<i32>} : memref<192x1024xbf16, #tpu.memory_space<vmem>>, vector<32x1024xbf16>,
    %c3_75 = arith.constant 3 : index
    %c0_76 = arith.constant 0 : index
    %c128_77 = arith.constant 128 : index
    %88 = vector.load %arg22[%c3_75, %c0_76, %c128_77] : memref<4x32x1280xbf16, #tpu.memory_space<vmem>>, vector<1x32x1024xbf16>
    %89 = vector.shape_cast %88 : vector<1x32x1024xbf16> to vector<32x1024xbf16>
    %c96_78 = arith.constant 96 : index
    %c0_79 = arith.constant 0 : index
    %90 = vector.load %arg24[%c96_78, %c0_79] : memref<192x1024xbf16, #tpu.memory_space<vmem>>, vector<32x1024xbf16>
    tpu.vector_store %arg24[%c96_78, %c0_79], %89 {strides = array<i32>} : memref<192x1024xbf16, #tpu.memory_space<vmem>>, vector<32x1024xbf16>,
    %c0_80 = arith.constant 0 : index
    %c0_81 = arith.constant 0 : index
    %c129 = arith.constant 129 : index
    %91 = vector.load %arg22[%c0_80, %c0_81, %c129] : memref<4x32x1280xbf16, #tpu.memory_space<vmem>>, vector<1x32x1024xbf16>
    %92 = vector.shape_cast %91 : vector<1x32x1024xbf16> to vector<32x1024xbf16>
    %c128_82 = arith.constant 128 : index
    %c0_83 = arith.constant 0 : index
    %93 = vector.load %arg24[%c128_82, %c0_83] : memref<192x1024xbf16, #tpu.memory_space<vmem>>, vector<32x1024xbf16>
    tpu.vector_store %arg24[%c128_82, %c0_83], %92 {strides = array<i32>} : memref<192x1024xbf16, #tpu.memory_space<vmem>>, vector<32x1024xbf16>,
    %c0_84 = arith.constant 0 : index
    %c0_85 = arith.constant 0 : index
    %94 = vector.load %arg7[%c0_84, %c0_85] : memref<64x160xbf16, #tpu.memory_space<vmem>>, vector<64x160xbf16>
    %c0_86 = arith.constant 0 : index
    %c0_87 = arith.constant 0 : index
    %95 = vector.load %arg24[%c0_86, %c0_87] : memref<192x1024xbf16, #tpu.memory_space<vmem>>, vector<160x1024xbf16>
    %cst_88 = arith.constant dense<0.000000e+00> : vector<64x1024xf32>
    %96 = tpu.matmul %94, %95, %cst_88 {dimension_numbers = #tpu.dot_dimension_numbers<[1], [0], [0], [1], [0, 0, 1, 1], [], []>} : vector<64x160xbf16>, vector<160x1024xbf16>, vector<64x1024xf32> -> vector<64x1024xf32>
    %c0_89 = arith.constant 0 : index
    %c0_90 = arith.constant 0 : index
    %97 = vector.load %arg8[%c0_89, %c0_90] : memref<64x1xf32, #tpu.memory_space<vmem>>, vector<64x1xf32>
    %98 = vector.broadcast %97 : vector<64x1xf32> to vector<64x1024xf32>
    %99 = arith.addf %96, %98 : vector<64x1024xf32>
    %cst_91 = arith.constant 0.000000e+00 : f32
    %100 = vector.broadcast %cst_91 : f32 to vector<64x1024xf32>
    %101 = arith.maximumf %99, %100 : vector<64x1024xf32>
    %c0_92 = arith.constant 0 : index
    %c0_93 = arith.constant 0 : index
    %102 = vector.load %arg9[%c0_92, %c0_93] : memref<64x1xf32, #tpu.memory_space<vmem>>, vector<64x1xf32>
    %103 = vector.broadcast %102 : vector<64x1xf32> to vector<64x1024xf32>
    %104 = arith.mulf %101, %103 : vector<64x1024xf32>
    %c0_94 = arith.constant 0 : index
    %c0_95 = arith.constant 0 : index
    %105 = vector.load %arg10[%c0_94, %c0_95] : memref<64x1xf32, #tpu.memory_space<vmem>>, vector<64x1xf32>
    %106 = vector.broadcast %105 : vector<64x1xf32> to vector<64x1024xf32>
    %107 = arith.addf %104, %106 : vector<64x1024xf32>
    %cst_96 = arith.constant 0.000000e+00 : f32
    %108 = vector.shape_cast %2 : vector<1x1024xi1> to vector<1x1024xi1>
    %109 = vector.broadcast %108 : vector<1x1024xi1> to vector<64x1024xi1>
    %110 = vector.broadcast %cst_96 : f32 to vector<64x1024xf32>
    %111 = arith.select %109, %107, %110 : vector<64x1024xi1>, vector<64x1024xf32>
    %112 = arith.truncf %111 : vector<64x1024xf32> to vector<64x1024xbf16>
    %c1_97 = arith.constant 1 : index
    %c0_98 = arith.constant 0 : index
    %c128_99 = arith.constant 128 : index
    %113 = vector.load %arg23[%c1_97, %c0_98, %c128_99] : memref<2x64x1280xbf16, #tpu.memory_space<vmem>>, vector<1x64x1024xbf16>
    %114 = vector.shape_cast %113 : vector<1x64x1024xbf16> to vector<64x1024xbf16>
    %115 = vector.shape_cast %112 : vector<64x1024xbf16> to vector<1x64x1024xbf16>
    tpu.vector_store %arg23[%c1_97, %c0_98, %c128_99], %115 {strides = array<i32>} : memref<2x64x1280xbf16, #tpu.memory_space<vmem>>, vector<1x64x1024xbf16>,
    %c1_100 = arith.constant 1 : index
    %c0_101 = arith.constant 0 : index
    %c127_102 = arith.constant 127 : index
    %116 = vector.load %arg23[%c1_100, %c0_101, %c127_102] : memref<2x64x1280xbf16, #tpu.memory_space<vmem>>, vector<1x64x1024xbf16>
    %117 = vector.shape_cast %116 : vector<1x64x1024xbf16> to vector<64x1024xbf16>
    %c0_103 = arith.constant 0 : index
    %c0_104 = arith.constant 0 : index
    %118 = vector.load %arg24[%c0_103, %c0_104] : memref<192x1024xbf16, #tpu.memory_space<vmem>>, vector<64x1024xbf16>
    tpu.vector_store %arg24[%c0_103, %c0_104], %117 {strides = array<i32>} : memref<192x1024xbf16, #tpu.memory_space<vmem>>, vector<64x1024xbf16>,
    %c0_105 = arith.constant 0 : index
    %c0_106 = arith.constant 0 : index
    %c128_107 = arith.constant 128 : index
    %119 = vector.load %arg23[%c0_105, %c0_106, %c128_107] : memref<2x64x1280xbf16, #tpu.memory_space<vmem>>, vector<1x64x1024xbf16>
    %120 = vector.shape_cast %119 : vector<1x64x1024xbf16> to vector<64x1024xbf16>
    %c64_108 = arith.constant 64 : index
    %c0_109 = arith.constant 0 : index
    %121 = vector.load %arg24[%c64_108, %c0_109] : memref<192x1024xbf16, #tpu.memory_space<vmem>>, vector<64x1024xbf16>
    tpu.vector_store %arg24[%c64_108, %c0_109], %120 {strides = array<i32>} : memref<192x1024xbf16, #tpu.memory_space<vmem>>, vector<64x1024xbf16>,
    %c1_110 = arith.constant 1 : index
    %c0_111 = arith.constant 0 : index
    %c128_112 = arith.constant 128 : index
    %122 = vector.load %arg23[%c1_110, %c0_111, %c128_112] : memref<2x64x1280xbf16, #tpu.memory_space<vmem>>, vector<1x64x1024xbf16>
    %123 = vector.shape_cast %122 : vector<1x64x1024xbf16> to vector<64x1024xbf16>
    %c128_113 = arith.constant 128 : index
    %c0_114 = arith.constant 0 : index
    %124 = vector.load %arg24[%c128_113, %c0_114] : memref<192x1024xbf16, #tpu.memory_space<vmem>>, vector<64x1024xbf16>
    tpu.vector_store %arg24[%c128_113, %c0_114], %123 {strides = array<i32>} : memref<192x1024xbf16, #tpu.memory_space<vmem>>, vector<64x1024xbf16>,
    %c0_115 = arith.constant 0 : index
    %c0_116 = arith.constant 0 : index
    %125 = vector.load %arg11[%c0_115, %c0_116] : memref<128x192xbf16, #tpu.memory_space<vmem>>, vector<128x192xbf16>
    %c0_117 = arith.constant 0 : index
    %c0_118 = arith.constant 0 : index
    %126 = vector.load %arg24[%c0_117, %c0_118] : memref<192x1024xbf16, #tpu.memory_space<vmem>>, vector<192x1024xbf16>
    %cst_119 = arith.constant dense<0.000000e+00> : vector<128x1024xf32>
    %127 = tpu.matmul %125, %126, %cst_119 {dimension_numbers = #tpu.dot_dimension_numbers<[1], [0], [0], [1], [0, 0, 1, 1], [], []>} : vector<128x192xbf16>, vector<192x1024xbf16>, vector<128x1024xf32> -> vector<128x1024xf32>
    %c0_120 = arith.constant 0 : index
    %c0_121 = arith.constant 0 : index
    %128 = vector.load %arg12[%c0_120, %c0_121] : memref<128x1xf32, #tpu.memory_space<vmem>>, vector<128x1xf32>
    %129 = vector.broadcast %128 : vector<128x1xf32> to vector<128x1024xf32>
    %130 = arith.addf %127, %129 : vector<128x1024xf32>
    %cst_122 = arith.constant 0.000000e+00 : f32
    %131 = vector.broadcast %cst_122 : f32 to vector<128x1024xf32>
    %132 = arith.maximumf %130, %131 : vector<128x1024xf32>
    %c0_123 = arith.constant 0 : index
    %c0_124 = arith.constant 0 : index
    %133 = vector.load %arg13[%c0_123, %c0_124] : memref<128x1xf32, #tpu.memory_space<vmem>>, vector<128x1xf32>
    %134 = vector.broadcast %133 : vector<128x1xf32> to vector<128x1024xf32>
    %135 = arith.mulf %132, %134 : vector<128x1024xf32>
    %c0_125 = arith.constant 0 : index
    %c0_126 = arith.constant 0 : index
    %136 = vector.load %arg14[%c0_125, %c0_126] : memref<128x1xf32, #tpu.memory_space<vmem>>, vector<128x1xf32>
    %137 = vector.broadcast %136 : vector<128x1xf32> to vector<128x1024xf32>
    %138 = arith.addf %135, %137 : vector<128x1024xf32>
    %cst_127 = arith.constant 0.000000e+00 : f32
    %139 = vector.shape_cast %2 : vector<1x1024xi1> to vector<1x1024xi1>
    %140 = vector.broadcast %139 : vector<1x1024xi1> to vector<128x1024xi1>
    %141 = vector.broadcast %cst_127 : f32 to vector<128x1024xf32>
    %142 = arith.select %140, %138, %141 : vector<128x1024xi1>, vector<128x1024xf32>
    %143 = vector.extract_strided_slice %142 {offsets = [0, 0], sizes = [128, 128], strides = [1, 1]} : vector<128x1024xf32> to vector<128x128xf32>
    %cst_128 = arith.constant dense<0.000000e+00> : vector<128xf32>
    %144 = vector.multi_reduction <add>, %143, %cst_128 [1] : vector<128x128xf32> to vector<128xf32>
    %145 = vector.shape_cast %144 : vector<128xf32> to vector<128x1xf32>
    %146 = vector.extract_strided_slice %142 {offsets = [0, 128], sizes = [128, 128], strides = [1, 1]} : vector<128x1024xf32> to vector<128x128xf32>
    %cst_129 = arith.constant dense<0.000000e+00> : vector<128xf32>
    %147 = vector.multi_reduction <add>, %146, %cst_129 [1] : vector<128x128xf32> to vector<128xf32>
    %148 = vector.shape_cast %147 : vector<128xf32> to vector<128x1xf32>
    %149 = vector.extract_strided_slice %142 {offsets = [0, 256], sizes = [128, 128], strides = [1, 1]} : vector<128x1024xf32> to vector<128x128xf32>
    %cst_130 = arith.constant dense<0.000000e+00> : vector<128xf32>
    %150 = vector.multi_reduction <add>, %149, %cst_130 [1] : vector<128x128xf32> to vector<128xf32>
    %151 = vector.shape_cast %150 : vector<128xf32> to vector<128x1xf32>
    %152 = vector.extract_strided_slice %142 {offsets = [0, 384], sizes = [128, 128], strides = [1, 1]} : vector<128x1024xf32> to vector<128x128xf32>
    %cst_131 = arith.constant dense<0.000000e+00> : vector<128xf32>
    %153 = vector.multi_reduction <add>, %152, %cst_131 [1] : vector<128x128xf32> to vector<128xf32>
    %154 = vector.shape_cast %153 : vector<128xf32> to vector<128x1xf32>
    %155 = vector.extract_strided_slice %142 {offsets = [0, 512], sizes = [128, 128], strides = [1, 1]} : vector<128x1024xf32> to vector<128x128xf32>
    %cst_132 = arith.constant dense<0.000000e+00> : vector<128xf32>
    %156 = vector.multi_reduction <add>, %155, %cst_132 [1] : vector<128x128xf32> to vector<128xf32>
    %157 = vector.shape_cast %156 : vector<128xf32> to vector<128x1xf32>
    %158 = vector.extract_strided_slice %142 {offsets = [0, 640], sizes = [128, 128], strides = [1, 1]} : vector<128x1024xf32> to vector<128x128xf32>
    %cst_133 = arith.constant dense<0.000000e+00> : vector<128xf32>
    %159 = vector.multi_reduction <add>, %158, %cst_133 [1] : vector<128x128xf32> to vector<128xf32>
    %160 = vector.shape_cast %159 : vector<128xf32> to vector<128x1xf32>
    %161 = vector.extract_strided_slice %142 {offsets = [0, 768], sizes = [128, 128], strides = [1, 1]} : vector<128x1024xf32> to vector<128x128xf32>
    %cst_134 = arith.constant dense<0.000000e+00> : vector<128xf32>
    %162 = vector.multi_reduction <add>, %161, %cst_134 [1] : vector<128x128xf32> to vector<128xf32>
    %163 = vector.shape_cast %162 : vector<128xf32> to vector<128x1xf32>
    %164 = vector.extract_strided_slice %142 {offsets = [0, 896], sizes = [128, 128], strides = [1, 1]} : vector<128x1024xf32> to vector<128x128xf32>
    %cst_135 = arith.constant dense<0.000000e+00> : vector<128xf32>
    %165 = vector.multi_reduction <add>, %164, %cst_135 [1] : vector<128x128xf32> to vector<128xf32>
    %166 = vector.shape_cast %165 : vector<128xf32> to vector<128x1xf32>
    %167 = tpu.concatenate %145, %148, %151, %154, %157, %160, %163, %166 in 1 : vector<128x1xf32>, vector<128x1xf32>, vector<128x1xf32>, vector<128x1xf32>, vector<128x1xf32>, vector<128x1xf32>, vector<128x1xf32>, vector<128x1xf32> -> vector<128x8xf32>
    %cst_136 = arith.constant 6.250000e-02 : f32
    %168 = vector.broadcast %cst_136 : f32 to vector<128x8xf32>
    %169 = arith.mulf %167, %168 : vector<128x8xf32>
    %c0_137 = arith.constant 0 : index
    %c0_138 = arith.constant 0 : index
    %170 = vector.load %arg15[%c0_137, %c0_138] : memref<256x128xf32, #tpu.memory_space<vmem>>, vector<256x128xf32>
    %cst_139 = arith.constant dense<0.000000e+00> : vector<256x8xf32>
    %171 = tpu.matmul %170, %169, %cst_139 {dimension_numbers = #tpu.dot_dimension_numbers<[1], [0], [0], [1], [0, 0, 1, 1], [], []>} : vector<256x128xf32>, vector<128x8xf32>, vector<256x8xf32> -> vector<256x8xf32>
    %c0_140 = arith.constant 0 : index
    %c0_141 = arith.constant 0 : index
    %172 = vector.load %arg16[%c0_140, %c0_141] : memref<256x1xf32, #tpu.memory_space<vmem>>, vector<256x1xf32>
    %173 = vector.broadcast %172 : vector<256x1xf32> to vector<256x8xf32>
    %174 = arith.addf %171, %173 : vector<256x8xf32>
    %cst_142 = arith.constant 0.000000e+00 : f32
    %175 = vector.broadcast %cst_142 : f32 to vector<256x8xf32>
    %176 = arith.maximumf %174, %175 : vector<256x8xf32>
    %c0_143 = arith.constant 0 : index
    %c0_144 = arith.constant 0 : index
    %177 = vector.load %arg17[%c0_143, %c0_144] : memref<128x256xf32, #tpu.memory_space<vmem>>, vector<128x256xf32>
    %cst_145 = arith.constant dense<0.000000e+00> : vector<128x8xf32>
    %178 = tpu.matmul %177, %176, %cst_145 {dimension_numbers = #tpu.dot_dimension_numbers<[1], [0], [0], [1], [0, 0, 1, 1], [], []>} : vector<128x256xf32>, vector<256x8xf32>, vector<128x8xf32> -> vector<128x8xf32>
    %c0_146 = arith.constant 0 : index
    %c0_147 = arith.constant 0 : index
    %179 = vector.load %arg18[%c0_146, %c0_147] : memref<128x1xf32, #tpu.memory_space<vmem>>, vector<128x1xf32>
    %180 = vector.broadcast %179 : vector<128x1xf32> to vector<128x8xf32>
    %181 = arith.addf %178, %180 : vector<128x8xf32>
    %cst_148 = arith.constant 0.000000e+00 : f32
    %182 = vector.broadcast %cst_148 : f32 to vector<128x8xf32>
    %183 = arith.maximumf %181, %182 : vector<128x8xf32>
    %c0_149 = arith.constant 0 : index
    %c0_150 = arith.constant 0 : index
    %184 = vector.load %arg19[%c0_149, %c0_150] : memref<2x128xf32, #tpu.memory_space<vmem>>, vector<2x128xf32>
    %cst_151 = arith.constant dense<0.000000e+00> : vector<2x8xf32>
    %185 = tpu.matmul %184, %183, %cst_151 {dimension_numbers = #tpu.dot_dimension_numbers<[1], [0], [0], [1], [0, 0, 1, 1], [], []>} : vector<2x128xf32>, vector<128x8xf32>, vector<2x8xf32> -> vector<2x8xf32>
    %c0_152 = arith.constant 0 : index
    %c0_153 = arith.constant 0 : index
    %186 = vector.load %arg20[%c0_152, %c0_153] : memref<2x1xf32, #tpu.memory_space<vmem>>, vector<2x1xf32>
    %187 = vector.broadcast %186 : vector<2x1xf32> to vector<2x8xf32>
    %188 = arith.addf %185, %187 : vector<2x8xf32>
    %c0_154 = arith.constant 0 : index
    %c0_155 = arith.constant 0 : index
    %c0_156 = arith.constant 0 : index
    %189 = vector.load %arg21[%c0_154, %c0_155, %c0_156] : memref<1x2x8xf32, #tpu.memory_space<vmem>>, vector<1x2x8xf32>
    %190 = vector.shape_cast %189 : vector<1x2x8xf32> to vector<2x8xf32>
    %191 = vector.shape_cast %188 : vector<2x8xf32> to vector<1x2x8xf32>
    tpu.vector_store %arg21[%c0_154, %c0_155, %c0_156], %191 {strides = array<i32>} : memref<1x2x8xf32, #tpu.memory_space<vmem>>, vector<1x2x8xf32>,
    return
  }
  func.func @transform_0(%arg0: i32) -> (i32, i32, i32) {
    %c0_i32 = arith.constant 0 : i32
    %c0_i32_0 = arith.constant 0 : i32
    %c0_i32_1 = arith.constant 0 : i32
    return %arg0, %c0_i32, %c0_i32_0 : i32, i32, i32
  }
  func.func @transform_1(%arg0: i32) -> (i32, i32) {
    %c0_i32 = arith.constant 0 : i32
    %c0_i32_0 = arith.constant 0 : i32
    %c0_i32_1 = arith.constant 0 : i32
    return %c0_i32, %c0_i32_0 : i32, i32
  }
  func.func @transform_2(%arg0: i32) -> (i32, i32) {
    %c0_i32 = arith.constant 0 : i32
    %c0_i32_0 = arith.constant 0 : i32
    %c0_i32_1 = arith.constant 0 : i32
    return %c0_i32, %c0_i32_0 : i32, i32
  }
  func.func @transform_3(%arg0: i32) -> (i32, i32) {
    %c0_i32 = arith.constant 0 : i32
    %c0_i32_0 = arith.constant 0 : i32
    %c0_i32_1 = arith.constant 0 : i32
    return %c0_i32, %c0_i32_0 : i32, i32
  }
  func.func @transform_4(%arg0: i32) -> (i32, i32) {
    %c0_i32 = arith.constant 0 : i32
    %c0_i32_0 = arith.constant 0 : i32
    %c0_i32_1 = arith.constant 0 : i32
    return %c0_i32, %c0_i32_0 : i32, i32
  }
  func.func @transform_5(%arg0: i32) -> (i32, i32) {
    %c0_i32 = arith.constant 0 : i32
    %c0_i32_0 = arith.constant 0 : i32
    %c0_i32_1 = arith.constant 0 : i32
    return %c0_i32, %c0_i32_0 : i32, i32
  }
  func.func @transform_6(%arg0: i32) -> (i32, i32) {
    %c0_i32 = arith.constant 0 : i32
    %c0_i32_0 = arith.constant 0 : i32
    %c0_i32_1 = arith.constant 0 : i32
    return %c0_i32, %c0_i32_0 : i32, i32
  }
  func.func @transform_7(%arg0: i32) -> (i32, i32) {
    %c0_i32 = arith.constant 0 : i32
    %c0_i32_0 = arith.constant 0 : i32
    %c0_i32_1 = arith.constant 0 : i32
    return %c0_i32, %c0_i32_0 : i32, i32
  }
  func.func @transform_8(%arg0: i32) -> (i32, i32) {
    %c0_i32 = arith.constant 0 : i32
    %c0_i32_0 = arith.constant 0 : i32
    %c0_i32_1 = arith.constant 0 : i32
    return %c0_i32, %c0_i32_0 : i32, i32
  }
  func.func @transform_9(%arg0: i32) -> (i32, i32) {
    %c0_i32 = arith.constant 0 : i32
    %c0_i32_0 = arith.constant 0 : i32
    %c0_i32_1 = arith.constant 0 : i32
    return %c0_i32, %c0_i32_0 : i32, i32
  }
  func.func @transform_10(%arg0: i32) -> (i32, i32) {
    %c0_i32 = arith.constant 0 : i32
    %c0_i32_0 = arith.constant 0 : i32
    %c0_i32_1 = arith.constant 0 : i32
    return %c0_i32, %c0_i32_0 : i32, i32
  }
  func.func @transform_11(%arg0: i32) -> (i32, i32) {
    %c0_i32 = arith.constant 0 : i32
    %c0_i32_0 = arith.constant 0 : i32
    %c0_i32_1 = arith.constant 0 : i32
    return %c0_i32, %c0_i32_0 : i32, i32
  }
  func.func @transform_12(%arg0: i32) -> (i32, i32) {
    %c0_i32 = arith.constant 0 : i32
    %c0_i32_0 = arith.constant 0 : i32
    %c0_i32_1 = arith.constant 0 : i32
    return %c0_i32, %c0_i32_0 : i32, i32
  }
  func.func @transform_13(%arg0: i32) -> (i32, i32) {
    %c0_i32 = arith.constant 0 : i32
    %c0_i32_0 = arith.constant 0 : i32
    %c0_i32_1 = arith.constant 0 : i32
    return %c0_i32, %c0_i32_0 : i32, i32
  }
  func.func @transform_14(%arg0: i32) -> (i32, i32) {
    %c0_i32 = arith.constant 0 : i32
    %c0_i32_0 = arith.constant 0 : i32
    %c0_i32_1 = arith.constant 0 : i32
    return %c0_i32, %c0_i32_0 : i32, i32
  }
  func.func @transform_15(%arg0: i32) -> (i32, i32) {
    %c0_i32 = arith.constant 0 : i32
    %c0_i32_0 = arith.constant 0 : i32
    %c0_i32_1 = arith.constant 0 : i32
    return %c0_i32, %c0_i32_0 : i32, i32
  }
  func.func @transform_16(%arg0: i32) -> (i32, i32) {
    %c0_i32 = arith.constant 0 : i32
    %c0_i32_0 = arith.constant 0 : i32
    %c0_i32_1 = arith.constant 0 : i32
    return %c0_i32, %c0_i32_0 : i32, i32
  }
  func.func @transform_17(%arg0: i32) -> (i32, i32) {
    %c0_i32 = arith.constant 0 : i32
    %c0_i32_0 = arith.constant 0 : i32
    %c0_i32_1 = arith.constant 0 : i32
    return %c0_i32, %c0_i32_0 : i32, i32
  }
  func.func @transform_18(%arg0: i32) -> (i32, i32) {
    %c0_i32 = arith.constant 0 : i32
    %c0_i32_0 = arith.constant 0 : i32
    %c0_i32_1 = arith.constant 0 : i32
    return %c0_i32, %c0_i32_0 : i32, i32
  }
  func.func @transform_19(%arg0: i32) -> (i32, i32) {
    %c0_i32 = arith.constant 0 : i32
    %c0_i32_0 = arith.constant 0 : i32
    %c0_i32_1 = arith.constant 0 : i32
    return %c0_i32, %c0_i32_0 : i32, i32
  }
  func.func @transform_20(%arg0: i32) -> (i32, i32, i32) {
    %c0_i32 = arith.constant 0 : i32
    %c0_i32_0 = arith.constant 0 : i32
    %c0_i32_1 = arith.constant 0 : i32
    return %arg0, %c0_i32, %c0_i32_0 : i32, i32, i32
  }
}

</mosaic_0001>

<llo_original>
// kernel: tpu_custom_call.1
$region0: #{tpu_custom_call.1}
  #allocation0 [shape = 'u32[]', space=smem, size = 0x4, offset = 0x4, fixed_abs, tag = 'smem constant byte address 0x4 - core index']
  #allocation1 [shape = 'u32[144,128]{1,0:T(1,128)}', space=vmem, size = 0x12000, scoped, tag = 'internal scratch']
  #allocation2 [shape = 'bf16[4,32,1280]{2,1,0:T(8,128)(2,1)}', space=vmem, size = 0x50000, scoped, tag = 'scratch operand']
  #allocation3 [shape = 'bf16[2,64,1280]{2,1,0:T(8,128)(2,1)}', space=vmem, size = 0x50000, scoped, tag = 'scratch operand']
  #allocation4 [shape = 'bf16[192,1024]{1,0:T(8,128)(2,1)}', space=vmem, size = 0x60000, scoped, tag = 'scratch operand']
  %s0 = inlined_call_operand.vmem [shape: f32[1,8,1024], index: 0, kind: input, shape index: {}]
  %s1 = inlined_call_operand.vmem [shape: f32[1,1024], index: 1, kind: input, shape index: {}]
  %s2 = inlined_call_operand.vmem [shape: f32[128,8], index: 2, kind: input, shape index: {}]
  %s3 = inlined_call_operand.vmem [shape: f32[128,1], index: 3, kind: input, shape index: {}]
  %s4 = inlined_call_operand.vmem [shape: f32[128,1], index: 4, kind: input, shape index: {}]
  %s5 = inlined_call_operand.vmem [shape: f32[128,1], index: 5, kind: input, shape index: {}]
  %s6 = inlined_call_operand.vmem [shape: bf16[64,160], index: 6, kind: input, shape index: {}]
  %s7 = inlined_call_operand.vmem [shape: f32[64,1], index: 7, kind: input, shape index: {}]
  %s8 = inlined_call_operand.vmem [shape: f32[64,1], index: 8, kind: input, shape index: {}]
  %s9 = inlined_call_operand.vmem [shape: f32[64,1], index: 9, kind: input, shape index: {}]
  %s10 = inlined_call_operand.vmem [shape: bf16[128,192], index: 10, kind: input, shape index: {}]
  %s11 = inlined_call_operand.vmem [shape: f32[128,1], index: 11, kind: input, shape index: {}]
  %s12 = inlined_call_operand.vmem [shape: f32[128,1], index: 12, kind: input, shape index: {}]
  %s13 = inlined_call_operand.vmem [shape: f32[128,1], index: 13, kind: input, shape index: {}]
  %s14 = inlined_call_operand.vmem [shape: f32[256,128], index: 14, kind: input, shape index: {}]
  %s15 = inlined_call_operand.vmem [shape: f32[256,1], index: 15, kind: input, shape index: {}]
  %s16 = inlined_call_operand.vmem [shape: f32[128,256], index: 16, kind: input, shape index: {}]
  %s17 = inlined_call_operand.vmem [shape: f32[128,1], index: 17, kind: input, shape index: {}]
  %s18 = inlined_call_operand.vmem [shape: f32[2,128], index: 18, kind: input, shape index: {}]
  %s19 = inlined_call_operand.vmem [shape: f32[2,1], index: 19, kind: input, shape index: {}]
  %s20 = inlined_call_operand.hbm [shape: f32[1,2,8], index: 20, kind: output, shape index: {}]
  %s21 = sld [smem:[#allocation0]]
  $region90: #{tpu_custom_call.1} parent=0
    _
  %s23 = ssub.s32 1, %s21
  %s24 = scalar_select 0, %s23, %s21
  $region1: #{tpu_custom_call.1} parent=0
    #allocation5 [shape = 'u8[1024]{0}', space=vmem, size = 0x400, scoped, tag = 'output window, operand 0, single buffered']
    #allocation6 [shape = 's32[1]{0}', space=sflag, size = 0x4, scoped, tag = 'scoped memory for tpu_custom_call.1']
    %25 = vsyncpa [#allocation6], 0
    // Predicated region
    $region2: #{tpu_custom_call.1} parent=1 // pred_check
      _
    $region3: #{tpu_custom_call.1} parent=1 // pred_check_branch
      %27 = sbr.rel (0) target = $region5
    $region4: #{tpu_custom_call.1} parent=1 // pred_region
      _
    $region5: #{tpu_custom_call.1} parent=1 // pred_fallthru
      _
    // Predicated region
    $region6: #{tpu_custom_call.1} parent=1 // pred_check
      _
    $region7: #{tpu_custom_call.1} parent=1 // pred_check_branch
      %29 = sbr.rel (0) target = $region9
    $region8: #{tpu_custom_call.1} parent=1 // pred_region
      _
    $region9: #{tpu_custom_call.1} parent=1 // pred_fallthru
      _
    // Predicated region
    $region10: #{tpu_custom_call.1} parent=1 // pred_check
      _
    $region11: #{tpu_custom_call.1} parent=1 // pred_check_branch
      %31 = sbr.rel (0) target = $region13
    $region12: #{tpu_custom_call.1} parent=1 // pred_region
      _
    $region13: #{tpu_custom_call.1} parent=1 // pred_fallthru
      _
    // Predicated region
    $region14: #{tpu_custom_call.1} parent=1 // pred_check
      _
    $region15: #{tpu_custom_call.1} parent=1 // pred_check_branch
      %33 = sbr.rel (0) target = $region17
    $region16: #{tpu_custom_call.1} parent=1 // pred_region
      _
    $region17: #{tpu_custom_call.1} parent=1 // pred_fallthru
      _
    // Predicated region
    $region18: #{tpu_custom_call.1} parent=1 // pred_check
      _
    $region19: #{tpu_custom_call.1} parent=1 // pred_check_branch
      %35 = sbr.rel (0) target = $region21
    $region20: #{tpu_custom_call.1} parent=1 // pred_region
      _
    $region21: #{tpu_custom_call.1} parent=1 // pred_fallthru
      _
    // Predicated region
    $region22: #{tpu_custom_call.1} parent=1 // pred_check
      _
    $region23: #{tpu_custom_call.1} parent=1 // pred_check_branch
      %37 = sbr.rel (0) target = $region25
    $region24: #{tpu_custom_call.1} parent=1 // pred_region
      _
    $region25: #{tpu_custom_call.1} parent=1 // pred_fallthru
      _
    // Predicated region
    $region26: #{tpu_custom_call.1} parent=1 // pred_check
      _
    $region27: #{tpu_custom_call.1} parent=1 // pred_check_branch
      %39 = sbr.rel (0) target = $region29
    $region28: #{tpu_custom_call.1} parent=1 // pred_region
      _
    $region29: #{tpu_custom_call.1} parent=1 // pred_fallthru
      _
    // Predicated region
    $region30: #{tpu_custom_call.1} parent=1 // pred_check
      _
    $region31: #{tpu_custom_call.1} parent=1 // pred_check_branch
      %41 = sbr.rel (0) target = $region33
    $region32: #{tpu_custom_call.1} parent=1 // pred_region
      _
    $region33: #{tpu_custom_call.1} parent=1 // pred_fallthru
      _
    // Predicated region
    $region34: #{tpu_custom_call.1} parent=1 // pred_check
      _
    $region35: #{tpu_custom_call.1} parent=1 // pred_check_branch
      %43 = sbr.rel (0) target = $region37
    $region36: #{tpu_custom_call.1} parent=1 // pred_region
      _
    $region37: #{tpu_custom_call.1} parent=1 // pred_fallthru
      _
    // Predicated region
    $region38: #{tpu_custom_call.1} parent=1 // pred_check
      _
    $region39: #{tpu_custom_call.1} parent=1 // pred_check_branch
      %45 = sbr.rel (0) target = $region41
    $region40: #{tpu_custom_call.1} parent=1 // pred_region
      _
    $region41: #{tpu_custom_call.1} parent=1 // pred_fallthru
      _
    // Predicated region
    $region42: #{tpu_custom_call.1} parent=1 // pred_check
      _
    $region43: #{tpu_custom_call.1} parent=1 // pred_check_branch
      %47 = sbr.rel (0) target = $region45
    $region44: #{tpu_custom_call.1} parent=1 // pred_region
      _
    $region45: #{tpu_custom_call.1} parent=1 // pred_fallthru
      _
    // Predicated region
    $region46: #{tpu_custom_call.1} parent=1 // pred_check
      _
    $region47: #{tpu_custom_call.1} parent=1 // pred_check_branch
      %49 = sbr.rel (0) target = $region49
    $region48: #{tpu_custom_call.1} parent=1 // pred_region
      _
    $region49: #{tpu_custom_call.1} parent=1 // pred_fallthru
      _
    // Predicated region
    $region50: #{tpu_custom_call.1} parent=1 // pred_check
      _
    $region51: #{tpu_custom_call.1} parent=1 // pred_check_branch
      %51 = sbr.rel (0) target = $region53
    $region52: #{tpu_custom_call.1} parent=1 // pred_region
      _
    $region53: #{tpu_custom_call.1} parent=1 // pred_fallthru
      _
    // Predicated region
    $region54: #{tpu_custom_call.1} parent=1 // pred_check
      _
    $region55: #{tpu_custom_call.1} parent=1 // pred_check_branch
      %53 = sbr.rel (0) target = $region57
    $region56: #{tpu_custom_call.1} parent=1 // pred_region
      _
    $region57: #{tpu_custom_call.1} parent=1 // pred_fallthru
      _
    // Predicated region
    $region58: #{tpu_custom_call.1} parent=1 // pred_check
      _
    $region59: #{tpu_custom_call.1} parent=1 // pred_check_branch
      %55 = sbr.rel (0) target = $region61
    $region60: #{tpu_custom_call.1} parent=1 // pred_region
      _
    $region61: #{tpu_custom_call.1} parent=1 // pred_fallthru
      _
    // Predicated region
    $region62: #{tpu_custom_call.1} parent=1 // pred_check
      _
    $region63: #{tpu_custom_call.1} parent=1 // pred_check_branch
      %57 = sbr.rel (0) target = $region65
    $region64: #{tpu_custom_call.1} parent=1 // pred_region
      _
    $region65: #{tpu_custom_call.1} parent=1 // pred_fallthru
      _
    // Predicated region
    $region66: #{tpu_custom_call.1} parent=1 // pred_check
      _
    $region67: #{tpu_custom_call.1} parent=1 // pred_check_branch
      %59 = sbr.rel (0) target = $region69
    $region68: #{tpu_custom_call.1} parent=1 // pred_region
      _
    $region69: #{tpu_custom_call.1} parent=1 // pred_fallthru
      _
    // Predicated region
    $region70: #{tpu_custom_call.1} parent=1 // pred_check
      _
    $region71: #{tpu_custom_call.1} parent=1 // pred_check_branch
      %61 = sbr.rel (0) target = $region73
    $region72: #{tpu_custom_call.1} parent=1 // pred_region
      _
    $region73: #{tpu_custom_call.1} parent=1 // pred_fallthru
      _
    // Predicated region
    $region74: #{tpu_custom_call.1} parent=1 // pred_check
      _
    $region75: #{tpu_custom_call.1} parent=1 // pred_check_branch
      %63 = sbr.rel (0) target = $region77
    $region76: #{tpu_custom_call.1} parent=1 // pred_region
      _
    $region77: #{tpu_custom_call.1} parent=1 // pred_fallthru
      _
    // Predicated region
    $region78: #{tpu_custom_call.1} parent=1 // pred_check
      _
    $region79: #{tpu_custom_call.1} parent=1 // pred_check_branch
      %65 = sbr.rel (0) target = $region81
    $region80: #{tpu_custom_call.1} parent=1 // pred_region
      _
    $region81: #{tpu_custom_call.1} parent=1 // pred_fallthru
      _
    %v67 = vld [vmem:[%s1] sm:$0xff]
    %vm68 = vcmp.ne.f32.partialorder %v67, 0.0
    %v69 = vld [vmem:[%s2] sm:$0xff]
    %v70 = vld [vmem:[%s2 + $0x8] sm:$0xff]
    %v71 = vld [vmem:[%s2 + $0x10] sm:$0xff]
    %v72 = vld [vmem:[%s2 + $0x18] sm:$0xff]
    %v73 = vld [vmem:[%s2 + $0x20] sm:$0xff]
    %v74 = vld [vmem:[%s2 + $0x28] sm:$0xff]
    %v75 = vld [vmem:[%s2 + $0x30] sm:$0xff]
    %v76 = vld [vmem:[%s2 + $0x38] sm:$0xff]
    %v77 = vld [vmem:[%s2 + $0x40] sm:$0xff]
    %v78 = vld [vmem:[%s2 + $0x48] sm:$0xff]
    %v79 = vld [vmem:[%s2 + $0x50] sm:$0xff]
    %v80 = vld [vmem:[%s2 + $0x58] sm:$0xff]
    %v81 = vld [vmem:[%s2 + $0x60] sm:$0xff]
    %v82 = vld [vmem:[%s2 + $0x68] sm:$0xff]
    %v83 = vld [vmem:[%s2 + $0x70] sm:$0xff]
    %v84 = vld [vmem:[%s2 + $0x78] sm:$0xff]
    %v85 = vld [vmem:[%s0] sm:$0xff]
    %v86 = vld [vmem:[%s0 + $0x8] sm:$0xff]
    %v87 = vld [vmem:[%s0 + $0x10] sm:$0xff]
    %v88 = vld [vmem:[%s0 + $0x18] sm:$0xff]
    %v89 = vld [vmem:[%s0 + $0x20] sm:$0xff]
    %v90 = vld [vmem:[%s0 + $0x28] sm:$0xff]
    %v91 = vld [vmem:[%s0 + $0x30] sm:$0xff]
    %v92 = vld [vmem:[%s0 + $0x38] sm:$0xff]
    %v93 = vld [vmem:[%s3] sm:$0xff]
    %v94 = vld [vmem:[%s3 + $0x8] sm:$0xff]
    %v95 = vld [vmem:[%s3 + $0x10] sm:$0xff]
    %v96 = vld [vmem:[%s3 + $0x18] sm:$0xff]
    %v97 = vld [vmem:[%s3 + $0x20] sm:$0xff]
    %v98 = vld [vmem:[%s3 + $0x28] sm:$0xff]
    %v99 = vld [vmem:[%s3 + $0x30] sm:$0xff]
    %v100 = vld [vmem:[%s3 + $0x38] sm:$0xff]
    %v101 = vld [vmem:[%s3 + $0x40] sm:$0xff]
    %v102 = vld [vmem:[%s3 + $0x48] sm:$0xff]
    %v103 = vld [vmem:[%s3 + $0x50] sm:$0xff]
    %v104 = vld [vmem:[%s3 + $0x58] sm:$0xff]
    %v105 = vld [vmem:[%s3 + $0x60] sm:$0xff]
    %v106 = vld [vmem:[%s3 + $0x68] sm:$0xff]
    %v107 = vld [vmem:[%s3 + $0x70] sm:$0xff]
    %v108 = vld [vmem:[%s3 + $0x78] sm:$0xff]
    %110 = vset.pattern.permute.xlu0 0
    %111 = vperm.xlu0 %110, %v93
    %v112 = vpop.permute.xlu0 %111
    %115 = vset.pattern.permute.xlu0 0
    %116 = vperm.xlu0 %115, %v94
    %v117 = vpop.permute.xlu0 %116
    %120 = vset.pattern.permute.xlu0 0
    %121 = vperm.xlu0 %120, %v95
    %v122 = vpop.permute.xlu0 %121
    %125 = vset.pattern.permute.xlu0 0
    %126 = vperm.xlu0 %125, %v96
    %v127 = vpop.permute.xlu0 %126
    %130 = vset.pattern.permute.xlu0 0
    %131 = vperm.xlu0 %130, %v97
    %v132 = vpop.permute.xlu0 %131
    %135 = vset.pattern.permute.xlu0 0
    %136 = vperm.xlu0 %135, %v98
    %v137 = vpop.permute.xlu0 %136
    %140 = vset.pattern.permute.xlu0 0
    %141 = vperm.xlu0 %140, %v99
    %v142 = vpop.permute.xlu0 %141
    %145 = vset.pattern.permute.xlu0 0
    %146 = vperm.xlu0 %145, %v100
    %v147 = vpop.permute.xlu0 %146
    %150 = vset.pattern.permute.xlu0 0
    %151 = vperm.xlu0 %150, %v101
    %v152 = vpop.permute.xlu0 %151
    %155 = vset.pattern.permute.xlu0 0
    %156 = vperm.xlu0 %155, %v102
    %v157 = vpop.permute.xlu0 %156
    %160 = vset.pattern.permute.xlu0 0
    %161 = vperm.xlu0 %160, %v103
    %v162 = vpop.permute.xlu0 %161
    %165 = vset.pattern.permute.xlu0 0
    %166 = vperm.xlu0 %165, %v104
    %v167 = vpop.permute.xlu0 %166
    %170 = vset.pattern.permute.xlu0 0
    %171 = vperm.xlu0 %170, %v105
    %v172 = vpop.permute.xlu0 %171
    %175 = vset.pattern.permute.xlu0 0
    %176 = vperm.xlu0 %175, %v106
    %v177 = vpop.permute.xlu0 %176
    %180 = vset.pattern.permute.xlu0 0
    %181 = vperm.xlu0 %180, %v107
    %v182 = vpop.permute.xlu0 %181
    %185 = vset.pattern.permute.xlu0 0
    %186 = vperm.xlu0 %185, %v108
    %v187 = vpop.permute.xlu0 %186
    %vm189 = vcmask 64512
    %v191 = vsel %vm189, %v69, 0
    %v194 = vsel %vm189, %v70, 0
    %v197 = vsel %vm189, %v71, 0
    %v200 = vsel %vm189, %v72, 0
    %v203 = vsel %vm189, %v73, 0
    %v206 = vsel %vm189, %v74, 0
    %v209 = vsel %vm189, %v75, 0
    %v212 = vsel %vm189, %v76, 0
    %v215 = vsel %vm189, %v77, 0
    %v218 = vsel %vm189, %v78, 0
    %v221 = vsel %vm189, %v79, 0
    %v224 = vsel %vm189, %v80, 0
    %v227 = vsel %vm189, %v81, 0
    %v230 = vsel %vm189, %v82, 0
    %v233 = vsel %vm189, %v83, 0
    %v236 = vsel %vm189, %v84, 0
    %238 = vmatprep.subr.mxu0 0.0
    %239 = vmatpush1.msra.mxu0 0.0
    %240 = vmatprep.subr.mxu0 0.0
    %241 = vmatpush1.msra.mxu0 0.0
    %242 = vmatprep.subr.mxu0 0.0
    %243 = vmatpush1.msra.mxu0 0.0
    %244 = vmatprep.subr.mxu0 0.0
    %245 = vmatpush1.msra.mxu0 0.0
    %246 = vmatprep.subr.mxu0 0.0
    %247 = vmatpush1.msra.mxu0 0.0
    %248 = vmatprep.subr.mxu0 0.0
    %249 = vmatpush1.msra.mxu0 0.0
    %250 = vmatprep.subr.mxu0 0.0
    %251 = vmatpush1.msra.mxu0 0.0
    %252 = vmatprep.subr.mxu0 0.0
    %253 = vmatpush1.msra.mxu0 0.0
    %254 = vmatprep.subr.mxu0 0.0
    %255 = vmatpush1.msra.mxu0 0.0
    %256 = vmatprep.subr.mxu0 0.0
    %257 = vmatpush1.msra.mxu0 0.0
    %258 = vmatprep.subr.mxu0 0.0
    %259 = vmatpush1.msra.mxu0 0.0
    %260 = vmatprep.subr.mxu0 0.0
    %261 = vmatpush1.msra.mxu0 0.0
    %262 = vmatprep.subr.mxu0 0.0
    %263 = vmatpush1.msra.mxu0 0.0
    %264 = vmatprep.subr.mxu0 0.0
    %265 = vmatpush1.msra.mxu0 0.0
    %266 = vmatprep.subr.mxu0 0.0
    %267 = vmatpush1.msra.mxu0 0.0
    %268 = vmatprep.subr.mxu0 %v86
    %269 = vmatpush1.msra.mxu0 %v85
    %270 = vmatprep.subr.mxu0 0.0
    %271 = vmatpush2.msra.mxu0 0.0
    %272 = vmatprep.subr.mxu0 0.0
    %273 = vmatpush2.msra.mxu0 0.0
    %274 = vmatprep.subr.mxu0 0.0
    %275 = vmatpush2.msra.mxu0 0.0
    %276 = vmatprep.subr.mxu0 0.0
    %277 = vmatpush2.msra.mxu0 0.0
    %278 = vmatprep.subr.mxu0 0.0
    %279 = vmatpush2.msra.mxu0 0.0
    %280 = vmatprep.subr.mxu0 0.0
    %281 = vmatpush2.msra.mxu0 0.0
    %282 = vmatprep.subr.mxu0 0.0
    %283 = vmatpush2.msra.mxu0 0.0
    %284 = vmatprep.subr.mxu0 0.0
    %285 = vmatpush2.msra.mxu0 0.0
    %286 = vmatprep.subr.mxu0 0.0
    %287 = vmatpush2.msra.mxu0 0.0
    %288 = vmatprep.subr.mxu0 0.0
    %289 = vmatpush2.msra.mxu0 0.0
    %290 = vmatprep.subr.mxu0 0.0
    %291 = vmatpush2.msra.mxu0 0.0
    %292 = vmatprep.subr.mxu0 0.0
    %293 = vmatpush2.msra.mxu0 0.0
    %294 = vmatprep.subr.mxu0 0.0
    %295 = vmatpush2.msra.mxu0 0.0
    %296 = vmatprep.subr.mxu0 0.0
    %297 = vmatpush2.msra.mxu0 0.0
    %298 = vmatprep.subr.mxu0 0.0
    %299 = vmatpush2.msra.mxu0 0.0
    %300 = vmatprep.subr.mxu0 0.0
    %301 = vmatpush2.msra.mxu0 0.0
    %302 = vmatprep.mubr.f32.mxu0 0.0
    %303 = vmatmul.mubr.f32.gmra.mxu0 %v191
    %v304 = vpop.f32.mrf.mxu0
    %v305 = vadd.f32 %v112, %v304
    %v306 = vpop.f32.mrf.mxu0
    %v307 = vadd.f32 %v112, %v306
    %308 = vmatprep.mubr.f32.mxu0 0.0
    %309 = vmatmul.mubr.f32.gmra.mxu0 %v194
    %v310 = vpop.f32.mrf.mxu0
    %v311 = vadd.f32 %v117, %v310
    %v312 = vpop.f32.mrf.mxu0
    %v313 = vadd.f32 %v117, %v312
    %314 = vmatprep.mubr.f32.mxu0 0.0
    %315 = vmatmul.mubr.f32.gmra.mxu0 %v197
    %v316 = vpop.f32.mrf.mxu0
    %v317 = vadd.f32 %v122, %v316
    %v318 = vpop.f32.mrf.mxu0
    %v319 = vadd.f32 %v122, %v318
    %320 = vmatprep.mubr.f32.mxu0 0.0
    %321 = vmatmul.mubr.f32.gmra.mxu0 %v200
    %v322 = vpop.f32.mrf.mxu0
    %v323 = vadd.f32 %v127, %v322
    %v324 = vpop.f32.mrf.mxu0
    %v325 = vadd.f32 %v127, %v324
    %326 = vmatprep.mubr.f32.mxu0 0.0
    %327 = vmatmul.mubr.f32.gmra.mxu0 %v203
    %v328 = vpop.f32.mrf.mxu0
    %v329 = vadd.f32 %v132, %v328
    %v330 = vpop.f32.mrf.mxu0
    %v331 = vadd.f32 %v132, %v330
    %332 = vmatprep.mubr.f32.mxu0 0.0
    %333 = vmatmul.mubr.f32.gmra.mxu0 %v206
    %v334 = vpop.f32.mrf.mxu0
    %v335 = vadd.f32 %v137, %v334
    %v336 = vpop.f32.mrf.mxu0
    %v337 = vadd.f32 %v137, %v336
    %338 = vmatprep.mubr.f32.mxu0 0.0
    %339 = vmatmul.mubr.f32.gmra.mxu0 %v209
    %v340 = vpop.f32.mrf.mxu0
    %v341 = vadd.f32 %v142, %v340
    %v342 = vpop.f32.mrf.mxu0
    %v343 = vadd.f32 %v142, %v342
    %344 = vmatprep.mubr.f32.mxu0 0.0
    %345 = vmatmul.mubr.f32.gmra.mxu0 %v212
    %v346 = vpop.f32.mrf.mxu0
    %v347 = vadd.f32 %v147, %v346
    %v348 = vpop.f32.mrf.mxu0
    %v349 = vadd.f32 %v147, %v348
    %350 = vmatprep.mubr.f32.mxu0 0.0
    %351 = vmatmul.mubr.f32.gmra.mxu0 %v215
    %v352 = vpop.f32.mrf.mxu0
    %v353 = vadd.f32 %v152, %v352
    %v354 = vpop.f32.mrf.mxu0
    %v355 = vadd.f32 %v152, %v354
    %356 = vmatprep.mubr.f32.mxu0 0.0
    %357 = vmatmul.mubr.f32.gmra.mxu0 %v218
    %v358 = vpop.f32.mrf.mxu0
    %v359 = vadd.f32 %v157, %v358
    %v360 = vpop.f32.mrf.mxu0
    %v361 = vadd.f32 %v157, %v360
    %362 = vmatprep.mubr.f32.mxu0 0.0
    %363 = vmatmul.mubr.f32.gmra.mxu0 %v221
    %v364 = vpop.f32.mrf.mxu0
    %v365 = vadd.f32 %v162, %v364
    %v366 = vpop.f32.mrf.mxu0
    %v367 = vadd.f32 %v162, %v366
    %368 = vmatprep.mubr.f32.mxu0 0.0
    %369 = vmatmul.mubr.f32.gmra.mxu0 %v224
    %v370 = vpop.f32.mrf.mxu0
    %v371 = vadd.f32 %v167, %v370
    %v372 = vpop.f32.mrf.mxu0
    %v373 = vadd.f32 %v167, %v372
    %374 = vmatprep.mubr.f32.mxu0 0.0
    %375 = vmatmul.mubr.f32.gmra.mxu0 %v227
    %v376 = vpop.f32.mrf.mxu0
    %v377 = vadd.f32 %v172, %v376
    %v378 = vpop.f32.mrf.mxu0
    %v379 = vadd.f32 %v172, %v378
    %380 = vmatprep.mubr.f32.mxu0 0.0
    %381 = vmatmul.mubr.f32.gmra.mxu0 %v230
    %v382 = vpop.f32.mrf.mxu0
    %v383 = vadd.f32 %v177, %v382
    %v384 = vpop.f32.mrf.mxu0
    %v385 = vadd.f32 %v177, %v384
    %386 = vmatprep.mubr.f32.mxu0 0.0
    %387 = vmatmul.mubr.f32.gmra.mxu0 %v233
    %v388 = vpop.f32.mrf.mxu0
    %v389 = vadd.f32 %v182, %v388
    %v390 = vpop.f32.mrf.mxu0
    %v391 = vadd.f32 %v182, %v390
    %392 = vmatprep.mubr.f32.mxu0 0.0
    %393 = vmatmul.mubr.f32.gmra.mxu0 %v236
    %v394 = vpop.f32.mrf.mxu0
    %v395 = vadd.f32 %v187, %v394
    %v396 = vpop.f32.mrf.mxu0
    %v397 = vadd.f32 %v187, %v396
    %398 = vdwg.mxu0
    %399 = vmatprep.subr.mxu0 0.0
    %400 = vmatpush1.msra.mxu0 0.0
    %401 = vmatprep.subr.mxu0 0.0
    %402 = vmatpush1.msra.mxu0 0.0
    %403 = vmatprep.subr.mxu0 0.0
    %404 = vmatpush1.msra.mxu0 0.0
    %405 = vmatprep.subr.mxu0 0.0
    %406 = vmatpush1.msra.mxu0 0.0
    %407 = vmatprep.subr.mxu0 0.0
    %408 = vmatpush1.msra.mxu0 0.0
    %409 = vmatprep.subr.mxu0 0.0
    %410 = vmatpush1.msra.mxu0 0.0
    %411 = vmatprep.subr.mxu0 0.0
    %412 = vmatpush1.msra.mxu0 0.0
    %413 = vmatprep.subr.mxu0 0.0
    %414 = vmatpush1.msra.mxu0 0.0
    %415 = vmatprep.subr.mxu0 0.0
    %416 = vmatpush1.msra.mxu0 0.0
    %417 = vmatprep.subr.mxu0 0.0
    %418 = vmatpush1.msra.mxu0 0.0
    %419 = vmatprep.subr.mxu0 0.0
    %420 = vmatpush1.msra.mxu0 0.0
    %421 = vmatprep.subr.mxu0 0.0
    %422 = vmatpush1.msra.mxu0 0.0
    %423 = vmatprep.subr.mxu0 0.0
    %424 = vmatpush1.msra.mxu0 0.0
    %425 = vmatprep.subr.mxu0 0.0
    %426 = vmatpush1.msra.mxu0 0.0
    %427 = vmatprep.subr.mxu0 0.0
    %428 = vmatpush1.msra.mxu0 0.0
    %429 = vmatprep.subr.mxu0 %v88
    %430 = vmatpush1.msra.mxu0 %v87
    %431 = vmatprep.subr.mxu0 0.0
    %432 = vmatpush2.msra.mxu0 0.0
    %433 = vmatprep.subr.mxu0 0.0
    %434 = vmatpush2.msra.mxu0 0.0
    %435 = vmatprep.subr.mxu0 0.0
    %436 = vmatpush2.msra.mxu0 0.0
    %437 = vmatprep.subr.mxu0 0.0
    %438 = vmatpush2.msra.mxu0 0.0
    %439 = vmatprep.subr.mxu0 0.0
    %440 = vmatpush2.msra.mxu0 0.0
    %441 = vmatprep.subr.mxu0 0.0
    %442 = vmatpush2.msra.mxu0 0.0
    %443 = vmatprep.subr.mxu0 0.0
    %444 = vmatpush2.msra.mxu0 0.0
    %445 = vmatprep.subr.mxu0 0.0
    %446 = vmatpush2.msra.mxu0 0.0
    %447 = vmatprep.subr.mxu0 0.0
    %448 = vmatpush2.msra.mxu0 0.0
    %449 = vmatprep.subr.mxu0 0.0
    %450 = vmatpush2.msra.mxu0 0.0
    %451 = vmatprep.subr.mxu0 0.0
    %452 = vmatpush2.msra.mxu0 0.0
    %453 = vmatprep.subr.mxu0 0.0
    %454 = vmatpush2.msra.mxu0 0.0
    %455 = vmatprep.subr.mxu0 0.0
    %456 = vmatpush2.msra.mxu0 0.0
    %457 = vmatprep.subr.mxu0 0.0
    %458 = vmatpush2.msra.mxu0 0.0
    %459 = vmatprep.subr.mxu0 0.0
    %460 = vmatpush2.msra.mxu0 0.0
    %461 = vmatprep.subr.mxu0 0.0
    %462 = vmatpush2.msra.mxu0 0.0
    %463 = vmatprep.mubr.f32.mxu0 0.0
    %464 = vmatmul.mubr.f32.gmra.mxu0 %v191
    %v465 = vpop.f32.mrf.mxu0
    %v466 = vadd.f32 %v112, %v465
    %v467 = vpop.f32.mrf.mxu0
    %v468 = vadd.f32 %v112, %v467
    %469 = vmatprep.mubr.f32.mxu0 0.0
    %470 = vmatmul.mubr.f32.gmra.mxu0 %v194
    %v471 = vpop.f32.mrf.mxu0
    %v472 = vadd.f32 %v117, %v471
    %v473 = vpop.f32.mrf.mxu0
    %v474 = vadd.f32 %v117, %v473
    %475 = vmatprep.mubr.f32.mxu0 0.0
    %476 = vmatmul.mubr.f32.gmra.mxu0 %v197
    %v477 = vpop.f32.mrf.mxu0
    %v478 = vadd.f32 %v122, %v477
    %v479 = vpop.f32.mrf.mxu0
    %v480 = vadd.f32 %v122, %v479
    %481 = vmatprep.mubr.f32.mxu0 0.0
    %482 = vmatmul.mubr.f32.gmra.mxu0 %v200
    %v483 = vpop.f32.mrf.mxu0
    %v484 = vadd.f32 %v127, %v483
    %v485 = vpop.f32.mrf.mxu0
    %v486 = vadd.f32 %v127, %v485
    %487 = vmatprep.mubr.f32.mxu0 0.0
    %488 = vmatmul.mubr.f32.gmra.mxu0 %v203
    %v489 = vpop.f32.mrf.mxu0
    %v490 = vadd.f32 %v132, %v489
    %v491 = vpop.f32.mrf.mxu0
    %v492 = vadd.f32 %v132, %v491
    %493 = vmatprep.mubr.f32.mxu0 0.0
    %494 = vmatmul.mubr.f32.gmra.mxu0 %v206
    %v495 = vpop.f32.mrf.mxu0
    %v496 = vadd.f32 %v137, %v495
    %v497 = vpop.f32.mrf.mxu0
    %v498 = vadd.f32 %v137, %v497
    %499 = vmatprep.mubr.f32.mxu0 0.0
    %500 = vmatmul.mubr.f32.gmra.mxu0 %v209
    %v501 = vpop.f32.mrf.mxu0
    %v502 = vadd.f32 %v142, %v501
    %v503 = vpop.f32.mrf.mxu0
    %v504 = vadd.f32 %v142, %v503
    %505 = vmatprep.mubr.f32.mxu0 0.0
    %506 = vmatmul.mubr.f32.gmra.mxu0 %v212
    %v507 = vpop.f32.mrf.mxu0
    %v508 = vadd.f32 %v147, %v507
    %v509 = vpop.f32.mrf.mxu0
    %v510 = vadd.f32 %v147, %v509
    %511 = vmatprep.mubr.f32.mxu0 0.0
    %512 = vmatmul.mubr.f32.gmra.mxu0 %v215
    %v513 = vpop.f32.mrf.mxu0
    %v514 = vadd.f32 %v152, %v513
    %v515 = vpop.f32.mrf.mxu0
    %v516 = vadd.f32 %v152, %v515
    %517 = vmatprep.mubr.f32.mxu0 0.0
    %518 = vmatmul.mubr.f32.gmra.mxu0 %v218
    %v519 = vpop.f32.mrf.mxu0
    %v520 = vadd.f32 %v157, %v519
    %v521 = vpop.f32.mrf.mxu0
    %v522 = vadd.f32 %v157, %v521
    %523 = vmatprep.mubr.f32.mxu0 0.0
    %524 = vmatmul.mubr.f32.gmra.mxu0 %v221
    %v525 = vpop.f32.mrf.mxu0
    %v526 = vadd.f32 %v162, %v525
    %v527 = vpop.f32.mrf.mxu0
    %v528 = vadd.f32 %v162, %v527
    %529 = vmatprep.mubr.f32.mxu0 0.0
    %530 = vmatmul.mubr.f32.gmra.mxu0 %v224
    %v531 = vpop.f32.mrf.mxu0
    %v532 = vadd.f32 %v167, %v531
    %v533 = vpop.f32.mrf.mxu0
    %v534 = vadd.f32 %v167, %v533
    %535 = vmatprep.mubr.f32.mxu0 0.0
    %536 = vmatmul.mubr.f32.gmra.mxu0 %v227
    %v537 = vpop.f32.mrf.mxu0
    %v538 = vadd.f32 %v172, %v537
    %v539 = vpop.f32.mrf.mxu0
    %v540 = vadd.f32 %v172, %v539
    %541 = vmatprep.mubr.f32.mxu0 0.0
    %542 = vmatmul.mubr.f32.gmra.mxu0 %v230
    %v543 = vpop.f32.mrf.mxu0
    %v544 = vadd.f32 %v177, %v543
    %v545 = vpop.f32.mrf.mxu0
    %v546 = vadd.f32 %v177, %v545
    %547 = vmatprep.mubr.f32.mxu0 0.0
    %548 = vmatmul.mubr.f32.gmra.mxu0 %v233
    %v549 = vpop.f32.mrf.mxu0
    %v550 = vadd.f32 %v182, %v549
    %v551 = vpop.f32.mrf.mxu0
    %v552 = vadd.f32 %v182, %v551
    %553 = vmatprep.mubr.f32.mxu0 0.0
    %554 = vmatmul.mubr.f32.gmra.mxu0 %v236
    %v555 = vpop.f32.mrf.mxu0
    %v556 = vadd.f32 %v187, %v555
    %v557 = vpop.f32.mrf.mxu0
    %v558 = vadd.f32 %v187, %v557
    %559 = vdwg.mxu0
    %560 = vmatprep.subr.mxu0 0.0
    %561 = vmatpush1.msra.mxu0 0.0
    %562 = vmatprep.subr.mxu0 0.0
    %563 = vmatpush1.msra.mxu0 0.0
    %564 = vmatprep.subr.mxu0 0.0
    %565 = vmatpush1.msra.mxu0 0.0
    %566 = vmatprep.subr.mxu0 0.0
    %567 = vmatpush1.msra.mxu0 0.0
    %568 = vmatprep.subr.mxu0 0.0
    %569 = vmatpush1.msra.mxu0 0.0
    %570 = vmatprep.subr.mxu0 0.0
    %571 = vmatpush1.msra.mxu0 0.0
    %572 = vmatprep.subr.mxu0 0.0
    %573 = vmatpush1.msra.mxu0 0.0
    %574 = vmatprep.subr.mxu0 0.0
    %575 = vmatpush1.msra.mxu0 0.0
    %576 = vmatprep.subr.mxu0 0.0
    %577 = vmatpush1.msra.mxu0 0.0
    %578 = vmatprep.subr.mxu0 0.0
    %579 = vmatpush1.msra.mxu0 0.0
    %580 = vmatprep.subr.mxu0 0.0
    %581 = vmatpush1.msra.mxu0 0.0
    %582 = vmatprep.subr.mxu0 0.0
    %583 = vmatpush1.msra.mxu0 0.0
    %584 = vmatprep.subr.mxu0 0.0
    %585 = vmatpush1.msra.mxu0 0.0
    %586 = vmatprep.subr.mxu0 0.0
    %587 = vmatpush1.msra.mxu0 0.0
    %588 = vmatprep.subr.mxu0 0.0
    %589 = vmatpush1.msra.mxu0 0.0
    %590 = vmatprep.subr.mxu0 %v90
    %591 = vmatpush1.msra.mxu0 %v89
    %592 = vmatprep.subr.mxu0 0.0
    %593 = vmatpush2.msra.mxu0 0.0
    %594 = vmatprep.subr.mxu0 0.0
    %595 = vmatpush2.msra.mxu0 0.0
    %596 = vmatprep.subr.mxu0 0.0
    %597 = vmatpush2.msra.mxu0 0.0
    %598 = vmatprep.subr.mxu0 0.0
    %599 = vmatpush2.msra.mxu0 0.0
    %600 = vmatprep.subr.mxu0 0.0
    %601 = vmatpush2.msra.mxu0 0.0
    %602 = vmatprep.subr.mxu0 0.0
    %603 = vmatpush2.msra.mxu0 0.0
    %604 = vmatprep.subr.mxu0 0.0
    %605 = vmatpush2.msra.mxu0 0.0
    %606 = vmatprep.subr.mxu0 0.0
    %607 = vmatpush2.msra.mxu0 0.0
    %608 = vmatprep.subr.mxu0 0.0
    %609 = vmatpush2.msra.mxu0 0.0
    %610 = vmatprep.subr.mxu0 0.0
    %611 = vmatpush2.msra.mxu0 0.0
    %612 = vmatprep.subr.mxu0 0.0
    %613 = vmatpush2.msra.mxu0 0.0
    %614 = vmatprep.subr.mxu0 0.0
    %615 = vmatpush2.msra.mxu0 0.0
    %616 = vmatprep.subr.mxu0 0.0
    %617 = vmatpush2.msra.mxu0 0.0
    %618 = vmatprep.subr.mxu0 0.0
    %619 = vmatpush2.msra.mxu0 0.0
    %620 = vmatprep.subr.mxu0 0.0
    %621 = vmatpush2.msra.mxu0 0.0
    %622 = vmatprep.subr.mxu0 0.0
    %623 = vmatpush2.msra.mxu0 0.0
    %624 = vmatprep.mubr.f32.mxu0 0.0
    %625 = vmatmul.mubr.f32.gmra.mxu0 %v191
    %v626 = vpop.f32.mrf.mxu0
    %v627 = vadd.f32 %v112, %v626
    %v628 = vpop.f32.mrf.mxu0
    %v629 = vadd.f32 %v112, %v628
    %630 = vmatprep.mubr.f32.mxu0 0.0
    %631 = vmatmul.mubr.f32.gmra.mxu0 %v194
    %v632 = vpop.f32.mrf.mxu0
    %v633 = vadd.f32 %v117, %v632
    %v634 = vpop.f32.mrf.mxu0
    %v635 = vadd.f32 %v117, %v634
    %636 = vmatprep.mubr.f32.mxu0 0.0
    %637 = vmatmul.mubr.f32.gmra.mxu0 %v197
    %v638 = vpop.f32.mrf.mxu0
    %v639 = vadd.f32 %v122, %v638
    %v640 = vpop.f32.mrf.mxu0
    %v641 = vadd.f32 %v122, %v640
    %642 = vmatprep.mubr.f32.mxu0 0.0
    %643 = vmatmul.mubr.f32.gmra.mxu0 %v200
    %v644 = vpop.f32.mrf.mxu0
    %v645 = vadd.f32 %v127, %v644
    %v646 = vpop.f32.mrf.mxu0
    %v647 = vadd.f32 %v127, %v646
    %648 = vmatprep.mubr.f32.mxu0 0.0
    %649 = vmatmul.mubr.f32.gmra.mxu0 %v203
    %v650 = vpop.f32.mrf.mxu0
    %v651 = vadd.f32 %v132, %v650
    %v652 = vpop.f32.mrf.mxu0
    %v653 = vadd.f32 %v132, %v652
    %654 = vmatprep.mubr.f32.mxu0 0.0
    %655 = vmatmul.mubr.f32.gmra.mxu0 %v206
    %v656 = vpop.f32.mrf.mxu0
    %v657 = vadd.f32 %v137, %v656
    %v658 = vpop.f32.mrf.mxu0
    %v659 = vadd.f32 %v137, %v658
    %660 = vmatprep.mubr.f32.mxu0 0.0
    %661 = vmatmul.mubr.f32.gmra.mxu0 %v209
    %v662 = vpop.f32.mrf.mxu0
    %v663 = vadd.f32 %v142, %v662
    %v664 = vpop.f32.mrf.mxu0
    %v665 = vadd.f32 %v142, %v664
    %666 = vmatprep.mubr.f32.mxu0 0.0
    %667 = vmatmul.mubr.f32.gmra.mxu0 %v212
    %v668 = vpop.f32.mrf.mxu0
    %v669 = vadd.f32 %v147, %v668
    %v670 = vpop.f32.mrf.mxu0
    %v671 = vadd.f32 %v147, %v670
    %672 = vmatprep.mubr.f32.mxu0 0.0
    %673 = vmatmul.mubr.f32.gmra.mxu0 %v215
    %v674 = vpop.f32.mrf.mxu0
    %v675 = vadd.f32 %v152, %v674
    %v676 = vpop.f32.mrf.mxu0
    %v677 = vadd.f32 %v152, %v676
    %678 = vmatprep.mubr.f32.mxu0 0.0
    %679 = vmatmul.mubr.f32.gmra.mxu0 %v218
    %v680 = vpop.f32.mrf.mxu0
    %v681 = vadd.f32 %v157, %v680
    %v682 = vpop.f32.mrf.mxu0
    %v683 = vadd.f32 %v157, %v682
    %684 = vmatprep.mubr.f32.mxu0 0.0
    %685 = vmatmul.mubr.f32.gmra.mxu0 %v221
    %v686 = vpop.f32.mrf.mxu0
    %v687 = vadd.f32 %v162, %v686
    %v688 = vpop.f32.mrf.mxu0
    %v689 = vadd.f32 %v162, %v688
    %690 = vmatprep.mubr.f32.mxu0 0.0
    %691 = vmatmul.mubr.f32.gmra.mxu0 %v224
    %v692 = vpop.f32.mrf.mxu0
    %v693 = vadd.f32 %v167, %v692
    %v694 = vpop.f32.mrf.mxu0
    %v695 = vadd.f32 %v167, %v694
    %696 = vmatprep.mubr.f32.mxu0 0.0
    %697 = vmatmul.mubr.f32.gmra.mxu0 %v227
    %v698 = vpop.f32.mrf.mxu0
    %v699 = vadd.f32 %v172, %v698
    %v700 = vpop.f32.mrf.mxu0
    %v701 = vadd.f32 %v172, %v700
    %702 = vmatprep.mubr.f32.mxu0 0.0
    %703 = vmatmul.mubr.f32.gmra.mxu0 %v230
    %v704 = vpop.f32.mrf.mxu0
    %v705 = vadd.f32 %v177, %v704
    %v706 = vpop.f32.mrf.mxu0
    %v707 = vadd.f32 %v177, %v706
    %708 = vmatprep.mubr.f32.mxu0 0.0
    %709 = vmatmul.mubr.f32.gmra.mxu0 %v233
    %v710 = vpop.f32.mrf.mxu0
    %v711 = vadd.f32 %v182, %v710
    %v712 = vpop.f32.mrf.mxu0
    %v713 = vadd.f32 %v182, %v712
    %714 = vmatprep.mubr.f32.mxu0 0.0
    %715 = vmatmul.mubr.f32.gmra.mxu0 %v236
    %v716 = vpop.f32.mrf.mxu0
    %v717 = vadd.f32 %v187, %v716
    %v718 = vpop.f32.mrf.mxu0
    %v719 = vadd.f32 %v187, %v718
    %720 = vdwg.mxu0
    %721 = vmatprep.subr.mxu0 0.0
    %722 = vmatpush1.msra.mxu0 0.0
    %723 = vmatprep.subr.mxu0 0.0
    %724 = vmatpush1.msra.mxu0 0.0
    %725 = vmatprep.subr.mxu0 0.0
    %726 = vmatpush1.msra.mxu0 0.0
    %727 = vmatprep.subr.mxu0 0.0
    %728 = vmatpush1.msra.mxu0 0.0
    %729 = vmatprep.subr.mxu0 0.0
    %730 = vmatpush1.msra.mxu0 0.0
    %731 = vmatprep.subr.mxu0 0.0
    %732 = vmatpush1.msra.mxu0 0.0
    %733 = vmatprep.subr.mxu0 0.0
    %734 = vmatpush1.msra.mxu0 0.0
    %735 = vmatprep.subr.mxu0 0.0
    %736 = vmatpush1.msra.mxu0 0.0
    %737 = vmatprep.subr.mxu0 0.0
    %738 = vmatpush1.msra.mxu0 0.0
    %739 = vmatprep.subr.mxu0 0.0
    %740 = vmatpush1.msra.mxu0 0.0
    %741 = vmatprep.subr.mxu0 0.0
    %742 = vmatpush1.msra.mxu0 0.0
    %743 = vmatprep.subr.mxu0 0.0
    %744 = vmatpush1.msra.mxu0 0.0
    %745 = vmatprep.subr.mxu0 0.0
    %746 = vmatpush1.msra.mxu0 0.0
    %747 = vmatprep.subr.mxu0 0.0
    %748 = vmatpush1.msra.mxu0 0.0
    %749 = vmatprep.subr.mxu0 0.0
    %750 = vmatpush1.msra.mxu0 0.0
    %751 = vmatprep.subr.mxu0 %v92
    %752 = vmatpush1.msra.mxu0 %v91
    %753 = vmatprep.subr.mxu0 0.0
    %754 = vmatpush2.msra.mxu0 0.0
    %755 = vmatprep.subr.mxu0 0.0
    %756 = vmatpush2.msra.mxu0 0.0
    %757 = vmatprep.subr.mxu0 0.0
    %758 = vmatpush2.msra.mxu0 0.0
    %759 = vmatprep.subr.mxu0 0.0
    %760 = vmatpush2.msra.mxu0 0.0
    %761 = vmatprep.subr.mxu0 0.0
    %762 = vmatpush2.msra.mxu0 0.0
    %763 = vmatprep.subr.mxu0 0.0
    %764 = vmatpush2.msra.mxu0 0.0
    %765 = vmatprep.subr.mxu0 0.0
    %766 = vmatpush2.msra.mxu0 0.0
    %767 = vmatprep.subr.mxu0 0.0
    %768 = vmatpush2.msra.mxu0 0.0
    %769 = vmatprep.subr.mxu0 0.0
    %770 = vmatpush2.msra.mxu0 0.0
    %771 = vmatprep.subr.mxu0 0.0
    %772 = vmatpush2.msra.mxu0 0.0
    %773 = vmatprep.subr.mxu0 0.0
    %774 = vmatpush2.msra.mxu0 0.0
    %775 = vmatprep.subr.mxu0 0.0
    %776 = vmatpush2.msra.mxu0 0.0
    %777 = vmatprep.subr.mxu0 0.0
    %778 = vmatpush2.msra.mxu0 0.0
    %779 = vmatprep.subr.mxu0 0.0
    %780 = vmatpush2.msra.mxu0 0.0
    %781 = vmatprep.subr.mxu0 0.0
    %782 = vmatpush2.msra.mxu0 0.0
    %783 = vmatprep.subr.mxu0 0.0
    %784 = vmatpush2.msra.mxu0 0.0
    %785 = vmatprep.mubr.f32.mxu0 0.0
    %786 = vmatmul.mubr.f32.gmra.mxu0 %v191
    %v787 = vpop.f32.mrf.mxu0
    %v788 = vadd.f32 %v112, %v787
    %v789 = vpop.f32.mrf.mxu0
    %v790 = vadd.f32 %v112, %v789
    %791 = vmatprep.mubr.f32.mxu0 0.0
    %792 = vmatmul.mubr.f32.gmra.mxu0 %v194
    %v793 = vpop.f32.mrf.mxu0
    %v794 = vadd.f32 %v117, %v793
    %v795 = vpop.f32.mrf.mxu0
    %v796 = vadd.f32 %v117, %v795
    %797 = vmatprep.mubr.f32.mxu0 0.0
    %798 = vmatmul.mubr.f32.gmra.mxu0 %v197
    %v799 = vpop.f32.mrf.mxu0
    %v800 = vadd.f32 %v122, %v799
    %v801 = vpop.f32.mrf.mxu0
    %v802 = vadd.f32 %v122, %v801
    %803 = vmatprep.mubr.f32.mxu0 0.0
    %804 = vmatmul.mubr.f32.gmra.mxu0 %v200
    %v805 = vpop.f32.mrf.mxu0
    %v806 = vadd.f32 %v127, %v805
    %v807 = vpop.f32.mrf.mxu0
    %v808 = vadd.f32 %v127, %v807
    %809 = vmatprep.mubr.f32.mxu0 0.0
    %810 = vmatmul.mubr.f32.gmra.mxu0 %v203
    %v811 = vpop.f32.mrf.mxu0
    %v812 = vadd.f32 %v132, %v811
    %v813 = vpop.f32.mrf.mxu0
    %v814 = vadd.f32 %v132, %v813
    %815 = vmatprep.mubr.f32.mxu0 0.0
    %816 = vmatmul.mubr.f32.gmra.mxu0 %v206
    %v817 = vpop.f32.mrf.mxu0
    %v818 = vadd.f32 %v137, %v817
    %v819 = vpop.f32.mrf.mxu0
    %v820 = vadd.f32 %v137, %v819
    %821 = vmatprep.mubr.f32.mxu0 0.0
    %822 = vmatmul.mubr.f32.gmra.mxu0 %v209
    %v823 = vpop.f32.mrf.mxu0
    %v824 = vadd.f32 %v142, %v823
    %v825 = vpop.f32.mrf.mxu0
    %v826 = vadd.f32 %v142, %v825
    %827 = vmatprep.mubr.f32.mxu0 0.0
    %828 = vmatmul.mubr.f32.gmra.mxu0 %v212
    %v829 = vpop.f32.mrf.mxu0
    %v830 = vadd.f32 %v147, %v829
    %v831 = vpop.f32.mrf.mxu0
    %v832 = vadd.f32 %v147, %v831
    %833 = vmatprep.mubr.f32.mxu0 0.0
    %834 = vmatmul.mubr.f32.gmra.mxu0 %v215
    %v835 = vpop.f32.mrf.mxu0
    %v836 = vadd.f32 %v152, %v835
    %v837 = vpop.f32.mrf.mxu0
    %v838 = vadd.f32 %v152, %v837
    %839 = vmatprep.mubr.f32.mxu0 0.0
    %840 = vmatmul.mubr.f32.gmra.mxu0 %v218
    %v841 = vpop.f32.mrf.mxu0
    %v842 = vadd.f32 %v157, %v841
    %v843 = vpop.f32.mrf.mxu0
    %v844 = vadd.f32 %v157, %v843
    %845 = vmatprep.mubr.f32.mxu0 0.0
    %846 = vmatmul.mubr.f32.gmra.mxu0 %v221
    %v847 = vpop.f32.mrf.mxu0
    %v848 = vadd.f32 %v162, %v847
    %v849 = vpop.f32.mrf.mxu0
    %v850 = vadd.f32 %v162, %v849
    %851 = vmatprep.mubr.f32.mxu0 0.0
    %852 = vmatmul.mubr.f32.gmra.mxu0 %v224
    %v853 = vpop.f32.mrf.mxu0
    %v854 = vadd.f32 %v167, %v853
    %v855 = vpop.f32.mrf.mxu0
    %v856 = vadd.f32 %v167, %v855
    %857 = vmatprep.mubr.f32.mxu0 0.0
    %858 = vmatmul.mubr.f32.gmra.mxu0 %v227
    %v859 = vpop.f32.mrf.mxu0
    %v860 = vadd.f32 %v172, %v859
    %v861 = vpop.f32.mrf.mxu0
    %v862 = vadd.f32 %v172, %v861
    %863 = vmatprep.mubr.f32.mxu0 0.0
    %864 = vmatmul.mubr.f32.gmra.mxu0 %v230
    %v865 = vpop.f32.mrf.mxu0
    %v866 = vadd.f32 %v177, %v865
    %v867 = vpop.f32.mrf.mxu0
    %v868 = vadd.f32 %v177, %v867
    %869 = vmatprep.mubr.f32.mxu0 0.0
    %870 = vmatmul.mubr.f32.gmra.mxu0 %v233
    %v871 = vpop.f32.mrf.mxu0
    %v872 = vadd.f32 %v182, %v871
    %v873 = vpop.f32.mrf.mxu0
    %v874 = vadd.f32 %v182, %v873
    %875 = vmatprep.mubr.f32.mxu0 0.0
    %876 = vmatmul.mubr.f32.gmra.mxu0 %v236
    %v877 = vpop.f32.mrf.mxu0
    %v878 = vadd.f32 %v187, %v877
    %v879 = vpop.f32.mrf.mxu0
    %v880 = vadd.f32 %v187, %v879
    %881 = vdwg.mxu0
    %v882 = vmax.f32 %v305, 0.0
    %v883 = vmax.f32 %v307, 0.0
    %v884 = vmax.f32 %v466, 0.0
    %v885 = vmax.f32 %v468, 0.0
    %v886 = vmax.f32 %v627, 0.0
    %v887 = vmax.f32 %v629, 0.0
    %v888 = vmax.f32 %v788, 0.0
    %v889 = vmax.f32 %v790, 0.0
    %v890 = vmax.f32 %v311, 0.0
    %v891 = vmax.f32 %v313, 0.0
    %v892 = vmax.f32 %v472, 0.0
    %v893 = vmax.f32 %v474, 0.0
    %v894 = vmax.f32 %v633, 0.0
    %v895 = vmax.f32 %v635, 0.0
    %v896 = vmax.f32 %v794, 0.0
    %v897 = vmax.f32 %v796, 0.0
    %v898 = vmax.f32 %v317, 0.0
    %v899 = vmax.f32 %v319, 0.0
    %v900 = vmax.f32 %v478, 0.0
    %v901 = vmax.f32 %v480, 0.0
    %v902 = vmax.f32 %v639, 0.0
    %v903 = vmax.f32 %v641, 0.0
    %v904 = vmax.f32 %v800, 0.0
    %v905 = vmax.f32 %v802, 0.0
    %v906 = vmax.f32 %v323, 0.0
    %v907 = vmax.f32 %v325, 0.0
    %v908 = vmax.f32 %v484, 0.0
    %v909 = vmax.f32 %v486, 0.0
    %v910 = vmax.f32 %v645, 0.0
    %v911 = vmax.f32 %v647, 0.0
    %v912 = vmax.f32 %v806, 0.0
    %v913 = vmax.f32 %v808, 0.0
    %v914 = vmax.f32 %v329, 0.0
    %v915 = vmax.f32 %v331, 0.0
    %v916 = vmax.f32 %v490, 0.0
    %v917 = vmax.f32 %v492, 0.0
    %v918 = vmax.f32 %v651, 0.0
    %v919 = vmax.f32 %v653, 0.0
    %v920 = vmax.f32 %v812, 0.0
    %v921 = vmax.f32 %v814, 0.0
    %v922 = vmax.f32 %v335, 0.0
    %v923 = vmax.f32 %v337, 0.0
    %v924 = vmax.f32 %v496, 0.0
    %v925 = vmax.f32 %v498, 0.0
    %v926 = vmax.f32 %v657, 0.0
    %v927 = vmax.f32 %v659, 0.0
    %v928 = vmax.f32 %v818, 0.0
    %v929 = vmax.f32 %v820, 0.0
    %v930 = vmax.f32 %v341, 0.0
    %v931 = vmax.f32 %v343, 0.0
    %v932 = vmax.f32 %v502, 0.0
    %v933 = vmax.f32 %v504, 0.0
    %v934 = vmax.f32 %v663, 0.0
    %v935 = vmax.f32 %v665, 0.0
    %v936 = vmax.f32 %v824, 0.0
    %v937 = vmax.f32 %v826, 0.0
    %v938 = vmax.f32 %v347, 0.0
    %v939 = vmax.f32 %v349, 0.0
    %v940 = vmax.f32 %v508, 0.0
    %v941 = vmax.f32 %v510, 0.0
    %v942 = vmax.f32 %v669, 0.0
    %v943 = vmax.f32 %v671, 0.0
    %v944 = vmax.f32 %v830, 0.0
    %v945 = vmax.f32 %v832, 0.0
    %v946 = vmax.f32 %v353, 0.0
    %v947 = vmax.f32 %v355, 0.0
    %v948 = vmax.f32 %v514, 0.0
    %v949 = vmax.f32 %v516, 0.0
    %v950 = vmax.f32 %v675, 0.0
    %v951 = vmax.f32 %v677, 0.0
    %v952 = vmax.f32 %v836, 0.0
    %v953 = vmax.f32 %v838, 0.0
    %v954 = vmax.f32 %v359, 0.0
    %v955 = vmax.f32 %v361, 0.0
    %v956 = vmax.f32 %v520, 0.0
    %v957 = vmax.f32 %v522, 0.0
    %v958 = vmax.f32 %v681, 0.0
    %v959 = vmax.f32 %v683, 0.0
    %v960 = vmax.f32 %v842, 0.0
    %v961 = vmax.f32 %v844, 0.0
    %v962 = vmax.f32 %v365, 0.0
    %v963 = vmax.f32 %v367, 0.0
    %v964 = vmax.f32 %v526, 0.0
    %v965 = vmax.f32 %v528, 0.0
    %v966 = vmax.f32 %v687, 0.0
    %v967 = vmax.f32 %v689, 0.0
    %v968 = vmax.f32 %v848, 0.0
    %v969 = vmax.f32 %v850, 0.0
    %v970 = vmax.f32 %v371, 0.0
    %v971 = vmax.f32 %v373, 0.0
    %v972 = vmax.f32 %v532, 0.0
    %v973 = vmax.f32 %v534, 0.0
    %v974 = vmax.f32 %v693, 0.0
    %v975 = vmax.f32 %v695, 0.0
    %v976 = vmax.f32 %v854, 0.0
    %v977 = vmax.f32 %v856, 0.0
    %v978 = vmax.f32 %v377, 0.0
    %v979 = vmax.f32 %v379, 0.0
    %v980 = vmax.f32 %v538, 0.0
    %v981 = vmax.f32 %v540, 0.0
    %v982 = vmax.f32 %v699, 0.0
    %v983 = vmax.f32 %v701, 0.0
    %v984 = vmax.f32 %v860, 0.0
    %v985 = vmax.f32 %v862, 0.0
    %v986 = vmax.f32 %v383, 0.0
    %v987 = vmax.f32 %v385, 0.0
    %v988 = vmax.f32 %v544, 0.0
    %v989 = vmax.f32 %v546, 0.0
    %v990 = vmax.f32 %v705, 0.0
    %v991 = vmax.f32 %v707, 0.0
    %v992 = vmax.f32 %v866, 0.0
    %v993 = vmax.f32 %v868, 0.0
    %v994 = vmax.f32 %v389, 0.0
    %v995 = vmax.f32 %v391, 0.0
    %v996 = vmax.f32 %v550, 0.0
    %v997 = vmax.f32 %v552, 0.0
    %v998 = vmax.f32 %v711, 0.0
    %v999 = vmax.f32 %v713, 0.0
    %v1000 = vmax.f32 %v872, 0.0
    %v1001 = vmax.f32 %v874, 0.0
    %v1002 = vmax.f32 %v395, 0.0
    %v1003 = vmax.f32 %v397, 0.0
    %v1004 = vmax.f32 %v556, 0.0
    %v1005 = vmax.f32 %v558, 0.0
    %v1006 = vmax.f32 %v717, 0.0
    %v1007 = vmax.f32 %v719, 0.0
    %v1008 = vmax.f32 %v878, 0.0
    %v1009 = vmax.f32 %v880, 0.0
    %v1010 = vld [vmem:[%s4] sm:$0xff]
    %v1011 = vld [vmem:[%s4 + $0x8] sm:$0xff]
    %v1012 = vld [vmem:[%s4 + $0x10] sm:$0xff]
    %v1013 = vld [vmem:[%s4 + $0x18] sm:$0xff]
    %v1014 = vld [vmem:[%s4 + $0x20] sm:$0xff]
    %v1015 = vld [vmem:[%s4 + $0x28] sm:$0xff]
    %v1016 = vld [vmem:[%s4 + $0x30] sm:$0xff]
    %v1017 = vld [vmem:[%s4 + $0x38] sm:$0xff]
    %v1018 = vld [vmem:[%s4 + $0x40] sm:$0xff]
    %v1019 = vld [vmem:[%s4 + $0x48] sm:$0xff]
    %v1020 = vld [vmem:[%s4 + $0x50] sm:$0xff]
    %v1021 = vld [vmem:[%s4 + $0x58] sm:$0xff]
    %v1022 = vld [vmem:[%s4 + $0x60] sm:$0xff]
    %v1023 = vld [vmem:[%s4 + $0x68] sm:$0xff]
    %v1024 = vld [vmem:[%s4 + $0x70] sm:$0xff]
    %v1025 = vld [vmem:[%s4 + $0x78] sm:$0xff]
    %1027 = vset.pattern.permute.xlu0 0
    %1028 = vperm.xlu0 %1027, %v1010
    %v1029 = vpop.permute.xlu0 %1028
    %1032 = vset.pattern.permute.xlu0 0
    %1033 = vperm.xlu0 %1032, %v1011
    %v1034 = vpop.permute.xlu0 %1033
    %1037 = vset.pattern.permute.xlu0 0
    %1038 = vperm.xlu0 %1037, %v1012
    %v1039 = vpop.permute.xlu0 %1038
    %1042 = vset.pattern.permute.xlu0 0
    %1043 = vperm.xlu0 %1042, %v1013
    %v1044 = vpop.permute.xlu0 %1043
    %1047 = vset.pattern.permute.xlu0 0
    %1048 = vperm.xlu0 %1047, %v1014
    %v1049 = vpop.permute.xlu0 %1048
    %1052 = vset.pattern.permute.xlu0 0
    %1053 = vperm.xlu0 %1052, %v1015
    %v1054 = vpop.permute.xlu0 %1053
    %1057 = vset.pattern.permute.xlu0 0
    %1058 = vperm.xlu0 %1057, %v1016
    %v1059 = vpop.permute.xlu0 %1058
    %1062 = vset.pattern.permute.xlu0 0
    %1063 = vperm.xlu0 %1062, %v1017
    %v1064 = vpop.permute.xlu0 %1063
    %1067 = vset.pattern.permute.xlu0 0
    %1068 = vperm.xlu0 %1067, %v1018
    %v1069 = vpop.permute.xlu0 %1068
    %1072 = vset.pattern.permute.xlu0 0
    %1073 = vperm.xlu0 %1072, %v1019
    %v1074 = vpop.permute.xlu0 %1073
    %1077 = vset.pattern.permute.xlu0 0
    %1078 = vperm.xlu0 %1077, %v1020
    %v1079 = vpop.permute.xlu0 %1078
    %1082 = vset.pattern.permute.xlu0 0
    %1083 = vperm.xlu0 %1082, %v1021
    %v1084 = vpop.permute.xlu0 %1083
    %1087 = vset.pattern.permute.xlu0 0
    %1088 = vperm.xlu0 %1087, %v1022
    %v1089 = vpop.permute.xlu0 %1088
    %1092 = vset.pattern.permute.xlu0 0
    %1093 = vperm.xlu0 %1092, %v1023
    %v1094 = vpop.permute.xlu0 %1093
    %1097 = vset.pattern.permute.xlu0 0
    %1098 = vperm.xlu0 %1097, %v1024
    %v1099 = vpop.permute.xlu0 %1098
    %1102 = vset.pattern.permute.xlu0 0
    %1103 = vperm.xlu0 %1102, %v1025
    %v1104 = vpop.permute.xlu0 %1103
    %v1106 = vmul.f32 %v882, %v1029
    %v1107 = vmul.f32 %v883, %v1029
    %v1108 = vmul.f32 %v884, %v1029
    %v1109 = vmul.f32 %v885, %v1029
    %v1110 = vmul.f32 %v886, %v1029
    %v1111 = vmul.f32 %v887, %v1029
    %v1112 = vmul.f32 %v888, %v1029
    %v1113 = vmul.f32 %v889, %v1029
    %v1114 = vmul.f32 %v890, %v1034
    %v1115 = vmul.f32 %v891, %v1034
    %v1116 = vmul.f32 %v892, %v1034
    %v1117 = vmul.f32 %v893, %v1034
    %v1118 = vmul.f32 %v894, %v1034
    %v1119 = vmul.f32 %v895, %v1034
    %v1120 = vmul.f32 %v896, %v1034
    %v1121 = vmul.f32 %v897, %v1034
    %v1122 = vmul.f32 %v898, %v1039
    %v1123 = vmul.f32 %v899, %v1039
    %v1124 = vmul.f32 %v900, %v1039
    %v1125 = vmul.f32 %v901, %v1039
    %v1126 = vmul.f32 %v902, %v1039
    %v1127 = vmul.f32 %v903, %v1039
    %v1128 = vmul.f32 %v904, %v1039
    %v1129 = vmul.f32 %v905, %v1039
    %v1130 = vmul.f32 %v906, %v1044
    %v1131 = vmul.f32 %v907, %v1044
    %v1132 = vmul.f32 %v908, %v1044
    %v1133 = vmul.f32 %v909, %v1044
    %v1134 = vmul.f32 %v910, %v1044
    %v1135 = vmul.f32 %v911, %v1044
    %v1136 = vmul.f32 %v912, %v1044
    %v1137 = vmul.f32 %v913, %v1044
    %v1138 = vmul.f32 %v914, %v1049
    %v1139 = vmul.f32 %v915, %v1049
    %v1140 = vmul.f32 %v916, %v1049
    %v1141 = vmul.f32 %v917, %v1049
    %v1142 = vmul.f32 %v918, %v1049
    %v1143 = vmul.f32 %v919, %v1049
    %v1144 = vmul.f32 %v920, %v1049
    %v1145 = vmul.f32 %v921, %v1049
    %v1146 = vmul.f32 %v922, %v1054
    %v1147 = vmul.f32 %v923, %v1054
    %v1148 = vmul.f32 %v924, %v1054
    %v1149 = vmul.f32 %v925, %v1054
    %v1150 = vmul.f32 %v926, %v1054
    %v1151 = vmul.f32 %v927, %v1054
    %v1152 = vmul.f32 %v928, %v1054
    %v1153 = vmul.f32 %v929, %v1054
    %v1154 = vmul.f32 %v930, %v1059
    %v1155 = vmul.f32 %v931, %v1059
    %v1156 = vmul.f32 %v932, %v1059
    %v1157 = vmul.f32 %v933, %v1059
    %v1158 = vmul.f32 %v934, %v1059
    %v1159 = vmul.f32 %v935, %v1059
    %v1160 = vmul.f32 %v936, %v1059
    %v1161 = vmul.f32 %v937, %v1059
    %v1162 = vmul.f32 %v938, %v1064
    %v1163 = vmul.f32 %v939, %v1064
    %v1164 = vmul.f32 %v940, %v1064
    %v1165 = vmul.f32 %v941, %v1064
    %v1166 = vmul.f32 %v942, %v1064
    %v1167 = vmul.f32 %v943, %v1064
    %v1168 = vmul.f32 %v944, %v1064
    %v1169 = vmul.f32 %v945, %v1064
    %v1170 = vmul.f32 %v946, %v1069
    %v1171 = vmul.f32 %v947, %v1069
    %v1172 = vmul.f32 %v948, %v1069
    %v1173 = vmul.f32 %v949, %v1069
    %v1174 = vmul.f32 %v950, %v1069
    %v1175 = vmul.f32 %v951, %v1069
    %v1176 = vmul.f32 %v952, %v1069
    %v1177 = vmul.f32 %v953, %v1069
    %v1178 = vmul.f32 %v954, %v1074
    %v1179 = vmul.f32 %v955, %v1074
    %v1180 = vmul.f32 %v956, %v1074
    %v1181 = vmul.f32 %v957, %v1074
    %v1182 = vmul.f32 %v958, %v1074
    %v1183 = vmul.f32 %v959, %v1074
    %v1184 = vmul.f32 %v960, %v1074
    %v1185 = vmul.f32 %v961, %v1074
    %v1186 = vmul.f32 %v962, %v1079
    %v1187 = vmul.f32 %v963, %v1079
    %v1188 = vmul.f32 %v964, %v1079
    %v1189 = vmul.f32 %v965, %v1079
    %v1190 = vmul.f32 %v966, %v1079
    %v1191 = vmul.f32 %v967, %v1079
    %v1192 = vmul.f32 %v968, %v1079
    %v1193 = vmul.f32 %v969, %v1079
    %v1194 = vmul.f32 %v970, %v1084
    %v1195 = vmul.f32 %v971, %v1084
    %v1196 = vmul.f32 %v972, %v1084
    %v1197 = vmul.f32 %v973, %v1084
    %v1198 = vmul.f32 %v974, %v1084
    %v1199 = vmul.f32 %v975, %v1084
    %v1200 = vmul.f32 %v976, %v1084
    %v1201 = vmul.f32 %v977, %v1084
    %v1202 = vmul.f32 %v978, %v1089
    %v1203 = vmul.f32 %v979, %v1089
    %v1204 = vmul.f32 %v980, %v1089
    %v1205 = vmul.f32 %v981, %v1089
    %v1206 = vmul.f32 %v982, %v1089
    %v1207 = vmul.f32 %v983, %v1089
    %v1208 = vmul.f32 %v984, %v1089
    %v1209 = vmul.f32 %v985, %v1089
    %v1210 = vmul.f32 %v986, %v1094
    %v1211 = vmul.f32 %v987, %v1094
    %v1212 = vmul.f32 %v988, %v1094
    %v1213 = vmul.f32 %v989, %v1094
    %v1214 = vmul.f32 %v990, %v1094
    %v1215 = vmul.f32 %v991, %v1094
    %v1216 = vmul.f32 %v992, %v1094
    %v1217 = vmul.f32 %v993, %v1094
    %v1218 = vmul.f32 %v994, %v1099
    %v1219 = vmul.f32 %v995, %v1099
    %v1220 = vmul.f32 %v996, %v1099
    %v1221 = vmul.f32 %v997, %v1099
    %v1222 = vmul.f32 %v998, %v1099
    %v1223 = vmul.f32 %v999, %v1099
    %v1224 = vmul.f32 %v1000, %v1099
    %v1225 = vmul.f32 %v1001, %v1099
    %v1226 = vmul.f32 %v1002, %v1104
    %v1227 = vmul.f32 %v1003, %v1104
    %v1228 = vmul.f32 %v1004, %v1104
    %v1229 = vmul.f32 %v1005, %v1104
    %v1230 = vmul.f32 %v1006, %v1104
    %v1231 = vmul.f32 %v1007, %v1104
    %v1232 = vmul.f32 %v1008, %v1104
    %v1233 = vmul.f32 %v1009, %v1104
    %v1234 = vld [vmem:[%s5] sm:$0xff]
    %v1235 = vld [vmem:[%s5 + $0x8] sm:$0xff]
    %v1236 = vld [vmem:[%s5 + $0x10] sm:$0xff]
    %v1237 = vld [vmem:[%s5 + $0x18] sm:$0xff]
    %v1238 = vld [vmem:[%s5 + $0x20] sm:$0xff]
    %v1239 = vld [vmem:[%s5 + $0x28] sm:$0xff]
    %v1240 = vld [vmem:[%s5 + $0x30] sm:$0xff]
    %v1241 = vld [vmem:[%s5 + $0x38] sm:$0xff]
    %v1242 = vld [vmem:[%s5 + $0x40] sm:$0xff]
    %v1243 = vld [vmem:[%s5 + $0x48] sm:$0xff]
    %v1244 = vld [vmem:[%s5 + $0x50] sm:$0xff]
    %v1245 = vld [vmem:[%s5 + $0x58] sm:$0xff]
    %v1246 = vld [vmem:[%s5 + $0x60] sm:$0xff]
    %v1247 = vld [vmem:[%s5 + $0x68] sm:$0xff]
    %v1248 = vld [vmem:[%s5 + $0x70] sm:$0xff]
    %v1249 = vld [vmem:[%s5 + $0x78] sm:$0xff]
    %1251 = vset.pattern.permute.xlu0 0
    %1252 = vperm.xlu0 %1251, %v1234
    %v1253 = vpop.permute.xlu0 %1252
    %1256 = vset.pattern.permute.xlu0 0
    %1257 = vperm.xlu0 %1256, %v1235
    %v1258 = vpop.permute.xlu0 %1257
    %1261 = vset.pattern.permute.xlu0 0
    %1262 = vperm.xlu0 %1261, %v1236
    %v1263 = vpop.permute.xlu0 %1262
    %1266 = vset.pattern.permute.xlu0 0
    %1267 = vperm.xlu0 %1266, %v1237
    %v1268 = vpop.permute.xlu0 %1267
    %1271 = vset.pattern.permute.xlu0 0
    %1272 = vperm.xlu0 %1271, %v1238
    %v1273 = vpop.permute.xlu0 %1272
    %1276 = vset.pattern.permute.xlu0 0
    %1277 = vperm.xlu0 %1276, %v1239
    %v1278 = vpop.permute.xlu0 %1277
    %1281 = vset.pattern.permute.xlu0 0
    %1282 = vperm.xlu0 %1281, %v1240
    %v1283 = vpop.permute.xlu0 %1282
    %1286 = vset.pattern.permute.xlu0 0
    %1287 = vperm.xlu0 %1286, %v1241
    %v1288 = vpop.permute.xlu0 %1287
    %1291 = vset.pattern.permute.xlu0 0
    %1292 = vperm.xlu0 %1291, %v1242
    %v1293 = vpop.permute.xlu0 %1292
    %1296 = vset.pattern.permute.xlu0 0
    %1297 = vperm.xlu0 %1296, %v1243
    %v1298 = vpop.permute.xlu0 %1297
    %1301 = vset.pattern.permute.xlu0 0
    %1302 = vperm.xlu0 %1301, %v1244
    %v1303 = vpop.permute.xlu0 %1302
    %1306 = vset.pattern.permute.xlu0 0
    %1307 = vperm.xlu0 %1306, %v1245
    %v1308 = vpop.permute.xlu0 %1307
    %1311 = vset.pattern.permute.xlu0 0
    %1312 = vperm.xlu0 %1311, %v1246
    %v1313 = vpop.permute.xlu0 %1312
    %1316 = vset.pattern.permute.xlu0 0
    %1317 = vperm.xlu0 %1316, %v1247
    %v1318 = vpop.permute.xlu0 %1317
    %1321 = vset.pattern.permute.xlu0 0
    %1322 = vperm.xlu0 %1321, %v1248
    %v1323 = vpop.permute.xlu0 %1322
    %1326 = vset.pattern.permute.xlu0 0
    %1327 = vperm.xlu0 %1326, %v1249
    %v1328 = vpop.permute.xlu0 %1327
    %v1330 = vadd.f32 %v1106, %v1253
    %v1331 = vadd.f32 %v1107, %v1253
    %v1332 = vadd.f32 %v1108, %v1253
    %v1333 = vadd.f32 %v1109, %v1253
    %v1334 = vadd.f32 %v1110, %v1253
    %v1335 = vadd.f32 %v1111, %v1253
    %v1336 = vadd.f32 %v1112, %v1253
    %v1337 = vadd.f32 %v1113, %v1253
    %v1338 = vadd.f32 %v1114, %v1258
    %v1339 = vadd.f32 %v1115, %v1258
    %v1340 = vadd.f32 %v1116, %v1258
    %v1341 = vadd.f32 %v1117, %v1258
    %v1342 = vadd.f32 %v1118, %v1258
    %v1343 = vadd.f32 %v1119, %v1258
    %v1344 = vadd.f32 %v1120, %v1258
    %v1345 = vadd.f32 %v1121, %v1258
    %v1346 = vadd.f32 %v1122, %v1263
    %v1347 = vadd.f32 %v1123, %v1263
    %v1348 = vadd.f32 %v1124, %v1263
    %v1349 = vadd.f32 %v1125, %v1263
    %v1350 = vadd.f32 %v1126, %v1263
    %v1351 = vadd.f32 %v1127, %v1263
    %v1352 = vadd.f32 %v1128, %v1263
    %v1353 = vadd.f32 %v1129, %v1263
    %v1354 = vadd.f32 %v1130, %v1268
    %v1355 = vadd.f32 %v1131, %v1268
    %v1356 = vadd.f32 %v1132, %v1268
    %v1357 = vadd.f32 %v1133, %v1268
    %v1358 = vadd.f32 %v1134, %v1268
    %v1359 = vadd.f32 %v1135, %v1268
    %v1360 = vadd.f32 %v1136, %v1268
    %v1361 = vadd.f32 %v1137, %v1268
    %v1362 = vadd.f32 %v1138, %v1273
    %v1363 = vadd.f32 %v1139, %v1273
    %v1364 = vadd.f32 %v1140, %v1273
    %v1365 = vadd.f32 %v1141, %v1273
    %v1366 = vadd.f32 %v1142, %v1273
    %v1367 = vadd.f32 %v1143, %v1273
    %v1368 = vadd.f32 %v1144, %v1273
    %v1369 = vadd.f32 %v1145, %v1273
    %v1370 = vadd.f32 %v1146, %v1278
    %v1371 = vadd.f32 %v1147, %v1278
    %v1372 = vadd.f32 %v1148, %v1278
    %v1373 = vadd.f32 %v1149, %v1278
    %v1374 = vadd.f32 %v1150, %v1278
    %v1375 = vadd.f32 %v1151, %v1278
    %v1376 = vadd.f32 %v1152, %v1278
    %v1377 = vadd.f32 %v1153, %v1278
    %v1378 = vadd.f32 %v1154, %v1283
    %v1379 = vadd.f32 %v1155, %v1283
    %v1380 = vadd.f32 %v1156, %v1283
    %v1381 = vadd.f32 %v1157, %v1283
    %v1382 = vadd.f32 %v1158, %v1283
    %v1383 = vadd.f32 %v1159, %v1283
    %v1384 = vadd.f32 %v1160, %v1283
    %v1385 = vadd.f32 %v1161, %v1283
    %v1386 = vadd.f32 %v1162, %v1288
    %v1387 = vadd.f32 %v1163, %v1288
    %v1388 = vadd.f32 %v1164, %v1288
    %v1389 = vadd.f32 %v1165, %v1288
    %v1390 = vadd.f32 %v1166, %v1288
    %v1391 = vadd.f32 %v1167, %v1288
    %v1392 = vadd.f32 %v1168, %v1288
    %v1393 = vadd.f32 %v1169, %v1288
    %v1394 = vadd.f32 %v1170, %v1293
    %v1395 = vadd.f32 %v1171, %v1293
    %v1396 = vadd.f32 %v1172, %v1293
    %v1397 = vadd.f32 %v1173, %v1293
    %v1398 = vadd.f32 %v1174, %v1293
    %v1399 = vadd.f32 %v1175, %v1293
    %v1400 = vadd.f32 %v1176, %v1293
    %v1401 = vadd.f32 %v1177, %v1293
    %v1402 = vadd.f32 %v1178, %v1298
    %v1403 = vadd.f32 %v1179, %v1298
    %v1404 = vadd.f32 %v1180, %v1298
    %v1405 = vadd.f32 %v1181, %v1298
    %v1406 = vadd.f32 %v1182, %v1298
    %v1407 = vadd.f32 %v1183, %v1298
    %v1408 = vadd.f32 %v1184, %v1298
    %v1409 = vadd.f32 %v1185, %v1298
    %v1410 = vadd.f32 %v1186, %v1303
    %v1411 = vadd.f32 %v1187, %v1303
    %v1412 = vadd.f32 %v1188, %v1303
    %v1413 = vadd.f32 %v1189, %v1303
    %v1414 = vadd.f32 %v1190, %v1303
    %v1415 = vadd.f32 %v1191, %v1303
    %v1416 = vadd.f32 %v1192, %v1303
    %v1417 = vadd.f32 %v1193, %v1303
    %v1418 = vadd.f32 %v1194, %v1308
    %v1419 = vadd.f32 %v1195, %v1308
    %v1420 = vadd.f32 %v1196, %v1308
    %v1421 = vadd.f32 %v1197, %v1308
    %v1422 = vadd.f32 %v1198, %v1308
    %v1423 = vadd.f32 %v1199, %v1308
    %v1424 = vadd.f32 %v1200, %v1308
    %v1425 = vadd.f32 %v1201, %v1308
    %v1426 = vadd.f32 %v1202, %v1313
    %v1427 = vadd.f32 %v1203, %v1313
    %v1428 = vadd.f32 %v1204, %v1313
    %v1429 = vadd.f32 %v1205, %v1313
    %v1430 = vadd.f32 %v1206, %v1313
    %v1431 = vadd.f32 %v1207, %v1313
    %v1432 = vadd.f32 %v1208, %v1313
    %v1433 = vadd.f32 %v1209, %v1313
    %v1434 = vadd.f32 %v1210, %v1318
    %v1435 = vadd.f32 %v1211, %v1318
    %v1436 = vadd.f32 %v1212, %v1318
    %v1437 = vadd.f32 %v1213, %v1318
    %v1438 = vadd.f32 %v1214, %v1318
    %v1439 = vadd.f32 %v1215, %v1318
    %v1440 = vadd.f32 %v1216, %v1318
    %v1441 = vadd.f32 %v1217, %v1318
    %v1442 = vadd.f32 %v1218, %v1323
    %v1443 = vadd.f32 %v1219, %v1323
    %v1444 = vadd.f32 %v1220, %v1323
    %v1445 = vadd.f32 %v1221, %v1323
    %v1446 = vadd.f32 %v1222, %v1323
    %v1447 = vadd.f32 %v1223, %v1323
    %v1448 = vadd.f32 %v1224, %v1323
    %v1449 = vadd.f32 %v1225, %v1323
    %v1450 = vadd.f32 %v1226, %v1328
    %v1451 = vadd.f32 %v1227, %v1328
    %v1452 = vadd.f32 %v1228, %v1328
    %v1453 = vadd.f32 %v1229, %v1328
    %v1454 = vadd.f32 %v1230, %v1328
    %v1455 = vadd.f32 %v1231, %v1328
    %v1456 = vadd.f32 %v1232, %v1328
    %v1457 = vadd.f32 %v1233, %v1328
    %v1458 = vsel %vm68, 1, 0
    %v1459 = vlaneseq
    %v1460 = vshrl.u32 %v1459, 7
    %v1461 = vsub.s32 0, %v1460
    %v1462 = vrot.slane %v1458, %v1461
    %v1463 = vlaneseq
    %v1464 = vshrl.u32 %v1463, 7
    %v1465 = vsub.s32 1, %v1464
    %v1466 = vrot.slane %v1458, %v1465
    %v1467 = vlaneseq
    %v1468 = vshrl.u32 %v1467, 7
    %v1469 = vsub.s32 2, %v1468
    %v1470 = vrot.slane %v1458, %v1469
    %v1471 = vlaneseq
    %v1472 = vshrl.u32 %v1471, 7
    %v1473 = vsub.s32 3, %v1472
    %v1474 = vrot.slane %v1458, %v1473
    %v1475 = vlaneseq
    %v1476 = vshrl.u32 %v1475, 7
    %v1477 = vsub.s32 4, %v1476
    %v1478 = vrot.slane %v1458, %v1477
    %v1479 = vlaneseq
    %v1480 = vshrl.u32 %v1479, 7
    %v1481 = vsub.s32 5, %v1480
    %v1482 = vrot.slane %v1458, %v1481
    %v1483 = vlaneseq
    %v1484 = vshrl.u32 %v1483, 7
    %v1485 = vsub.s32 6, %v1484
    %v1486 = vrot.slane %v1458, %v1485
    %v1487 = vlaneseq
    %v1488 = vshrl.u32 %v1487, 7
    %v1489 = vsub.s32 7, %v1488
    %v1490 = vrot.slane %v1458, %v1489
    %vm1491 = vcmp.eq.s32.totalorder %v1462, 1
    %vm1492 = vcmp.eq.s32.totalorder %v1466, 1
    %vm1493 = vcmp.eq.s32.totalorder %v1470, 1
    %vm1494 = vcmp.eq.s32.totalorder %v1474, 1
    %vm1495 = vcmp.eq.s32.totalorder %v1478, 1
    %vm1496 = vcmp.eq.s32.totalorder %v1482, 1
    %vm1497 = vcmp.eq.s32.totalorder %v1486, 1
    %vm1498 = vcmp.eq.s32.totalorder %v1490, 1
    %v1499 = vsel %vm1491, %v1330, 0.0
    %v1500 = vsel %vm1492, %v1331, 0.0
    %v1501 = vsel %vm1493, %v1332, 0.0
    %v1502 = vsel %vm1494, %v1333, 0.0
    %v1503 = vsel %vm1495, %v1334, 0.0
    %v1504 = vsel %vm1496, %v1335, 0.0
    %v1505 = vsel %vm1497, %v1336, 0.0
    %v1506 = vsel %vm1498, %v1337, 0.0
    %v1507 = vsel %vm1491, %v1338, 0.0
    %v1508 = vsel %vm1492, %v1339, 0.0
    %v1509 = vsel %vm1493, %v1340, 0.0
    %v1510 = vsel %vm1494, %v1341, 0.0
    %v1511 = vsel %vm1495, %v1342, 0.0
    %v1512 = vsel %vm1496, %v1343, 0.0
    %v1513 = vsel %vm1497, %v1344, 0.0
    %v1514 = vsel %vm1498, %v1345, 0.0
    %v1515 = vsel %vm1491, %v1346, 0.0
    %v1516 = vsel %vm1492, %v1347, 0.0
    %v1517 = vsel %vm1493, %v1348, 0.0
    %v1518 = vsel %vm1494, %v1349, 0.0
    %v1519 = vsel %vm1495, %v1350, 0.0
    %v1520 = vsel %vm1496, %v1351, 0.0
    %v1521 = vsel %vm1497, %v1352, 0.0
    %v1522 = vsel %vm1498, %v1353, 0.0
    %v1523 = vsel %vm1491, %v1354, 0.0
    %v1524 = vsel %vm1492, %v1355, 0.0
    %v1525 = vsel %vm1493, %v1356, 0.0
    %v1526 = vsel %vm1494, %v1357, 0.0
    %v1527 = vsel %vm1495, %v1358, 0.0
    %v1528 = vsel %vm1496, %v1359, 0.0
    %v1529 = vsel %vm1497, %v1360, 0.0
    %v1530 = vsel %vm1498, %v1361, 0.0
    %v1531 = vsel %vm1491, %v1362, 0.0
    %v1532 = vsel %vm1492, %v1363, 0.0
    %v1533 = vsel %vm1493, %v1364, 0.0
    %v1534 = vsel %vm1494, %v1365, 0.0
    %v1535 = vsel %vm1495, %v1366, 0.0
    %v1536 = vsel %vm1496, %v1367, 0.0
    %v1537 = vsel %vm1497, %v1368, 0.0
    %v1538 = vsel %vm1498, %v1369, 0.0
    %v1539 = vsel %vm1491, %v1370, 0.0
    %v1540 = vsel %vm1492, %v1371, 0.0
    %v1541 = vsel %vm1493, %v1372, 0.0
    %v1542 = vsel %vm1494, %v1373, 0.0
    %v1543 = vsel %vm1495, %v1374, 0.0
    %v1544 = vsel %vm1496, %v1375, 0.0
    %v1545 = vsel %vm1497, %v1376, 0.0
    %v1546 = vsel %vm1498, %v1377, 0.0
    %v1547 = vsel %vm1491, %v1378, 0.0
    %v1548 = vsel %vm1492, %v1379, 0.0
    %v1549 = vsel %vm1493, %v1380, 0.0
    %v1550 = vsel %vm1494, %v1381, 0.0
    %v1551 = vsel %vm1495, %v1382, 0.0
    %v1552 = vsel %vm1496, %v1383, 0.0
    %v1553 = vsel %vm1497, %v1384, 0.0
    %v1554 = vsel %vm1498, %v1385, 0.0
    %v1555 = vsel %vm1491, %v1386, 0.0
    %v1556 = vsel %vm1492, %v1387, 0.0
    %v1557 = vsel %vm1493, %v1388, 0.0
    %v1558 = vsel %vm1494, %v1389, 0.0
    %v1559 = vsel %vm1495, %v1390, 0.0
    %v1560 = vsel %vm1496, %v1391, 0.0
    %v1561 = vsel %vm1497, %v1392, 0.0
    %v1562 = vsel %vm1498, %v1393, 0.0
    %v1563 = vsel %vm1491, %v1394, 0.0
    %v1564 = vsel %vm1492, %v1395, 0.0
    %v1565 = vsel %vm1493, %v1396, 0.0
    %v1566 = vsel %vm1494, %v1397, 0.0
    %v1567 = vsel %vm1495, %v1398, 0.0
    %v1568 = vsel %vm1496, %v1399, 0.0
    %v1569 = vsel %vm1497, %v1400, 0.0
    %v1570 = vsel %vm1498, %v1401, 0.0
    %v1571 = vsel %vm1491, %v1402, 0.0
    %v1572 = vsel %vm1492, %v1403, 0.0
    %v1573 = vsel %vm1493, %v1404, 0.0
    %v1574 = vsel %vm1494, %v1405, 0.0
    %v1575 = vsel %vm1495, %v1406, 0.0
    %v1576 = vsel %vm1496, %v1407, 0.0
    %v1577 = vsel %vm1497, %v1408, 0.0
    %v1578 = vsel %vm1498, %v1409, 0.0
    %v1579 = vsel %vm1491, %v1410, 0.0
    %v1580 = vsel %vm1492, %v1411, 0.0
    %v1581 = vsel %vm1493, %v1412, 0.0
    %v1582 = vsel %vm1494, %v1413, 0.0
    %v1583 = vsel %vm1495, %v1414, 0.0
    %v1584 = vsel %vm1496, %v1415, 0.0
    %v1585 = vsel %vm1497, %v1416, 0.0
    %v1586 = vsel %vm1498, %v1417, 0.0
    %v1587 = vsel %vm1491, %v1418, 0.0
    %v1588 = vsel %vm1492, %v1419, 0.0
    %v1589 = vsel %vm1493, %v1420, 0.0
    %v1590 = vsel %vm1494, %v1421, 0.0
    %v1591 = vsel %vm1495, %v1422, 0.0
    %v1592 = vsel %vm1496, %v1423, 0.0
    %v1593 = vsel %vm1497, %v1424, 0.0
    %v1594 = vsel %vm1498, %v1425, 0.0
    %v1595 = vsel %vm1491, %v1426, 0.0
    %v1596 = vsel %vm1492, %v1427, 0.0
    %v1597 = vsel %vm1493, %v1428, 0.0
    %v1598 = vsel %vm1494, %v1429, 0.0
    %v1599 = vsel %vm1495, %v1430, 0.0
    %v1600 = vsel %vm1496, %v1431, 0.0
    %v1601 = vsel %vm1497, %v1432, 0.0
    %v1602 = vsel %vm1498, %v1433, 0.0
    %v1603 = vsel %vm1491, %v1434, 0.0
    %v1604 = vsel %vm1492, %v1435, 0.0
    %v1605 = vsel %vm1493, %v1436, 0.0
    %v1606 = vsel %vm1494, %v1437, 0.0
    %v1607 = vsel %vm1495, %v1438, 0.0
    %v1608 = vsel %vm1496, %v1439, 0.0
    %v1609 = vsel %vm1497, %v1440, 0.0
    %v1610 = vsel %vm1498, %v1441, 0.0
    %v1611 = vsel %vm1491, %v1442, 0.0
    %v1612 = vsel %vm1492, %v1443, 0.0
    %v1613 = vsel %vm1493, %v1444, 0.0
    %v1614 = vsel %vm1494, %v1445, 0.0
    %v1615 = vsel %vm1495, %v1446, 0.0
    %v1616 = vsel %vm1496, %v1447, 0.0
    %v1617 = vsel %vm1497, %v1448, 0.0
    %v1618 = vsel %vm1498, %v1449, 0.0
    %v1619 = vsel %vm1491, %v1450, 0.0
    %v1620 = vsel %vm1492, %v1451, 0.0
    %v1621 = vsel %vm1493, %v1452, 0.0
    %v1622 = vsel %vm1494, %v1453, 0.0
    %v1623 = vsel %vm1495, %v1454, 0.0
    %v1624 = vsel %vm1496, %v1455, 0.0
    %v1625 = vsel %vm1497, %v1456, 0.0
    %v1626 = vsel %vm1498, %v1457, 0.0
    %v1627 = vpack.c.bf16 %v1507, %v1499
    %v1628 = vpack.c.bf16 %v1508, %v1500
    %v1629 = vpack.c.bf16 %v1509, %v1501
    %v1630 = vpack.c.bf16 %v1510, %v1502
    %v1631 = vpack.c.bf16 %v1511, %v1503
    %v1632 = vpack.c.bf16 %v1512, %v1504
    %v1633 = vpack.c.bf16 %v1513, %v1505
    %v1634 = vpack.c.bf16 %v1514, %v1506
    %v1635 = vpack.c.bf16 %v1523, %v1515
    %v1636 = vpack.c.bf16 %v1524, %v1516
    %v1637 = vpack.c.bf16 %v1525, %v1517
    %v1638 = vpack.c.bf16 %v1526, %v1518
    %v1639 = vpack.c.bf16 %v1527, %v1519
    %v1640 = vpack.c.bf16 %v1528, %v1520
    %v1641 = vpack.c.bf16 %v1529, %v1521
    %v1642 = vpack.c.bf16 %v1530, %v1522
    %v1659 = vunpack.c.l.b16 %v1627
    %v1660 = vunpack.c.l.b16 %v1628
    %v1661 = vunpack.c.l.b16 %v1629
    %v1662 = vunpack.c.l.b16 %v1630
    %v1663 = vunpack.c.l.b16 %v1631
    %v1664 = vunpack.c.l.b16 %v1632
    %v1665 = vunpack.c.l.b16 %v1633
    %v1666 = vunpack.c.l.b16 %v1634
    %v1667 = vunpack.c.h.b16 %v1627
    %v1668 = vunpack.c.h.b16 %v1628
    %v1669 = vunpack.c.h.b16 %v1629
    %v1670 = vunpack.c.h.b16 %v1630
    %v1671 = vunpack.c.h.b16 %v1631
    %v1672 = vunpack.c.h.b16 %v1632
    %v1673 = vunpack.c.h.b16 %v1633
    %v1674 = vunpack.c.h.b16 %v1634
    %v1675 = vunpack.c.l.b16 %v1635
    %v1676 = vunpack.c.l.b16 %v1636
    %v1677 = vunpack.c.l.b16 %v1637
    %v1678 = vunpack.c.l.b16 %v1638
    %v1679 = vunpack.c.l.b16 %v1639
    %v1680 = vunpack.c.l.b16 %v1640
    %v1681 = vunpack.c.l.b16 %v1641
    %v1682 = vunpack.c.l.b16 %v1642
    %v1683 = vunpack.c.h.b16 %v1635
    %v1684 = vunpack.c.h.b16 %v1636
    %v1685 = vunpack.c.h.b16 %v1637
    %v1686 = vunpack.c.h.b16 %v1638
    %v1687 = vunpack.c.h.b16 %v1639
    %v1688 = vunpack.c.h.b16 %v1640
    %v1689 = vunpack.c.h.b16 %v1641
    %v1690 = vunpack.c.h.b16 %v1642
    %v1691 = vpack.c.b16 %v1660, %v1659
    %v1692 = vpack.c.b16 %v1662, %v1661
    %v1693 = vpack.c.b16 %v1664, %v1663
    %v1694 = vpack.c.b16 %v1666, %v1665
    %v1695 = vpack.c.b16 %v1668, %v1667
    %v1696 = vpack.c.b16 %v1670, %v1669
    %v1697 = vpack.c.b16 %v1672, %v1671
    %v1698 = vpack.c.b16 %v1674, %v1673
    %v1699 = vpack.c.b16 %v1676, %v1675
    %v1700 = vpack.c.b16 %v1678, %v1677
    %v1701 = vpack.c.b16 %v1680, %v1679
    %v1702 = vpack.c.b16 %v1682, %v1681
    %v1703 = vpack.c.b16 %v1684, %v1683
    %v1704 = vpack.c.b16 %v1686, %v1685
    %v1705 = vpack.c.b16 %v1688, %v1687
    %v1706 = vpack.c.b16 %v1690, %v1689
    %1723 = vst [vmem:[#allocation2 + $0x4] sm:$0xff] %v1691
    %1724 = vst [vmem:[#allocation2 + $0xc] sm:$0xff] %v1692
    %1725 = vst [vmem:[#allocation2 + $0x14] sm:$0xff] %v1693
    %1726 = vst [vmem:[#allocation2 + $0x1c] sm:$0xff] %v1694
    %1727 = vst [vmem:[#allocation2 + $0x2c] sm:$0xff] %v1695
    %1728 = vst [vmem:[#allocation2 + $0x34] sm:$0xff] %v1696
    %1729 = vst [vmem:[#allocation2 + $0x3c] sm:$0xff] %v1697
    %1730 = vst [vmem:[#allocation2 + $0x44] sm:$0xff] %v1698
    %1731 = vst [vmem:[#allocation2 + $0x54] sm:$0xff] %v1699
    %1732 = vst [vmem:[#allocation2 + $0x5c] sm:$0xff] %v1700
    %1733 = vst [vmem:[#allocation2 + $0x64] sm:$0xff] %v1701
    %1734 = vst [vmem:[#allocation2 + $0x6c] sm:$0xff] %v1702
    %1735 = vst [vmem:[#allocation2 + $0x7c] sm:$0xff] %v1703
    %1736 = vst [vmem:[#allocation2 + $0x84] sm:$0xff] %v1704
    %1737 = vst [vmem:[#allocation2 + $0x8c] sm:$0xff] %v1705
    %1738 = vst [vmem:[#allocation2 + $0x94] sm:$0xff] %v1706
    %v1739 = vpack.c.bf16 %v1539, %v1531
    %v1740 = vpack.c.bf16 %v1540, %v1532
    %v1741 = vpack.c.bf16 %v1541, %v1533
    %v1742 = vpack.c.bf16 %v1542, %v1534
    %v1743 = vpack.c.bf16 %v1543, %v1535
    %v1744 = vpack.c.bf16 %v1544, %v1536
    %v1745 = vpack.c.bf16 %v1545, %v1537
    %v1746 = vpack.c.bf16 %v1546, %v1538
    %v1747 = vpack.c.bf16 %v1555, %v1547
    %v1748 = vpack.c.bf16 %v1556, %v1548
    %v1749 = vpack.c.bf16 %v1557, %v1549
    %v1750 = vpack.c.bf16 %v1558, %v1550
    %v1751 = vpack.c.bf16 %v1559, %v1551
    %v1752 = vpack.c.bf16 %v1560, %v1552
    %v1753 = vpack.c.bf16 %v1561, %v1553
    %v1754 = vpack.c.bf16 %v1562, %v1554
    %v1771 = vunpack.c.l.b16 %v1739
    %v1772 = vunpack.c.l.b16 %v1740
    %v1773 = vunpack.c.l.b16 %v1741
    %v1774 = vunpack.c.l.b16 %v1742
    %v1775 = vunpack.c.l.b16 %v1743
    %v1776 = vunpack.c.l.b16 %v1744
    %v1777 = vunpack.c.l.b16 %v1745
    %v1778 = vunpack.c.l.b16 %v1746
    %v1779 = vunpack.c.h.b16 %v1739
    %v1780 = vunpack.c.h.b16 %v1740
    %v1781 = vunpack.c.h.b16 %v1741
    %v1782 = vunpack.c.h.b16 %v1742
    %v1783 = vunpack.c.h.b16 %v1743
    %v1784 = vunpack.c.h.b16 %v1744
    %v1785 = vunpack.c.h.b16 %v1745
    %v1786 = vunpack.c.h.b16 %v1746
    %v1787 = vunpack.c.l.b16 %v1747
    %v1788 = vunpack.c.l.b16 %v1748
    %v1789 = vunpack.c.l.b16 %v1749
    %v1790 = vunpack.c.l.b16 %v1750
    %v1791 = vunpack.c.l.b16 %v1751
    %v1792 = vunpack.c.l.b16 %v1752
    %v1793 = vunpack.c.l.b16 %v1753
    %v1794 = vunpack.c.l.b16 %v1754
    %v1795 = vunpack.c.h.b16 %v1747
    %v1796 = vunpack.c.h.b16 %v1748
    %v1797 = vunpack.c.h.b16 %v1749
    %v1798 = vunpack.c.h.b16 %v1750
    %v1799 = vunpack.c.h.b16 %v1751
    %v1800 = vunpack.c.h.b16 %v1752
    %v1801 = vunpack.c.h.b16 %v1753
    %v1802 = vunpack.c.h.b16 %v1754
    %v1803 = vpack.c.b16 %v1772, %v1771
    %v1804 = vpack.c.b16 %v1774, %v1773
    %v1805 = vpack.c.b16 %v1776, %v1775
    %v1806 = vpack.c.b16 %v1778, %v1777
    %v1807 = vpack.c.b16 %v1780, %v1779
    %v1808 = vpack.c.b16 %v1782, %v1781
    %v1809 = vpack.c.b16 %v1784, %v1783
    %v1810 = vpack.c.b16 %v1786, %v1785
    %v1811 = vpack.c.b16 %v1788, %v1787
    %v1812 = vpack.c.b16 %v1790, %v1789
    %v1813 = vpack.c.b16 %v1792, %v1791
    %v1814 = vpack.c.b16 %v1794, %v1793
    %v1815 = vpack.c.b16 %v1796, %v1795
    %v1816 = vpack.c.b16 %v1798, %v1797
    %v1817 = vpack.c.b16 %v1800, %v1799
    %v1818 = vpack.c.b16 %v1802, %v1801
    %s1835 = scalar_lea.vmem [#allocation2], 160
    %1836 = vst [vmem:[%s1835 + $0x4] sm:$0xff] %v1803
    %1837 = vst [vmem:[%s1835 + $0xc] sm:$0xff] %v1804
    %1838 = vst [vmem:[%s1835 + $0x14] sm:$0xff] %v1805
    %1839 = vst [vmem:[%s1835 + $0x1c] sm:$0xff] %v1806
    %1840 = vst [vmem:[%s1835 + $0x2c] sm:$0xff] %v1807
    %1841 = vst [vmem:[%s1835 + $0x34] sm:$0xff] %v1808
    %1842 = vst [vmem:[%s1835 + $0x3c] sm:$0xff] %v1809
    %1843 = vst [vmem:[%s1835 + $0x44] sm:$0xff] %v1810
    %1844 = vst [vmem:[%s1835 + $0x54] sm:$0xff] %v1811
    %1845 = vst [vmem:[%s1835 + $0x5c] sm:$0xff] %v1812
    %1846 = vst [vmem:[%s1835 + $0x64] sm:$0xff] %v1813
    %1847 = vst [vmem:[%s1835 + $0x6c] sm:$0xff] %v1814
    %1848 = vst [vmem:[%s1835 + $0x7c] sm:$0xff] %v1815
    %1849 = vst [vmem:[%s1835 + $0x84] sm:$0xff] %v1816
    %1850 = vst [vmem:[%s1835 + $0x8c] sm:$0xff] %v1817
    %1851 = vst [vmem:[%s1835 + $0x94] sm:$0xff] %v1818
    %v1852 = vpack.c.bf16 %v1571, %v1563
    %v1853 = vpack.c.bf16 %v1572, %v1564
    %v1854 = vpack.c.bf16 %v1573, %v1565
    %v1855 = vpack.c.bf16 %v1574, %v1566
    %v1856 = vpack.c.bf16 %v1575, %v1567
    %v1857 = vpack.c.bf16 %v1576, %v1568
    %v1858 = vpack.c.bf16 %v1577, %v1569
    %v1859 = vpack.c.bf16 %v1578, %v1570
    %v1860 = vpack.c.bf16 %v1587, %v1579
    %v1861 = vpack.c.bf16 %v1588, %v1580
    %v1862 = vpack.c.bf16 %v1589, %v1581
    %v1863 = vpack.c.bf16 %v1590, %v1582
    %v1864 = vpack.c.bf16 %v1591, %v1583
    %v1865 = vpack.c.bf16 %v1592, %v1584
    %v1866 = vpack.c.bf16 %v1593, %v1585
    %v1867 = vpack.c.bf16 %v1594, %v1586
    %v1884 = vunpack.c.l.b16 %v1852
    %v1885 = vunpack.c.l.b16 %v1853
    %v1886 = vunpack.c.l.b16 %v1854
    %v1887 = vunpack.c.l.b16 %v1855
    %v1888 = vunpack.c.l.b16 %v1856
    %v1889 = vunpack.c.l.b16 %v1857
    %v1890 = vunpack.c.l.b16 %v1858
    %v1891 = vunpack.c.l.b16 %v1859
    %v1892 = vunpack.c.h.b16 %v1852
    %v1893 = vunpack.c.h.b16 %v1853
    %v1894 = vunpack.c.h.b16 %v1854
    %v1895 = vunpack.c.h.b16 %v1855
    %v1896 = vunpack.c.h.b16 %v1856
    %v1897 = vunpack.c.h.b16 %v1857
    %v1898 = vunpack.c.h.b16 %v1858
    %v1899 = vunpack.c.h.b16 %v1859
    %v1900 = vunpack.c.l.b16 %v1860
    %v1901 = vunpack.c.l.b16 %v1861
    %v1902 = vunpack.c.l.b16 %v1862
    %v1903 = vunpack.c.l.b16 %v1863
    %v1904 = vunpack.c.l.b16 %v1864
    %v1905 = vunpack.c.l.b16 %v1865
    %v1906 = vunpack.c.l.b16 %v1866
    %v1907 = vunpack.c.l.b16 %v1867
    %v1908 = vunpack.c.h.b16 %v1860
    %v1909 = vunpack.c.h.b16 %v1861
    %v1910 = vunpack.c.h.b16 %v1862
    %v1911 = vunpack.c.h.b16 %v1863
    %v1912 = vunpack.c.h.b16 %v1864
    %v1913 = vunpack.c.h.b16 %v1865
    %v1914 = vunpack.c.h.b16 %v1866
    %v1915 = vunpack.c.h.b16 %v1867
    %v1916 = vpack.c.b16 %v1885, %v1884
    %v1917 = vpack.c.b16 %v1887, %v1886
    %v1918 = vpack.c.b16 %v1889, %v1888
    %v1919 = vpack.c.b16 %v1891, %v1890
    %v1920 = vpack.c.b16 %v1893, %v1892
    %v1921 = vpack.c.b16 %v1895, %v1894
    %v1922 = vpack.c.b16 %v1897, %v1896
    %v1923 = vpack.c.b16 %v1899, %v1898
    %v1924 = vpack.c.b16 %v1901, %v1900
    %v1925 = vpack.c.b16 %v1903, %v1902
    %v1926 = vpack.c.b16 %v1905, %v1904
    %v1927 = vpack.c.b16 %v1907, %v1906
    %v1928 = vpack.c.b16 %v1909, %v1908
    %v1929 = vpack.c.b16 %v1911, %v1910
    %v1930 = vpack.c.b16 %v1913, %v1912
    %v1931 = vpack.c.b16 %v1915, %v1914
    %s1948 = scalar_lea.vmem [#allocation2], 320
    %1949 = vst [vmem:[%s1948 + $0x4] sm:$0xff] %v1916
    %1950 = vst [vmem:[%s1948 + $0xc] sm:$0xff] %v1917
    %1951 = vst [vmem:[%s1948 + $0x14] sm:$0xff] %v1918
    %1952 = vst [vmem:[%s1948 + $0x1c] sm:$0xff] %v1919
    %1953 = vst [vmem:[%s1948 + $0x2c] sm:$0xff] %v1920
    %1954 = vst [vmem:[%s1948 + $0x34] sm:$0xff] %v1921
    %1955 = vst [vmem:[%s1948 + $0x3c] sm:$0xff] %v1922
    %1956 = vst [vmem:[%s1948 + $0x44] sm:$0xff] %v1923
    %1957 = vst [vmem:[%s1948 + $0x54] sm:$0xff] %v1924
    %1958 = vst [vmem:[%s1948 + $0x5c] sm:$0xff] %v1925
    %1959 = vst [vmem:[%s1948 + $0x64] sm:$0xff] %v1926
    %1960 = vst [vmem:[%s1948 + $0x6c] sm:$0xff] %v1927
    %1961 = vst [vmem:[%s1948 + $0x7c] sm:$0xff] %v1928
    %1962 = vst [vmem:[%s1948 + $0x84] sm:$0xff] %v1929
    %1963 = vst [vmem:[%s1948 + $0x8c] sm:$0xff] %v1930
    %1964 = vst [vmem:[%s1948 + $0x94] sm:$0xff] %v1931
    %v1965 = vpack.c.bf16 %v1603, %v1595
    %v1966 = vpack.c.bf16 %v1604, %v1596
    %v1967 = vpack.c.bf16 %v1605, %v1597
    %v1968 = vpack.c.bf16 %v1606, %v1598
    %v1969 = vpack.c.bf16 %v1607, %v1599
    %v1970 = vpack.c.bf16 %v1608, %v1600
    %v1971 = vpack.c.bf16 %v1609, %v1601
    %v1972 = vpack.c.bf16 %v1610, %v1602
    %v1973 = vpack.c.bf16 %v1619, %v1611
    %v1974 = vpack.c.bf16 %v1620, %v1612
    %v1975 = vpack.c.bf16 %v1621, %v1613
    %v1976 = vpack.c.bf16 %v1622, %v1614
    %v1977 = vpack.c.bf16 %v1623, %v1615
    %v1978 = vpack.c.bf16 %v1624, %v1616
    %v1979 = vpack.c.bf16 %v1625, %v1617
    %v1980 = vpack.c.bf16 %v1626, %v1618
    %v1997 = vunpack.c.l.b16 %v1965
    %v1998 = vunpack.c.l.b16 %v1966
    %v1999 = vunpack.c.l.b16 %v1967
    %v2000 = vunpack.c.l.b16 %v1968
    %v2001 = vunpack.c.l.b16 %v1969
    %v2002 = vunpack.c.l.b16 %v1970
    %v2003 = vunpack.c.l.b16 %v1971
    %v2004 = vunpack.c.l.b16 %v1972
    %v2005 = vunpack.c.h.b16 %v1965
    %v2006 = vunpack.c.h.b16 %v1966
    %v2007 = vunpack.c.h.b16 %v1967
    %v2008 = vunpack.c.h.b16 %v1968
    %v2009 = vunpack.c.h.b16 %v1969
    %v2010 = vunpack.c.h.b16 %v1970
    %v2011 = vunpack.c.h.b16 %v1971
    %v2012 = vunpack.c.h.b16 %v1972
    %v2013 = vunpack.c.l.b16 %v1973
    %v2014 = vunpack.c.l.b16 %v1974
    %v2015 = vunpack.c.l.b16 %v1975
    %v2016 = vunpack.c.l.b16 %v1976
    %v2017 = vunpack.c.l.b16 %v1977
    %v2018 = vunpack.c.l.b16 %v1978
    %v2019 = vunpack.c.l.b16 %v1979
    %v2020 = vunpack.c.l.b16 %v1980
    %v2021 = vunpack.c.h.b16 %v1973
    %v2022 = vunpack.c.h.b16 %v1974
    %v2023 = vunpack.c.h.b16 %v1975
    %v2024 = vunpack.c.h.b16 %v1976
    %v2025 = vunpack.c.h.b16 %v1977
    %v2026 = vunpack.c.h.b16 %v1978
    %v2027 = vunpack.c.h.b16 %v1979
    %v2028 = vunpack.c.h.b16 %v1980
    %v2029 = vpack.c.b16 %v1998, %v1997
    %v2030 = vpack.c.b16 %v2000, %v1999
    %v2031 = vpack.c.b16 %v2002, %v2001
    %v2032 = vpack.c.b16 %v2004, %v2003
    %v2033 = vpack.c.b16 %v2006, %v2005
    %v2034 = vpack.c.b16 %v2008, %v2007
    %v2035 = vpack.c.b16 %v2010, %v2009
    %v2036 = vpack.c.b16 %v2012, %v2011
    %v2037 = vpack.c.b16 %v2014, %v2013
    %v2038 = vpack.c.b16 %v2016, %v2015
    %v2039 = vpack.c.b16 %v2018, %v2017
    %v2040 = vpack.c.b16 %v2020, %v2019
    %v2041 = vpack.c.b16 %v2022, %v2021
    %v2042 = vpack.c.b16 %v2024, %v2023
    %v2043 = vpack.c.b16 %v2026, %v2025
    %v2044 = vpack.c.b16 %v2028, %v2027
    %s2061 = scalar_lea.vmem [#allocation2], 480
    %2062 = vst [vmem:[%s2061 + $0x4] sm:$0xff] %v2029
    %2063 = vst [vmem:[%s2061 + $0xc] sm:$0xff] %v2030
    %2064 = vst [vmem:[%s2061 + $0x14] sm:$0xff] %v2031
    %2065 = vst [vmem:[%s2061 + $0x1c] sm:$0xff] %v2032
    %2066 = vst [vmem:[%s2061 + $0x2c] sm:$0xff] %v2033
    %2067 = vst [vmem:[%s2061 + $0x34] sm:$0xff] %v2034
    %2068 = vst [vmem:[%s2061 + $0x3c] sm:$0xff] %v2035
    %2069 = vst [vmem:[%s2061 + $0x44] sm:$0xff] %v2036
    %2070 = vst [vmem:[%s2061 + $0x54] sm:$0xff] %v2037
    %2071 = vst [vmem:[%s2061 + $0x5c] sm:$0xff] %v2038
    %2072 = vst [vmem:[%s2061 + $0x64] sm:$0xff] %v2039
    %2073 = vst [vmem:[%s2061 + $0x6c] sm:$0xff] %v2040
    %2074 = vst [vmem:[%s2061 + $0x7c] sm:$0xff] %v2041
    %2075 = vst [vmem:[%s2061 + $0x84] sm:$0xff] %v2042
    %2076 = vst [vmem:[%s2061 + $0x8c] sm:$0xff] %v2043
    %2077 = vst [vmem:[%s2061 + $0x94] sm:$0xff] %v2044
    %v2078 = vld [vmem:[%s1948] sm:$0xff]
    %v2079 = vld [vmem:[%s1948 + $0x8] sm:$0xff]
    %v2080 = vld [vmem:[%s1948 + $0x10] sm:$0xff]
    %v2081 = vld [vmem:[%s1948 + $0x18] sm:$0xff]
    %v2082 = vld [vmem:[%s1948 + $0x20] sm:$0xf]
    %v2083 = vld [vmem:[%s1948 + $0x28] sm:$0xff]
    %v2084 = vld [vmem:[%s1948 + $0x30] sm:$0xff]
    %v2085 = vld [vmem:[%s1948 + $0x38] sm:$0xff]
    %v2086 = vld [vmem:[%s1948 + $0x40] sm:$0xff]
    %v2087 = vld [vmem:[%s1948 + $0x48] sm:$0xf]
    %v2088 = vld [vmem:[%s1948 + $0x50] sm:$0xff]
    %v2089 = vld [vmem:[%s1948 + $0x58] sm:$0xff]
    %v2090 = vld [vmem:[%s1948 + $0x60] sm:$0xff]
    %v2091 = vld [vmem:[%s1948 + $0x68] sm:$0xff]
    %v2092 = vld [vmem:[%s1948 + $0x70] sm:$0xf]
    %v2093 = vld [vmem:[%s1948 + $0x78] sm:$0xff]
    %v2094 = vld [vmem:[%s1948 + $0x80] sm:$0xff]
    %v2095 = vld [vmem:[%s1948 + $0x88] sm:$0xff]
    %v2096 = vld [vmem:[%s1948 + $0x90] sm:$0xff]
    %v2097 = vld [vmem:[%s1948 + $0x98] sm:$0xf]
    %2118 = vrot.lane.b32.xlu0 %v2078, 1
    %v2119 = vpop.permute.xlu0 %2118
    %2120 = vrot.lane.b32.xlu0 %v2079, 1
    %v2121 = vpop.permute.xlu0 %2120
    %2122 = vrot.lane.b32.xlu0 %v2080, 1
    %v2123 = vpop.permute.xlu0 %2122
    %2124 = vrot.lane.b32.xlu0 %v2081, 1
    %v2125 = vpop.permute.xlu0 %2124
    %2126 = vrot.lane.b32.xlu0 %v2082, 1
    %v2127 = vpop.permute.xlu0 %2126
    %2128 = vrot.lane.b32.xlu0 %v2083, 1
    %v2129 = vpop.permute.xlu0 %2128
    %2130 = vrot.lane.b32.xlu0 %v2084, 1
    %v2131 = vpop.permute.xlu0 %2130
    %2132 = vrot.lane.b32.xlu0 %v2085, 1
    %v2133 = vpop.permute.xlu0 %2132
    %2134 = vrot.lane.b32.xlu0 %v2086, 1
    %v2135 = vpop.permute.xlu0 %2134
    %2136 = vrot.lane.b32.xlu0 %v2087, 1
    %v2137 = vpop.permute.xlu0 %2136
    %2138 = vrot.lane.b32.xlu0 %v2088, 1
    %v2139 = vpop.permute.xlu0 %2138
    %2140 = vrot.lane.b32.xlu0 %v2089, 1
    %v2141 = vpop.permute.xlu0 %2140
    %2142 = vrot.lane.b32.xlu0 %v2090, 1
    %v2143 = vpop.permute.xlu0 %2142
    %2144 = vrot.lane.b32.xlu0 %v2091, 1
    %v2145 = vpop.permute.xlu0 %2144
    %2146 = vrot.lane.b32.xlu0 %v2092, 1
    %v2147 = vpop.permute.xlu0 %2146
    %2148 = vrot.lane.b32.xlu0 %v2093, 1
    %v2149 = vpop.permute.xlu0 %2148
    %2150 = vrot.lane.b32.xlu0 %v2094, 1
    %v2151 = vpop.permute.xlu0 %2150
    %2152 = vrot.lane.b32.xlu0 %v2095, 1
    %v2153 = vpop.permute.xlu0 %2152
    %2154 = vrot.lane.b32.xlu0 %v2096, 1
    %v2155 = vpop.permute.xlu0 %2154
    %2156 = vrot.lane.b32.xlu0 %v2097, 1
    %v2157 = vpop.permute.xlu0 %2156
    %v2158 = vrot.slane %v2119, 4
    %v2159 = vrot.slane %v2121, 4
    %v2160 = vrot.slane %v2123, 4
    %v2161 = vrot.slane %v2125, 4
    %v2162 = vrot.slane %v2127, 4
    %v2163 = vrot.slane %v2129, 4
    %v2164 = vrot.slane %v2131, 4
    %v2165 = vrot.slane %v2133, 4
    %v2166 = vrot.slane %v2135, 4
    %v2167 = vrot.slane %v2137, 4
    %v2168 = vrot.slane %v2139, 4
    %v2169 = vrot.slane %v2141, 4
    %v2170 = vrot.slane %v2143, 4
    %v2171 = vrot.slane %v2145, 4
    %v2172 = vrot.slane %v2147, 4
    %v2173 = vrot.slane %v2149, 4
    %v2174 = vrot.slane %v2151, 4
    %v2175 = vrot.slane %v2153, 4
    %v2176 = vrot.slane %v2155, 4
    %v2177 = vrot.slane %v2157, 4
    %vm2178 = vcmask 1043456
    %v2179 = vsel %vm2178, %v2158, %v2159
    %vm2180 = vcmask 7168
    %v2181 = vsel %vm2180, %v2119, %v2179
    %v2182 = vsel %vm2178, %v2159, %v2160
    %v2183 = vsel %vm2180, %v2121, %v2182
    %v2184 = vsel %vm2178, %v2160, %v2161
    %v2185 = vsel %vm2180, %v2123, %v2184
    %v2186 = vsel %vm2178, %v2161, %v2162
    %v2187 = vsel %vm2180, %v2125, %v2186
    %v2188 = vsel %vm2178, %v2163, %v2164
    %v2189 = vsel %vm2180, %v2129, %v2188
    %v2190 = vsel %vm2178, %v2164, %v2165
    %v2191 = vsel %vm2180, %v2131, %v2190
    %v2192 = vsel %vm2178, %v2165, %v2166
    %v2193 = vsel %vm2180, %v2133, %v2192
    %v2194 = vsel %vm2178, %v2166, %v2167
    %v2195 = vsel %vm2180, %v2135, %v2194
    %v2196 = vsel %vm2178, %v2168, %v2169
    %v2197 = vsel %vm2180, %v2139, %v2196
    %v2198 = vsel %vm2178, %v2169, %v2170
    %v2199 = vsel %vm2180, %v2141, %v2198
    %v2200 = vsel %vm2178, %v2170, %v2171
    %v2201 = vsel %vm2180, %v2143, %v2200
    %v2202 = vsel %vm2178, %v2171, %v2172
    %v2203 = vsel %vm2180, %v2145, %v2202
    %v2204 = vsel %vm2178, %v2173, %v2174
    %v2205 = vsel %vm2180, %v2149, %v2204
    %v2206 = vsel %vm2178, %v2174, %v2175
    %v2207 = vsel %vm2180, %v2151, %v2206
    %v2208 = vsel %vm2178, %v2175, %v2176
    %v2209 = vsel %vm2180, %v2153, %v2208
    %v2210 = vsel %vm2178, %v2176, %v2177
    %v2211 = vsel %vm2180, %v2155, %v2210
    %2228 = vst [vmem:[#allocation4] sm:$0xff] %v2181
    %2229 = vst [vmem:[#allocation4 + $0x8] sm:$0xff] %v2183
    %2230 = vst [vmem:[#allocation4 + $0x10] sm:$0xff] %v2185
    %2231 = vst [vmem:[#allocation4 + $0x18] sm:$0xff] %v2187
    %2232 = vst [vmem:[#allocation4 + $0x20] sm:$0xff] %v2189
    %2233 = vst [vmem:[#allocation4 + $0x28] sm:$0xff] %v2191
    %2234 = vst [vmem:[#allocation4 + $0x30] sm:$0xff] %v2193
    %2235 = vst [vmem:[#allocation4 + $0x38] sm:$0xff] %v2195
    %2236 = vst [vmem:[#allocation4 + $0x40] sm:$0xff] %v2197
    %2237 = vst [vmem:[#allocation4 + $0x48] sm:$0xff] %v2199
    %2238 = vst [vmem:[#allocation4 + $0x50] sm:$0xff] %v2201
    %2239 = vst [vmem:[#allocation4 + $0x58] sm:$0xff] %v2203
    %2240 = vst [vmem:[#allocation4 + $0x60] sm:$0xff] %v2205
    %2241 = vst [vmem:[#allocation4 + $0x68] sm:$0xff] %v2207
    %2242 = vst [vmem:[#allocation4 + $0x70] sm:$0xff] %v2209
    %2243 = vst [vmem:[#allocation4 + $0x78] sm:$0xff] %v2211
    %v2244 = vld [vmem:[%s2061] sm:$0xff]
    %v2245 = vld [vmem:[%s2061 + $0x8] sm:$0xff]
    %v2246 = vld [vmem:[%s2061 + $0x10] sm:$0xff]
    %v2247 = vld [vmem:[%s2061 + $0x18] sm:$0xff]
    %v2248 = vld [vmem:[%s2061 + $0x20] sm:$0xf]
    %v2249 = vld [vmem:[%s2061 + $0x28] sm:$0xff]
    %v2250 = vld [vmem:[%s2061 + $0x30] sm:$0xff]
    %v2251 = vld [vmem:[%s2061 + $0x38] sm:$0xff]
    %v2252 = vld [vmem:[%s2061 + $0x40] sm:$0xff]
    %v2253 = vld [vmem:[%s2061 + $0x48] sm:$0xf]
    %v2254 = vld [vmem:[%s2061 + $0x50] sm:$0xff]
    %v2255 = vld [vmem:[%s2061 + $0x58] sm:$0xff]
    %v2256 = vld [vmem:[%s2061 + $0x60] sm:$0xff]
    %v2257 = vld [vmem:[%s2061 + $0x68] sm:$0xff]
    %v2258 = vld [vmem:[%s2061 + $0x70] sm:$0xf]
    %v2259 = vld [vmem:[%s2061 + $0x78] sm:$0xff]
    %v2260 = vld [vmem:[%s2061 + $0x80] sm:$0xff]
    %v2261 = vld [vmem:[%s2061 + $0x88] sm:$0xff]
    %v2262 = vld [vmem:[%s2061 + $0x90] sm:$0xff]
    %v2263 = vld [vmem:[%s2061 + $0x98] sm:$0xf]
    %2284 = vrot.lane.b32.xlu0 %v2244, 1
    %v2285 = vpop.permute.xlu0 %2284
    %2286 = vrot.lane.b32.xlu0 %v2245, 1
    %v2287 = vpop.permute.xlu0 %2286
    %2288 = vrot.lane.b32.xlu0 %v2246, 1
    %v2289 = vpop.permute.xlu0 %2288
    %2290 = vrot.lane.b32.xlu0 %v2247, 1
    %v2291 = vpop.permute.xlu0 %2290
    %2292 = vrot.lane.b32.xlu0 %v2248, 1
    %v2293 = vpop.permute.xlu0 %2292
    %2294 = vrot.lane.b32.xlu0 %v2249, 1
    %v2295 = vpop.permute.xlu0 %2294
    %2296 = vrot.lane.b32.xlu0 %v2250, 1
    %v2297 = vpop.permute.xlu0 %2296
    %2298 = vrot.lane.b32.xlu0 %v2251, 1
    %v2299 = vpop.permute.xlu0 %2298
    %2300 = vrot.lane.b32.xlu0 %v2252, 1
    %v2301 = vpop.permute.xlu0 %2300
    %2302 = vrot.lane.b32.xlu0 %v2253, 1
    %v2303 = vpop.permute.xlu0 %2302
    %2304 = vrot.lane.b32.xlu0 %v2254, 1
    %v2305 = vpop.permute.xlu0 %2304
    %2306 = vrot.lane.b32.xlu0 %v2255, 1
    %v2307 = vpop.permute.xlu0 %2306
    %2308 = vrot.lane.b32.xlu0 %v2256, 1
    %v2309 = vpop.permute.xlu0 %2308
    %2310 = vrot.lane.b32.xlu0 %v2257, 1
    %v2311 = vpop.permute.xlu0 %2310
    %2312 = vrot.lane.b32.xlu0 %v2258, 1
    %v2313 = vpop.permute.xlu0 %2312
    %2314 = vrot.lane.b32.xlu0 %v2259, 1
    %v2315 = vpop.permute.xlu0 %2314
    %2316 = vrot.lane.b32.xlu0 %v2260, 1
    %v2317 = vpop.permute.xlu0 %2316
    %2318 = vrot.lane.b32.xlu0 %v2261, 1
    %v2319 = vpop.permute.xlu0 %2318
    %2320 = vrot.lane.b32.xlu0 %v2262, 1
    %v2321 = vpop.permute.xlu0 %2320
    %2322 = vrot.lane.b32.xlu0 %v2263, 1
    %v2323 = vpop.permute.xlu0 %2322
    %v2324 = vrot.slane %v2285, 4
    %v2325 = vrot.slane %v2287, 4
    %v2326 = vrot.slane %v2289, 4
    %v2327 = vrot.slane %v2291, 4
    %v2328 = vrot.slane %v2293, 4
    %v2329 = vrot.slane %v2295, 4
    %v2330 = vrot.slane %v2297, 4
    %v2331 = vrot.slane %v2299, 4
    %v2332 = vrot.slane %v2301, 4
    %v2333 = vrot.slane %v2303, 4
    %v2334 = vrot.slane %v2305, 4
    %v2335 = vrot.slane %v2307, 4
    %v2336 = vrot.slane %v2309, 4
    %v2337 = vrot.slane %v2311, 4
    %v2338 = vrot.slane %v2313, 4
    %v2339 = vrot.slane %v2315, 4
    %v2340 = vrot.slane %v2317, 4
    %v2341 = vrot.slane %v2319, 4
    %v2342 = vrot.slane %v2321, 4
    %v2343 = vrot.slane %v2323, 4
    %v2344 = vsel %vm2178, %v2324, %v2325
    %v2345 = vsel %vm2180, %v2285, %v2344
    %v2346 = vsel %vm2178, %v2325, %v2326
    %v2347 = vsel %vm2180, %v2287, %v2346
    %v2348 = vsel %vm2178, %v2326, %v2327
    %v2349 = vsel %vm2180, %v2289, %v2348
    %v2350 = vsel %vm2178, %v2327, %v2328
    %v2351 = vsel %vm2180, %v2291, %v2350
    %v2352 = vsel %vm2178, %v2329, %v2330
    %v2353 = vsel %vm2180, %v2295, %v2352
    %v2354 = vsel %vm2178, %v2330, %v2331
    %v2355 = vsel %vm2180, %v2297, %v2354
    %v2356 = vsel %vm2178, %v2331, %v2332
    %v2357 = vsel %vm2180, %v2299, %v2356
    %v2358 = vsel %vm2178, %v2332, %v2333
    %v2359 = vsel %vm2180, %v2301, %v2358
    %v2360 = vsel %vm2178, %v2334, %v2335
    %v2361 = vsel %vm2180, %v2305, %v2360
    %v2362 = vsel %vm2178, %v2335, %v2336
    %v2363 = vsel %vm2180, %v2307, %v2362
    %v2364 = vsel %vm2178, %v2336, %v2337
    %v2365 = vsel %vm2180, %v2309, %v2364
    %v2366 = vsel %vm2178, %v2337, %v2338
    %v2367 = vsel %vm2180, %v2311, %v2366
    %v2368 = vsel %vm2178, %v2339, %v2340
    %v2369 = vsel %vm2180, %v2315, %v2368
    %v2370 = vsel %vm2178, %v2340, %v2341
    %v2371 = vsel %vm2180, %v2317, %v2370
    %v2372 = vsel %vm2178, %v2341, %v2342
    %v2373 = vsel %vm2180, %v2319, %v2372
    %v2374 = vsel %vm2178, %v2342, %v2343
    %v2375 = vsel %vm2180, %v2321, %v2374
    %2392 = vst [vmem:[#allocation4 + $0x80] sm:$0xff] %v2345
    %2393 = vst [vmem:[#allocation4 + $0x88] sm:$0xff] %v2347
    %2394 = vst [vmem:[#allocation4 + $0x90] sm:$0xff] %v2349
    %2395 = vst [vmem:[#allocation4 + $0x98] sm:$0xff] %v2351
    %2396 = vst [vmem:[#allocation4 + $0xa0] sm:$0xff] %v2353
    %2397 = vst [vmem:[#allocation4 + $0xa8] sm:$0xff] %v2355
    %2398 = vst [vmem:[#allocation4 + $0xb0] sm:$0xff] %v2357
    %2399 = vst [vmem:[#allocation4 + $0xb8] sm:$0xff] %v2359
    %2400 = vst [vmem:[#allocation4 + $0xc0] sm:$0xff] %v2361
    %2401 = vst [vmem:[#allocation4 + $0xc8] sm:$0xff] %v2363
    %2402 = vst [vmem:[#allocation4 + $0xd0] sm:$0xff] %v2365
    %2403 = vst [vmem:[#allocation4 + $0xd8] sm:$0xff] %v2367
    %2404 = vst [vmem:[#allocation4 + $0xe0] sm:$0xff] %v2369
    %2405 = vst [vmem:[#allocation4 + $0xe8] sm:$0xff] %v2371
    %2406 = vst [vmem:[#allocation4 + $0xf0] sm:$0xff] %v2373
    %2407 = vst [vmem:[#allocation4 + $0xf8] sm:$0xff] %v2375
    %v2408 = vld [vmem:[#allocation2 + $0x4] sm:$0xff]
    %v2409 = vld [vmem:[#allocation2 + $0xc] sm:$0xff]
    %v2410 = vld [vmem:[#allocation2 + $0x14] sm:$0xff]
    %v2411 = vld [vmem:[#allocation2 + $0x1c] sm:$0xff]
    %v2412 = vld [vmem:[#allocation2 + $0x2c] sm:$0xff]
    %v2413 = vld [vmem:[#allocation2 + $0x34] sm:$0xff]
    %v2414 = vld [vmem:[#allocation2 + $0x3c] sm:$0xff]
    %v2415 = vld [vmem:[#allocation2 + $0x44] sm:$0xff]
    %v2416 = vld [vmem:[#allocation2 + $0x54] sm:$0xff]
    %v2417 = vld [vmem:[#allocation2 + $0x5c] sm:$0xff]
    %v2418 = vld [vmem:[#allocation2 + $0x64] sm:$0xff]
    %v2419 = vld [vmem:[#allocation2 + $0x6c] sm:$0xff]
    %v2420 = vld [vmem:[#allocation2 + $0x7c] sm:$0xff]
    %v2421 = vld [vmem:[#allocation2 + $0x84] sm:$0xff]
    %v2422 = vld [vmem:[#allocation2 + $0x8c] sm:$0xff]
    %v2423 = vld [vmem:[#allocation2 + $0x94] sm:$0xff]
    %2424 = vst [vmem:[#allocation4 + $0x100] sm:$0xff] %v2408
    %2425 = vst [vmem:[#allocation4 + $0x108] sm:$0xff] %v2409
    %2426 = vst [vmem:[#allocation4 + $0x110] sm:$0xff] %v2410
    %2427 = vst [vmem:[#allocation4 + $0x118] sm:$0xff] %v2411
    %2428 = vst [vmem:[#allocation4 + $0x120] sm:$0xff] %v2412
    %2429 = vst [vmem:[#allocation4 + $0x128] sm:$0xff] %v2413
    %2430 = vst [vmem:[#allocation4 + $0x130] sm:$0xff] %v2414
    %2431 = vst [vmem:[#allocation4 + $0x138] sm:$0xff] %v2415
    %2432 = vst [vmem:[#allocation4 + $0x140] sm:$0xff] %v2416
    %2433 = vst [vmem:[#allocation4 + $0x148] sm:$0xff] %v2417
    %2434 = vst [vmem:[#allocation4 + $0x150] sm:$0xff] %v2418
    %2435 = vst [vmem:[#allocation4 + $0x158] sm:$0xff] %v2419
    %2436 = vst [vmem:[#allocation4 + $0x160] sm:$0xff] %v2420
    %2437 = vst [vmem:[#allocation4 + $0x168] sm:$0xff] %v2421
    %2438 = vst [vmem:[#allocation4 + $0x170] sm:$0xff] %v2422
    %2439 = vst [vmem:[#allocation4 + $0x178] sm:$0xff] %v2423
    %v2440 = vld [vmem:[%s1835 + $0x4] sm:$0xff]
    %v2441 = vld [vmem:[%s1835 + $0xc] sm:$0xff]
    %v2442 = vld [vmem:[%s1835 + $0x14] sm:$0xff]
    %v2443 = vld [vmem:[%s1835 + $0x1c] sm:$0xff]
    %v2444 = vld [vmem:[%s1835 + $0x2c] sm:$0xff]
    %v2445 = vld [vmem:[%s1835 + $0x34] sm:$0xff]
    %v2446 = vld [vmem:[%s1835 + $0x3c] sm:$0xff]
    %v2447 = vld [vmem:[%s1835 + $0x44] sm:$0xff]
    %v2448 = vld [vmem:[%s1835 + $0x54] sm:$0xff]
    %v2449 = vld [vmem:[%s1835 + $0x5c] sm:$0xff]
    %v2450 = vld [vmem:[%s1835 + $0x64] sm:$0xff]
    %v2451 = vld [vmem:[%s1835 + $0x6c] sm:$0xff]
    %v2452 = vld [vmem:[%s1835 + $0x7c] sm:$0xff]
    %v2453 = vld [vmem:[%s1835 + $0x84] sm:$0xff]
    %v2454 = vld [vmem:[%s1835 + $0x8c] sm:$0xff]
    %v2455 = vld [vmem:[%s1835 + $0x94] sm:$0xff]
    %2456 = vst [vmem:[#allocation4 + $0x180] sm:$0xff] %v2440
    %2457 = vst [vmem:[#allocation4 + $0x188] sm:$0xff] %v2441
    %2458 = vst [vmem:[#allocation4 + $0x190] sm:$0xff] %v2442
    %2459 = vst [vmem:[#allocation4 + $0x198] sm:$0xff] %v2443
    %2460 = vst [vmem:[#allocation4 + $0x1a0] sm:$0xff] %v2444
    %2461 = vst [vmem:[#allocation4 + $0x1a8] sm:$0xff] %v2445
    %2462 = vst [vmem:[#allocation4 + $0x1b0] sm:$0xff] %v2446
    %2463 = vst [vmem:[#allocation4 + $0x1b8] sm:$0xff] %v2447
    %2464 = vst [vmem:[#allocation4 + $0x1c0] sm:$0xff] %v2448
    %2465 = vst [vmem:[#allocation4 + $0x1c8] sm:$0xff] %v2449
    %2466 = vst [vmem:[#allocation4 + $0x1d0] sm:$0xff] %v2450
    %2467 = vst [vmem:[#allocation4 + $0x1d8] sm:$0xff] %v2451
    %2468 = vst [vmem:[#allocation4 + $0x1e0] sm:$0xff] %v2452
    %2469 = vst [vmem:[#allocation4 + $0x1e8] sm:$0xff] %v2453
    %2470 = vst [vmem:[#allocation4 + $0x1f0] sm:$0xff] %v2454
    %2471 = vst [vmem:[#allocation4 + $0x1f8] sm:$0xff] %v2455
    %v2472 = vld [vmem:[%s1948 + $0x4] sm:$0xff]
    %v2473 = vld [vmem:[%s1948 + $0xc] sm:$0xff]
    %v2474 = vld [vmem:[%s1948 + $0x14] sm:$0xff]
    %v2475 = vld [vmem:[%s1948 + $0x1c] sm:$0xff]
    %v2476 = vld [vmem:[%s1948 + $0x2c] sm:$0xff]
    %v2477 = vld [vmem:[%s1948 + $0x34] sm:$0xff]
    %v2478 = vld [vmem:[%s1948 + $0x3c] sm:$0xff]
    %v2479 = vld [vmem:[%s1948 + $0x44] sm:$0xff]
    %v2480 = vld [vmem:[%s1948 + $0x54] sm:$0xff]
    %v2481 = vld [vmem:[%s1948 + $0x5c] sm:$0xff]
    %v2482 = vld [vmem:[%s1948 + $0x64] sm:$0xff]
    %v2483 = vld [vmem:[%s1948 + $0x6c] sm:$0xff]
    %v2484 = vld [vmem:[%s1948 + $0x7c] sm:$0xff]
    %v2485 = vld [vmem:[%s1948 + $0x84] sm:$0xff]
    %v2486 = vld [vmem:[%s1948 + $0x8c] sm:$0xff]
    %v2487 = vld [vmem:[%s1948 + $0x94] sm:$0xff]
    %2488 = vst [vmem:[#allocation4 + $0x200] sm:$0xff] %v2472
    %2489 = vst [vmem:[#allocation4 + $0x208] sm:$0xff] %v2473
    %2490 = vst [vmem:[#allocation4 + $0x210] sm:$0xff] %v2474
    %2491 = vst [vmem:[#allocation4 + $0x218] sm:$0xff] %v2475
    %2492 = vst [vmem:[#allocation4 + $0x220] sm:$0xff] %v2476
    %2493 = vst [vmem:[#allocation4 + $0x228] sm:$0xff] %v2477
    %2494 = vst [vmem:[#allocation4 + $0x230] sm:$0xff] %v2478
    %2495 = vst [vmem:[#allocation4 + $0x238] sm:$0xff] %v2479
    %2496 = vst [vmem:[#allocation4 + $0x240] sm:$0xff] %v2480
    %2497 = vst [vmem:[#allocation4 + $0x248] sm:$0xff] %v2481
    %2498 = vst [vmem:[#allocation4 + $0x250] sm:$0xff] %v2482
    %2499 = vst [vmem:[#allocation4 + $0x258] sm:$0xff] %v2483
    %2500 = vst [vmem:[#allocation4 + $0x260] sm:$0xff] %v2484
    %2501 = vst [vmem:[#allocation4 + $0x268] sm:$0xff] %v2485
    %2502 = vst [vmem:[#allocation4 + $0x270] sm:$0xff] %v2486
    %2503 = vst [vmem:[#allocation4 + $0x278] sm:$0xff] %v2487
    %v2504 = vld [vmem:[%s6] sm:$0xff]
    %v2505 = vld [vmem:[%s6 + $0x8] sm:$0xff]
    %v2506 = vld [vmem:[%s6 + $0x10] sm:$0xff]
    %v2507 = vld [vmem:[%s6 + $0x18] sm:$0xff]
    %v2508 = vld [vmem:[%s6 + $0x20] sm:$0xff]
    %v2509 = vld [vmem:[%s6 + $0x28] sm:$0xff]
    %v2510 = vld [vmem:[%s6 + $0x30] sm:$0xff]
    %v2511 = vld [vmem:[%s6 + $0x38] sm:$0xff]
    %v2512 = vld [vmem:[#allocation4] sm:$0xff]
    %v2513 = vld [vmem:[#allocation4 + $0x8] sm:$0xff]
    %v2514 = vld [vmem:[#allocation4 + $0x10] sm:$0xff]
    %v2515 = vld [vmem:[#allocation4 + $0x18] sm:$0xff]
    %v2516 = vld [vmem:[#allocation4 + $0x20] sm:$0xff]
    %v2517 = vld [vmem:[#allocation4 + $0x28] sm:$0xff]
    %v2518 = vld [vmem:[#allocation4 + $0x30] sm:$0xff]
    %v2519 = vld [vmem:[#allocation4 + $0x38] sm:$0xff]
    %v2520 = vld [vmem:[#allocation4 + $0x40] sm:$0xff]
    %v2521 = vld [vmem:[#allocation4 + $0x48] sm:$0xff]
    %v2522 = vld [vmem:[#allocation4 + $0x50] sm:$0xff]
    %v2523 = vld [vmem:[#allocation4 + $0x58] sm:$0xff]
    %v2524 = vld [vmem:[#allocation4 + $0x60] sm:$0xff]
    %v2525 = vld [vmem:[#allocation4 + $0x68] sm:$0xff]
    %v2526 = vld [vmem:[#allocation4 + $0x70] sm:$0xff]
    %v2527 = vld [vmem:[#allocation4 + $0x78] sm:$0xff]
    %v2528 = vld [vmem:[#allocation4 + $0x80] sm:$0xff]
    %v2529 = vld [vmem:[#allocation4 + $0x88] sm:$0xff]
    %v2530 = vld [vmem:[#allocation4 + $0x90] sm:$0xff]
    %v2531 = vld [vmem:[#allocation4 + $0x98] sm:$0xff]
    %v2532 = vld [vmem:[#allocation4 + $0xa0] sm:$0xff]
    %v2533 = vld [vmem:[#allocation4 + $0xa8] sm:$0xff]
    %v2534 = vld [vmem:[#allocation4 + $0xb0] sm:$0xff]
    %v2535 = vld [vmem:[#allocation4 + $0xb8] sm:$0xff]
    %v2536 = vld [vmem:[#allocation4 + $0xc0] sm:$0xff]
    %v2537 = vld [vmem:[#allocation4 + $0xc8] sm:$0xff]
    %v2538 = vld [vmem:[#allocation4 + $0xd0] sm:$0xff]
    %v2539 = vld [vmem:[#allocation4 + $0xd8] sm:$0xff]
    %v2540 = vld [vmem:[#allocation4 + $0xe0] sm:$0xff]
    %v2541 = vld [vmem:[#allocation4 + $0xe8] sm:$0xff]
    %v2542 = vld [vmem:[#allocation4 + $0xf0] sm:$0xff]
    %v2543 = vld [vmem:[#allocation4 + $0xf8] sm:$0xff]
    %v2544 = vld [vmem:[#allocation4 + $0x100] sm:$0xff]
    %v2545 = vld [vmem:[#allocation4 + $0x108] sm:$0xff]
    %v2546 = vld [vmem:[#allocation4 + $0x110] sm:$0xff]
    %v2547 = vld [vmem:[#allocation4 + $0x118] sm:$0xff]
    %v2548 = vld [vmem:[#allocation4 + $0x120] sm:$0xff]
    %v2549 = vld [vmem:[#allocation4 + $0x128] sm:$0xff]
    %v2550 = vld [vmem:[#allocation4 + $0x130] sm:$0xff]
    %v2551 = vld [vmem:[#allocation4 + $0x138] sm:$0xff]
    %v2552 = vld [vmem:[#allocation4 + $0x140] sm:$0xff]
    %v2553 = vld [vmem:[#allocation4 + $0x148] sm:$0xff]
    %v2554 = vld [vmem:[#allocation4 + $0x150] sm:$0xff]
    %v2555 = vld [vmem:[#allocation4 + $0x158] sm:$0xff]
    %v2556 = vld [vmem:[#allocation4 + $0x160] sm:$0xff]
    %v2557 = vld [vmem:[#allocation4 + $0x168] sm:$0xff]
    %v2558 = vld [vmem:[#allocation4 + $0x170] sm:$0xff]
    %v2559 = vld [vmem:[#allocation4 + $0x178] sm:$0xff]
    %v2560 = vld [vmem:[#allocation4 + $0x180] sm:$0xff]
    %v2561 = vld [vmem:[#allocation4 + $0x188] sm:$0xff]
    %v2562 = vld [vmem:[#allocation4 + $0x190] sm:$0xff]
    %v2563 = vld [vmem:[#allocation4 + $0x198] sm:$0xff]
    %v2564 = vld [vmem:[#allocation4 + $0x1a0] sm:$0xff]
    %v2565 = vld [vmem:[#allocation4 + $0x1a8] sm:$0xff]
    %v2566 = vld [vmem:[#allocation4 + $0x1b0] sm:$0xff]
    %v2567 = vld [vmem:[#allocation4 + $0x1b8] sm:$0xff]
    %v2568 = vld [vmem:[#allocation4 + $0x1c0] sm:$0xff]
    %v2569 = vld [vmem:[#allocation4 + $0x1c8] sm:$0xff]
    %v2570 = vld [vmem:[#allocation4 + $0x1d0] sm:$0xff]
    %v2571 = vld [vmem:[#allocation4 + $0x1d8] sm:$0xff]
    %v2572 = vld [vmem:[#allocation4 + $0x1e0] sm:$0xff]
    %v2573 = vld [vmem:[#allocation4 + $0x1e8] sm:$0xff]
    %v2574 = vld [vmem:[#allocation4 + $0x1f0] sm:$0xff]
    %v2575 = vld [vmem:[#allocation4 + $0x1f8] sm:$0xff]
    %v2576 = vld [vmem:[#allocation4 + $0x200] sm:$0xff]
    %v2577 = vld [vmem:[#allocation4 + $0x208] sm:$0xff]
    %v2578 = vld [vmem:[#allocation4 + $0x210] sm:$0xff]
    %v2579 = vld [vmem:[#allocation4 + $0x218] sm:$0xff]
    %v2580 = vld [vmem:[#allocation4 + $0x220] sm:$0xff]
    %v2581 = vld [vmem:[#allocation4 + $0x228] sm:$0xff]
    %v2582 = vld [vmem:[#allocation4 + $0x230] sm:$0xff]
    %v2583 = vld [vmem:[#allocation4 + $0x238] sm:$0xff]
    %v2584 = vld [vmem:[#allocation4 + $0x240] sm:$0xff]
    %v2585 = vld [vmem:[#allocation4 + $0x248] sm:$0xff]
    %v2586 = vld [vmem:[#allocation4 + $0x250] sm:$0xff]
    %v2587 = vld [vmem:[#allocation4 + $0x258] sm:$0xff]
    %v2588 = vld [vmem:[#allocation4 + $0x260] sm:$0xff]
    %v2589 = vld [vmem:[#allocation4 + $0x268] sm:$0xff]
    %v2590 = vld [vmem:[#allocation4 + $0x270] sm:$0xff]
    %v2591 = vld [vmem:[#allocation4 + $0x278] sm:$0xff]
    %v2592 = vld [vmem:[%s7] sm:$0xff]
    %v2593 = vld [vmem:[%s7 + $0x8] sm:$0xff]
    %v2594 = vld [vmem:[%s7 + $0x10] sm:$0xff]
    %v2595 = vld [vmem:[%s7 + $0x18] sm:$0xff]
    %v2596 = vld [vmem:[%s7 + $0x20] sm:$0xff]
    %v2597 = vld [vmem:[%s7 + $0x28] sm:$0xff]
    %v2598 = vld [vmem:[%s7 + $0x30] sm:$0xff]
    %v2599 = vld [vmem:[%s7 + $0x38] sm:$0xff]
    %2601 = vset.pattern.permute.xlu0 0
    %2602 = vperm.xlu0 %2601, %v2592
    %v2603 = vpop.permute.xlu0 %2602
    %2606 = vset.pattern.permute.xlu0 0
    %2607 = vperm.xlu0 %2606, %v2593
    %v2608 = vpop.permute.xlu0 %2607
    %2611 = vset.pattern.permute.xlu0 0
    %2612 = vperm.xlu0 %2611, %v2594
    %v2613 = vpop.permute.xlu0 %2612
    %2616 = vset.pattern.permute.xlu0 0
    %2617 = vperm.xlu0 %2616, %v2595
    %v2618 = vpop.permute.xlu0 %2617
    %2621 = vset.pattern.permute.xlu0 0
    %2622 = vperm.xlu0 %2621, %v2596
    %v2623 = vpop.permute.xlu0 %2622
    %2626 = vset.pattern.permute.xlu0 0
    %2627 = vperm.xlu0 %2626, %v2597
    %v2628 = vpop.permute.xlu0 %2627
    %2631 = vset.pattern.permute.xlu0 0
    %2632 = vperm.xlu0 %2631, %v2598
    %v2633 = vpop.permute.xlu0 %2632
    %2636 = vset.pattern.permute.xlu0 0
    %2637 = vperm.xlu0 %2636, %v2599
    %v2638 = vpop.permute.xlu0 %2637
    %v2648 = vunpack.c.l.b16 %v2504
    %v2649 = vunpack.c.h.b16 %v2504
    %v2650 = vunpack.c.l.b16 %v2505
    %v2651 = vunpack.c.h.b16 %v2505
    %v2652 = vunpack.c.l.b16 %v2506
    %v2653 = vunpack.c.h.b16 %v2506
    %v2654 = vunpack.c.l.b16 %v2507
    %v2655 = vunpack.c.h.b16 %v2507
    %v2656 = vunpack.c.l.b16 %v2508
    %v2657 = vunpack.c.h.b16 %v2508
    %v2658 = vunpack.c.l.b16 %v2509
    %v2659 = vunpack.c.h.b16 %v2509
    %v2660 = vunpack.c.l.b16 %v2510
    %v2661 = vunpack.c.h.b16 %v2510
    %v2662 = vunpack.c.l.b16 %v2511
    %v2663 = vunpack.c.h.b16 %v2511
    %v2664 = vpack.c.b16 %v2650, %v2648
    %v2665 = vpack.c.b16 %v2651, %v2649
    %v2666 = vpack.c.b16 %v2654, %v2652
    %v2667 = vpack.c.b16 %v2655, %v2653
    %v2668 = vpack.c.b16 %v2658, %v2656
    %v2669 = vpack.c.b16 %v2659, %v2657
    %v2670 = vpack.c.b16 %v2662, %v2660
    %v2671 = vpack.c.b16 %v2663, %v2661
    %v2756 = vunpack.c.l.b16 %v2512
    %v2757 = vunpack.c.h.b16 %v2512
    %v2758 = vunpack.c.l.b16 %v2513
    %v2759 = vunpack.c.h.b16 %v2513
    %v2760 = vunpack.c.l.b16 %v2514
    %v2761 = vunpack.c.h.b16 %v2514
    %v2762 = vunpack.c.l.b16 %v2515
    %v2763 = vunpack.c.h.b16 %v2515
    %v2764 = vunpack.c.l.b16 %v2516
    %v2765 = vunpack.c.h.b16 %v2516
    %v2766 = vunpack.c.l.b16 %v2517
    %v2767 = vunpack.c.h.b16 %v2517
    %v2768 = vunpack.c.l.b16 %v2518
    %v2769 = vunpack.c.h.b16 %v2518
    %v2770 = vunpack.c.l.b16 %v2519
    %v2771 = vunpack.c.h.b16 %v2519
    %v2772 = vunpack.c.l.b16 %v2520
    %v2773 = vunpack.c.h.b16 %v2520
    %v2774 = vunpack.c.l.b16 %v2521
    %v2775 = vunpack.c.h.b16 %v2521
    %v2776 = vunpack.c.l.b16 %v2522
    %v2777 = vunpack.c.h.b16 %v2522
    %v2778 = vunpack.c.l.b16 %v2523
    %v2779 = vunpack.c.h.b16 %v2523
    %v2780 = vunpack.c.l.b16 %v2524
    %v2781 = vunpack.c.h.b16 %v2524
    %v2782 = vunpack.c.l.b16 %v2525
    %v2783 = vunpack.c.h.b16 %v2525
    %v2784 = vunpack.c.l.b16 %v2526
    %v2785 = vunpack.c.h.b16 %v2526
    %v2786 = vunpack.c.l.b16 %v2527
    %v2787 = vunpack.c.h.b16 %v2527
    %v2788 = vunpack.c.l.b16 %v2528
    %v2789 = vunpack.c.h.b16 %v2528
    %v2790 = vunpack.c.l.b16 %v2529
    %v2791 = vunpack.c.h.b16 %v2529
    %v2792 = vunpack.c.l.b16 %v2530
    %v2793 = vunpack.c.h.b16 %v2530
    %v2794 = vunpack.c.l.b16 %v2531
    %v2795 = vunpack.c.h.b16 %v2531
    %v2796 = vunpack.c.l.b16 %v2532
    %v2797 = vunpack.c.h.b16 %v2532
    %v2798 = vunpack.c.l.b16 %v2533
    %v2799 = vunpack.c.h.b16 %v2533
    %v2800 = vunpack.c.l.b16 %v2534
    %v2801 = vunpack.c.h.b16 %v2534
    %v2802 = vunpack.c.l.b16 %v2535
    %v2803 = vunpack.c.h.b16 %v2535
    %v2804 = vunpack.c.l.b16 %v2536
    %v2805 = vunpack.c.h.b16 %v2536
    %v2806 = vunpack.c.l.b16 %v2537
    %v2807 = vunpack.c.h.b16 %v2537
    %v2808 = vunpack.c.l.b16 %v2538
    %v2809 = vunpack.c.h.b16 %v2538
    %v2810 = vunpack.c.l.b16 %v2539
    %v2811 = vunpack.c.h.b16 %v2539
    %v2812 = vunpack.c.l.b16 %v2540
    %v2813 = vunpack.c.h.b16 %v2540
    %v2814 = vunpack.c.l.b16 %v2541
    %v2815 = vunpack.c.h.b16 %v2541
    %v2816 = vunpack.c.l.b16 %v2542
    %v2817 = vunpack.c.h.b16 %v2542
    %v2818 = vunpack.c.l.b16 %v2543
    %v2819 = vunpack.c.h.b16 %v2543
    %v2820 = vunpack.c.l.b16 %v2544
    %v2821 = vunpack.c.h.b16 %v2544
    %v2822 = vunpack.c.l.b16 %v2545
    %v2823 = vunpack.c.h.b16 %v2545
    %v2824 = vunpack.c.l.b16 %v2546
    %v2825 = vunpack.c.h.b16 %v2546
    %v2826 = vunpack.c.l.b16 %v2547
    %v2827 = vunpack.c.h.b16 %v2547
    %v2828 = vunpack.c.l.b16 %v2548
    %v2829 = vunpack.c.h.b16 %v2548
    %v2830 = vunpack.c.l.b16 %v2549
    %v2831 = vunpack.c.h.b16 %v2549
    %v2832 = vunpack.c.l.b16 %v2550
    %v2833 = vunpack.c.h.b16 %v2550
    %v2834 = vunpack.c.l.b16 %v2551
    %v2835 = vunpack.c.h.b16 %v2551
    %v2836 = vunpack.c.l.b16 %v2552
    %v2837 = vunpack.c.h.b16 %v2552
    %v2838 = vunpack.c.l.b16 %v2553
    %v2839 = vunpack.c.h.b16 %v2553
    %v2840 = vunpack.c.l.b16 %v2554
    %v2841 = vunpack.c.h.b16 %v2554
    %v2842 = vunpack.c.l.b16 %v2555
    %v2843 = vunpack.c.h.b16 %v2555
    %v2844 = vunpack.c.l.b16 %v2556
    %v2845 = vunpack.c.h.b16 %v2556
    %v2846 = vunpack.c.l.b16 %v2557
    %v2847 = vunpack.c.h.b16 %v2557
    %v2848 = vunpack.c.l.b16 %v2558
    %v2849 = vunpack.c.h.b16 %v2558
    %v2850 = vunpack.c.l.b16 %v2559
    %v2851 = vunpack.c.h.b16 %v2559
    %v2852 = vunpack.c.l.b16 %v2560
    %v2853 = vunpack.c.h.b16 %v2560
    %v2854 = vunpack.c.l.b16 %v2561
    %v2855 = vunpack.c.h.b16 %v2561
    %v2856 = vunpack.c.l.b16 %v2562
    %v2857 = vunpack.c.h.b16 %v2562
    %v2858 = vunpack.c.l.b16 %v2563
    %v2859 = vunpack.c.h.b16 %v2563
    %v2860 = vunpack.c.l.b16 %v2564
    %v2861 = vunpack.c.h.b16 %v2564
    %v2862 = vunpack.c.l.b16 %v2565
    %v2863 = vunpack.c.h.b16 %v2565
    %v2864 = vunpack.c.l.b16 %v2566
    %v2865 = vunpack.c.h.b16 %v2566
    %v2866 = vunpack.c.l.b16 %v2567
    %v2867 = vunpack.c.h.b16 %v2567
    %v2868 = vunpack.c.l.b16 %v2568
    %v2869 = vunpack.c.h.b16 %v2568
    %v2870 = vunpack.c.l.b16 %v2569
    %v2871 = vunpack.c.h.b16 %v2569
    %v2872 = vunpack.c.l.b16 %v2570
    %v2873 = vunpack.c.h.b16 %v2570
    %v2874 = vunpack.c.l.b16 %v2571
    %v2875 = vunpack.c.h.b16 %v2571
    %v2876 = vunpack.c.l.b16 %v2572
    %v2877 = vunpack.c.h.b16 %v2572
    %v2878 = vunpack.c.l.b16 %v2573
    %v2879 = vunpack.c.h.b16 %v2573
    %v2880 = vunpack.c.l.b16 %v2574
    %v2881 = vunpack.c.h.b16 %v2574
    %v2882 = vunpack.c.l.b16 %v2575
    %v2883 = vunpack.c.h.b16 %v2575
    %v2884 = vunpack.c.l.b16 %v2576
    %v2885 = vunpack.c.h.b16 %v2576
    %v2886 = vunpack.c.l.b16 %v2577
    %v2887 = vunpack.c.h.b16 %v2577
    %v2888 = vunpack.c.l.b16 %v2578
    %v2889 = vunpack.c.h.b16 %v2578
    %v2890 = vunpack.c.l.b16 %v2579
    %v2891 = vunpack.c.h.b16 %v2579
    %v2892 = vunpack.c.l.b16 %v2580
    %v2893 = vunpack.c.h.b16 %v2580
    %v2894 = vunpack.c.l.b16 %v2581
    %v2895 = vunpack.c.h.b16 %v2581
    %v2896 = vunpack.c.l.b16 %v2582
    %v2897 = vunpack.c.h.b16 %v2582
    %v2898 = vunpack.c.l.b16 %v2583
    %v2899 = vunpack.c.h.b16 %v2583
    %v2900 = vunpack.c.l.b16 %v2584
    %v2901 = vunpack.c.h.b16 %v2584
    %v2902 = vunpack.c.l.b16 %v2585
    %v2903 = vunpack.c.h.b16 %v2585
    %v2904 = vunpack.c.l.b16 %v2586
    %v2905 = vunpack.c.h.b16 %v2586
    %v2906 = vunpack.c.l.b16 %v2587
    %v2907 = vunpack.c.h.b16 %v2587
    %v2908 = vunpack.c.l.b16 %v2588
    %v2909 = vunpack.c.h.b16 %v2588
    %v2910 = vunpack.c.l.b16 %v2589
    %v2911 = vunpack.c.h.b16 %v2589
    %v2912 = vunpack.c.l.b16 %v2590
    %v2913 = vunpack.c.h.b16 %v2590
    %v2914 = vunpack.c.l.b16 %v2591
    %v2915 = vunpack.c.h.b16 %v2591
    %v2916 = vpack.c.b16 %v2764, %v2756
    %v2917 = vpack.c.b16 %v2765, %v2757
    %v2918 = vpack.c.b16 %v2766, %v2758
    %v2919 = vpack.c.b16 %v2767, %v2759
    %v2920 = vpack.c.b16 %v2768, %v2760
    %v2921 = vpack.c.b16 %v2769, %v2761
    %v2922 = vpack.c.b16 %v2770, %v2762
    %v2923 = vpack.c.b16 %v2771, %v2763
    %v2924 = vpack.c.b16 %v2780, %v2772
    %v2925 = vpack.c.b16 %v2781, %v2773
    %v2926 = vpack.c.b16 %v2782, %v2774
    %v2927 = vpack.c.b16 %v2783, %v2775
    %v2928 = vpack.c.b16 %v2784, %v2776
    %v2929 = vpack.c.b16 %v2785, %v2777
    %v2930 = vpack.c.b16 %v2786, %v2778
    %v2931 = vpack.c.b16 %v2787, %v2779
    %v2932 = vpack.c.b16 %v2796, %v2788
    %v2933 = vpack.c.b16 %v2797, %v2789
    %v2934 = vpack.c.b16 %v2798, %v2790
    %v2935 = vpack.c.b16 %v2799, %v2791
    %v2936 = vpack.c.b16 %v2800, %v2792
    %v2937 = vpack.c.b16 %v2801, %v2793
    %v2938 = vpack.c.b16 %v2802, %v2794
    %v2939 = vpack.c.b16 %v2803, %v2795
    %v2940 = vpack.c.b16 %v2812, %v2804
    %v2941 = vpack.c.b16 %v2813, %v2805
    %v2942 = vpack.c.b16 %v2814, %v2806
    %v2943 = vpack.c.b16 %v2815, %v2807
    %v2944 = vpack.c.b16 %v2816, %v2808
    %v2945 = vpack.c.b16 %v2817, %v2809
    %v2946 = vpack.c.b16 %v2818, %v2810
    %v2947 = vpack.c.b16 %v2819, %v2811
    %v2948 = vpack.c.b16 %v2828, %v2820
    %v2949 = vpack.c.b16 %v2829, %v2821
    %v2950 = vpack.c.b16 %v2830, %v2822
    %v2951 = vpack.c.b16 %v2831, %v2823
    %v2952 = vpack.c.b16 %v2832, %v2824
    %v2953 = vpack.c.b16 %v2833, %v2825
    %v2954 = vpack.c.b16 %v2834, %v2826
    %v2955 = vpack.c.b16 %v2835, %v2827
    %v2956 = vpack.c.b16 %v2844, %v2836
    %v2957 = vpack.c.b16 %v2845, %v2837
    %v2958 = vpack.c.b16 %v2846, %v2838
    %v2959 = vpack.c.b16 %v2847, %v2839
    %v2960 = vpack.c.b16 %v2848, %v2840
    %v2961 = vpack.c.b16 %v2849, %v2841
    %v2962 = vpack.c.b16 %v2850, %v2842
    %v2963 = vpack.c.b16 %v2851, %v2843
    %v2964 = vpack.c.b16 %v2860, %v2852
    %v2965 = vpack.c.b16 %v2861, %v2853
    %v2966 = vpack.c.b16 %v2862, %v2854
    %v2967 = vpack.c.b16 %v2863, %v2855
    %v2968 = vpack.c.b16 %v2864, %v2856
    %v2969 = vpack.c.b16 %v2865, %v2857
    %v2970 = vpack.c.b16 %v2866, %v2858
    %v2971 = vpack.c.b16 %v2867, %v2859
    %v2972 = vpack.c.b16 %v2876, %v2868
    %v2973 = vpack.c.b16 %v2877, %v2869
    %v2974 = vpack.c.b16 %v2878, %v2870
    %v2975 = vpack.c.b16 %v2879, %v2871
    %v2976 = vpack.c.b16 %v2880, %v2872
    %v2977 = vpack.c.b16 %v2881, %v2873
    %v2978 = vpack.c.b16 %v2882, %v2874
    %v2979 = vpack.c.b16 %v2883, %v2875
    %v2980 = vpack.c.b16 %v2892, %v2884
    %v2981 = vpack.c.b16 %v2893, %v2885
    %v2982 = vpack.c.b16 %v2894, %v2886
    %v2983 = vpack.c.b16 %v2895, %v2887
    %v2984 = vpack.c.b16 %v2896, %v2888
    %v2985 = vpack.c.b16 %v2897, %v2889
    %v2986 = vpack.c.b16 %v2898, %v2890
    %v2987 = vpack.c.b16 %v2899, %v2891
    %v2988 = vpack.c.b16 %v2908, %v2900
    %v2989 = vpack.c.b16 %v2909, %v2901
    %v2990 = vpack.c.b16 %v2910, %v2902
    %v2991 = vpack.c.b16 %v2911, %v2903
    %v2992 = vpack.c.b16 %v2912, %v2904
    %v2993 = vpack.c.b16 %v2913, %v2905
    %v2994 = vpack.c.b16 %v2914, %v2906
    %v2995 = vpack.c.b16 %v2915, %v2907
    %vm3076 = vcmask 261120
    %v3078 = vsel %vm3076, %v2665, 0
    %v3081 = vsel %vm3076, %v2667, 0
    %v3084 = vsel %vm3076, %v2669, 0
    %v3087 = vsel %vm3076, %v2671, 0
    %3089 = vmatprep.subr.bf16.mxu0 %v2973
    %3090 = vmatpush1.bf16.msra.mxu0 %v2972
    %3091 = vmatprep.subr.bf16.mxu0 %v2965
    %3092 = vmatpush1.bf16.msra.mxu0 %v2964
    %3093 = vmatprep.subr.bf16.mxu0 %v2957
    %3094 = vmatpush1.bf16.msra.mxu0 %v2956
    %3095 = vmatprep.subr.bf16.mxu0 %v2949
    %3096 = vmatpush1.bf16.msra.mxu0 %v2948
    %3097 = vmatprep.subr.bf16.mxu0 %v2941
    %3098 = vmatpush1.bf16.msra.mxu0 %v2940
    %3099 = vmatprep.subr.bf16.mxu0 %v2933
    %3100 = vmatpush1.bf16.msra.mxu0 %v2932
    %3101 = vmatprep.subr.bf16.mxu0 %v2925
    %3102 = vmatpush1.bf16.msra.mxu0 %v2924
    %3103 = vmatprep.subr.bf16.mxu0 %v2917
    %3104 = vmatpush1.bf16.msra.mxu0 %v2916
    %3105 = vmatprep.subr.bf16.mxu0 0
    %3106 = vmatpush2.bf16.msra.mxu0 0
    %3107 = vmatprep.subr.bf16.mxu0 0
    %3108 = vmatpush2.bf16.msra.mxu0 0
    %3109 = vmatprep.subr.bf16.mxu0 0
    %3110 = vmatpush2.bf16.msra.mxu0 0
    %3111 = vmatprep.subr.bf16.mxu0 0
    %3112 = vmatpush2.bf16.msra.mxu0 0
    %3113 = vmatprep.subr.bf16.mxu0 0
    %3114 = vmatpush2.bf16.msra.mxu0 0
    %3115 = vmatprep.subr.bf16.mxu0 0
    %3116 = vmatpush2.bf16.msra.mxu0 0
    %3117 = vmatprep.subr.bf16.mxu0 %v2989
    %3118 = vmatpush2.bf16.msra.mxu0 %v2988
    %3119 = vmatprep.subr.bf16.mxu0 %v2981
    %3120 = vmatpush2.bf16.msra.mxu0 %v2980
    %3121 = vmatprep.mubr.bf16.mxu0 %v3078
    %3122 = vmatmul.mubr.bf16.gmra.mxu0 %v2664
    %v3123 = vpop.f32.mrf.mxu0
    %v3124 = vadd.f32 %v2603, %v3123
    %v3125 = vpop.f32.mrf.mxu0
    %v3126 = vadd.f32 %v2603, %v3125
    %v3127 = vpop.f32.mrf.mxu0
    %v3128 = vadd.f32 %v2608, %v3127
    %v3129 = vpop.f32.mrf.mxu0
    %v3130 = vadd.f32 %v2608, %v3129
    %3131 = vmatprep.mubr.bf16.mxu0 %v3081
    %3132 = vmatmul.mubr.bf16.gmra.mxu0 %v2666
    %v3133 = vpop.f32.mrf.mxu0
    %v3134 = vadd.f32 %v2613, %v3133
    %v3135 = vpop.f32.mrf.mxu0
    %v3136 = vadd.f32 %v2613, %v3135
    %v3137 = vpop.f32.mrf.mxu0
    %v3138 = vadd.f32 %v2618, %v3137
    %v3139 = vpop.f32.mrf.mxu0
    %v3140 = vadd.f32 %v2618, %v3139
    %3141 = vmatprep.mubr.bf16.mxu0 %v3084
    %3142 = vmatmul.mubr.bf16.gmra.mxu0 %v2668
    %v3143 = vpop.f32.mrf.mxu0
    %v3144 = vadd.f32 %v2623, %v3143
    %v3145 = vpop.f32.mrf.mxu0
    %v3146 = vadd.f32 %v2623, %v3145
    %v3147 = vpop.f32.mrf.mxu0
    %v3148 = vadd.f32 %v2628, %v3147
    %v3149 = vpop.f32.mrf.mxu0
    %v3150 = vadd.f32 %v2628, %v3149
    %3151 = vmatprep.mubr.bf16.mxu0 %v3087
    %3152 = vmatmul.mubr.bf16.gmra.mxu0 %v2670
    %v3153 = vpop.f32.mrf.mxu0
    %v3154 = vadd.f32 %v2633, %v3153
    %v3155 = vpop.f32.mrf.mxu0
    %v3156 = vadd.f32 %v2633, %v3155
    %v3157 = vpop.f32.mrf.mxu0
    %v3158 = vadd.f32 %v2638, %v3157
    %v3159 = vpop.f32.mrf.mxu0
    %v3160 = vadd.f32 %v2638, %v3159
    %3161 = vdwg.mxu0
    %3162 = vmatprep.subr.bf16.mxu0 %v2975
    %3163 = vmatpush1.bf16.msra.mxu0 %v2974
    %3164 = vmatprep.subr.bf16.mxu0 %v2967
    %3165 = vmatpush1.bf16.msra.mxu0 %v2966
    %3166 = vmatprep.subr.bf16.mxu0 %v2959
    %3167 = vmatpush1.bf16.msra.mxu0 %v2958
    %3168 = vmatprep.subr.bf16.mxu0 %v2951
    %3169 = vmatpush1.bf16.msra.mxu0 %v2950
    %3170 = vmatprep.subr.bf16.mxu0 %v2943
    %3171 = vmatpush1.bf16.msra.mxu0 %v2942
    %3172 = vmatprep.subr.bf16.mxu0 %v2935
    %3173 = vmatpush1.bf16.msra.mxu0 %v2934
    %3174 = vmatprep.subr.bf16.mxu0 %v2927
    %3175 = vmatpush1.bf16.msra.mxu0 %v2926
    %3176 = vmatprep.subr.bf16.mxu0 %v2919
    %3177 = vmatpush1.bf16.msra.mxu0 %v2918
    %3178 = vmatprep.subr.bf16.mxu0 0
    %3179 = vmatpush2.bf16.msra.mxu0 0
    %3180 = vmatprep.subr.bf16.mxu0 0
    %3181 = vmatpush2.bf16.msra.mxu0 0
    %3182 = vmatprep.subr.bf16.mxu0 0
    %3183 = vmatpush2.bf16.msra.mxu0 0
    %3184 = vmatprep.subr.bf16.mxu0 0
    %3185 = vmatpush2.bf16.msra.mxu0 0
    %3186 = vmatprep.subr.bf16.mxu0 0
    %3187 = vmatpush2.bf16.msra.mxu0 0
    %3188 = vmatprep.subr.bf16.mxu0 0
    %3189 = vmatpush2.bf16.msra.mxu0 0
    %3190 = vmatprep.subr.bf16.mxu0 %v2991
    %3191 = vmatpush2.bf16.msra.mxu0 %v2990
    %3192 = vmatprep.subr.bf16.mxu0 %v2983
    %3193 = vmatpush2.bf16.msra.mxu0 %v2982
    %3194 = vmatprep.mubr.bf16.mxu0 %v3078
    %3195 = vmatmul.mubr.bf16.gmra.mxu0 %v2664
    %v3196 = vpop.f32.mrf.mxu0
    %v3197 = vadd.f32 %v2603, %v3196
    %v3198 = vpop.f32.mrf.mxu0
    %v3199 = vadd.f32 %v2603, %v3198
    %v3200 = vpop.f32.mrf.mxu0
    %v3201 = vadd.f32 %v2608, %v3200
    %v3202 = vpop.f32.mrf.mxu0
    %v3203 = vadd.f32 %v2608, %v3202
    %3204 = vmatprep.mubr.bf16.mxu0 %v3081
    %3205 = vmatmul.mubr.bf16.gmra.mxu0 %v2666
    %v3206 = vpop.f32.mrf.mxu0
    %v3207 = vadd.f32 %v2613, %v3206
    %v3208 = vpop.f32.mrf.mxu0
    %v3209 = vadd.f32 %v2613, %v3208
    %v3210 = vpop.f32.mrf.mxu0
    %v3211 = vadd.f32 %v2618, %v3210
    %v3212 = vpop.f32.mrf.mxu0
    %v3213 = vadd.f32 %v2618, %v3212
    %3214 = vmatprep.mubr.bf16.mxu0 %v3084
    %3215 = vmatmul.mubr.bf16.gmra.mxu0 %v2668
    %v3216 = vpop.f32.mrf.mxu0
    %v3217 = vadd.f32 %v2623, %v3216
    %v3218 = vpop.f32.mrf.mxu0
    %v3219 = vadd.f32 %v2623, %v3218
    %v3220 = vpop.f32.mrf.mxu0
    %v3221 = vadd.f32 %v2628, %v3220
    %v3222 = vpop.f32.mrf.mxu0
    %v3223 = vadd.f32 %v2628, %v3222
    %3224 = vmatprep.mubr.bf16.mxu0 %v3087
    %3225 = vmatmul.mubr.bf16.gmra.mxu0 %v2670
    %v3226 = vpop.f32.mrf.mxu0
    %v3227 = vadd.f32 %v2633, %v3226
    %v3228 = vpop.f32.mrf.mxu0
    %v3229 = vadd.f32 %v2633, %v3228
    %v3230 = vpop.f32.mrf.mxu0
    %v3231 = vadd.f32 %v2638, %v3230
    %v3232 = vpop.f32.mrf.mxu0
    %v3233 = vadd.f32 %v2638, %v3232
    %3234 = vdwg.mxu0
    %3235 = vmatprep.subr.bf16.mxu0 %v2977
    %3236 = vmatpush1.bf16.msra.mxu0 %v2976
    %3237 = vmatprep.subr.bf16.mxu0 %v2969
    %3238 = vmatpush1.bf16.msra.mxu0 %v2968
    %3239 = vmatprep.subr.bf16.mxu0 %v2961
    %3240 = vmatpush1.bf16.msra.mxu0 %v2960
    %3241 = vmatprep.subr.bf16.mxu0 %v2953
    %3242 = vmatpush1.bf16.msra.mxu0 %v2952
    %3243 = vmatprep.subr.bf16.mxu0 %v2945
    %3244 = vmatpush1.bf16.msra.mxu0 %v2944
    %3245 = vmatprep.subr.bf16.mxu0 %v2937
    %3246 = vmatpush1.bf16.msra.mxu0 %v2936
    %3247 = vmatprep.subr.bf16.mxu0 %v2929
    %3248 = vmatpush1.bf16.msra.mxu0 %v2928
    %3249 = vmatprep.subr.bf16.mxu0 %v2921
    %3250 = vmatpush1.bf16.msra.mxu0 %v2920
    %3251 = vmatprep.subr.bf16.mxu0 0
    %3252 = vmatpush2.bf16.msra.mxu0 0
    %3253 = vmatprep.subr.bf16.mxu0 0
    %3254 = vmatpush2.bf16.msra.mxu0 0
    %3255 = vmatprep.subr.bf16.mxu0 0
    %3256 = vmatpush2.bf16.msra.mxu0 0
    %3257 = vmatprep.subr.bf16.mxu0 0
    %3258 = vmatpush2.bf16.msra.mxu0 0
    %3259 = vmatprep.subr.bf16.mxu0 0
    %3260 = vmatpush2.bf16.msra.mxu0 0
    %3261 = vmatprep.subr.bf16.mxu0 0
    %3262 = vmatpush2.bf16.msra.mxu0 0
    %3263 = vmatprep.subr.bf16.mxu0 %v2993
    %3264 = vmatpush2.bf16.msra.mxu0 %v2992
    %3265 = vmatprep.subr.bf16.mxu0 %v2985
    %3266 = vmatpush2.bf16.msra.mxu0 %v2984
    %3267 = vmatprep.mubr.bf16.mxu0 %v3078
    %3268 = vmatmul.mubr.bf16.gmra.mxu0 %v2664
    %v3269 = vpop.f32.mrf.mxu0
    %v3270 = vadd.f32 %v2603, %v3269
    %v3271 = vpop.f32.mrf.mxu0
    %v3272 = vadd.f32 %v2603, %v3271
    %v3273 = vpop.f32.mrf.mxu0
    %v3274 = vadd.f32 %v2608, %v3273
    %v3275 = vpop.f32.mrf.mxu0
    %v3276 = vadd.f32 %v2608, %v3275
    %3277 = vmatprep.mubr.bf16.mxu0 %v3081
    %3278 = vmatmul.mubr.bf16.gmra.mxu0 %v2666
    %v3279 = vpop.f32.mrf.mxu0
    %v3280 = vadd.f32 %v2613, %v3279
    %v3281 = vpop.f32.mrf.mxu0
    %v3282 = vadd.f32 %v2613, %v3281
    %v3283 = vpop.f32.mrf.mxu0
    %v3284 = vadd.f32 %v2618, %v3283
    %v3285 = vpop.f32.mrf.mxu0
    %v3286 = vadd.f32 %v2618, %v3285
    %3287 = vmatprep.mubr.bf16.mxu0 %v3084
    %3288 = vmatmul.mubr.bf16.gmra.mxu0 %v2668
    %v3289 = vpop.f32.mrf.mxu0
    %v3290 = vadd.f32 %v2623, %v3289
    %v3291 = vpop.f32.mrf.mxu0
    %v3292 = vadd.f32 %v2623, %v3291
    %v3293 = vpop.f32.mrf.mxu0
    %v3294 = vadd.f32 %v2628, %v3293
    %v3295 = vpop.f32.mrf.mxu0
    %v3296 = vadd.f32 %v2628, %v3295
    %3297 = vmatprep.mubr.bf16.mxu0 %v3087
    %3298 = vmatmul.mubr.bf16.gmra.mxu0 %v2670
    %v3299 = vpop.f32.mrf.mxu0
    %v3300 = vadd.f32 %v2633, %v3299
    %v3301 = vpop.f32.mrf.mxu0
    %v3302 = vadd.f32 %v2633, %v3301
    %v3303 = vpop.f32.mrf.mxu0
    %v3304 = vadd.f32 %v2638, %v3303
    %v3305 = vpop.f32.mrf.mxu0
    %v3306 = vadd.f32 %v2638, %v3305
    %3307 = vdwg.mxu0
    %3308 = vmatprep.subr.bf16.mxu0 %v2979
    %3309 = vmatpush1.bf16.msra.mxu0 %v2978
    %3310 = vmatprep.subr.bf16.mxu0 %v2971
    %3311 = vmatpush1.bf16.msra.mxu0 %v2970
    %3312 = vmatprep.subr.bf16.mxu0 %v2963
    %3313 = vmatpush1.bf16.msra.mxu0 %v2962
    %3314 = vmatprep.subr.bf16.mxu0 %v2955
    %3315 = vmatpush1.bf16.msra.mxu0 %v2954
    %3316 = vmatprep.subr.bf16.mxu0 %v2947
    %3317 = vmatpush1.bf16.msra.mxu0 %v2946
    %3318 = vmatprep.subr.bf16.mxu0 %v2939
    %3319 = vmatpush1.bf16.msra.mxu0 %v2938
    %3320 = vmatprep.subr.bf16.mxu0 %v2931
    %3321 = vmatpush1.bf16.msra.mxu0 %v2930
    %3322 = vmatprep.subr.bf16.mxu0 %v2923
    %3323 = vmatpush1.bf16.msra.mxu0 %v2922
    %3324 = vmatprep.subr.bf16.mxu0 0
    %3325 = vmatpush2.bf16.msra.mxu0 0
    %3326 = vmatprep.subr.bf16.mxu0 0
    %3327 = vmatpush2.bf16.msra.mxu0 0
    %3328 = vmatprep.subr.bf16.mxu0 0
    %3329 = vmatpush2.bf16.msra.mxu0 0
    %3330 = vmatprep.subr.bf16.mxu0 0
    %3331 = vmatpush2.bf16.msra.mxu0 0
    %3332 = vmatprep.subr.bf16.mxu0 0
    %3333 = vmatpush2.bf16.msra.mxu0 0
    %3334 = vmatprep.subr.bf16.mxu0 0
    %3335 = vmatpush2.bf16.msra.mxu0 0
    %3336 = vmatprep.subr.bf16.mxu0 %v2995
    %3337 = vmatpush2.bf16.msra.mxu0 %v2994
    %3338 = vmatprep.subr.bf16.mxu0 %v2987
    %3339 = vmatpush2.bf16.msra.mxu0 %v2986
    %3340 = vmatprep.mubr.bf16.mxu0 %v3078
    %3341 = vmatmul.mubr.bf16.gmra.mxu0 %v2664
    %v3342 = vpop.f32.mrf.mxu0
    %v3343 = vadd.f32 %v2603, %v3342
    %v3344 = vpop.f32.mrf.mxu0
    %v3345 = vadd.f32 %v2603, %v3344
    %v3346 = vpop.f32.mrf.mxu0
    %v3347 = vadd.f32 %v2608, %v3346
    %v3348 = vpop.f32.mrf.mxu0
    %v3349 = vadd.f32 %v2608, %v3348
    %3350 = vmatprep.mubr.bf16.mxu0 %v3081
    %3351 = vmatmul.mubr.bf16.gmra.mxu0 %v2666
    %v3352 = vpop.f32.mrf.mxu0
    %v3353 = vadd.f32 %v2613, %v3352
    %v3354 = vpop.f32.mrf.mxu0
    %v3355 = vadd.f32 %v2613, %v3354
    %v3356 = vpop.f32.mrf.mxu0
    %v3357 = vadd.f32 %v2618, %v3356
    %v3358 = vpop.f32.mrf.mxu0
    %v3359 = vadd.f32 %v2618, %v3358
    %3360 = vmatprep.mubr.bf16.mxu0 %v3084
    %3361 = vmatmul.mubr.bf16.gmra.mxu0 %v2668
    %v3362 = vpop.f32.mrf.mxu0
    %v3363 = vadd.f32 %v2623, %v3362
    %v3364 = vpop.f32.mrf.mxu0
    %v3365 = vadd.f32 %v2623, %v3364
    %v3366 = vpop.f32.mrf.mxu0
    %v3367 = vadd.f32 %v2628, %v3366
    %v3368 = vpop.f32.mrf.mxu0
    %v3369 = vadd.f32 %v2628, %v3368
    %3370 = vmatprep.mubr.bf16.mxu0 %v3087
    %3371 = vmatmul.mubr.bf16.gmra.mxu0 %v2670
    %v3372 = vpop.f32.mrf.mxu0
    %v3373 = vadd.f32 %v2633, %v3372
    %v3374 = vpop.f32.mrf.mxu0
    %v3375 = vadd.f32 %v2633, %v3374
    %v3376 = vpop.f32.mrf.mxu0
    %v3377 = vadd.f32 %v2638, %v3376
    %v3378 = vpop.f32.mrf.mxu0
    %v3379 = vadd.f32 %v2638, %v3378
    %3380 = vdwg.mxu0
    %v3381 = vmax.f32 %v3124, 0.0
    %v3382 = vmax.f32 %v3126, 0.0
    %v3383 = vmax.f32 %v3197, 0.0
    %v3384 = vmax.f32 %v3199, 0.0
    %v3385 = vmax.f32 %v3270, 0.0
    %v3386 = vmax.f32 %v3272, 0.0
    %v3387 = vmax.f32 %v3343, 0.0
    %v3388 = vmax.f32 %v3345, 0.0
    %v3389 = vmax.f32 %v3128, 0.0
    %v3390 = vmax.f32 %v3130, 0.0
    %v3391 = vmax.f32 %v3201, 0.0
    %v3392 = vmax.f32 %v3203, 0.0
    %v3393 = vmax.f32 %v3274, 0.0
    %v3394 = vmax.f32 %v3276, 0.0
    %v3395 = vmax.f32 %v3347, 0.0
    %v3396 = vmax.f32 %v3349, 0.0
    %v3397 = vmax.f32 %v3134, 0.0
    %v3398 = vmax.f32 %v3136, 0.0
    %v3399 = vmax.f32 %v3207, 0.0
    %v3400 = vmax.f32 %v3209, 0.0
    %v3401 = vmax.f32 %v3280, 0.0
    %v3402 = vmax.f32 %v3282, 0.0
    %v3403 = vmax.f32 %v3353, 0.0
    %v3404 = vmax.f32 %v3355, 0.0
    %v3405 = vmax.f32 %v3138, 0.0
    %v3406 = vmax.f32 %v3140, 0.0
    %v3407 = vmax.f32 %v3211, 0.0
    %v3408 = vmax.f32 %v3213, 0.0
    %v3409 = vmax.f32 %v3284, 0.0
    %v3410 = vmax.f32 %v3286, 0.0
    %v3411 = vmax.f32 %v3357, 0.0
    %v3412 = vmax.f32 %v3359, 0.0
    %v3413 = vmax.f32 %v3144, 0.0
    %v3414 = vmax.f32 %v3146, 0.0
    %v3415 = vmax.f32 %v3217, 0.0
    %v3416 = vmax.f32 %v3219, 0.0
    %v3417 = vmax.f32 %v3290, 0.0
    %v3418 = vmax.f32 %v3292, 0.0
    %v3419 = vmax.f32 %v3363, 0.0
    %v3420 = vmax.f32 %v3365, 0.0
    %v3421 = vmax.f32 %v3148, 0.0
    %v3422 = vmax.f32 %v3150, 0.0
    %v3423 = vmax.f32 %v3221, 0.0
    %v3424 = vmax.f32 %v3223, 0.0
    %v3425 = vmax.f32 %v3294, 0.0
    %v3426 = vmax.f32 %v3296, 0.0
    %v3427 = vmax.f32 %v3367, 0.0
    %v3428 = vmax.f32 %v3369, 0.0
    %v3429 = vmax.f32 %v3154, 0.0
    %v3430 = vmax.f32 %v3156, 0.0
    %v3431 = vmax.f32 %v3227, 0.0
    %v3432 = vmax.f32 %v3229, 0.0
    %v3433 = vmax.f32 %v3300, 0.0
    %v3434 = vmax.f32 %v3302, 0.0
    %v3435 = vmax.f32 %v3373, 0.0
    %v3436 = vmax.f32 %v3375, 0.0
    %v3437 = vmax.f32 %v3158, 0.0
    %v3438 = vmax.f32 %v3160, 0.0
    %v3439 = vmax.f32 %v3231, 0.0
    %v3440 = vmax.f32 %v3233, 0.0
    %v3441 = vmax.f32 %v3304, 0.0
    %v3442 = vmax.f32 %v3306, 0.0
    %v3443 = vmax.f32 %v3377, 0.0
    %v3444 = vmax.f32 %v3379, 0.0
    %v3445 = vld [vmem:[%s8] sm:$0xff]
    %v3446 = vld [vmem:[%s8 + $0x8] sm:$0xff]
    %v3447 = vld [vmem:[%s8 + $0x10] sm:$0xff]
    %v3448 = vld [vmem:[%s8 + $0x18] sm:$0xff]
    %v3449 = vld [vmem:[%s8 + $0x20] sm:$0xff]
    %v3450 = vld [vmem:[%s8 + $0x28] sm:$0xff]
    %v3451 = vld [vmem:[%s8 + $0x30] sm:$0xff]
    %v3452 = vld [vmem:[%s8 + $0x38] sm:$0xff]
    %3454 = vset.pattern.permute.xlu0 0
    %3455 = vperm.xlu0 %3454, %v3445
    %v3456 = vpop.permute.xlu0 %3455
    %3459 = vset.pattern.permute.xlu0 0
    %3460 = vperm.xlu0 %3459, %v3446
    %v3461 = vpop.permute.xlu0 %3460
    %3464 = vset.pattern.permute.xlu0 0
    %3465 = vperm.xlu0 %3464, %v3447
    %v3466 = vpop.permute.xlu0 %3465
    %3469 = vset.pattern.permute.xlu0 0
    %3470 = vperm.xlu0 %3469, %v3448
    %v3471 = vpop.permute.xlu0 %3470
    %3474 = vset.pattern.permute.xlu0 0
    %3475 = vperm.xlu0 %3474, %v3449
    %v3476 = vpop.permute.xlu0 %3475
    %3479 = vset.pattern.permute.xlu0 0
    %3480 = vperm.xlu0 %3479, %v3450
    %v3481 = vpop.permute.xlu0 %3480
    %3484 = vset.pattern.permute.xlu0 0
    %3485 = vperm.xlu0 %3484, %v3451
    %v3486 = vpop.permute.xlu0 %3485
    %3489 = vset.pattern.permute.xlu0 0
    %3490 = vperm.xlu0 %3489, %v3452
    %v3491 = vpop.permute.xlu0 %3490
    %v3493 = vmul.f32 %v3381, %v3456
    %v3494 = vmul.f32 %v3382, %v3456
    %v3495 = vmul.f32 %v3383, %v3456
    %v3496 = vmul.f32 %v3384, %v3456
    %v3497 = vmul.f32 %v3385, %v3456
    %v3498 = vmul.f32 %v3386, %v3456
    %v3499 = vmul.f32 %v3387, %v3456
    %v3500 = vmul.f32 %v3388, %v3456
    %v3501 = vmul.f32 %v3389, %v3461
    %v3502 = vmul.f32 %v3390, %v3461
    %v3503 = vmul.f32 %v3391, %v3461
    %v3504 = vmul.f32 %v3392, %v3461
    %v3505 = vmul.f32 %v3393, %v3461
    %v3506 = vmul.f32 %v3394, %v3461
    %v3507 = vmul.f32 %v3395, %v3461
    %v3508 = vmul.f32 %v3396, %v3461
    %v3509 = vmul.f32 %v3397, %v3466
    %v3510 = vmul.f32 %v3398, %v3466
    %v3511 = vmul.f32 %v3399, %v3466
    %v3512 = vmul.f32 %v3400, %v3466
    %v3513 = vmul.f32 %v3401, %v3466
    %v3514 = vmul.f32 %v3402, %v3466
    %v3515 = vmul.f32 %v3403, %v3466
    %v3516 = vmul.f32 %v3404, %v3466
    %v3517 = vmul.f32 %v3405, %v3471
    %v3518 = vmul.f32 %v3406, %v3471
    %v3519 = vmul.f32 %v3407, %v3471
    %v3520 = vmul.f32 %v3408, %v3471
    %v3521 = vmul.f32 %v3409, %v3471
    %v3522 = vmul.f32 %v3410, %v3471
    %v3523 = vmul.f32 %v3411, %v3471
    %v3524 = vmul.f32 %v3412, %v3471
    %v3525 = vmul.f32 %v3413, %v3476
    %v3526 = vmul.f32 %v3414, %v3476
    %v3527 = vmul.f32 %v3415, %v3476
    %v3528 = vmul.f32 %v3416, %v3476
    %v3529 = vmul.f32 %v3417, %v3476
    %v3530 = vmul.f32 %v3418, %v3476
    %v3531 = vmul.f32 %v3419, %v3476
    %v3532 = vmul.f32 %v3420, %v3476
    %v3533 = vmul.f32 %v3421, %v3481
    %v3534 = vmul.f32 %v3422, %v3481
    %v3535 = vmul.f32 %v3423, %v3481
    %v3536 = vmul.f32 %v3424, %v3481
    %v3537 = vmul.f32 %v3425, %v3481
    %v3538 = vmul.f32 %v3426, %v3481
    %v3539 = vmul.f32 %v3427, %v3481
    %v3540 = vmul.f32 %v3428, %v3481
    %v3541 = vmul.f32 %v3429, %v3486
    %v3542 = vmul.f32 %v3430, %v3486
    %v3543 = vmul.f32 %v3431, %v3486
    %v3544 = vmul.f32 %v3432, %v3486
    %v3545 = vmul.f32 %v3433, %v3486
    %v3546 = vmul.f32 %v3434, %v3486
    %v3547 = vmul.f32 %v3435, %v3486
    %v3548 = vmul.f32 %v3436, %v3486
    %v3549 = vmul.f32 %v3437, %v3491
    %v3550 = vmul.f32 %v3438, %v3491
    %v3551 = vmul.f32 %v3439, %v3491
    %v3552 = vmul.f32 %v3440, %v3491
    %v3553 = vmul.f32 %v3441, %v3491
    %v3554 = vmul.f32 %v3442, %v3491
    %v3555 = vmul.f32 %v3443, %v3491
    %v3556 = vmul.f32 %v3444, %v3491
    %v3557 = vld [vmem:[%s9] sm:$0xff]
    %v3558 = vld [vmem:[%s9 + $0x8] sm:$0xff]
    %v3559 = vld [vmem:[%s9 + $0x10] sm:$0xff]
    %v3560 = vld [vmem:[%s9 + $0x18] sm:$0xff]
    %v3561 = vld [vmem:[%s9 + $0x20] sm:$0xff]
    %v3562 = vld [vmem:[%s9 + $0x28] sm:$0xff]
    %v3563 = vld [vmem:[%s9 + $0x30] sm:$0xff]
    %v3564 = vld [vmem:[%s9 + $0x38] sm:$0xff]
    %3566 = vset.pattern.permute.xlu0 0
    %3567 = vperm.xlu0 %3566, %v3557
    %v3568 = vpop.permute.xlu0 %3567
    %3571 = vset.pattern.permute.xlu0 0
    %3572 = vperm.xlu0 %3571, %v3558
    %v3573 = vpop.permute.xlu0 %3572
    %3576 = vset.pattern.permute.xlu0 0
    %3577 = vperm.xlu0 %3576, %v3559
    %v3578 = vpop.permute.xlu0 %3577
    %3581 = vset.pattern.permute.xlu0 0
    %3582 = vperm.xlu0 %3581, %v3560
    %v3583 = vpop.permute.xlu0 %3582
    %3586 = vset.pattern.permute.xlu0 0
    %3587 = vperm.xlu0 %3586, %v3561
    %v3588 = vpop.permute.xlu0 %3587
    %3591 = vset.pattern.permute.xlu0 0
    %3592 = vperm.xlu0 %3591, %v3562
    %v3593 = vpop.permute.xlu0 %3592
    %3596 = vset.pattern.permute.xlu0 0
    %3597 = vperm.xlu0 %3596, %v3563
    %v3598 = vpop.permute.xlu0 %3597
    %3601 = vset.pattern.permute.xlu0 0
    %3602 = vperm.xlu0 %3601, %v3564
    %v3603 = vpop.permute.xlu0 %3602
    %v3605 = vadd.f32 %v3493, %v3568
    %v3606 = vadd.f32 %v3494, %v3568
    %v3607 = vadd.f32 %v3495, %v3568
    %v3608 = vadd.f32 %v3496, %v3568
    %v3609 = vadd.f32 %v3497, %v3568
    %v3610 = vadd.f32 %v3498, %v3568
    %v3611 = vadd.f32 %v3499, %v3568
    %v3612 = vadd.f32 %v3500, %v3568
    %v3613 = vadd.f32 %v3501, %v3573
    %v3614 = vadd.f32 %v3502, %v3573
    %v3615 = vadd.f32 %v3503, %v3573
    %v3616 = vadd.f32 %v3504, %v3573
    %v3617 = vadd.f32 %v3505, %v3573
    %v3618 = vadd.f32 %v3506, %v3573
    %v3619 = vadd.f32 %v3507, %v3573
    %v3620 = vadd.f32 %v3508, %v3573
    %v3621 = vadd.f32 %v3509, %v3578
    %v3622 = vadd.f32 %v3510, %v3578
    %v3623 = vadd.f32 %v3511, %v3578
    %v3624 = vadd.f32 %v3512, %v3578
    %v3625 = vadd.f32 %v3513, %v3578
    %v3626 = vadd.f32 %v3514, %v3578
    %v3627 = vadd.f32 %v3515, %v3578
    %v3628 = vadd.f32 %v3516, %v3578
    %v3629 = vadd.f32 %v3517, %v3583
    %v3630 = vadd.f32 %v3518, %v3583
    %v3631 = vadd.f32 %v3519, %v3583
    %v3632 = vadd.f32 %v3520, %v3583
    %v3633 = vadd.f32 %v3521, %v3583
    %v3634 = vadd.f32 %v3522, %v3583
    %v3635 = vadd.f32 %v3523, %v3583
    %v3636 = vadd.f32 %v3524, %v3583
    %v3637 = vadd.f32 %v3525, %v3588
    %v3638 = vadd.f32 %v3526, %v3588
    %v3639 = vadd.f32 %v3527, %v3588
    %v3640 = vadd.f32 %v3528, %v3588
    %v3641 = vadd.f32 %v3529, %v3588
    %v3642 = vadd.f32 %v3530, %v3588
    %v3643 = vadd.f32 %v3531, %v3588
    %v3644 = vadd.f32 %v3532, %v3588
    %v3645 = vadd.f32 %v3533, %v3593
    %v3646 = vadd.f32 %v3534, %v3593
    %v3647 = vadd.f32 %v3535, %v3593
    %v3648 = vadd.f32 %v3536, %v3593
    %v3649 = vadd.f32 %v3537, %v3593
    %v3650 = vadd.f32 %v3538, %v3593
    %v3651 = vadd.f32 %v3539, %v3593
    %v3652 = vadd.f32 %v3540, %v3593
    %v3653 = vadd.f32 %v3541, %v3598
    %v3654 = vadd.f32 %v3542, %v3598
    %v3655 = vadd.f32 %v3543, %v3598
    %v3656 = vadd.f32 %v3544, %v3598
    %v3657 = vadd.f32 %v3545, %v3598
    %v3658 = vadd.f32 %v3546, %v3598
    %v3659 = vadd.f32 %v3547, %v3598
    %v3660 = vadd.f32 %v3548, %v3598
    %v3661 = vadd.f32 %v3549, %v3603
    %v3662 = vadd.f32 %v3550, %v3603
    %v3663 = vadd.f32 %v3551, %v3603
    %v3664 = vadd.f32 %v3552, %v3603
    %v3665 = vadd.f32 %v3553, %v3603
    %v3666 = vadd.f32 %v3554, %v3603
    %v3667 = vadd.f32 %v3555, %v3603
    %v3668 = vadd.f32 %v3556, %v3603
    %v3669 = vsel %vm1491, %v3605, 0.0
    %v3670 = vsel %vm1492, %v3606, 0.0
    %v3671 = vsel %vm1493, %v3607, 0.0
    %v3672 = vsel %vm1494, %v3608, 0.0
    %v3673 = vsel %vm1495, %v3609, 0.0
    %v3674 = vsel %vm1496, %v3610, 0.0
    %v3675 = vsel %vm1497, %v3611, 0.0
    %v3676 = vsel %vm1498, %v3612, 0.0
    %v3677 = vsel %vm1491, %v3613, 0.0
    %v3678 = vsel %vm1492, %v3614, 0.0
    %v3679 = vsel %vm1493, %v3615, 0.0
    %v3680 = vsel %vm1494, %v3616, 0.0
    %v3681 = vsel %vm1495, %v3617, 0.0
    %v3682 = vsel %vm1496, %v3618, 0.0
    %v3683 = vsel %vm1497, %v3619, 0.0
    %v3684 = vsel %vm1498, %v3620, 0.0
    %v3685 = vsel %vm1491, %v3621, 0.0
    %v3686 = vsel %vm1492, %v3622, 0.0
    %v3687 = vsel %vm1493, %v3623, 0.0
    %v3688 = vsel %vm1494, %v3624, 0.0
    %v3689 = vsel %vm1495, %v3625, 0.0
    %v3690 = vsel %vm1496, %v3626, 0.0
    %v3691 = vsel %vm1497, %v3627, 0.0
    %v3692 = vsel %vm1498, %v3628, 0.0
    %v3693 = vsel %vm1491, %v3629, 0.0
    %v3694 = vsel %vm1492, %v3630, 0.0
    %v3695 = vsel %vm1493, %v3631, 0.0
    %v3696 = vsel %vm1494, %v3632, 0.0
    %v3697 = vsel %vm1495, %v3633, 0.0
    %v3698 = vsel %vm1496, %v3634, 0.0
    %v3699 = vsel %vm1497, %v3635, 0.0
    %v3700 = vsel %vm1498, %v3636, 0.0
    %v3701 = vsel %vm1491, %v3637, 0.0
    %v3702 = vsel %vm1492, %v3638, 0.0
    %v3703 = vsel %vm1493, %v3639, 0.0
    %v3704 = vsel %vm1494, %v3640, 0.0
    %v3705 = vsel %vm1495, %v3641, 0.0
    %v3706 = vsel %vm1496, %v3642, 0.0
    %v3707 = vsel %vm1497, %v3643, 0.0
    %v3708 = vsel %vm1498, %v3644, 0.0
    %v3709 = vsel %vm1491, %v3645, 0.0
    %v3710 = vsel %vm1492, %v3646, 0.0
    %v3711 = vsel %vm1493, %v3647, 0.0
    %v3712 = vsel %vm1494, %v3648, 0.0
    %v3713 = vsel %vm1495, %v3649, 0.0
    %v3714 = vsel %vm1496, %v3650, 0.0
    %v3715 = vsel %vm1497, %v3651, 0.0
    %v3716 = vsel %vm1498, %v3652, 0.0
    %v3717 = vsel %vm1491, %v3653, 0.0
    %v3718 = vsel %vm1492, %v3654, 0.0
    %v3719 = vsel %vm1493, %v3655, 0.0
    %v3720 = vsel %vm1494, %v3656, 0.0
    %v3721 = vsel %vm1495, %v3657, 0.0
    %v3722 = vsel %vm1496, %v3658, 0.0
    %v3723 = vsel %vm1497, %v3659, 0.0
    %v3724 = vsel %vm1498, %v3660, 0.0
    %v3725 = vsel %vm1491, %v3661, 0.0
    %v3726 = vsel %vm1492, %v3662, 0.0
    %v3727 = vsel %vm1493, %v3663, 0.0
    %v3728 = vsel %vm1494, %v3664, 0.0
    %v3729 = vsel %vm1495, %v3665, 0.0
    %v3730 = vsel %vm1496, %v3666, 0.0
    %v3731 = vsel %vm1497, %v3667, 0.0
    %v3732 = vsel %vm1498, %v3668, 0.0
    %v3733 = vpack.c.bf16 %v3677, %v3669
    %v3734 = vpack.c.bf16 %v3678, %v3670
    %v3735 = vpack.c.bf16 %v3679, %v3671
    %v3736 = vpack.c.bf16 %v3680, %v3672
    %v3737 = vpack.c.bf16 %v3681, %v3673
    %v3738 = vpack.c.bf16 %v3682, %v3674
    %v3739 = vpack.c.bf16 %v3683, %v3675
    %v3740 = vpack.c.bf16 %v3684, %v3676
    %v3741 = vpack.c.bf16 %v3693, %v3685
    %v3742 = vpack.c.bf16 %v3694, %v3686
    %v3743 = vpack.c.bf16 %v3695, %v3687
    %v3744 = vpack.c.bf16 %v3696, %v3688
    %v3745 = vpack.c.bf16 %v3697, %v3689
    %v3746 = vpack.c.bf16 %v3698, %v3690
    %v3747 = vpack.c.bf16 %v3699, %v3691
    %v3748 = vpack.c.bf16 %v3700, %v3692
    %v3749 = vpack.c.bf16 %v3709, %v3701
    %v3750 = vpack.c.bf16 %v3710, %v3702
    %v3751 = vpack.c.bf16 %v3711, %v3703
    %v3752 = vpack.c.bf16 %v3712, %v3704
    %v3753 = vpack.c.bf16 %v3713, %v3705
    %v3754 = vpack.c.bf16 %v3714, %v3706
    %v3755 = vpack.c.bf16 %v3715, %v3707
    %v3756 = vpack.c.bf16 %v3716, %v3708
    %v3757 = vpack.c.bf16 %v3725, %v3717
    %v3758 = vpack.c.bf16 %v3726, %v3718
    %v3759 = vpack.c.bf16 %v3727, %v3719
    %v3760 = vpack.c.bf16 %v3728, %v3720
    %v3761 = vpack.c.bf16 %v3729, %v3721
    %v3762 = vpack.c.bf16 %v3730, %v3722
    %v3763 = vpack.c.bf16 %v3731, %v3723
    %v3764 = vpack.c.bf16 %v3732, %v3724
    %v3797 = vunpack.c.l.b16 %v3733
    %v3798 = vunpack.c.l.b16 %v3734
    %v3799 = vunpack.c.l.b16 %v3735
    %v3800 = vunpack.c.l.b16 %v3736
    %v3801 = vunpack.c.l.b16 %v3737
    %v3802 = vunpack.c.l.b16 %v3738
    %v3803 = vunpack.c.l.b16 %v3739
    %v3804 = vunpack.c.l.b16 %v3740
    %v3805 = vunpack.c.h.b16 %v3733
    %v3806 = vunpack.c.h.b16 %v3734
    %v3807 = vunpack.c.h.b16 %v3735
    %v3808 = vunpack.c.h.b16 %v3736
    %v3809 = vunpack.c.h.b16 %v3737
    %v3810 = vunpack.c.h.b16 %v3738
    %v3811 = vunpack.c.h.b16 %v3739
    %v3812 = vunpack.c.h.b16 %v3740
    %v3813 = vunpack.c.l.b16 %v3741
    %v3814 = vunpack.c.l.b16 %v3742
    %v3815 = vunpack.c.l.b16 %v3743
    %v3816 = vunpack.c.l.b16 %v3744
    %v3817 = vunpack.c.l.b16 %v3745
    %v3818 = vunpack.c.l.b16 %v3746
    %v3819 = vunpack.c.l.b16 %v3747
    %v3820 = vunpack.c.l.b16 %v3748
    %v3821 = vunpack.c.h.b16 %v3741
    %v3822 = vunpack.c.h.b16 %v3742
    %v3823 = vunpack.c.h.b16 %v3743
    %v3824 = vunpack.c.h.b16 %v3744
    %v3825 = vunpack.c.h.b16 %v3745
    %v3826 = vunpack.c.h.b16 %v3746
    %v3827 = vunpack.c.h.b16 %v3747
    %v3828 = vunpack.c.h.b16 %v3748
    %v3829 = vunpack.c.l.b16 %v3749
    %v3830 = vunpack.c.l.b16 %v3750
    %v3831 = vunpack.c.l.b16 %v3751
    %v3832 = vunpack.c.l.b16 %v3752
    %v3833 = vunpack.c.l.b16 %v3753
    %v3834 = vunpack.c.l.b16 %v3754
    %v3835 = vunpack.c.l.b16 %v3755
    %v3836 = vunpack.c.l.b16 %v3756
    %v3837 = vunpack.c.h.b16 %v3749
    %v3838 = vunpack.c.h.b16 %v3750
    %v3839 = vunpack.c.h.b16 %v3751
    %v3840 = vunpack.c.h.b16 %v3752
    %v3841 = vunpack.c.h.b16 %v3753
    %v3842 = vunpack.c.h.b16 %v3754
    %v3843 = vunpack.c.h.b16 %v3755
    %v3844 = vunpack.c.h.b16 %v3756
    %v3845 = vunpack.c.l.b16 %v3757
    %v3846 = vunpack.c.l.b16 %v3758
    %v3847 = vunpack.c.l.b16 %v3759
    %v3848 = vunpack.c.l.b16 %v3760
    %v3849 = vunpack.c.l.b16 %v3761
    %v3850 = vunpack.c.l.b16 %v3762
    %v3851 = vunpack.c.l.b16 %v3763
    %v3852 = vunpack.c.l.b16 %v3764
    %v3853 = vunpack.c.h.b16 %v3757
    %v3854 = vunpack.c.h.b16 %v3758
    %v3855 = vunpack.c.h.b16 %v3759
    %v3856 = vunpack.c.h.b16 %v3760
    %v3857 = vunpack.c.h.b16 %v3761
    %v3858 = vunpack.c.h.b16 %v3762
    %v3859 = vunpack.c.h.b16 %v3763
    %v3860 = vunpack.c.h.b16 %v3764
    %v3861 = vpack.c.b16 %v3798, %v3797
    %v3862 = vpack.c.b16 %v3800, %v3799
    %v3863 = vpack.c.b16 %v3802, %v3801
    %v3864 = vpack.c.b16 %v3804, %v3803
    %v3865 = vpack.c.b16 %v3806, %v3805
    %v3866 = vpack.c.b16 %v3808, %v3807
    %v3867 = vpack.c.b16 %v3810, %v3809
    %v3868 = vpack.c.b16 %v3812, %v3811
    %v3869 = vpack.c.b16 %v3814, %v3813
    %v3870 = vpack.c.b16 %v3816, %v3815
    %v3871 = vpack.c.b16 %v3818, %v3817
    %v3872 = vpack.c.b16 %v3820, %v3819
    %v3873 = vpack.c.b16 %v3822, %v3821
    %v3874 = vpack.c.b16 %v3824, %v3823
    %v3875 = vpack.c.b16 %v3826, %v3825
    %v3876 = vpack.c.b16 %v3828, %v3827
    %v3877 = vpack.c.b16 %v3830, %v3829
    %v3878 = vpack.c.b16 %v3832, %v3831
    %v3879 = vpack.c.b16 %v3834, %v3833
    %v3880 = vpack.c.b16 %v3836, %v3835
    %v3881 = vpack.c.b16 %v3838, %v3837
    %v3882 = vpack.c.b16 %v3840, %v3839
    %v3883 = vpack.c.b16 %v3842, %v3841
    %v3884 = vpack.c.b16 %v3844, %v3843
    %v3885 = vpack.c.b16 %v3846, %v3845
    %v3886 = vpack.c.b16 %v3848, %v3847
    %v3887 = vpack.c.b16 %v3850, %v3849
    %v3888 = vpack.c.b16 %v3852, %v3851
    %v3889 = vpack.c.b16 %v3854, %v3853
    %v3890 = vpack.c.b16 %v3856, %v3855
    %v3891 = vpack.c.b16 %v3858, %v3857
    %v3892 = vpack.c.b16 %v3860, %v3859
    %3925 = vst [vmem:[#allocation3 + $0x4] sm:$0xff] %v3861
    %3926 = vst [vmem:[#allocation3 + $0xc] sm:$0xff] %v3862
    %3927 = vst [vmem:[#allocation3 + $0x14] sm:$0xff] %v3863
    %3928 = vst [vmem:[#allocation3 + $0x1c] sm:$0xff] %v3864
    %3929 = vst [vmem:[#allocation3 + $0x2c] sm:$0xff] %v3865
    %3930 = vst [vmem:[#allocation3 + $0x34] sm:$0xff] %v3866
    %3931 = vst [vmem:[#allocation3 + $0x3c] sm:$0xff] %v3867
    %3932 = vst [vmem:[#allocation3 + $0x44] sm:$0xff] %v3868
    %3933 = vst [vmem:[#allocation3 + $0x54] sm:$0xff] %v3869
    %3934 = vst [vmem:[#allocation3 + $0x5c] sm:$0xff] %v3870
    %3935 = vst [vmem:[#allocation3 + $0x64] sm:$0xff] %v3871
    %3936 = vst [vmem:[#allocation3 + $0x6c] sm:$0xff] %v3872
    %3937 = vst [vmem:[#allocation3 + $0x7c] sm:$0xff] %v3873
    %3938 = vst [vmem:[#allocation3 + $0x84] sm:$0xff] %v3874
    %3939 = vst [vmem:[#allocation3 + $0x8c] sm:$0xff] %v3875
    %3940 = vst [vmem:[#allocation3 + $0x94] sm:$0xff] %v3876
    %3941 = vst [vmem:[#allocation3 + $0xa4] sm:$0xff] %v3877
    %3942 = vst [vmem:[#allocation3 + $0xac] sm:$0xff] %v3878
    %3943 = vst [vmem:[#allocation3 + $0xb4] sm:$0xff] %v3879
    %3944 = vst [vmem:[#allocation3 + $0xbc] sm:$0xff] %v3880
    %3945 = vst [vmem:[#allocation3 + $0xcc] sm:$0xff] %v3881
    %3946 = vst [vmem:[#allocation3 + $0xd4] sm:$0xff] %v3882
    %3947 = vst [vmem:[#allocation3 + $0xdc] sm:$0xff] %v3883
    %3948 = vst [vmem:[#allocation3 + $0xe4] sm:$0xff] %v3884
    %3949 = vst [vmem:[#allocation3 + $0xf4] sm:$0xff] %v3885
    %3950 = vst [vmem:[#allocation3 + $0xfc] sm:$0xff] %v3886
    %3951 = vst [vmem:[#allocation3 + $0x104] sm:$0xff] %v3887
    %3952 = vst [vmem:[#allocation3 + $0x10c] sm:$0xff] %v3888
    %3953 = vst [vmem:[#allocation3 + $0x11c] sm:$0xff] %v3889
    %3954 = vst [vmem:[#allocation3 + $0x124] sm:$0xff] %v3890
    %3955 = vst [vmem:[#allocation3 + $0x12c] sm:$0xff] %v3891
    %3956 = vst [vmem:[#allocation3 + $0x134] sm:$0xff] %v3892
    %v3957 = vld [vmem:[#allocation2 + $0x4] sm:$0xff]
    %v3958 = vld [vmem:[#allocation2 + $0xc] sm:$0xff]
    %v3959 = vld [vmem:[#allocation2 + $0x14] sm:$0xff]
    %v3960 = vld [vmem:[#allocation2 + $0x1c] sm:$0xff]
    %v3961 = vld [vmem:[#allocation2 + $0x2c] sm:$0xff]
    %v3962 = vld [vmem:[#allocation2 + $0x34] sm:$0xff]
    %v3963 = vld [vmem:[#allocation2 + $0x3c] sm:$0xff]
    %v3964 = vld [vmem:[#allocation2 + $0x44] sm:$0xff]
    %v3965 = vld [vmem:[#allocation2 + $0x54] sm:$0xff]
    %v3966 = vld [vmem:[#allocation2 + $0x5c] sm:$0xff]
    %v3967 = vld [vmem:[#allocation2 + $0x64] sm:$0xff]
    %v3968 = vld [vmem:[#allocation2 + $0x6c] sm:$0xff]
    %v3969 = vld [vmem:[#allocation2 + $0x7c] sm:$0xff]
    %v3970 = vld [vmem:[#allocation2 + $0x84] sm:$0xff]
    %v3971 = vld [vmem:[#allocation2 + $0x8c] sm:$0xff]
    %v3972 = vld [vmem:[#allocation2 + $0x94] sm:$0xff]
    %3973 = vst [vmem:[#allocation4] sm:$0xff] %v3957
    %3974 = vst [vmem:[#allocation4 + $0x8] sm:$0xff] %v3958
    %3975 = vst [vmem:[#allocation4 + $0x10] sm:$0xff] %v3959
    %3976 = vst [vmem:[#allocation4 + $0x18] sm:$0xff] %v3960
    %3977 = vst [vmem:[#allocation4 + $0x20] sm:$0xff] %v3961
    %3978 = vst [vmem:[#allocation4 + $0x28] sm:$0xff] %v3962
    %3979 = vst [vmem:[#allocation4 + $0x30] sm:$0xff] %v3963
    %3980 = vst [vmem:[#allocation4 + $0x38] sm:$0xff] %v3964
    %3981 = vst [vmem:[#allocation4 + $0x40] sm:$0xff] %v3965
    %3982 = vst [vmem:[#allocation4 + $0x48] sm:$0xff] %v3966
    %3983 = vst [vmem:[#allocation4 + $0x50] sm:$0xff] %v3967
    %3984 = vst [vmem:[#allocation4 + $0x58] sm:$0xff] %v3968
    %3985 = vst [vmem:[#allocation4 + $0x60] sm:$0xff] %v3969
    %3986 = vst [vmem:[#allocation4 + $0x68] sm:$0xff] %v3970
    %3987 = vst [vmem:[#allocation4 + $0x70] sm:$0xff] %v3971
    %3988 = vst [vmem:[#allocation4 + $0x78] sm:$0xff] %v3972
    %v3989 = vld [vmem:[%s1835 + $0x4] sm:$0xff]
    %v3990 = vld [vmem:[%s1835 + $0xc] sm:$0xff]
    %v3991 = vld [vmem:[%s1835 + $0x14] sm:$0xff]
    %v3992 = vld [vmem:[%s1835 + $0x1c] sm:$0xff]
    %v3993 = vld [vmem:[%s1835 + $0x2c] sm:$0xff]
    %v3994 = vld [vmem:[%s1835 + $0x34] sm:$0xff]
    %v3995 = vld [vmem:[%s1835 + $0x3c] sm:$0xff]
    %v3996 = vld [vmem:[%s1835 + $0x44] sm:$0xff]
    %v3997 = vld [vmem:[%s1835 + $0x54] sm:$0xff]
    %v3998 = vld [vmem:[%s1835 + $0x5c] sm:$0xff]
    %v3999 = vld [vmem:[%s1835 + $0x64] sm:$0xff]
    %v4000 = vld [vmem:[%s1835 + $0x6c] sm:$0xff]
    %v4001 = vld [vmem:[%s1835 + $0x7c] sm:$0xff]
    %v4002 = vld [vmem:[%s1835 + $0x84] sm:$0xff]
    %v4003 = vld [vmem:[%s1835 + $0x8c] sm:$0xff]
    %v4004 = vld [vmem:[%s1835 + $0x94] sm:$0xff]
    %4005 = vst [vmem:[#allocation4 + $0x80] sm:$0xff] %v3989
    %4006 = vst [vmem:[#allocation4 + $0x88] sm:$0xff] %v3990
    %4007 = vst [vmem:[#allocation4 + $0x90] sm:$0xff] %v3991
    %4008 = vst [vmem:[#allocation4 + $0x98] sm:$0xff] %v3992
    %4009 = vst [vmem:[#allocation4 + $0xa0] sm:$0xff] %v3993
    %4010 = vst [vmem:[#allocation4 + $0xa8] sm:$0xff] %v3994
    %4011 = vst [vmem:[#allocation4 + $0xb0] sm:$0xff] %v3995
    %4012 = vst [vmem:[#allocation4 + $0xb8] sm:$0xff] %v3996
    %4013 = vst [vmem:[#allocation4 + $0xc0] sm:$0xff] %v3997
    %4014 = vst [vmem:[#allocation4 + $0xc8] sm:$0xff] %v3998
    %4015 = vst [vmem:[#allocation4 + $0xd0] sm:$0xff] %v3999
    %4016 = vst [vmem:[#allocation4 + $0xd8] sm:$0xff] %v4000
    %4017 = vst [vmem:[#allocation4 + $0xe0] sm:$0xff] %v4001
    %4018 = vst [vmem:[#allocation4 + $0xe8] sm:$0xff] %v4002
    %4019 = vst [vmem:[#allocation4 + $0xf0] sm:$0xff] %v4003
    %4020 = vst [vmem:[#allocation4 + $0xf8] sm:$0xff] %v4004
    %v4021 = vld [vmem:[%s1948 + $0x4] sm:$0xff]
    %v4022 = vld [vmem:[%s1948 + $0xc] sm:$0xff]
    %v4023 = vld [vmem:[%s1948 + $0x14] sm:$0xff]
    %v4024 = vld [vmem:[%s1948 + $0x1c] sm:$0xff]
    %v4025 = vld [vmem:[%s1948 + $0x2c] sm:$0xff]
    %v4026 = vld [vmem:[%s1948 + $0x34] sm:$0xff]
    %v4027 = vld [vmem:[%s1948 + $0x3c] sm:$0xff]
    %v4028 = vld [vmem:[%s1948 + $0x44] sm:$0xff]
    %v4029 = vld [vmem:[%s1948 + $0x54] sm:$0xff]
    %v4030 = vld [vmem:[%s1948 + $0x5c] sm:$0xff]
    %v4031 = vld [vmem:[%s1948 + $0x64] sm:$0xff]
    %v4032 = vld [vmem:[%s1948 + $0x6c] sm:$0xff]
    %v4033 = vld [vmem:[%s1948 + $0x7c] sm:$0xff]
    %v4034 = vld [vmem:[%s1948 + $0x84] sm:$0xff]
    %v4035 = vld [vmem:[%s1948 + $0x8c] sm:$0xff]
    %v4036 = vld [vmem:[%s1948 + $0x94] sm:$0xff]
    %4037 = vst [vmem:[#allocation4 + $0x100] sm:$0xff] %v4021
    %4038 = vst [vmem:[#allocation4 + $0x108] sm:$0xff] %v4022
    %4039 = vst [vmem:[#allocation4 + $0x110] sm:$0xff] %v4023
    %4040 = vst [vmem:[#allocation4 + $0x118] sm:$0xff] %v4024
    %4041 = vst [vmem:[#allocation4 + $0x120] sm:$0xff] %v4025
    %4042 = vst [vmem:[#allocation4 + $0x128] sm:$0xff] %v4026
    %4043 = vst [vmem:[#allocation4 + $0x130] sm:$0xff] %v4027
    %4044 = vst [vmem:[#allocation4 + $0x138] sm:$0xff] %v4028
    %4045 = vst [vmem:[#allocation4 + $0x140] sm:$0xff] %v4029
    %4046 = vst [vmem:[#allocation4 + $0x148] sm:$0xff] %v4030
    %4047 = vst [vmem:[#allocation4 + $0x150] sm:$0xff] %v4031
    %4048 = vst [vmem:[#allocation4 + $0x158] sm:$0xff] %v4032
    %4049 = vst [vmem:[#allocation4 + $0x160] sm:$0xff] %v4033
    %4050 = vst [vmem:[#allocation4 + $0x168] sm:$0xff] %v4034
    %4051 = vst [vmem:[#allocation4 + $0x170] sm:$0xff] %v4035
    %4052 = vst [vmem:[#allocation4 + $0x178] sm:$0xff] %v4036
    %v4053 = vld [vmem:[%s2061 + $0x4] sm:$0xff]
    %v4054 = vld [vmem:[%s2061 + $0xc] sm:$0xff]
    %v4055 = vld [vmem:[%s2061 + $0x14] sm:$0xff]
    %v4056 = vld [vmem:[%s2061 + $0x1c] sm:$0xff]
    %v4057 = vld [vmem:[%s2061 + $0x2c] sm:$0xff]
    %v4058 = vld [vmem:[%s2061 + $0x34] sm:$0xff]
    %v4059 = vld [vmem:[%s2061 + $0x3c] sm:$0xff]
    %v4060 = vld [vmem:[%s2061 + $0x44] sm:$0xff]
    %v4061 = vld [vmem:[%s2061 + $0x54] sm:$0xff]
    %v4062 = vld [vmem:[%s2061 + $0x5c] sm:$0xff]
    %v4063 = vld [vmem:[%s2061 + $0x64] sm:$0xff]
    %v4064 = vld [vmem:[%s2061 + $0x6c] sm:$0xff]
    %v4065 = vld [vmem:[%s2061 + $0x7c] sm:$0xff]
    %v4066 = vld [vmem:[%s2061 + $0x84] sm:$0xff]
    %v4067 = vld [vmem:[%s2061 + $0x8c] sm:$0xff]
    %v4068 = vld [vmem:[%s2061 + $0x94] sm:$0xff]
    %4069 = vst [vmem:[#allocation4 + $0x180] sm:$0xff] %v4053
    %4070 = vst [vmem:[#allocation4 + $0x188] sm:$0xff] %v4054
    %4071 = vst [vmem:[#allocation4 + $0x190] sm:$0xff] %v4055
    %4072 = vst [vmem:[#allocation4 + $0x198] sm:$0xff] %v4056
    %4073 = vst [vmem:[#allocation4 + $0x1a0] sm:$0xff] %v4057
    %4074 = vst [vmem:[#allocation4 + $0x1a8] sm:$0xff] %v4058
    %4075 = vst [vmem:[#allocation4 + $0x1b0] sm:$0xff] %v4059
    %4076 = vst [vmem:[#allocation4 + $0x1b8] sm:$0xff] %v4060
    %4077 = vst [vmem:[#allocation4 + $0x1c0] sm:$0xff] %v4061
    %4078 = vst [vmem:[#allocation4 + $0x1c8] sm:$0xff] %v4062
    %4079 = vst [vmem:[#allocation4 + $0x1d0] sm:$0xff] %v4063
    %4080 = vst [vmem:[#allocation4 + $0x1d8] sm:$0xff] %v4064
    %4081 = vst [vmem:[#allocation4 + $0x1e0] sm:$0xff] %v4065
    %4082 = vst [vmem:[#allocation4 + $0x1e8] sm:$0xff] %v4066
    %4083 = vst [vmem:[#allocation4 + $0x1f0] sm:$0xff] %v4067
    %4084 = vst [vmem:[#allocation4 + $0x1f8] sm:$0xff] %v4068
    %v4085 = vld [vmem:[#allocation2 + $0x4] sm:$0xff]
    %v4086 = vld [vmem:[#allocation2 + $0xc] sm:$0xff]
    %v4087 = vld [vmem:[#allocation2 + $0x14] sm:$0xff]
    %v4088 = vld [vmem:[#allocation2 + $0x1c] sm:$0xff]
    %v4089 = vld [vmem:[#allocation2 + $0x24] sm:$0xf]
    %v4090 = vld [vmem:[#allocation2 + $0x2c] sm:$0xff]
    %v4091 = vld [vmem:[#allocation2 + $0x34] sm:$0xff]
    %v4092 = vld [vmem:[#allocation2 + $0x3c] sm:$0xff]
    %v4093 = vld [vmem:[#allocation2 + $0x44] sm:$0xff]
    %v4094 = vld [vmem:[#allocation2 + $0x4c] sm:$0xf]
    %v4095 = vld [vmem:[#allocation2 + $0x54] sm:$0xff]
    %v4096 = vld [vmem:[#allocation2 + $0x5c] sm:$0xff]
    %v4097 = vld [vmem:[#allocation2 + $0x64] sm:$0xff]
    %v4098 = vld [vmem:[#allocation2 + $0x6c] sm:$0xff]
    %v4099 = vld [vmem:[#allocation2 + $0x74] sm:$0xf]
    %v4100 = vld [vmem:[#allocation2 + $0x7c] sm:$0xff]
    %v4101 = vld [vmem:[#allocation2 + $0x84] sm:$0xff]
    %v4102 = vld [vmem:[#allocation2 + $0x8c] sm:$0xff]
    %v4103 = vld [vmem:[#allocation2 + $0x94] sm:$0xff]
    %v4104 = vld [vmem:[#allocation2 + $0x9c] sm:$0xf]
    %4125 = vrot.lane.b32.xlu0 %v4085, 127
    %v4126 = vpop.permute.xlu0 %4125
    %4127 = vrot.lane.b32.xlu0 %v4086, 127
    %v4128 = vpop.permute.xlu0 %4127
    %4129 = vrot.lane.b32.xlu0 %v4087, 127
    %v4130 = vpop.permute.xlu0 %4129
    %4131 = vrot.lane.b32.xlu0 %v4088, 127
    %v4132 = vpop.permute.xlu0 %4131
    %4133 = vrot.lane.b32.xlu0 %v4089, 127
    %v4134 = vpop.permute.xlu0 %4133
    %4135 = vrot.lane.b32.xlu0 %v4090, 127
    %v4136 = vpop.permute.xlu0 %4135
    %4137 = vrot.lane.b32.xlu0 %v4091, 127
    %v4138 = vpop.permute.xlu0 %4137
    %4139 = vrot.lane.b32.xlu0 %v4092, 127
    %v4140 = vpop.permute.xlu0 %4139
    %4141 = vrot.lane.b32.xlu0 %v4093, 127
    %v4142 = vpop.permute.xlu0 %4141
    %4143 = vrot.lane.b32.xlu0 %v4094, 127
    %v4144 = vpop.permute.xlu0 %4143
    %4145 = vrot.lane.b32.xlu0 %v4095, 127
    %v4146 = vpop.permute.xlu0 %4145
    %4147 = vrot.lane.b32.xlu0 %v4096, 127
    %v4148 = vpop.permute.xlu0 %4147
    %4149 = vrot.lane.b32.xlu0 %v4097, 127
    %v4150 = vpop.permute.xlu0 %4149
    %4151 = vrot.lane.b32.xlu0 %v4098, 127
    %v4152 = vpop.permute.xlu0 %4151
    %4153 = vrot.lane.b32.xlu0 %v4099, 127
    %v4154 = vpop.permute.xlu0 %4153
    %4155 = vrot.lane.b32.xlu0 %v4100, 127
    %v4156 = vpop.permute.xlu0 %4155
    %4157 = vrot.lane.b32.xlu0 %v4101, 127
    %v4158 = vpop.permute.xlu0 %4157
    %4159 = vrot.lane.b32.xlu0 %v4102, 127
    %v4160 = vpop.permute.xlu0 %4159
    %4161 = vrot.lane.b32.xlu0 %v4103, 127
    %v4162 = vpop.permute.xlu0 %4161
    %4163 = vrot.lane.b32.xlu0 %v4104, 127
    %v4164 = vpop.permute.xlu0 %4163
    %v4165 = vrot.slane %v4126, 4
    %v4166 = vrot.slane %v4128, 4
    %v4167 = vrot.slane %v4130, 4
    %v4168 = vrot.slane %v4132, 4
    %v4169 = vrot.slane %v4134, 4
    %v4170 = vrot.slane %v4136, 4
    %v4171 = vrot.slane %v4138, 4
    %v4172 = vrot.slane %v4140, 4
    %v4173 = vrot.slane %v4142, 4
    %v4174 = vrot.slane %v4144, 4
    %v4175 = vrot.slane %v4146, 4
    %v4176 = vrot.slane %v4148, 4
    %v4177 = vrot.slane %v4150, 4
    %v4178 = vrot.slane %v4152, 4
    %v4179 = vrot.slane %v4154, 4
    %v4180 = vrot.slane %v4156, 4
    %v4181 = vrot.slane %v4158, 4
    %v4182 = vrot.slane %v4160, 4
    %v4183 = vrot.slane %v4162, 4
    %v4184 = vrot.slane %v4164, 4
    %v4185 = vsel %vm2178, %v4165, %v4166
    %vm4186 = vcmask 1039360
    %v4187 = vsel %vm4186, %v4126, %v4185
    %v4188 = vsel %vm2178, %v4166, %v4167
    %v4189 = vsel %vm4186, %v4128, %v4188
    %v4190 = vsel %vm2178, %v4167, %v4168
    %v4191 = vsel %vm4186, %v4130, %v4190
    %v4192 = vsel %vm2178, %v4168, %v4169
    %v4193 = vsel %vm4186, %v4132, %v4192
    %v4194 = vsel %vm2178, %v4170, %v4171
    %v4195 = vsel %vm4186, %v4136, %v4194
    %v4196 = vsel %vm2178, %v4171, %v4172
    %v4197 = vsel %vm4186, %v4138, %v4196
    %v4198 = vsel %vm2178, %v4172, %v4173
    %v4199 = vsel %vm4186, %v4140, %v4198
    %v4200 = vsel %vm2178, %v4173, %v4174
    %v4201 = vsel %vm4186, %v4142, %v4200
    %v4202 = vsel %vm2178, %v4175, %v4176
    %v4203 = vsel %vm4186, %v4146, %v4202
    %v4204 = vsel %vm2178, %v4176, %v4177
    %v4205 = vsel %vm4186, %v4148, %v4204
    %v4206 = vsel %vm2178, %v4177, %v4178
    %v4207 = vsel %vm4186, %v4150, %v4206
    %v4208 = vsel %vm2178, %v4178, %v4179
    %v4209 = vsel %vm4186, %v4152, %v4208
    %v4210 = vsel %vm2178, %v4180, %v4181
    %v4211 = vsel %vm4186, %v4156, %v4210
    %v4212 = vsel %vm2178, %v4181, %v4182
    %v4213 = vsel %vm4186, %v4158, %v4212
    %v4214 = vsel %vm2178, %v4182, %v4183
    %v4215 = vsel %vm4186, %v4160, %v4214
    %v4216 = vsel %vm2178, %v4183, %v4184
    %v4217 = vsel %vm4186, %v4162, %v4216
    %4234 = vst [vmem:[#allocation4 + $0x200] sm:$0xff] %v4187
    %4235 = vst [vmem:[#allocation4 + $0x208] sm:$0xff] %v4189
    %4236 = vst [vmem:[#allocation4 + $0x210] sm:$0xff] %v4191
    %4237 = vst [vmem:[#allocation4 + $0x218] sm:$0xff] %v4193
    %4238 = vst [vmem:[#allocation4 + $0x220] sm:$0xff] %v4195
    %4239 = vst [vmem:[#allocation4 + $0x228] sm:$0xff] %v4197
    %4240 = vst [vmem:[#allocation4 + $0x230] sm:$0xff] %v4199
    %4241 = vst [vmem:[#allocation4 + $0x238] sm:$0xff] %v4201
    %4242 = vst [vmem:[#allocation4 + $0x240] sm:$0xff] %v4203
    %4243 = vst [vmem:[#allocation4 + $0x248] sm:$0xff] %v4205
    %4244 = vst [vmem:[#allocation4 + $0x250] sm:$0xff] %v4207
    %4245 = vst [vmem:[#allocation4 + $0x258] sm:$0xff] %v4209
    %4246 = vst [vmem:[#allocation4 + $0x260] sm:$0xff] %v4211
    %4247 = vst [vmem:[#allocation4 + $0x268] sm:$0xff] %v4213
    %4248 = vst [vmem:[#allocation4 + $0x270] sm:$0xff] %v4215
    %4249 = vst [vmem:[#allocation4 + $0x278] sm:$0xff] %v4217
    %v4250 = vld [vmem:[%s6] sm:$0xff]
    %v4251 = vld [vmem:[%s6 + $0x8] sm:$0xff]
    %v4252 = vld [vmem:[%s6 + $0x10] sm:$0xff]
    %v4253 = vld [vmem:[%s6 + $0x18] sm:$0xff]
    %v4254 = vld [vmem:[%s6 + $0x20] sm:$0xff]
    %v4255 = vld [vmem:[%s6 + $0x28] sm:$0xff]
    %v4256 = vld [vmem:[%s6 + $0x30] sm:$0xff]
    %v4257 = vld [vmem:[%s6 + $0x38] sm:$0xff]
    %v4258 = vld [vmem:[#allocation4] sm:$0xff]
    %v4259 = vld [vmem:[#allocation4 + $0x8] sm:$0xff]
    %v4260 = vld [vmem:[#allocation4 + $0x10] sm:$0xff]
    %v4261 = vld [vmem:[#allocation4 + $0x18] sm:$0xff]
    %v4262 = vld [vmem:[#allocation4 + $0x20] sm:$0xff]
    %v4263 = vld [vmem:[#allocation4 + $0x28] sm:$0xff]
    %v4264 = vld [vmem:[#allocation4 + $0x30] sm:$0xff]
    %v4265 = vld [vmem:[#allocation4 + $0x38] sm:$0xff]
    %v4266 = vld [vmem:[#allocation4 + $0x40] sm:$0xff]
    %v4267 = vld [vmem:[#allocation4 + $0x48] sm:$0xff]
    %v4268 = vld [vmem:[#allocation4 + $0x50] sm:$0xff]
    %v4269 = vld [vmem:[#allocation4 + $0x58] sm:$0xff]
    %v4270 = vld [vmem:[#allocation4 + $0x60] sm:$0xff]
    %v4271 = vld [vmem:[#allocation4 + $0x68] sm:$0xff]
    %v4272 = vld [vmem:[#allocation4 + $0x70] sm:$0xff]
    %v4273 = vld [vmem:[#allocation4 + $0x78] sm:$0xff]
    %v4274 = vld [vmem:[#allocation4 + $0x80] sm:$0xff]
    %v4275 = vld [vmem:[#allocation4 + $0x88] sm:$0xff]
    %v4276 = vld [vmem:[#allocation4 + $0x90] sm:$0xff]
    %v4277 = vld [vmem:[#allocation4 + $0x98] sm:$0xff]
    %v4278 = vld [vmem:[#allocation4 + $0xa0] sm:$0xff]
    %v4279 = vld [vmem:[#allocation4 + $0xa8] sm:$0xff]
    %v4280 = vld [vmem:[#allocation4 + $0xb0] sm:$0xff]
    %v4281 = vld [vmem:[#allocation4 + $0xb8] sm:$0xff]
    %v4282 = vld [vmem:[#allocation4 + $0xc0] sm:$0xff]
    %v4283 = vld [vmem:[#allocation4 + $0xc8] sm:$0xff]
    %v4284 = vld [vmem:[#allocation4 + $0xd0] sm:$0xff]
    %v4285 = vld [vmem:[#allocation4 + $0xd8] sm:$0xff]
    %v4286 = vld [vmem:[#allocation4 + $0xe0] sm:$0xff]
    %v4287 = vld [vmem:[#allocation4 + $0xe8] sm:$0xff]
    %v4288 = vld [vmem:[#allocation4 + $0xf0] sm:$0xff]
    %v4289 = vld [vmem:[#allocation4 + $0xf8] sm:$0xff]
    %v4290 = vld [vmem:[#allocation4 + $0x100] sm:$0xff]
    %v4291 = vld [vmem:[#allocation4 + $0x108] sm:$0xff]
    %v4292 = vld [vmem:[#allocation4 + $0x110] sm:$0xff]
    %v4293 = vld [vmem:[#allocation4 + $0x118] sm:$0xff]
    %v4294 = vld [vmem:[#allocation4 + $0x120] sm:$0xff]
    %v4295 = vld [vmem:[#allocation4 + $0x128] sm:$0xff]
    %v4296 = vld [vmem:[#allocation4 + $0x130] sm:$0xff]
    %v4297 = vld [vmem:[#allocation4 + $0x138] sm:$0xff]
    %v4298 = vld [vmem:[#allocation4 + $0x140] sm:$0xff]
    %v4299 = vld [vmem:[#allocation4 + $0x148] sm:$0xff]
    %v4300 = vld [vmem:[#allocation4 + $0x150] sm:$0xff]
    %v4301 = vld [vmem:[#allocation4 + $0x158] sm:$0xff]
    %v4302 = vld [vmem:[#allocation4 + $0x160] sm:$0xff]
    %v4303 = vld [vmem:[#allocation4 + $0x168] sm:$0xff]
    %v4304 = vld [vmem:[#allocation4 + $0x170] sm:$0xff]
    %v4305 = vld [vmem:[#allocation4 + $0x178] sm:$0xff]
    %v4306 = vld [vmem:[#allocation4 + $0x180] sm:$0xff]
    %v4307 = vld [vmem:[#allocation4 + $0x188] sm:$0xff]
    %v4308 = vld [vmem:[#allocation4 + $0x190] sm:$0xff]
    %v4309 = vld [vmem:[#allocation4 + $0x198] sm:$0xff]
    %v4310 = vld [vmem:[#allocation4 + $0x1a0] sm:$0xff]
    %v4311 = vld [vmem:[#allocation4 + $0x1a8] sm:$0xff]
    %v4312 = vld [vmem:[#allocation4 + $0x1b0] sm:$0xff]
    %v4313 = vld [vmem:[#allocation4 + $0x1b8] sm:$0xff]
    %v4314 = vld [vmem:[#allocation4 + $0x1c0] sm:$0xff]
    %v4315 = vld [vmem:[#allocation4 + $0x1c8] sm:$0xff]
    %v4316 = vld [vmem:[#allocation4 + $0x1d0] sm:$0xff]
    %v4317 = vld [vmem:[#allocation4 + $0x1d8] sm:$0xff]
    %v4318 = vld [vmem:[#allocation4 + $0x1e0] sm:$0xff]
    %v4319 = vld [vmem:[#allocation4 + $0x1e8] sm:$0xff]
    %v4320 = vld [vmem:[#allocation4 + $0x1f0] sm:$0xff]
    %v4321 = vld [vmem:[#allocation4 + $0x1f8] sm:$0xff]
    %v4322 = vld [vmem:[#allocation4 + $0x200] sm:$0xff]
    %v4323 = vld [vmem:[#allocation4 + $0x208] sm:$0xff]
    %v4324 = vld [vmem:[#allocation4 + $0x210] sm:$0xff]
    %v4325 = vld [vmem:[#allocation4 + $0x218] sm:$0xff]
    %v4326 = vld [vmem:[#allocation4 + $0x220] sm:$0xff]
    %v4327 = vld [vmem:[#allocation4 + $0x228] sm:$0xff]
    %v4328 = vld [vmem:[#allocation4 + $0x230] sm:$0xff]
    %v4329 = vld [vmem:[#allocation4 + $0x238] sm:$0xff]
    %v4330 = vld [vmem:[#allocation4 + $0x240] sm:$0xff]
    %v4331 = vld [vmem:[#allocation4 + $0x248] sm:$0xff]
    %v4332 = vld [vmem:[#allocation4 + $0x250] sm:$0xff]
    %v4333 = vld [vmem:[#allocation4 + $0x258] sm:$0xff]
    %v4334 = vld [vmem:[#allocation4 + $0x260] sm:$0xff]
    %v4335 = vld [vmem:[#allocation4 + $0x268] sm:$0xff]
    %v4336 = vld [vmem:[#allocation4 + $0x270] sm:$0xff]
    %v4337 = vld [vmem:[#allocation4 + $0x278] sm:$0xff]
    %v4338 = vld [vmem:[%s7] sm:$0xff]
    %v4339 = vld [vmem:[%s7 + $0x8] sm:$0xff]
    %v4340 = vld [vmem:[%s7 + $0x10] sm:$0xff]
    %v4341 = vld [vmem:[%s7 + $0x18] sm:$0xff]
    %v4342 = vld [vmem:[%s7 + $0x20] sm:$0xff]
    %v4343 = vld [vmem:[%s7 + $0x28] sm:$0xff]
    %v4344 = vld [vmem:[%s7 + $0x30] sm:$0xff]
    %v4345 = vld [vmem:[%s7 + $0x38] sm:$0xff]
    %4347 = vset.pattern.permute.xlu0 0
    %4348 = vperm.xlu0 %4347, %v4338
    %v4349 = vpop.permute.xlu0 %4348
    %4352 = vset.pattern.permute.xlu0 0
    %4353 = vperm.xlu0 %4352, %v4339
    %v4354 = vpop.permute.xlu0 %4353
    %4357 = vset.pattern.permute.xlu0 0
    %4358 = vperm.xlu0 %4357, %v4340
    %v4359 = vpop.permute.xlu0 %4358
    %4362 = vset.pattern.permute.xlu0 0
    %4363 = vperm.xlu0 %4362, %v4341
    %v4364 = vpop.permute.xlu0 %4363
    %4367 = vset.pattern.permute.xlu0 0
    %4368 = vperm.xlu0 %4367, %v4342
    %v4369 = vpop.permute.xlu0 %4368
    %4372 = vset.pattern.permute.xlu0 0
    %4373 = vperm.xlu0 %4372, %v4343
    %v4374 = vpop.permute.xlu0 %4373
    %4377 = vset.pattern.permute.xlu0 0
    %4378 = vperm.xlu0 %4377, %v4344
    %v4379 = vpop.permute.xlu0 %4378
    %4382 = vset.pattern.permute.xlu0 0
    %4383 = vperm.xlu0 %4382, %v4345
    %v4384 = vpop.permute.xlu0 %4383
    %v4394 = vunpack.c.l.b16 %v4250
    %v4395 = vunpack.c.h.b16 %v4250
    %v4396 = vunpack.c.l.b16 %v4251
    %v4397 = vunpack.c.h.b16 %v4251
    %v4398 = vunpack.c.l.b16 %v4252
    %v4399 = vunpack.c.h.b16 %v4252
    %v4400 = vunpack.c.l.b16 %v4253
    %v4401 = vunpack.c.h.b16 %v4253
    %v4402 = vunpack.c.l.b16 %v4254
    %v4403 = vunpack.c.h.b16 %v4254
    %v4404 = vunpack.c.l.b16 %v4255
    %v4405 = vunpack.c.h.b16 %v4255
    %v4406 = vunpack.c.l.b16 %v4256
    %v4407 = vunpack.c.h.b16 %v4256
    %v4408 = vunpack.c.l.b16 %v4257
    %v4409 = vunpack.c.h.b16 %v4257
    %v4410 = vpack.c.b16 %v4396, %v4394
    %v4411 = vpack.c.b16 %v4397, %v4395
    %v4412 = vpack.c.b16 %v4400, %v4398
    %v4413 = vpack.c.b16 %v4401, %v4399
    %v4414 = vpack.c.b16 %v4404, %v4402
    %v4415 = vpack.c.b16 %v4405, %v4403
    %v4416 = vpack.c.b16 %v4408, %v4406
    %v4417 = vpack.c.b16 %v4409, %v4407
    %v4502 = vunpack.c.l.b16 %v4258
    %v4503 = vunpack.c.h.b16 %v4258
    %v4504 = vunpack.c.l.b16 %v4259
    %v4505 = vunpack.c.h.b16 %v4259
    %v4506 = vunpack.c.l.b16 %v4260
    %v4507 = vunpack.c.h.b16 %v4260
    %v4508 = vunpack.c.l.b16 %v4261
    %v4509 = vunpack.c.h.b16 %v4261
    %v4510 = vunpack.c.l.b16 %v4262
    %v4511 = vunpack.c.h.b16 %v4262
    %v4512 = vunpack.c.l.b16 %v4263
    %v4513 = vunpack.c.h.b16 %v4263
    %v4514 = vunpack.c.l.b16 %v4264
    %v4515 = vunpack.c.h.b16 %v4264
    %v4516 = vunpack.c.l.b16 %v4265
    %v4517 = vunpack.c.h.b16 %v4265
    %v4518 = vunpack.c.l.b16 %v4266
    %v4519 = vunpack.c.h.b16 %v4266
    %v4520 = vunpack.c.l.b16 %v4267
    %v4521 = vunpack.c.h.b16 %v4267
    %v4522 = vunpack.c.l.b16 %v4268
    %v4523 = vunpack.c.h.b16 %v4268
    %v4524 = vunpack.c.l.b16 %v4269
    %v4525 = vunpack.c.h.b16 %v4269
    %v4526 = vunpack.c.l.b16 %v4270
    %v4527 = vunpack.c.h.b16 %v4270
    %v4528 = vunpack.c.l.b16 %v4271
    %v4529 = vunpack.c.h.b16 %v4271
    %v4530 = vunpack.c.l.b16 %v4272
    %v4531 = vunpack.c.h.b16 %v4272
    %v4532 = vunpack.c.l.b16 %v4273
    %v4533 = vunpack.c.h.b16 %v4273
    %v4534 = vunpack.c.l.b16 %v4274
    %v4535 = vunpack.c.h.b16 %v4274
    %v4536 = vunpack.c.l.b16 %v4275
    %v4537 = vunpack.c.h.b16 %v4275
    %v4538 = vunpack.c.l.b16 %v4276
    %v4539 = vunpack.c.h.b16 %v4276
    %v4540 = vunpack.c.l.b16 %v4277
    %v4541 = vunpack.c.h.b16 %v4277
    %v4542 = vunpack.c.l.b16 %v4278
    %v4543 = vunpack.c.h.b16 %v4278
    %v4544 = vunpack.c.l.b16 %v4279
    %v4545 = vunpack.c.h.b16 %v4279
    %v4546 = vunpack.c.l.b16 %v4280
    %v4547 = vunpack.c.h.b16 %v4280
    %v4548 = vunpack.c.l.b16 %v4281
    %v4549 = vunpack.c.h.b16 %v4281
    %v4550 = vunpack.c.l.b16 %v4282
    %v4551 = vunpack.c.h.b16 %v4282
    %v4552 = vunpack.c.l.b16 %v4283
    %v4553 = vunpack.c.h.b16 %v4283
    %v4554 = vunpack.c.l.b16 %v4284
    %v4555 = vunpack.c.h.b16 %v4284
    %v4556 = vunpack.c.l.b16 %v4285
    %v4557 = vunpack.c.h.b16 %v4285
    %v4558 = vunpack.c.l.b16 %v4286
    %v4559 = vunpack.c.h.b16 %v4286
    %v4560 = vunpack.c.l.b16 %v4287
    %v4561 = vunpack.c.h.b16 %v4287
    %v4562 = vunpack.c.l.b16 %v4288
    %v4563 = vunpack.c.h.b16 %v4288
    %v4564 = vunpack.c.l.b16 %v4289
    %v4565 = vunpack.c.h.b16 %v4289
    %v4566 = vunpack.c.l.b16 %v4290
    %v4567 = vunpack.c.h.b16 %v4290
    %v4568 = vunpack.c.l.b16 %v4291
    %v4569 = vunpack.c.h.b16 %v4291
    %v4570 = vunpack.c.l.b16 %v4292
    %v4571 = vunpack.c.h.b16 %v4292
    %v4572 = vunpack.c.l.b16 %v4293
    %v4573 = vunpack.c.h.b16 %v4293
    %v4574 = vunpack.c.l.b16 %v4294
    %v4575 = vunpack.c.h.b16 %v4294
    %v4576 = vunpack.c.l.b16 %v4295
    %v4577 = vunpack.c.h.b16 %v4295
    %v4578 = vunpack.c.l.b16 %v4296
    %v4579 = vunpack.c.h.b16 %v4296
    %v4580 = vunpack.c.l.b16 %v4297
    %v4581 = vunpack.c.h.b16 %v4297
    %v4582 = vunpack.c.l.b16 %v4298
    %v4583 = vunpack.c.h.b16 %v4298
    %v4584 = vunpack.c.l.b16 %v4299
    %v4585 = vunpack.c.h.b16 %v4299
    %v4586 = vunpack.c.l.b16 %v4300
    %v4587 = vunpack.c.h.b16 %v4300
    %v4588 = vunpack.c.l.b16 %v4301
    %v4589 = vunpack.c.h.b16 %v4301
    %v4590 = vunpack.c.l.b16 %v4302
    %v4591 = vunpack.c.h.b16 %v4302
    %v4592 = vunpack.c.l.b16 %v4303
    %v4593 = vunpack.c.h.b16 %v4303
    %v4594 = vunpack.c.l.b16 %v4304
    %v4595 = vunpack.c.h.b16 %v4304
    %v4596 = vunpack.c.l.b16 %v4305
    %v4597 = vunpack.c.h.b16 %v4305
    %v4598 = vunpack.c.l.b16 %v4306
    %v4599 = vunpack.c.h.b16 %v4306
    %v4600 = vunpack.c.l.b16 %v4307
    %v4601 = vunpack.c.h.b16 %v4307
    %v4602 = vunpack.c.l.b16 %v4308
    %v4603 = vunpack.c.h.b16 %v4308
    %v4604 = vunpack.c.l.b16 %v4309
    %v4605 = vunpack.c.h.b16 %v4309
    %v4606 = vunpack.c.l.b16 %v4310
    %v4607 = vunpack.c.h.b16 %v4310
    %v4608 = vunpack.c.l.b16 %v4311
    %v4609 = vunpack.c.h.b16 %v4311
    %v4610 = vunpack.c.l.b16 %v4312
    %v4611 = vunpack.c.h.b16 %v4312
    %v4612 = vunpack.c.l.b16 %v4313
    %v4613 = vunpack.c.h.b16 %v4313
    %v4614 = vunpack.c.l.b16 %v4314
    %v4615 = vunpack.c.h.b16 %v4314
    %v4616 = vunpack.c.l.b16 %v4315
    %v4617 = vunpack.c.h.b16 %v4315
    %v4618 = vunpack.c.l.b16 %v4316
    %v4619 = vunpack.c.h.b16 %v4316
    %v4620 = vunpack.c.l.b16 %v4317
    %v4621 = vunpack.c.h.b16 %v4317
    %v4622 = vunpack.c.l.b16 %v4318
    %v4623 = vunpack.c.h.b16 %v4318
    %v4624 = vunpack.c.l.b16 %v4319
    %v4625 = vunpack.c.h.b16 %v4319
    %v4626 = vunpack.c.l.b16 %v4320
    %v4627 = vunpack.c.h.b16 %v4320
    %v4628 = vunpack.c.l.b16 %v4321
    %v4629 = vunpack.c.h.b16 %v4321
    %v4630 = vunpack.c.l.b16 %v4322
    %v4631 = vunpack.c.h.b16 %v4322
    %v4632 = vunpack.c.l.b16 %v4323
    %v4633 = vunpack.c.h.b16 %v4323
    %v4634 = vunpack.c.l.b16 %v4324
    %v4635 = vunpack.c.h.b16 %v4324
    %v4636 = vunpack.c.l.b16 %v4325
    %v4637 = vunpack.c.h.b16 %v4325
    %v4638 = vunpack.c.l.b16 %v4326
    %v4639 = vunpack.c.h.b16 %v4326
    %v4640 = vunpack.c.l.b16 %v4327
    %v4641 = vunpack.c.h.b16 %v4327
    %v4642 = vunpack.c.l.b16 %v4328
    %v4643 = vunpack.c.h.b16 %v4328
    %v4644 = vunpack.c.l.b16 %v4329
    %v4645 = vunpack.c.h.b16 %v4329
    %v4646 = vunpack.c.l.b16 %v4330
    %v4647 = vunpack.c.h.b16 %v4330
    %v4648 = vunpack.c.l.b16 %v4331
    %v4649 = vunpack.c.h.b16 %v4331
    %v4650 = vunpack.c.l.b16 %v4332
    %v4651 = vunpack.c.h.b16 %v4332
    %v4652 = vunpack.c.l.b16 %v4333
    %v4653 = vunpack.c.h.b16 %v4333
    %v4654 = vunpack.c.l.b16 %v4334
    %v4655 = vunpack.c.h.b16 %v4334
    %v4656 = vunpack.c.l.b16 %v4335
    %v4657 = vunpack.c.h.b16 %v4335
    %v4658 = vunpack.c.l.b16 %v4336
    %v4659 = vunpack.c.h.b16 %v4336
    %v4660 = vunpack.c.l.b16 %v4337
    %v4661 = vunpack.c.h.b16 %v4337
    %v4662 = vpack.c.b16 %v4510, %v4502
    %v4663 = vpack.c.b16 %v4511, %v4503
    %v4664 = vpack.c.b16 %v4512, %v4504
    %v4665 = vpack.c.b16 %v4513, %v4505
    %v4666 = vpack.c.b16 %v4514, %v4506
    %v4667 = vpack.c.b16 %v4515, %v4507
    %v4668 = vpack.c.b16 %v4516, %v4508
    %v4669 = vpack.c.b16 %v4517, %v4509
    %v4670 = vpack.c.b16 %v4526, %v4518
    %v4671 = vpack.c.b16 %v4527, %v4519
    %v4672 = vpack.c.b16 %v4528, %v4520
    %v4673 = vpack.c.b16 %v4529, %v4521
    %v4674 = vpack.c.b16 %v4530, %v4522
    %v4675 = vpack.c.b16 %v4531, %v4523
    %v4676 = vpack.c.b16 %v4532, %v4524
    %v4677 = vpack.c.b16 %v4533, %v4525
    %v4678 = vpack.c.b16 %v4542, %v4534
    %v4679 = vpack.c.b16 %v4543, %v4535
    %v4680 = vpack.c.b16 %v4544, %v4536
    %v4681 = vpack.c.b16 %v4545, %v4537
    %v4682 = vpack.c.b16 %v4546, %v4538
    %v4683 = vpack.c.b16 %v4547, %v4539
    %v4684 = vpack.c.b16 %v4548, %v4540
    %v4685 = vpack.c.b16 %v4549, %v4541
    %v4686 = vpack.c.b16 %v4558, %v4550
    %v4687 = vpack.c.b16 %v4559, %v4551
    %v4688 = vpack.c.b16 %v4560, %v4552
    %v4689 = vpack.c.b16 %v4561, %v4553
    %v4690 = vpack.c.b16 %v4562, %v4554
    %v4691 = vpack.c.b16 %v4563, %v4555
    %v4692 = vpack.c.b16 %v4564, %v4556
    %v4693 = vpack.c.b16 %v4565, %v4557
    %v4694 = vpack.c.b16 %v4574, %v4566
    %v4695 = vpack.c.b16 %v4575, %v4567
    %v4696 = vpack.c.b16 %v4576, %v4568
    %v4697 = vpack.c.b16 %v4577, %v4569
    %v4698 = vpack.c.b16 %v4578, %v4570
    %v4699 = vpack.c.b16 %v4579, %v4571
    %v4700 = vpack.c.b16 %v4580, %v4572
    %v4701 = vpack.c.b16 %v4581, %v4573
    %v4702 = vpack.c.b16 %v4590, %v4582
    %v4703 = vpack.c.b16 %v4591, %v4583
    %v4704 = vpack.c.b16 %v4592, %v4584
    %v4705 = vpack.c.b16 %v4593, %v4585
    %v4706 = vpack.c.b16 %v4594, %v4586
    %v4707 = vpack.c.b16 %v4595, %v4587
    %v4708 = vpack.c.b16 %v4596, %v4588
    %v4709 = vpack.c.b16 %v4597, %v4589
    %v4710 = vpack.c.b16 %v4606, %v4598
    %v4711 = vpack.c.b16 %v4607, %v4599
    %v4712 = vpack.c.b16 %v4608, %v4600
    %v4713 = vpack.c.b16 %v4609, %v4601
    %v4714 = vpack.c.b16 %v4610, %v4602
    %v4715 = vpack.c.b16 %v4611, %v4603
    %v4716 = vpack.c.b16 %v4612, %v4604
    %v4717 = vpack.c.b16 %v4613, %v4605
    %v4718 = vpack.c.b16 %v4622, %v4614
    %v4719 = vpack.c.b16 %v4623, %v4615
    %v4720 = vpack.c.b16 %v4624, %v4616
    %v4721 = vpack.c.b16 %v4625, %v4617
    %v4722 = vpack.c.b16 %v4626, %v4618
    %v4723 = vpack.c.b16 %v4627, %v4619
    %v4724 = vpack.c.b16 %v4628, %v4620
    %v4725 = vpack.c.b16 %v4629, %v4621
    %v4726 = vpack.c.b16 %v4638, %v4630
    %v4727 = vpack.c.b16 %v4639, %v4631
    %v4728 = vpack.c.b16 %v4640, %v4632
    %v4729 = vpack.c.b16 %v4641, %v4633
    %v4730 = vpack.c.b16 %v4642, %v4634
    %v4731 = vpack.c.b16 %v4643, %v4635
    %v4732 = vpack.c.b16 %v4644, %v4636
    %v4733 = vpack.c.b16 %v4645, %v4637
    %v4734 = vpack.c.b16 %v4654, %v4646
    %v4735 = vpack.c.b16 %v4655, %v4647
    %v4736 = vpack.c.b16 %v4656, %v4648
    %v4737 = vpack.c.b16 %v4657, %v4649
    %v4738 = vpack.c.b16 %v4658, %v4650
    %v4739 = vpack.c.b16 %v4659, %v4651
    %v4740 = vpack.c.b16 %v4660, %v4652
    %v4741 = vpack.c.b16 %v4661, %v4653
    %v4823 = vsel %vm3076, %v4411, 0
    %v4826 = vsel %vm3076, %v4413, 0
    %v4829 = vsel %vm3076, %v4415, 0
    %v4832 = vsel %vm3076, %v4417, 0
    %4834 = vmatprep.subr.bf16.mxu0 %v4719
    %4835 = vmatpush1.bf16.msra.mxu0 %v4718
    %4836 = vmatprep.subr.bf16.mxu0 %v4711
    %4837 = vmatpush1.bf16.msra.mxu0 %v4710
    %4838 = vmatprep.subr.bf16.mxu0 %v4703
    %4839 = vmatpush1.bf16.msra.mxu0 %v4702
    %4840 = vmatprep.subr.bf16.mxu0 %v4695
    %4841 = vmatpush1.bf16.msra.mxu0 %v4694
    %4842 = vmatprep.subr.bf16.mxu0 %v4687
    %4843 = vmatpush1.bf16.msra.mxu0 %v4686
    %4844 = vmatprep.subr.bf16.mxu0 %v4679
    %4845 = vmatpush1.bf16.msra.mxu0 %v4678
    %4846 = vmatprep.subr.bf16.mxu0 %v4671
    %4847 = vmatpush1.bf16.msra.mxu0 %v4670
    %4848 = vmatprep.subr.bf16.mxu0 %v4663
    %4849 = vmatpush1.bf16.msra.mxu0 %v4662
    %4850 = vmatprep.subr.bf16.mxu0 0
    %4851 = vmatpush2.bf16.msra.mxu0 0
    %4852 = vmatprep.subr.bf16.mxu0 0
    %4853 = vmatpush2.bf16.msra.mxu0 0
    %4854 = vmatprep.subr.bf16.mxu0 0
    %4855 = vmatpush2.bf16.msra.mxu0 0
    %4856 = vmatprep.subr.bf16.mxu0 0
    %4857 = vmatpush2.bf16.msra.mxu0 0
    %4858 = vmatprep.subr.bf16.mxu0 0
    %4859 = vmatpush2.bf16.msra.mxu0 0
    %4860 = vmatprep.subr.bf16.mxu0 0
    %4861 = vmatpush2.bf16.msra.mxu0 0
    %4862 = vmatprep.subr.bf16.mxu0 %v4735
    %4863 = vmatpush2.bf16.msra.mxu0 %v4734
    %4864 = vmatprep.subr.bf16.mxu0 %v4727
    %4865 = vmatpush2.bf16.msra.mxu0 %v4726
    %4866 = vmatprep.mubr.bf16.mxu0 %v4823
    %4867 = vmatmul.mubr.bf16.gmra.mxu0 %v4410
    %v4868 = vpop.f32.mrf.mxu0
    %v4869 = vadd.f32 %v4349, %v4868
    %v4870 = vpop.f32.mrf.mxu0
    %v4871 = vadd.f32 %v4349, %v4870
    %v4872 = vpop.f32.mrf.mxu0
    %v4873 = vadd.f32 %v4354, %v4872
    %v4874 = vpop.f32.mrf.mxu0
    %v4875 = vadd.f32 %v4354, %v4874
    %4876 = vmatprep.mubr.bf16.mxu0 %v4826
    %4877 = vmatmul.mubr.bf16.gmra.mxu0 %v4412
    %v4878 = vpop.f32.mrf.mxu0
    %v4879 = vadd.f32 %v4359, %v4878
    %v4880 = vpop.f32.mrf.mxu0
    %v4881 = vadd.f32 %v4359, %v4880
    %v4882 = vpop.f32.mrf.mxu0
    %v4883 = vadd.f32 %v4364, %v4882
    %v4884 = vpop.f32.mrf.mxu0
    %v4885 = vadd.f32 %v4364, %v4884
    %4886 = vmatprep.mubr.bf16.mxu0 %v4829
    %4887 = vmatmul.mubr.bf16.gmra.mxu0 %v4414
    %v4888 = vpop.f32.mrf.mxu0
    %v4889 = vadd.f32 %v4369, %v4888
    %v4890 = vpop.f32.mrf.mxu0
    %v4891 = vadd.f32 %v4369, %v4890
    %v4892 = vpop.f32.mrf.mxu0
    %v4893 = vadd.f32 %v4374, %v4892
    %v4894 = vpop.f32.mrf.mxu0
    %v4895 = vadd.f32 %v4374, %v4894
    %4896 = vmatprep.mubr.bf16.mxu0 %v4832
    %4897 = vmatmul.mubr.bf16.gmra.mxu0 %v4416
    %v4898 = vpop.f32.mrf.mxu0
    %v4899 = vadd.f32 %v4379, %v4898
    %v4900 = vpop.f32.mrf.mxu0
    %v4901 = vadd.f32 %v4379, %v4900
    %v4902 = vpop.f32.mrf.mxu0
    %v4903 = vadd.f32 %v4384, %v4902
    %v4904 = vpop.f32.mrf.mxu0
    %v4905 = vadd.f32 %v4384, %v4904
    %4906 = vdwg.mxu0
    %4907 = vmatprep.subr.bf16.mxu0 %v4721
    %4908 = vmatpush1.bf16.msra.mxu0 %v4720
    %4909 = vmatprep.subr.bf16.mxu0 %v4713
    %4910 = vmatpush1.bf16.msra.mxu0 %v4712
    %4911 = vmatprep.subr.bf16.mxu0 %v4705
    %4912 = vmatpush1.bf16.msra.mxu0 %v4704
    %4913 = vmatprep.subr.bf16.mxu0 %v4697
    %4914 = vmatpush1.bf16.msra.mxu0 %v4696
    %4915 = vmatprep.subr.bf16.mxu0 %v4689
    %4916 = vmatpush1.bf16.msra.mxu0 %v4688
    %4917 = vmatprep.subr.bf16.mxu0 %v4681
    %4918 = vmatpush1.bf16.msra.mxu0 %v4680
    %4919 = vmatprep.subr.bf16.mxu0 %v4673
    %4920 = vmatpush1.bf16.msra.mxu0 %v4672
    %4921 = vmatprep.subr.bf16.mxu0 %v4665
    %4922 = vmatpush1.bf16.msra.mxu0 %v4664
    %4923 = vmatprep.subr.bf16.mxu0 0
    %4924 = vmatpush2.bf16.msra.mxu0 0
    %4925 = vmatprep.subr.bf16.mxu0 0
    %4926 = vmatpush2.bf16.msra.mxu0 0
    %4927 = vmatprep.subr.bf16.mxu0 0
    %4928 = vmatpush2.bf16.msra.mxu0 0
    %4929 = vmatprep.subr.bf16.mxu0 0
    %4930 = vmatpush2.bf16.msra.mxu0 0
    %4931 = vmatprep.subr.bf16.mxu0 0
    %4932 = vmatpush2.bf16.msra.mxu0 0
    %4933 = vmatprep.subr.bf16.mxu0 0
    %4934 = vmatpush2.bf16.msra.mxu0 0
    %4935 = vmatprep.subr.bf16.mxu0 %v4737
    %4936 = vmatpush2.bf16.msra.mxu0 %v4736
    %4937 = vmatprep.subr.bf16.mxu0 %v4729
    %4938 = vmatpush2.bf16.msra.mxu0 %v4728
    %4939 = vmatprep.mubr.bf16.mxu0 %v4823
    %4940 = vmatmul.mubr.bf16.gmra.mxu0 %v4410
    %v4941 = vpop.f32.mrf.mxu0
    %v4942 = vadd.f32 %v4349, %v4941
    %v4943 = vpop.f32.mrf.mxu0
    %v4944 = vadd.f32 %v4349, %v4943
    %v4945 = vpop.f32.mrf.mxu0
    %v4946 = vadd.f32 %v4354, %v4945
    %v4947 = vpop.f32.mrf.mxu0
    %v4948 = vadd.f32 %v4354, %v4947
    %4949 = vmatprep.mubr.bf16.mxu0 %v4826
    %4950 = vmatmul.mubr.bf16.gmra.mxu0 %v4412
    %v4951 = vpop.f32.mrf.mxu0
    %v4952 = vadd.f32 %v4359, %v4951
    %v4953 = vpop.f32.mrf.mxu0
    %v4954 = vadd.f32 %v4359, %v4953
    %v4955 = vpop.f32.mrf.mxu0
    %v4956 = vadd.f32 %v4364, %v4955
    %v4957 = vpop.f32.mrf.mxu0
    %v4958 = vadd.f32 %v4364, %v4957
    %4959 = vmatprep.mubr.bf16.mxu0 %v4829
    %4960 = vmatmul.mubr.bf16.gmra.mxu0 %v4414
    %v4961 = vpop.f32.mrf.mxu0
    %v4962 = vadd.f32 %v4369, %v4961
    %v4963 = vpop.f32.mrf.mxu0
    %v4964 = vadd.f32 %v4369, %v4963
    %v4965 = vpop.f32.mrf.mxu0
    %v4966 = vadd.f32 %v4374, %v4965
    %v4967 = vpop.f32.mrf.mxu0
    %v4968 = vadd.f32 %v4374, %v4967
    %4969 = vmatprep.mubr.bf16.mxu0 %v4832
    %4970 = vmatmul.mubr.bf16.gmra.mxu0 %v4416
    %v4971 = vpop.f32.mrf.mxu0
    %v4972 = vadd.f32 %v4379, %v4971
    %v4973 = vpop.f32.mrf.mxu0
    %v4974 = vadd.f32 %v4379, %v4973
    %v4975 = vpop.f32.mrf.mxu0
    %v4976 = vadd.f32 %v4384, %v4975
    %v4977 = vpop.f32.mrf.mxu0
    %v4978 = vadd.f32 %v4384, %v4977
    %4979 = vdwg.mxu0
    %4980 = vmatprep.subr.bf16.mxu0 %v4723
    %4981 = vmatpush1.bf16.msra.mxu0 %v4722
    %4982 = vmatprep.subr.bf16.mxu0 %v4715
    %4983 = vmatpush1.bf16.msra.mxu0 %v4714
    %4984 = vmatprep.subr.bf16.mxu0 %v4707
    %4985 = vmatpush1.bf16.msra.mxu0 %v4706
    %4986 = vmatprep.subr.bf16.mxu0 %v4699
    %4987 = vmatpush1.bf16.msra.mxu0 %v4698
    %4988 = vmatprep.subr.bf16.mxu0 %v4691
    %4989 = vmatpush1.bf16.msra.mxu0 %v4690
    %4990 = vmatprep.subr.bf16.mxu0 %v4683
    %4991 = vmatpush1.bf16.msra.mxu0 %v4682
    %4992 = vmatprep.subr.bf16.mxu0 %v4675
    %4993 = vmatpush1.bf16.msra.mxu0 %v4674
    %4994 = vmatprep.subr.bf16.mxu0 %v4667
    %4995 = vmatpush1.bf16.msra.mxu0 %v4666
    %4996 = vmatprep.subr.bf16.mxu0 0
    %4997 = vmatpush2.bf16.msra.mxu0 0
    %4998 = vmatprep.subr.bf16.mxu0 0
    %4999 = vmatpush2.bf16.msra.mxu0 0
    %5000 = vmatprep.subr.bf16.mxu0 0
    %5001 = vmatpush2.bf16.msra.mxu0 0
    %5002 = vmatprep.subr.bf16.mxu0 0
    %5003 = vmatpush2.bf16.msra.mxu0 0
    %5004 = vmatprep.subr.bf16.mxu0 0
    %5005 = vmatpush2.bf16.msra.mxu0 0
    %5006 = vmatprep.subr.bf16.mxu0 0
    %5007 = vmatpush2.bf16.msra.mxu0 0
    %5008 = vmatprep.subr.bf16.mxu0 %v4739
    %5009 = vmatpush2.bf16.msra.mxu0 %v4738
    %5010 = vmatprep.subr.bf16.mxu0 %v4731
    %5011 = vmatpush2.bf16.msra.mxu0 %v4730
    %5012 = vmatprep.mubr.bf16.mxu0 %v4823
    %5013 = vmatmul.mubr.bf16.gmra.mxu0 %v4410
    %v5014 = vpop.f32.mrf.mxu0
    %v5015 = vadd.f32 %v4349, %v5014
    %v5016 = vpop.f32.mrf.mxu0
    %v5017 = vadd.f32 %v4349, %v5016
    %v5018 = vpop.f32.mrf.mxu0
    %v5019 = vadd.f32 %v4354, %v5018
    %v5020 = vpop.f32.mrf.mxu0
    %v5021 = vadd.f32 %v4354, %v5020
    %5022 = vmatprep.mubr.bf16.mxu0 %v4826
    %5023 = vmatmul.mubr.bf16.gmra.mxu0 %v4412
    %v5024 = vpop.f32.mrf.mxu0
    %v5025 = vadd.f32 %v4359, %v5024
    %v5026 = vpop.f32.mrf.mxu0
    %v5027 = vadd.f32 %v4359, %v5026
    %v5028 = vpop.f32.mrf.mxu0
    %v5029 = vadd.f32 %v4364, %v5028
    %v5030 = vpop.f32.mrf.mxu0
    %v5031 = vadd.f32 %v4364, %v5030
    %5032 = vmatprep.mubr.bf16.mxu0 %v4829
    %5033 = vmatmul.mubr.bf16.gmra.mxu0 %v4414
    %v5034 = vpop.f32.mrf.mxu0
    %v5035 = vadd.f32 %v4369, %v5034
    %v5036 = vpop.f32.mrf.mxu0
    %v5037 = vadd.f32 %v4369, %v5036
    %v5038 = vpop.f32.mrf.mxu0
    %v5039 = vadd.f32 %v4374, %v5038
    %v5040 = vpop.f32.mrf.mxu0
    %v5041 = vadd.f32 %v4374, %v5040
    %5042 = vmatprep.mubr.bf16.mxu0 %v4832
    %5043 = vmatmul.mubr.bf16.gmra.mxu0 %v4416
    %v5044 = vpop.f32.mrf.mxu0
    %v5045 = vadd.f32 %v4379, %v5044
    %v5046 = vpop.f32.mrf.mxu0
    %v5047 = vadd.f32 %v4379, %v5046
    %v5048 = vpop.f32.mrf.mxu0
    %v5049 = vadd.f32 %v4384, %v5048
    %v5050 = vpop.f32.mrf.mxu0
    %v5051 = vadd.f32 %v4384, %v5050
    %5052 = vdwg.mxu0
    %5053 = vmatprep.subr.bf16.mxu0 %v4725
    %5054 = vmatpush1.bf16.msra.mxu0 %v4724
    %5055 = vmatprep.subr.bf16.mxu0 %v4717
    %5056 = vmatpush1.bf16.msra.mxu0 %v4716
    %5057 = vmatprep.subr.bf16.mxu0 %v4709
    %5058 = vmatpush1.bf16.msra.mxu0 %v4708
    %5059 = vmatprep.subr.bf16.mxu0 %v4701
    %5060 = vmatpush1.bf16.msra.mxu0 %v4700
    %5061 = vmatprep.subr.bf16.mxu0 %v4693
    %5062 = vmatpush1.bf16.msra.mxu0 %v4692
    %5063 = vmatprep.subr.bf16.mxu0 %v4685
    %5064 = vmatpush1.bf16.msra.mxu0 %v4684
    %5065 = vmatprep.subr.bf16.mxu0 %v4677
    %5066 = vmatpush1.bf16.msra.mxu0 %v4676
    %5067 = vmatprep.subr.bf16.mxu0 %v4669
    %5068 = vmatpush1.bf16.msra.mxu0 %v4668
    %5069 = vmatprep.subr.bf16.mxu0 0
    %5070 = vmatpush2.bf16.msra.mxu0 0
    %5071 = vmatprep.subr.bf16.mxu0 0
    %5072 = vmatpush2.bf16.msra.mxu0 0
    %5073 = vmatprep.subr.bf16.mxu0 0
    %5074 = vmatpush2.bf16.msra.mxu0 0
    %5075 = vmatprep.subr.bf16.mxu0 0
    %5076 = vmatpush2.bf16.msra.mxu0 0
    %5077 = vmatprep.subr.bf16.mxu0 0
    %5078 = vmatpush2.bf16.msra.mxu0 0
    %5079 = vmatprep.subr.bf16.mxu0 0
    %5080 = vmatpush2.bf16.msra.mxu0 0
    %5081 = vmatprep.subr.bf16.mxu0 %v4741
    %5082 = vmatpush2.bf16.msra.mxu0 %v4740
    %5083 = vmatprep.subr.bf16.mxu0 %v4733
    %5084 = vmatpush2.bf16.msra.mxu0 %v4732
    %5085 = vmatprep.mubr.bf16.mxu0 %v4823
    %5086 = vmatmul.mubr.bf16.gmra.mxu0 %v4410
    %v5087 = vpop.f32.mrf.mxu0
    %v5088 = vadd.f32 %v4349, %v5087
    %v5089 = vpop.f32.mrf.mxu0
    %v5090 = vadd.f32 %v4349, %v5089
    %v5091 = vpop.f32.mrf.mxu0
    %v5092 = vadd.f32 %v4354, %v5091
    %v5093 = vpop.f32.mrf.mxu0
    %v5094 = vadd.f32 %v4354, %v5093
    %5095 = vmatprep.mubr.bf16.mxu0 %v4826
    %5096 = vmatmul.mubr.bf16.gmra.mxu0 %v4412
    %v5097 = vpop.f32.mrf.mxu0
    %v5098 = vadd.f32 %v4359, %v5097
    %v5099 = vpop.f32.mrf.mxu0
    %v5100 = vadd.f32 %v4359, %v5099
    %v5101 = vpop.f32.mrf.mxu0
    %v5102 = vadd.f32 %v4364, %v5101
    %v5103 = vpop.f32.mrf.mxu0
    %v5104 = vadd.f32 %v4364, %v5103
    %5105 = vmatprep.mubr.bf16.mxu0 %v4829
    %5106 = vmatmul.mubr.bf16.gmra.mxu0 %v4414
    %v5107 = vpop.f32.mrf.mxu0
    %v5108 = vadd.f32 %v4369, %v5107
    %v5109 = vpop.f32.mrf.mxu0
    %v5110 = vadd.f32 %v4369, %v5109
    %v5111 = vpop.f32.mrf.mxu0
    %v5112 = vadd.f32 %v4374, %v5111
    %v5113 = vpop.f32.mrf.mxu0
    %v5114 = vadd.f32 %v4374, %v5113
    %5115 = vmatprep.mubr.bf16.mxu0 %v4832
    %5116 = vmatmul.mubr.bf16.gmra.mxu0 %v4416
    %v5117 = vpop.f32.mrf.mxu0
    %v5118 = vadd.f32 %v4379, %v5117
    %v5119 = vpop.f32.mrf.mxu0
    %v5120 = vadd.f32 %v4379, %v5119
    %v5121 = vpop.f32.mrf.mxu0
    %v5122 = vadd.f32 %v4384, %v5121
    %v5123 = vpop.f32.mrf.mxu0
    %v5124 = vadd.f32 %v4384, %v5123
    %5125 = vdwg.mxu0
    %v5126 = vmax.f32 %v4869, 0.0
    %v5127 = vmax.f32 %v4871, 0.0
    %v5128 = vmax.f32 %v4942, 0.0
    %v5129 = vmax.f32 %v4944, 0.0
    %v5130 = vmax.f32 %v5015, 0.0
    %v5131 = vmax.f32 %v5017, 0.0
    %v5132 = vmax.f32 %v5088, 0.0
    %v5133 = vmax.f32 %v5090, 0.0
    %v5134 = vmax.f32 %v4873, 0.0
    %v5135 = vmax.f32 %v4875, 0.0
    %v5136 = vmax.f32 %v4946, 0.0
    %v5137 = vmax.f32 %v4948, 0.0
    %v5138 = vmax.f32 %v5019, 0.0
    %v5139 = vmax.f32 %v5021, 0.0
    %v5140 = vmax.f32 %v5092, 0.0
    %v5141 = vmax.f32 %v5094, 0.0
    %v5142 = vmax.f32 %v4879, 0.0
    %v5143 = vmax.f32 %v4881, 0.0
    %v5144 = vmax.f32 %v4952, 0.0
    %v5145 = vmax.f32 %v4954, 0.0
    %v5146 = vmax.f32 %v5025, 0.0
    %v5147 = vmax.f32 %v5027, 0.0
    %v5148 = vmax.f32 %v5098, 0.0
    %v5149 = vmax.f32 %v5100, 0.0
    %v5150 = vmax.f32 %v4883, 0.0
    %v5151 = vmax.f32 %v4885, 0.0
    %v5152 = vmax.f32 %v4956, 0.0
    %v5153 = vmax.f32 %v4958, 0.0
    %v5154 = vmax.f32 %v5029, 0.0
    %v5155 = vmax.f32 %v5031, 0.0
    %v5156 = vmax.f32 %v5102, 0.0
    %v5157 = vmax.f32 %v5104, 0.0
    %v5158 = vmax.f32 %v4889, 0.0
    %v5159 = vmax.f32 %v4891, 0.0
    %v5160 = vmax.f32 %v4962, 0.0
    %v5161 = vmax.f32 %v4964, 0.0
    %v5162 = vmax.f32 %v5035, 0.0
    %v5163 = vmax.f32 %v5037, 0.0
    %v5164 = vmax.f32 %v5108, 0.0
    %v5165 = vmax.f32 %v5110, 0.0
    %v5166 = vmax.f32 %v4893, 0.0
    %v5167 = vmax.f32 %v4895, 0.0
    %v5168 = vmax.f32 %v4966, 0.0
    %v5169 = vmax.f32 %v4968, 0.0
    %v5170 = vmax.f32 %v5039, 0.0
    %v5171 = vmax.f32 %v5041, 0.0
    %v5172 = vmax.f32 %v5112, 0.0
    %v5173 = vmax.f32 %v5114, 0.0
    %v5174 = vmax.f32 %v4899, 0.0
    %v5175 = vmax.f32 %v4901, 0.0
    %v5176 = vmax.f32 %v4972, 0.0
    %v5177 = vmax.f32 %v4974, 0.0
    %v5178 = vmax.f32 %v5045, 0.0
    %v5179 = vmax.f32 %v5047, 0.0
    %v5180 = vmax.f32 %v5118, 0.0
    %v5181 = vmax.f32 %v5120, 0.0
    %v5182 = vmax.f32 %v4903, 0.0
    %v5183 = vmax.f32 %v4905, 0.0
    %v5184 = vmax.f32 %v4976, 0.0
    %v5185 = vmax.f32 %v4978, 0.0
    %v5186 = vmax.f32 %v5049, 0.0
    %v5187 = vmax.f32 %v5051, 0.0
    %v5188 = vmax.f32 %v5122, 0.0
    %v5189 = vmax.f32 %v5124, 0.0
    %v5190 = vld [vmem:[%s8] sm:$0xff]
    %v5191 = vld [vmem:[%s8 + $0x8] sm:$0xff]
    %v5192 = vld [vmem:[%s8 + $0x10] sm:$0xff]
    %v5193 = vld [vmem:[%s8 + $0x18] sm:$0xff]
    %v5194 = vld [vmem:[%s8 + $0x20] sm:$0xff]
    %v5195 = vld [vmem:[%s8 + $0x28] sm:$0xff]
    %v5196 = vld [vmem:[%s8 + $0x30] sm:$0xff]
    %v5197 = vld [vmem:[%s8 + $0x38] sm:$0xff]
    %5199 = vset.pattern.permute.xlu0 0
    %5200 = vperm.xlu0 %5199, %v5190
    %v5201 = vpop.permute.xlu0 %5200
    %5204 = vset.pattern.permute.xlu0 0
    %5205 = vperm.xlu0 %5204, %v5191
    %v5206 = vpop.permute.xlu0 %5205
    %5209 = vset.pattern.permute.xlu0 0
    %5210 = vperm.xlu0 %5209, %v5192
    %v5211 = vpop.permute.xlu0 %5210
    %5214 = vset.pattern.permute.xlu0 0
    %5215 = vperm.xlu0 %5214, %v5193
    %v5216 = vpop.permute.xlu0 %5215
    %5219 = vset.pattern.permute.xlu0 0
    %5220 = vperm.xlu0 %5219, %v5194
    %v5221 = vpop.permute.xlu0 %5220
    %5224 = vset.pattern.permute.xlu0 0
    %5225 = vperm.xlu0 %5224, %v5195
    %v5226 = vpop.permute.xlu0 %5225
    %5229 = vset.pattern.permute.xlu0 0
    %5230 = vperm.xlu0 %5229, %v5196
    %v5231 = vpop.permute.xlu0 %5230
    %5234 = vset.pattern.permute.xlu0 0
    %5235 = vperm.xlu0 %5234, %v5197
    %v5236 = vpop.permute.xlu0 %5235
    %v5238 = vmul.f32 %v5126, %v5201
    %v5239 = vmul.f32 %v5127, %v5201
    %v5240 = vmul.f32 %v5128, %v5201
    %v5241 = vmul.f32 %v5129, %v5201
    %v5242 = vmul.f32 %v5130, %v5201
    %v5243 = vmul.f32 %v5131, %v5201
    %v5244 = vmul.f32 %v5132, %v5201
    %v5245 = vmul.f32 %v5133, %v5201
    %v5246 = vmul.f32 %v5134, %v5206
    %v5247 = vmul.f32 %v5135, %v5206
    %v5248 = vmul.f32 %v5136, %v5206
    %v5249 = vmul.f32 %v5137, %v5206
    %v5250 = vmul.f32 %v5138, %v5206
    %v5251 = vmul.f32 %v5139, %v5206
    %v5252 = vmul.f32 %v5140, %v5206
    %v5253 = vmul.f32 %v5141, %v5206
    %v5254 = vmul.f32 %v5142, %v5211
    %v5255 = vmul.f32 %v5143, %v5211
    %v5256 = vmul.f32 %v5144, %v5211
    %v5257 = vmul.f32 %v5145, %v5211
    %v5258 = vmul.f32 %v5146, %v5211
    %v5259 = vmul.f32 %v5147, %v5211
    %v5260 = vmul.f32 %v5148, %v5211
    %v5261 = vmul.f32 %v5149, %v5211
    %v5262 = vmul.f32 %v5150, %v5216
    %v5263 = vmul.f32 %v5151, %v5216
    %v5264 = vmul.f32 %v5152, %v5216
    %v5265 = vmul.f32 %v5153, %v5216
    %v5266 = vmul.f32 %v5154, %v5216
    %v5267 = vmul.f32 %v5155, %v5216
    %v5268 = vmul.f32 %v5156, %v5216
    %v5269 = vmul.f32 %v5157, %v5216
    %v5270 = vmul.f32 %v5158, %v5221
    %v5271 = vmul.f32 %v5159, %v5221
    %v5272 = vmul.f32 %v5160, %v5221
    %v5273 = vmul.f32 %v5161, %v5221
    %v5274 = vmul.f32 %v5162, %v5221
    %v5275 = vmul.f32 %v5163, %v5221
    %v5276 = vmul.f32 %v5164, %v5221
    %v5277 = vmul.f32 %v5165, %v5221
    %v5278 = vmul.f32 %v5166, %v5226
    %v5279 = vmul.f32 %v5167, %v5226
    %v5280 = vmul.f32 %v5168, %v5226
    %v5281 = vmul.f32 %v5169, %v5226
    %v5282 = vmul.f32 %v5170, %v5226
    %v5283 = vmul.f32 %v5171, %v5226
    %v5284 = vmul.f32 %v5172, %v5226
    %v5285 = vmul.f32 %v5173, %v5226
    %v5286 = vmul.f32 %v5174, %v5231
    %v5287 = vmul.f32 %v5175, %v5231
    %v5288 = vmul.f32 %v5176, %v5231
    %v5289 = vmul.f32 %v5177, %v5231
    %v5290 = vmul.f32 %v5178, %v5231
    %v5291 = vmul.f32 %v5179, %v5231
    %v5292 = vmul.f32 %v5180, %v5231
    %v5293 = vmul.f32 %v5181, %v5231
    %v5294 = vmul.f32 %v5182, %v5236
    %v5295 = vmul.f32 %v5183, %v5236
    %v5296 = vmul.f32 %v5184, %v5236
    %v5297 = vmul.f32 %v5185, %v5236
    %v5298 = vmul.f32 %v5186, %v5236
    %v5299 = vmul.f32 %v5187, %v5236
    %v5300 = vmul.f32 %v5188, %v5236
    %v5301 = vmul.f32 %v5189, %v5236
    %v5302 = vld [vmem:[%s9] sm:$0xff]
    %v5303 = vld [vmem:[%s9 + $0x8] sm:$0xff]
    %v5304 = vld [vmem:[%s9 + $0x10] sm:$0xff]
    %v5305 = vld [vmem:[%s9 + $0x18] sm:$0xff]
    %v5306 = vld [vmem:[%s9 + $0x20] sm:$0xff]
    %v5307 = vld [vmem:[%s9 + $0x28] sm:$0xff]
    %v5308 = vld [vmem:[%s9 + $0x30] sm:$0xff]
    %v5309 = vld [vmem:[%s9 + $0x38] sm:$0xff]
    %5311 = vset.pattern.permute.xlu0 0
    %5312 = vperm.xlu0 %5311, %v5302
    %v5313 = vpop.permute.xlu0 %5312
    %5316 = vset.pattern.permute.xlu0 0
    %5317 = vperm.xlu0 %5316, %v5303
    %v5318 = vpop.permute.xlu0 %5317
    %5321 = vset.pattern.permute.xlu0 0
    %5322 = vperm.xlu0 %5321, %v5304
    %v5323 = vpop.permute.xlu0 %5322
    %5326 = vset.pattern.permute.xlu0 0
    %5327 = vperm.xlu0 %5326, %v5305
    %v5328 = vpop.permute.xlu0 %5327
    %5331 = vset.pattern.permute.xlu0 0
    %5332 = vperm.xlu0 %5331, %v5306
    %v5333 = vpop.permute.xlu0 %5332
    %5336 = vset.pattern.permute.xlu0 0
    %5337 = vperm.xlu0 %5336, %v5307
    %v5338 = vpop.permute.xlu0 %5337
    %5341 = vset.pattern.permute.xlu0 0
    %5342 = vperm.xlu0 %5341, %v5308
    %v5343 = vpop.permute.xlu0 %5342
    %5346 = vset.pattern.permute.xlu0 0
    %5347 = vperm.xlu0 %5346, %v5309
    %v5348 = vpop.permute.xlu0 %5347
    %v5350 = vadd.f32 %v5238, %v5313
    %v5351 = vadd.f32 %v5239, %v5313
    %v5352 = vadd.f32 %v5240, %v5313
    %v5353 = vadd.f32 %v5241, %v5313
    %v5354 = vadd.f32 %v5242, %v5313
    %v5355 = vadd.f32 %v5243, %v5313
    %v5356 = vadd.f32 %v5244, %v5313
    %v5357 = vadd.f32 %v5245, %v5313
    %v5358 = vadd.f32 %v5246, %v5318
    %v5359 = vadd.f32 %v5247, %v5318
    %v5360 = vadd.f32 %v5248, %v5318
    %v5361 = vadd.f32 %v5249, %v5318
    %v5362 = vadd.f32 %v5250, %v5318
    %v5363 = vadd.f32 %v5251, %v5318
    %v5364 = vadd.f32 %v5252, %v5318
    %v5365 = vadd.f32 %v5253, %v5318
    %v5366 = vadd.f32 %v5254, %v5323
    %v5367 = vadd.f32 %v5255, %v5323
    %v5368 = vadd.f32 %v5256, %v5323
    %v5369 = vadd.f32 %v5257, %v5323
    %v5370 = vadd.f32 %v5258, %v5323
    %v5371 = vadd.f32 %v5259, %v5323
    %v5372 = vadd.f32 %v5260, %v5323
    %v5373 = vadd.f32 %v5261, %v5323
    %v5374 = vadd.f32 %v5262, %v5328
    %v5375 = vadd.f32 %v5263, %v5328
    %v5376 = vadd.f32 %v5264, %v5328
    %v5377 = vadd.f32 %v5265, %v5328
    %v5378 = vadd.f32 %v5266, %v5328
    %v5379 = vadd.f32 %v5267, %v5328
    %v5380 = vadd.f32 %v5268, %v5328
    %v5381 = vadd.f32 %v5269, %v5328
    %v5382 = vadd.f32 %v5270, %v5333
    %v5383 = vadd.f32 %v5271, %v5333
    %v5384 = vadd.f32 %v5272, %v5333
    %v5385 = vadd.f32 %v5273, %v5333
    %v5386 = vadd.f32 %v5274, %v5333
    %v5387 = vadd.f32 %v5275, %v5333
    %v5388 = vadd.f32 %v5276, %v5333
    %v5389 = vadd.f32 %v5277, %v5333
    %v5390 = vadd.f32 %v5278, %v5338
    %v5391 = vadd.f32 %v5279, %v5338
    %v5392 = vadd.f32 %v5280, %v5338
    %v5393 = vadd.f32 %v5281, %v5338
    %v5394 = vadd.f32 %v5282, %v5338
    %v5395 = vadd.f32 %v5283, %v5338
    %v5396 = vadd.f32 %v5284, %v5338
    %v5397 = vadd.f32 %v5285, %v5338
    %v5398 = vadd.f32 %v5286, %v5343
    %v5399 = vadd.f32 %v5287, %v5343
    %v5400 = vadd.f32 %v5288, %v5343
    %v5401 = vadd.f32 %v5289, %v5343
    %v5402 = vadd.f32 %v5290, %v5343
    %v5403 = vadd.f32 %v5291, %v5343
    %v5404 = vadd.f32 %v5292, %v5343
    %v5405 = vadd.f32 %v5293, %v5343
    %v5406 = vadd.f32 %v5294, %v5348
    %v5407 = vadd.f32 %v5295, %v5348
    %v5408 = vadd.f32 %v5296, %v5348
    %v5409 = vadd.f32 %v5297, %v5348
    %v5410 = vadd.f32 %v5298, %v5348
    %v5411 = vadd.f32 %v5299, %v5348
    %v5412 = vadd.f32 %v5300, %v5348
    %v5413 = vadd.f32 %v5301, %v5348
    %v5414 = vsel %vm1491, %v5350, 0.0
    %v5415 = vsel %vm1492, %v5351, 0.0
    %v5416 = vsel %vm1493, %v5352, 0.0
    %v5417 = vsel %vm1494, %v5353, 0.0
    %v5418 = vsel %vm1495, %v5354, 0.0
    %v5419 = vsel %vm1496, %v5355, 0.0
    %v5420 = vsel %vm1497, %v5356, 0.0
    %v5421 = vsel %vm1498, %v5357, 0.0
    %v5422 = vsel %vm1491, %v5358, 0.0
    %v5423 = vsel %vm1492, %v5359, 0.0
    %v5424 = vsel %vm1493, %v5360, 0.0
    %v5425 = vsel %vm1494, %v5361, 0.0
    %v5426 = vsel %vm1495, %v5362, 0.0
    %v5427 = vsel %vm1496, %v5363, 0.0
    %v5428 = vsel %vm1497, %v5364, 0.0
    %v5429 = vsel %vm1498, %v5365, 0.0
    %v5430 = vsel %vm1491, %v5366, 0.0
    %v5431 = vsel %vm1492, %v5367, 0.0
    %v5432 = vsel %vm1493, %v5368, 0.0
    %v5433 = vsel %vm1494, %v5369, 0.0
    %v5434 = vsel %vm1495, %v5370, 0.0
    %v5435 = vsel %vm1496, %v5371, 0.0
    %v5436 = vsel %vm1497, %v5372, 0.0
    %v5437 = vsel %vm1498, %v5373, 0.0
    %v5438 = vsel %vm1491, %v5374, 0.0
    %v5439 = vsel %vm1492, %v5375, 0.0
    %v5440 = vsel %vm1493, %v5376, 0.0
    %v5441 = vsel %vm1494, %v5377, 0.0
    %v5442 = vsel %vm1495, %v5378, 0.0
    %v5443 = vsel %vm1496, %v5379, 0.0
    %v5444 = vsel %vm1497, %v5380, 0.0
    %v5445 = vsel %vm1498, %v5381, 0.0
    %v5446 = vsel %vm1491, %v5382, 0.0
    %v5447 = vsel %vm1492, %v5383, 0.0
    %v5448 = vsel %vm1493, %v5384, 0.0
    %v5449 = vsel %vm1494, %v5385, 0.0
    %v5450 = vsel %vm1495, %v5386, 0.0
    %v5451 = vsel %vm1496, %v5387, 0.0
    %v5452 = vsel %vm1497, %v5388, 0.0
    %v5453 = vsel %vm1498, %v5389, 0.0
    %v5454 = vsel %vm1491, %v5390, 0.0
    %v5455 = vsel %vm1492, %v5391, 0.0
    %v5456 = vsel %vm1493, %v5392, 0.0
    %v5457 = vsel %vm1494, %v5393, 0.0
    %v5458 = vsel %vm1495, %v5394, 0.0
    %v5459 = vsel %vm1496, %v5395, 0.0
    %v5460 = vsel %vm1497, %v5396, 0.0
    %v5461 = vsel %vm1498, %v5397, 0.0
    %v5462 = vsel %vm1491, %v5398, 0.0
    %v5463 = vsel %vm1492, %v5399, 0.0
    %v5464 = vsel %vm1493, %v5400, 0.0
    %v5465 = vsel %vm1494, %v5401, 0.0
    %v5466 = vsel %vm1495, %v5402, 0.0
    %v5467 = vsel %vm1496, %v5403, 0.0
    %v5468 = vsel %vm1497, %v5404, 0.0
    %v5469 = vsel %vm1498, %v5405, 0.0
    %v5470 = vsel %vm1491, %v5406, 0.0
    %v5471 = vsel %vm1492, %v5407, 0.0
    %v5472 = vsel %vm1493, %v5408, 0.0
    %v5473 = vsel %vm1494, %v5409, 0.0
    %v5474 = vsel %vm1495, %v5410, 0.0
    %v5475 = vsel %vm1496, %v5411, 0.0
    %v5476 = vsel %vm1497, %v5412, 0.0
    %v5477 = vsel %vm1498, %v5413, 0.0
    %v5478 = vpack.c.bf16 %v5422, %v5414
    %v5479 = vpack.c.bf16 %v5423, %v5415
    %v5480 = vpack.c.bf16 %v5424, %v5416
    %v5481 = vpack.c.bf16 %v5425, %v5417
    %v5482 = vpack.c.bf16 %v5426, %v5418
    %v5483 = vpack.c.bf16 %v5427, %v5419
    %v5484 = vpack.c.bf16 %v5428, %v5420
    %v5485 = vpack.c.bf16 %v5429, %v5421
    %v5486 = vpack.c.bf16 %v5438, %v5430
    %v5487 = vpack.c.bf16 %v5439, %v5431
    %v5488 = vpack.c.bf16 %v5440, %v5432
    %v5489 = vpack.c.bf16 %v5441, %v5433
    %v5490 = vpack.c.bf16 %v5442, %v5434
    %v5491 = vpack.c.bf16 %v5443, %v5435
    %v5492 = vpack.c.bf16 %v5444, %v5436
    %v5493 = vpack.c.bf16 %v5445, %v5437
    %v5494 = vpack.c.bf16 %v5454, %v5446
    %v5495 = vpack.c.bf16 %v5455, %v5447
    %v5496 = vpack.c.bf16 %v5456, %v5448
    %v5497 = vpack.c.bf16 %v5457, %v5449
    %v5498 = vpack.c.bf16 %v5458, %v5450
    %v5499 = vpack.c.bf16 %v5459, %v5451
    %v5500 = vpack.c.bf16 %v5460, %v5452
    %v5501 = vpack.c.bf16 %v5461, %v5453
    %v5502 = vpack.c.bf16 %v5470, %v5462
    %v5503 = vpack.c.bf16 %v5471, %v5463
    %v5504 = vpack.c.bf16 %v5472, %v5464
    %v5505 = vpack.c.bf16 %v5473, %v5465
    %v5506 = vpack.c.bf16 %v5474, %v5466
    %v5507 = vpack.c.bf16 %v5475, %v5467
    %v5508 = vpack.c.bf16 %v5476, %v5468
    %v5509 = vpack.c.bf16 %v5477, %v5469
    %v5542 = vunpack.c.l.b16 %v5478
    %v5543 = vunpack.c.l.b16 %v5479
    %v5544 = vunpack.c.l.b16 %v5480
    %v5545 = vunpack.c.l.b16 %v5481
    %v5546 = vunpack.c.l.b16 %v5482
    %v5547 = vunpack.c.l.b16 %v5483
    %v5548 = vunpack.c.l.b16 %v5484
    %v5549 = vunpack.c.l.b16 %v5485
    %v5550 = vunpack.c.h.b16 %v5478
    %v5551 = vunpack.c.h.b16 %v5479
    %v5552 = vunpack.c.h.b16 %v5480
    %v5553 = vunpack.c.h.b16 %v5481
    %v5554 = vunpack.c.h.b16 %v5482
    %v5555 = vunpack.c.h.b16 %v5483
    %v5556 = vunpack.c.h.b16 %v5484
    %v5557 = vunpack.c.h.b16 %v5485
    %v5558 = vunpack.c.l.b16 %v5486
    %v5559 = vunpack.c.l.b16 %v5487
    %v5560 = vunpack.c.l.b16 %v5488
    %v5561 = vunpack.c.l.b16 %v5489
    %v5562 = vunpack.c.l.b16 %v5490
    %v5563 = vunpack.c.l.b16 %v5491
    %v5564 = vunpack.c.l.b16 %v5492
    %v5565 = vunpack.c.l.b16 %v5493
    %v5566 = vunpack.c.h.b16 %v5486
    %v5567 = vunpack.c.h.b16 %v5487
    %v5568 = vunpack.c.h.b16 %v5488
    %v5569 = vunpack.c.h.b16 %v5489
    %v5570 = vunpack.c.h.b16 %v5490
    %v5571 = vunpack.c.h.b16 %v5491
    %v5572 = vunpack.c.h.b16 %v5492
    %v5573 = vunpack.c.h.b16 %v5493
    %v5574 = vunpack.c.l.b16 %v5494
    %v5575 = vunpack.c.l.b16 %v5495
    %v5576 = vunpack.c.l.b16 %v5496
    %v5577 = vunpack.c.l.b16 %v5497
    %v5578 = vunpack.c.l.b16 %v5498
    %v5579 = vunpack.c.l.b16 %v5499
    %v5580 = vunpack.c.l.b16 %v5500
    %v5581 = vunpack.c.l.b16 %v5501
    %v5582 = vunpack.c.h.b16 %v5494
    %v5583 = vunpack.c.h.b16 %v5495
    %v5584 = vunpack.c.h.b16 %v5496
    %v5585 = vunpack.c.h.b16 %v5497
    %v5586 = vunpack.c.h.b16 %v5498
    %v5587 = vunpack.c.h.b16 %v5499
    %v5588 = vunpack.c.h.b16 %v5500
    %v5589 = vunpack.c.h.b16 %v5501
    %v5590 = vunpack.c.l.b16 %v5502
    %v5591 = vunpack.c.l.b16 %v5503
    %v5592 = vunpack.c.l.b16 %v5504
    %v5593 = vunpack.c.l.b16 %v5505
    %v5594 = vunpack.c.l.b16 %v5506
    %v5595 = vunpack.c.l.b16 %v5507
    %v5596 = vunpack.c.l.b16 %v5508
    %v5597 = vunpack.c.l.b16 %v5509
    %v5598 = vunpack.c.h.b16 %v5502
    %v5599 = vunpack.c.h.b16 %v5503
    %v5600 = vunpack.c.h.b16 %v5504
    %v5601 = vunpack.c.h.b16 %v5505
    %v5602 = vunpack.c.h.b16 %v5506
    %v5603 = vunpack.c.h.b16 %v5507
    %v5604 = vunpack.c.h.b16 %v5508
    %v5605 = vunpack.c.h.b16 %v5509
    %v5606 = vpack.c.b16 %v5543, %v5542
    %v5607 = vpack.c.b16 %v5545, %v5544
    %v5608 = vpack.c.b16 %v5547, %v5546
    %v5609 = vpack.c.b16 %v5549, %v5548
    %v5610 = vpack.c.b16 %v5551, %v5550
    %v5611 = vpack.c.b16 %v5553, %v5552
    %v5612 = vpack.c.b16 %v5555, %v5554
    %v5613 = vpack.c.b16 %v5557, %v5556
    %v5614 = vpack.c.b16 %v5559, %v5558
    %v5615 = vpack.c.b16 %v5561, %v5560
    %v5616 = vpack.c.b16 %v5563, %v5562
    %v5617 = vpack.c.b16 %v5565, %v5564
    %v5618 = vpack.c.b16 %v5567, %v5566
    %v5619 = vpack.c.b16 %v5569, %v5568
    %v5620 = vpack.c.b16 %v5571, %v5570
    %v5621 = vpack.c.b16 %v5573, %v5572
    %v5622 = vpack.c.b16 %v5575, %v5574
    %v5623 = vpack.c.b16 %v5577, %v5576
    %v5624 = vpack.c.b16 %v5579, %v5578
    %v5625 = vpack.c.b16 %v5581, %v5580
    %v5626 = vpack.c.b16 %v5583, %v5582
    %v5627 = vpack.c.b16 %v5585, %v5584
    %v5628 = vpack.c.b16 %v5587, %v5586
    %v5629 = vpack.c.b16 %v5589, %v5588
    %v5630 = vpack.c.b16 %v5591, %v5590
    %v5631 = vpack.c.b16 %v5593, %v5592
    %v5632 = vpack.c.b16 %v5595, %v5594
    %v5633 = vpack.c.b16 %v5597, %v5596
    %v5634 = vpack.c.b16 %v5599, %v5598
    %v5635 = vpack.c.b16 %v5601, %v5600
    %v5636 = vpack.c.b16 %v5603, %v5602
    %v5637 = vpack.c.b16 %v5605, %v5604
    %s5670 = scalar_lea.vmem [#allocation3], 320
    %5671 = vst [vmem:[%s5670 + $0x4] sm:$0xff] %v5606
    %5672 = vst [vmem:[%s5670 + $0xc] sm:$0xff] %v5607
    %5673 = vst [vmem:[%s5670 + $0x14] sm:$0xff] %v5608
    %5674 = vst [vmem:[%s5670 + $0x1c] sm:$0xff] %v5609
    %5675 = vst [vmem:[%s5670 + $0x2c] sm:$0xff] %v5610
    %5676 = vst [vmem:[%s5670 + $0x34] sm:$0xff] %v5611
    %5677 = vst [vmem:[%s5670 + $0x3c] sm:$0xff] %v5612
    %5678 = vst [vmem:[%s5670 + $0x44] sm:$0xff] %v5613
    %5679 = vst [vmem:[%s5670 + $0x54] sm:$0xff] %v5614
    %5680 = vst [vmem:[%s5670 + $0x5c] sm:$0xff] %v5615
    %5681 = vst [vmem:[%s5670 + $0x64] sm:$0xff] %v5616
    %5682 = vst [vmem:[%s5670 + $0x6c] sm:$0xff] %v5617
    %5683 = vst [vmem:[%s5670 + $0x7c] sm:$0xff] %v5618
    %5684 = vst [vmem:[%s5670 + $0x84] sm:$0xff] %v5619
    %5685 = vst [vmem:[%s5670 + $0x8c] sm:$0xff] %v5620
    %5686 = vst [vmem:[%s5670 + $0x94] sm:$0xff] %v5621
    %5687 = vst [vmem:[%s5670 + $0xa4] sm:$0xff] %v5622
    %5688 = vst [vmem:[%s5670 + $0xac] sm:$0xff] %v5623
    %5689 = vst [vmem:[%s5670 + $0xb4] sm:$0xff] %v5624
    %5690 = vst [vmem:[%s5670 + $0xbc] sm:$0xff] %v5625
    %5691 = vst [vmem:[%s5670 + $0xcc] sm:$0xff] %v5626
    %5692 = vst [vmem:[%s5670 + $0xd4] sm:$0xff] %v5627
    %5693 = vst [vmem:[%s5670 + $0xdc] sm:$0xff] %v5628
    %5694 = vst [vmem:[%s5670 + $0xe4] sm:$0xff] %v5629
    %5695 = vst [vmem:[%s5670 + $0xf4] sm:$0xff] %v5630
    %5696 = vst [vmem:[%s5670 + $0xfc] sm:$0xff] %v5631
    %5697 = vst [vmem:[%s5670 + $0x104] sm:$0xff] %v5632
    %5698 = vst [vmem:[%s5670 + $0x10c] sm:$0xff] %v5633
    %5699 = vst [vmem:[%s5670 + $0x11c] sm:$0xff] %v5634
    %5700 = vst [vmem:[%s5670 + $0x124] sm:$0xff] %v5635
    %5701 = vst [vmem:[%s5670 + $0x12c] sm:$0xff] %v5636
    %5702 = vst [vmem:[%s5670 + $0x134] sm:$0xff] %v5637
    %v5703 = vld [vmem:[%s5670] sm:$0xff]
    %v5704 = vld [vmem:[%s5670 + $0x8] sm:$0xff]
    %v5705 = vld [vmem:[%s5670 + $0x10] sm:$0xff]
    %v5706 = vld [vmem:[%s5670 + $0x18] sm:$0xff]
    %v5707 = vld [vmem:[%s5670 + $0x20] sm:$0xf]
    %v5708 = vld [vmem:[%s5670 + $0x28] sm:$0xff]
    %v5709 = vld [vmem:[%s5670 + $0x30] sm:$0xff]
    %v5710 = vld [vmem:[%s5670 + $0x38] sm:$0xff]
    %v5711 = vld [vmem:[%s5670 + $0x40] sm:$0xff]
    %v5712 = vld [vmem:[%s5670 + $0x48] sm:$0xf]
    %v5713 = vld [vmem:[%s5670 + $0x50] sm:$0xff]
    %v5714 = vld [vmem:[%s5670 + $0x58] sm:$0xff]
    %v5715 = vld [vmem:[%s5670 + $0x60] sm:$0xff]
    %v5716 = vld [vmem:[%s5670 + $0x68] sm:$0xff]
    %v5717 = vld [vmem:[%s5670 + $0x70] sm:$0xf]
    %v5718 = vld [vmem:[%s5670 + $0x78] sm:$0xff]
    %v5719 = vld [vmem:[%s5670 + $0x80] sm:$0xff]
    %v5720 = vld [vmem:[%s5670 + $0x88] sm:$0xff]
    %v5721 = vld [vmem:[%s5670 + $0x90] sm:$0xff]
    %v5722 = vld [vmem:[%s5670 + $0x98] sm:$0xf]
    %v5723 = vld [vmem:[%s5670 + $0xa0] sm:$0xff]
    %v5724 = vld [vmem:[%s5670 + $0xa8] sm:$0xff]
    %v5725 = vld [vmem:[%s5670 + $0xb0] sm:$0xff]
    %v5726 = vld [vmem:[%s5670 + $0xb8] sm:$0xff]
    %v5727 = vld [vmem:[%s5670 + $0xc0] sm:$0xf]
    %v5728 = vld [vmem:[%s5670 + $0xc8] sm:$0xff]
    %v5729 = vld [vmem:[%s5670 + $0xd0] sm:$0xff]
    %v5730 = vld [vmem:[%s5670 + $0xd8] sm:$0xff]
    %v5731 = vld [vmem:[%s5670 + $0xe0] sm:$0xff]
    %v5732 = vld [vmem:[%s5670 + $0xe8] sm:$0xf]
    %v5733 = vld [vmem:[%s5670 + $0xf0] sm:$0xff]
    %v5734 = vld [vmem:[%s5670 + $0xf8] sm:$0xff]
    %v5735 = vld [vmem:[%s5670 + $0x100] sm:$0xff]
    %v5736 = vld [vmem:[%s5670 + $0x108] sm:$0xff]
    %v5737 = vld [vmem:[%s5670 + $0x110] sm:$0xf]
    %v5738 = vld [vmem:[%s5670 + $0x118] sm:$0xff]
    %v5739 = vld [vmem:[%s5670 + $0x120] sm:$0xff]
    %v5740 = vld [vmem:[%s5670 + $0x128] sm:$0xff]
    %v5741 = vld [vmem:[%s5670 + $0x130] sm:$0xff]
    %v5742 = vld [vmem:[%s5670 + $0x138] sm:$0xf]
    %5783 = vrot.lane.b32.xlu0 %v5703, 1
    %v5784 = vpop.permute.xlu0 %5783
    %5785 = vrot.lane.b32.xlu0 %v5704, 1
    %v5786 = vpop.permute.xlu0 %5785
    %5787 = vrot.lane.b32.xlu0 %v5705, 1
    %v5788 = vpop.permute.xlu0 %5787
    %5789 = vrot.lane.b32.xlu0 %v5706, 1
    %v5790 = vpop.permute.xlu0 %5789
    %5791 = vrot.lane.b32.xlu0 %v5707, 1
    %v5792 = vpop.permute.xlu0 %5791
    %5793 = vrot.lane.b32.xlu0 %v5708, 1
    %v5794 = vpop.permute.xlu0 %5793
    %5795 = vrot.lane.b32.xlu0 %v5709, 1
    %v5796 = vpop.permute.xlu0 %5795
    %5797 = vrot.lane.b32.xlu0 %v5710, 1
    %v5798 = vpop.permute.xlu0 %5797
    %5799 = vrot.lane.b32.xlu0 %v5711, 1
    %v5800 = vpop.permute.xlu0 %5799
    %5801 = vrot.lane.b32.xlu0 %v5712, 1
    %v5802 = vpop.permute.xlu0 %5801
    %5803 = vrot.lane.b32.xlu0 %v5713, 1
    %v5804 = vpop.permute.xlu0 %5803
    %5805 = vrot.lane.b32.xlu0 %v5714, 1
    %v5806 = vpop.permute.xlu0 %5805
    %5807 = vrot.lane.b32.xlu0 %v5715, 1
    %v5808 = vpop.permute.xlu0 %5807
    %5809 = vrot.lane.b32.xlu0 %v5716, 1
    %v5810 = vpop.permute.xlu0 %5809
    %5811 = vrot.lane.b32.xlu0 %v5717, 1
    %v5812 = vpop.permute.xlu0 %5811
    %5813 = vrot.lane.b32.xlu0 %v5718, 1
    %v5814 = vpop.permute.xlu0 %5813
    %5815 = vrot.lane.b32.xlu0 %v5719, 1
    %v5816 = vpop.permute.xlu0 %5815
    %5817 = vrot.lane.b32.xlu0 %v5720, 1
    %v5818 = vpop.permute.xlu0 %5817
    %5819 = vrot.lane.b32.xlu0 %v5721, 1
    %v5820 = vpop.permute.xlu0 %5819
    %5821 = vrot.lane.b32.xlu0 %v5722, 1
    %v5822 = vpop.permute.xlu0 %5821
    %5823 = vrot.lane.b32.xlu0 %v5723, 1
    %v5824 = vpop.permute.xlu0 %5823
    %5825 = vrot.lane.b32.xlu0 %v5724, 1
    %v5826 = vpop.permute.xlu0 %5825
    %5827 = vrot.lane.b32.xlu0 %v5725, 1
    %v5828 = vpop.permute.xlu0 %5827
    %5829 = vrot.lane.b32.xlu0 %v5726, 1
    %v5830 = vpop.permute.xlu0 %5829
    %5831 = vrot.lane.b32.xlu0 %v5727, 1
    %v5832 = vpop.permute.xlu0 %5831
    %5833 = vrot.lane.b32.xlu0 %v5728, 1
    %v5834 = vpop.permute.xlu0 %5833
    %5835 = vrot.lane.b32.xlu0 %v5729, 1
    %v5836 = vpop.permute.xlu0 %5835
    %5837 = vrot.lane.b32.xlu0 %v5730, 1
    %v5838 = vpop.permute.xlu0 %5837
    %5839 = vrot.lane.b32.xlu0 %v5731, 1
    %v5840 = vpop.permute.xlu0 %5839
    %5841 = vrot.lane.b32.xlu0 %v5732, 1
    %v5842 = vpop.permute.xlu0 %5841
    %5843 = vrot.lane.b32.xlu0 %v5733, 1
    %v5844 = vpop.permute.xlu0 %5843
    %5845 = vrot.lane.b32.xlu0 %v5734, 1
    %v5846 = vpop.permute.xlu0 %5845
    %5847 = vrot.lane.b32.xlu0 %v5735, 1
    %v5848 = vpop.permute.xlu0 %5847
    %5849 = vrot.lane.b32.xlu0 %v5736, 1
    %v5850 = vpop.permute.xlu0 %5849
    %5851 = vrot.lane.b32.xlu0 %v5737, 1
    %v5852 = vpop.permute.xlu0 %5851
    %5853 = vrot.lane.b32.xlu0 %v5738, 1
    %v5854 = vpop.permute.xlu0 %5853
    %5855 = vrot.lane.b32.xlu0 %v5739, 1
    %v5856 = vpop.permute.xlu0 %5855
    %5857 = vrot.lane.b32.xlu0 %v5740, 1
    %v5858 = vpop.permute.xlu0 %5857
    %5859 = vrot.lane.b32.xlu0 %v5741, 1
    %v5860 = vpop.permute.xlu0 %5859
    %5861 = vrot.lane.b32.xlu0 %v5742, 1
    %v5862 = vpop.permute.xlu0 %5861
    %v5863 = vrot.slane %v5784, 4
    %v5864 = vrot.slane %v5786, 4
    %v5865 = vrot.slane %v5788, 4
    %v5866 = vrot.slane %v5790, 4
    %v5867 = vrot.slane %v5792, 4
    %v5868 = vrot.slane %v5794, 4
    %v5869 = vrot.slane %v5796, 4
    %v5870 = vrot.slane %v5798, 4
    %v5871 = vrot.slane %v5800, 4
    %v5872 = vrot.slane %v5802, 4
    %v5873 = vrot.slane %v5804, 4
    %v5874 = vrot.slane %v5806, 4
    %v5875 = vrot.slane %v5808, 4
    %v5876 = vrot.slane %v5810, 4
    %v5877 = vrot.slane %v5812, 4
    %v5878 = vrot.slane %v5814, 4
    %v5879 = vrot.slane %v5816, 4
    %v5880 = vrot.slane %v5818, 4
    %v5881 = vrot.slane %v5820, 4
    %v5882 = vrot.slane %v5822, 4
    %v5883 = vrot.slane %v5824, 4
    %v5884 = vrot.slane %v5826, 4
    %v5885 = vrot.slane %v5828, 4
    %v5886 = vrot.slane %v5830, 4
    %v5887 = vrot.slane %v5832, 4
    %v5888 = vrot.slane %v5834, 4
    %v5889 = vrot.slane %v5836, 4
    %v5890 = vrot.slane %v5838, 4
    %v5891 = vrot.slane %v5840, 4
    %v5892 = vrot.slane %v5842, 4
    %v5893 = vrot.slane %v5844, 4
    %v5894 = vrot.slane %v5846, 4
    %v5895 = vrot.slane %v5848, 4
    %v5896 = vrot.slane %v5850, 4
    %v5897 = vrot.slane %v5852, 4
    %v5898 = vrot.slane %v5854, 4
    %v5899 = vrot.slane %v5856, 4
    %v5900 = vrot.slane %v5858, 4
    %v5901 = vrot.slane %v5860, 4
    %v5902 = vrot.slane %v5862, 4
    %v5903 = vsel %vm2178, %v5863, %v5864
    %v5904 = vsel %vm2180, %v5784, %v5903
    %v5905 = vsel %vm2178, %v5864, %v5865
    %v5906 = vsel %vm2180, %v5786, %v5905
    %v5907 = vsel %vm2178, %v5865, %v5866
    %v5908 = vsel %vm2180, %v5788, %v5907
    %v5909 = vsel %vm2178, %v5866, %v5867
    %v5910 = vsel %vm2180, %v5790, %v5909
    %v5911 = vsel %vm2178, %v5868, %v5869
    %v5912 = vsel %vm2180, %v5794, %v5911
    %v5913 = vsel %vm2178, %v5869, %v5870
    %v5914 = vsel %vm2180, %v5796, %v5913
    %v5915 = vsel %vm2178, %v5870, %v5871
    %v5916 = vsel %vm2180, %v5798, %v5915
    %v5917 = vsel %vm2178, %v5871, %v5872
    %v5918 = vsel %vm2180, %v5800, %v5917
    %v5919 = vsel %vm2178, %v5873, %v5874
    %v5920 = vsel %vm2180, %v5804, %v5919
    %v5921 = vsel %vm2178, %v5874, %v5875
    %v5922 = vsel %vm2180, %v5806, %v5921
    %v5923 = vsel %vm2178, %v5875, %v5876
    %v5924 = vsel %vm2180, %v5808, %v5923
    %v5925 = vsel %vm2178, %v5876, %v5877
    %v5926 = vsel %vm2180, %v5810, %v5925
    %v5927 = vsel %vm2178, %v5878, %v5879
    %v5928 = vsel %vm2180, %v5814, %v5927
    %v5929 = vsel %vm2178, %v5879, %v5880
    %v5930 = vsel %vm2180, %v5816, %v5929
    %v5931 = vsel %vm2178, %v5880, %v5881
    %v5932 = vsel %vm2180, %v5818, %v5931
    %v5933 = vsel %vm2178, %v5881, %v5882
    %v5934 = vsel %vm2180, %v5820, %v5933
    %v5935 = vsel %vm2178, %v5883, %v5884
    %v5936 = vsel %vm2180, %v5824, %v5935
    %v5937 = vsel %vm2178, %v5884, %v5885
    %v5938 = vsel %vm2180, %v5826, %v5937
    %v5939 = vsel %vm2178, %v5885, %v5886
    %v5940 = vsel %vm2180, %v5828, %v5939
    %v5941 = vsel %vm2178, %v5886, %v5887
    %v5942 = vsel %vm2180, %v5830, %v5941
    %v5943 = vsel %vm2178, %v5888, %v5889
    %v5944 = vsel %vm2180, %v5834, %v5943
    %v5945 = vsel %vm2178, %v5889, %v5890
    %v5946 = vsel %vm2180, %v5836, %v5945
    %v5947 = vsel %vm2178, %v5890, %v5891
    %v5948 = vsel %vm2180, %v5838, %v5947
    %v5949 = vsel %vm2178, %v5891, %v5892
    %v5950 = vsel %vm2180, %v5840, %v5949
    %v5951 = vsel %vm2178, %v5893, %v5894
    %v5952 = vsel %vm2180, %v5844, %v5951
    %v5953 = vsel %vm2178, %v5894, %v5895
    %v5954 = vsel %vm2180, %v5846, %v5953
    %v5955 = vsel %vm2178, %v5895, %v5896
    %v5956 = vsel %vm2180, %v5848, %v5955
    %v5957 = vsel %vm2178, %v5896, %v5897
    %v5958 = vsel %vm2180, %v5850, %v5957
    %v5959 = vsel %vm2178, %v5898, %v5899
    %v5960 = vsel %vm2180, %v5854, %v5959
    %v5961 = vsel %vm2178, %v5899, %v5900
    %v5962 = vsel %vm2180, %v5856, %v5961
    %v5963 = vsel %vm2178, %v5900, %v5901
    %v5964 = vsel %vm2180, %v5858, %v5963
    %v5965 = vsel %vm2178, %v5901, %v5902
    %v5966 = vsel %vm2180, %v5860, %v5965
    %5999 = vst [vmem:[#allocation4] sm:$0xff] %v5904
    %6000 = vst [vmem:[#allocation4 + $0x8] sm:$0xff] %v5906
    %6001 = vst [vmem:[#allocation4 + $0x10] sm:$0xff] %v5908
    %6002 = vst [vmem:[#allocation4 + $0x18] sm:$0xff] %v5910
    %6003 = vst [vmem:[#allocation4 + $0x20] sm:$0xff] %v5912
    %6004 = vst [vmem:[#allocation4 + $0x28] sm:$0xff] %v5914
    %6005 = vst [vmem:[#allocation4 + $0x30] sm:$0xff] %v5916
    %6006 = vst [vmem:[#allocation4 + $0x38] sm:$0xff] %v5918
    %6007 = vst [vmem:[#allocation4 + $0x40] sm:$0xff] %v5920
    %6008 = vst [vmem:[#allocation4 + $0x48] sm:$0xff] %v5922
    %6009 = vst [vmem:[#allocation4 + $0x50] sm:$0xff] %v5924
    %6010 = vst [vmem:[#allocation4 + $0x58] sm:$0xff] %v5926
    %6011 = vst [vmem:[#allocation4 + $0x60] sm:$0xff] %v5928
    %6012 = vst [vmem:[#allocation4 + $0x68] sm:$0xff] %v5930
    %6013 = vst [vmem:[#allocation4 + $0x70] sm:$0xff] %v5932
    %6014 = vst [vmem:[#allocation4 + $0x78] sm:$0xff] %v5934
    %6015 = vst [vmem:[#allocation4 + $0x80] sm:$0xff] %v5936
    %6016 = vst [vmem:[#allocation4 + $0x88] sm:$0xff] %v5938
    %6017 = vst [vmem:[#allocation4 + $0x90] sm:$0xff] %v5940
    %6018 = vst [vmem:[#allocation4 + $0x98] sm:$0xff] %v5942
    %6019 = vst [vmem:[#allocation4 + $0xa0] sm:$0xff] %v5944
    %6020 = vst [vmem:[#allocation4 + $0xa8] sm:$0xff] %v5946
    %6021 = vst [vmem:[#allocation4 + $0xb0] sm:$0xff] %v5948
    %6022 = vst [vmem:[#allocation4 + $0xb8] sm:$0xff] %v5950
    %6023 = vst [vmem:[#allocation4 + $0xc0] sm:$0xff] %v5952
    %6024 = vst [vmem:[#allocation4 + $0xc8] sm:$0xff] %v5954
    %6025 = vst [vmem:[#allocation4 + $0xd0] sm:$0xff] %v5956
    %6026 = vst [vmem:[#allocation4 + $0xd8] sm:$0xff] %v5958
    %6027 = vst [vmem:[#allocation4 + $0xe0] sm:$0xff] %v5960
    %6028 = vst [vmem:[#allocation4 + $0xe8] sm:$0xff] %v5962
    %6029 = vst [vmem:[#allocation4 + $0xf0] sm:$0xff] %v5964
    %6030 = vst [vmem:[#allocation4 + $0xf8] sm:$0xff] %v5966
    %v6031 = vld [vmem:[#allocation3 + $0x4] sm:$0xff]
    %v6032 = vld [vmem:[#allocation3 + $0xc] sm:$0xff]
    %v6033 = vld [vmem:[#allocation3 + $0x14] sm:$0xff]
    %v6034 = vld [vmem:[#allocation3 + $0x1c] sm:$0xff]
    %v6035 = vld [vmem:[#allocation3 + $0x2c] sm:$0xff]
    %v6036 = vld [vmem:[#allocation3 + $0x34] sm:$0xff]
    %v6037 = vld [vmem:[#allocation3 + $0x3c] sm:$0xff]
    %v6038 = vld [vmem:[#allocation3 + $0x44] sm:$0xff]
    %v6039 = vld [vmem:[#allocation3 + $0x54] sm:$0xff]
    %v6040 = vld [vmem:[#allocation3 + $0x5c] sm:$0xff]
    %v6041 = vld [vmem:[#allocation3 + $0x64] sm:$0xff]
    %v6042 = vld [vmem:[#allocation3 + $0x6c] sm:$0xff]
    %v6043 = vld [vmem:[#allocation3 + $0x7c] sm:$0xff]
    %v6044 = vld [vmem:[#allocation3 + $0x84] sm:$0xff]
    %v6045 = vld [vmem:[#allocation3 + $0x8c] sm:$0xff]
    %v6046 = vld [vmem:[#allocation3 + $0x94] sm:$0xff]
    %v6047 = vld [vmem:[#allocation3 + $0xa4] sm:$0xff]
    %v6048 = vld [vmem:[#allocation3 + $0xac] sm:$0xff]
    %v6049 = vld [vmem:[#allocation3 + $0xb4] sm:$0xff]
    %v6050 = vld [vmem:[#allocation3 + $0xbc] sm:$0xff]
    %v6051 = vld [vmem:[#allocation3 + $0xcc] sm:$0xff]
    %v6052 = vld [vmem:[#allocation3 + $0xd4] sm:$0xff]
    %v6053 = vld [vmem:[#allocation3 + $0xdc] sm:$0xff]
    %v6054 = vld [vmem:[#allocation3 + $0xe4] sm:$0xff]
    %v6055 = vld [vmem:[#allocation3 + $0xf4] sm:$0xff]
    %v6056 = vld [vmem:[#allocation3 + $0xfc] sm:$0xff]
    %v6057 = vld [vmem:[#allocation3 + $0x104] sm:$0xff]
    %v6058 = vld [vmem:[#allocation3 + $0x10c] sm:$0xff]
    %v6059 = vld [vmem:[#allocation3 + $0x11c] sm:$0xff]
    %v6060 = vld [vmem:[#allocation3 + $0x124] sm:$0xff]
    %v6061 = vld [vmem:[#allocation3 + $0x12c] sm:$0xff]
    %v6062 = vld [vmem:[#allocation3 + $0x134] sm:$0xff]
    %6063 = vst [vmem:[#allocation4 + $0x100] sm:$0xff] %v6031
    %6064 = vst [vmem:[#allocation4 + $0x108] sm:$0xff] %v6032
    %6065 = vst [vmem:[#allocation4 + $0x110] sm:$0xff] %v6033
    %6066 = vst [vmem:[#allocation4 + $0x118] sm:$0xff] %v6034
    %6067 = vst [vmem:[#allocation4 + $0x120] sm:$0xff] %v6035
    %6068 = vst [vmem:[#allocation4 + $0x128] sm:$0xff] %v6036
    %6069 = vst [vmem:[#allocation4 + $0x130] sm:$0xff] %v6037
    %6070 = vst [vmem:[#allocation4 + $0x138] sm:$0xff] %v6038
    %6071 = vst [vmem:[#allocation4 + $0x140] sm:$0xff] %v6039
    %6072 = vst [vmem:[#allocation4 + $0x148] sm:$0xff] %v6040
    %6073 = vst [vmem:[#allocation4 + $0x150] sm:$0xff] %v6041
    %6074 = vst [vmem:[#allocation4 + $0x158] sm:$0xff] %v6042
    %6075 = vst [vmem:[#allocation4 + $0x160] sm:$0xff] %v6043
    %6076 = vst [vmem:[#allocation4 + $0x168] sm:$0xff] %v6044
    %6077 = vst [vmem:[#allocation4 + $0x170] sm:$0xff] %v6045
    %6078 = vst [vmem:[#allocation4 + $0x178] sm:$0xff] %v6046
    %6079 = vst [vmem:[#allocation4 + $0x180] sm:$0xff] %v6047
    %6080 = vst [vmem:[#allocation4 + $0x188] sm:$0xff] %v6048
    %6081 = vst [vmem:[#allocation4 + $0x190] sm:$0xff] %v6049
    %6082 = vst [vmem:[#allocation4 + $0x198] sm:$0xff] %v6050
    %6083 = vst [vmem:[#allocation4 + $0x1a0] sm:$0xff] %v6051
    %6084 = vst [vmem:[#allocation4 + $0x1a8] sm:$0xff] %v6052
    %6085 = vst [vmem:[#allocation4 + $0x1b0] sm:$0xff] %v6053
    %6086 = vst [vmem:[#allocation4 + $0x1b8] sm:$0xff] %v6054
    %6087 = vst [vmem:[#allocation4 + $0x1c0] sm:$0xff] %v6055
    %6088 = vst [vmem:[#allocation4 + $0x1c8] sm:$0xff] %v6056
    %6089 = vst [vmem:[#allocation4 + $0x1d0] sm:$0xff] %v6057
    %6090 = vst [vmem:[#allocation4 + $0x1d8] sm:$0xff] %v6058
    %6091 = vst [vmem:[#allocation4 + $0x1e0] sm:$0xff] %v6059
    %6092 = vst [vmem:[#allocation4 + $0x1e8] sm:$0xff] %v6060
    %6093 = vst [vmem:[#allocation4 + $0x1f0] sm:$0xff] %v6061
    %6094 = vst [vmem:[#allocation4 + $0x1f8] sm:$0xff] %v6062
    %v6095 = vld [vmem:[%s5670 + $0x4] sm:$0xff]
    %v6096 = vld [vmem:[%s5670 + $0xc] sm:$0xff]
    %v6097 = vld [vmem:[%s5670 + $0x14] sm:$0xff]
    %v6098 = vld [vmem:[%s5670 + $0x1c] sm:$0xff]
    %v6099 = vld [vmem:[%s5670 + $0x2c] sm:$0xff]
    %v6100 = vld [vmem:[%s5670 + $0x34] sm:$0xff]
    %v6101 = vld [vmem:[%s5670 + $0x3c] sm:$0xff]
    %v6102 = vld [vmem:[%s5670 + $0x44] sm:$0xff]
    %v6103 = vld [vmem:[%s5670 + $0x54] sm:$0xff]
    %v6104 = vld [vmem:[%s5670 + $0x5c] sm:$0xff]
    %v6105 = vld [vmem:[%s5670 + $0x64] sm:$0xff]
    %v6106 = vld [vmem:[%s5670 + $0x6c] sm:$0xff]
    %v6107 = vld [vmem:[%s5670 + $0x7c] sm:$0xff]
    %v6108 = vld [vmem:[%s5670 + $0x84] sm:$0xff]
    %v6109 = vld [vmem:[%s5670 + $0x8c] sm:$0xff]
    %v6110 = vld [vmem:[%s5670 + $0x94] sm:$0xff]
    %v6111 = vld [vmem:[%s5670 + $0xa4] sm:$0xff]
    %v6112 = vld [vmem:[%s5670 + $0xac] sm:$0xff]
    %v6113 = vld [vmem:[%s5670 + $0xb4] sm:$0xff]
    %v6114 = vld [vmem:[%s5670 + $0xbc] sm:$0xff]
    %v6115 = vld [vmem:[%s5670 + $0xcc] sm:$0xff]
    %v6116 = vld [vmem:[%s5670 + $0xd4] sm:$0xff]
    %v6117 = vld [vmem:[%s5670 + $0xdc] sm:$0xff]
    %v6118 = vld [vmem:[%s5670 + $0xe4] sm:$0xff]
    %v6119 = vld [vmem:[%s5670 + $0xf4] sm:$0xff]
    %v6120 = vld [vmem:[%s5670 + $0xfc] sm:$0xff]
    %v6121 = vld [vmem:[%s5670 + $0x104] sm:$0xff]
    %v6122 = vld [vmem:[%s5670 + $0x10c] sm:$0xff]
    %v6123 = vld [vmem:[%s5670 + $0x11c] sm:$0xff]
    %v6124 = vld [vmem:[%s5670 + $0x124] sm:$0xff]
    %v6125 = vld [vmem:[%s5670 + $0x12c] sm:$0xff]
    %v6126 = vld [vmem:[%s5670 + $0x134] sm:$0xff]
    %6127 = vst [vmem:[#allocation4 + $0x200] sm:$0xff] %v6095
    %6128 = vst [vmem:[#allocation4 + $0x208] sm:$0xff] %v6096
    %6129 = vst [vmem:[#allocation4 + $0x210] sm:$0xff] %v6097
    %6130 = vst [vmem:[#allocation4 + $0x218] sm:$0xff] %v6098
    %6131 = vst [vmem:[#allocation4 + $0x220] sm:$0xff] %v6099
    %6132 = vst [vmem:[#allocation4 + $0x228] sm:$0xff] %v6100
    %6133 = vst [vmem:[#allocation4 + $0x230] sm:$0xff] %v6101
    %6134 = vst [vmem:[#allocation4 + $0x238] sm:$0xff] %v6102
    %6135 = vst [vmem:[#allocation4 + $0x240] sm:$0xff] %v6103
    %6136 = vst [vmem:[#allocation4 + $0x248] sm:$0xff] %v6104
    %6137 = vst [vmem:[#allocation4 + $0x250] sm:$0xff] %v6105
    %6138 = vst [vmem:[#allocation4 + $0x258] sm:$0xff] %v6106
    %6139 = vst [vmem:[#allocation4 + $0x260] sm:$0xff] %v6107
    %6140 = vst [vmem:[#allocation4 + $0x268] sm:$0xff] %v6108
    %6141 = vst [vmem:[#allocation4 + $0x270] sm:$0xff] %v6109
    %6142 = vst [vmem:[#allocation4 + $0x278] sm:$0xff] %v6110
    %6143 = vst [vmem:[#allocation4 + $0x280] sm:$0xff] %v6111
    %6144 = vst [vmem:[#allocation4 + $0x288] sm:$0xff] %v6112
    %6145 = vst [vmem:[#allocation4 + $0x290] sm:$0xff] %v6113
    %6146 = vst [vmem:[#allocation4 + $0x298] sm:$0xff] %v6114
    %6147 = vst [vmem:[#allocation4 + $0x2a0] sm:$0xff] %v6115
    %6148 = vst [vmem:[#allocation4 + $0x2a8] sm:$0xff] %v6116
    %6149 = vst [vmem:[#allocation4 + $0x2b0] sm:$0xff] %v6117
    %6150 = vst [vmem:[#allocation4 + $0x2b8] sm:$0xff] %v6118
    %6151 = vst [vmem:[#allocation4 + $0x2c0] sm:$0xff] %v6119
    %6152 = vst [vmem:[#allocation4 + $0x2c8] sm:$0xff] %v6120
    %6153 = vst [vmem:[#allocation4 + $0x2d0] sm:$0xff] %v6121
    %6154 = vst [vmem:[#allocation4 + $0x2d8] sm:$0xff] %v6122
    %6155 = vst [vmem:[#allocation4 + $0x2e0] sm:$0xff] %v6123
    %6156 = vst [vmem:[#allocation4 + $0x2e8] sm:$0xff] %v6124
    %6157 = vst [vmem:[#allocation4 + $0x2f0] sm:$0xff] %v6125
    %6158 = vst [vmem:[#allocation4 + $0x2f8] sm:$0xff] %v6126
    %v6159 = vld [vmem:[%s10] sm:$0xff]
    %v6160 = vld [vmem:[%s10 + $0x8] sm:$0xff]
    %v6161 = vld [vmem:[%s10 + $0x10] sm:$0xff]
    %v6162 = vld [vmem:[%s10 + $0x18] sm:$0xff]
    %v6163 = vld [vmem:[%s10 + $0x20] sm:$0xff]
    %v6164 = vld [vmem:[%s10 + $0x28] sm:$0xff]
    %v6165 = vld [vmem:[%s10 + $0x30] sm:$0xff]
    %v6166 = vld [vmem:[%s10 + $0x38] sm:$0xff]
    %v6167 = vld [vmem:[%s10 + $0x40] sm:$0xff]
    %v6168 = vld [vmem:[%s10 + $0x48] sm:$0xff]
    %v6169 = vld [vmem:[%s10 + $0x50] sm:$0xff]
    %v6170 = vld [vmem:[%s10 + $0x58] sm:$0xff]
    %v6171 = vld [vmem:[%s10 + $0x60] sm:$0xff]
    %v6172 = vld [vmem:[%s10 + $0x68] sm:$0xff]
    %v6173 = vld [vmem:[%s10 + $0x70] sm:$0xff]
    %v6174 = vld [vmem:[%s10 + $0x78] sm:$0xff]
    %v6175 = vld [vmem:[#allocation4] sm:$0xff]
    %v6176 = vld [vmem:[#allocation4 + $0x8] sm:$0xff]
    %v6177 = vld [vmem:[#allocation4 + $0x10] sm:$0xff]
    %v6178 = vld [vmem:[#allocation4 + $0x18] sm:$0xff]
    %v6179 = vld [vmem:[#allocation4 + $0x20] sm:$0xff]
    %v6180 = vld [vmem:[#allocation4 + $0x28] sm:$0xff]
    %v6181 = vld [vmem:[#allocation4 + $0x30] sm:$0xff]
    %v6182 = vld [vmem:[#allocation4 + $0x38] sm:$0xff]
    %v6183 = vld [vmem:[#allocation4 + $0x40] sm:$0xff]
    %v6184 = vld [vmem:[#allocation4 + $0x48] sm:$0xff]
    %v6185 = vld [vmem:[#allocation4 + $0x50] sm:$0xff]
    %v6186 = vld [vmem:[#allocation4 + $0x58] sm:$0xff]
    %v6187 = vld [vmem:[#allocation4 + $0x60] sm:$0xff]
    %v6188 = vld [vmem:[#allocation4 + $0x68] sm:$0xff]
    %v6189 = vld [vmem:[#allocation4 + $0x70] sm:$0xff]
    %v6190 = vld [vmem:[#allocation4 + $0x78] sm:$0xff]
    %v6191 = vld [vmem:[#allocation4 + $0x80] sm:$0xff]
    %v6192 = vld [vmem:[#allocation4 + $0x88] sm:$0xff]
    %v6193 = vld [vmem:[#allocation4 + $0x90] sm:$0xff]
    %v6194 = vld [vmem:[#allocation4 + $0x98] sm:$0xff]
    %v6195 = vld [vmem:[#allocation4 + $0xa0] sm:$0xff]
    %v6196 = vld [vmem:[#allocation4 + $0xa8] sm:$0xff]
    %v6197 = vld [vmem:[#allocation4 + $0xb0] sm:$0xff]
    %v6198 = vld [vmem:[#allocation4 + $0xb8] sm:$0xff]
    %v6199 = vld [vmem:[#allocation4 + $0xc0] sm:$0xff]
    %v6200 = vld [vmem:[#allocation4 + $0xc8] sm:$0xff]
    %v6201 = vld [vmem:[#allocation4 + $0xd0] sm:$0xff]
    %v6202 = vld [vmem:[#allocation4 + $0xd8] sm:$0xff]
    %v6203 = vld [vmem:[#allocation4 + $0xe0] sm:$0xff]
    %v6204 = vld [vmem:[#allocation4 + $0xe8] sm:$0xff]
    %v6205 = vld [vmem:[#allocation4 + $0xf0] sm:$0xff]
    %v6206 = vld [vmem:[#allocation4 + $0xf8] sm:$0xff]
    %v6207 = vld [vmem:[#allocation4 + $0x100] sm:$0xff]
    %v6208 = vld [vmem:[#allocation4 + $0x108] sm:$0xff]
    %v6209 = vld [vmem:[#allocation4 + $0x110] sm:$0xff]
    %v6210 = vld [vmem:[#allocation4 + $0x118] sm:$0xff]
    %v6211 = vld [vmem:[#allocation4 + $0x120] sm:$0xff]
    %v6212 = vld [vmem:[#allocation4 + $0x128] sm:$0xff]
    %v6213 = vld [vmem:[#allocation4 + $0x130] sm:$0xff]
    %v6214 = vld [vmem:[#allocation4 + $0x138] sm:$0xff]
    %v6215 = vld [vmem:[#allocation4 + $0x140] sm:$0xff]
    %v6216 = vld [vmem:[#allocation4 + $0x148] sm:$0xff]
    %v6217 = vld [vmem:[#allocation4 + $0x150] sm:$0xff]
    %v6218 = vld [vmem:[#allocation4 + $0x158] sm:$0xff]
    %v6219 = vld [vmem:[#allocation4 + $0x160] sm:$0xff]
    %v6220 = vld [vmem:[#allocation4 + $0x168] sm:$0xff]
    %v6221 = vld [vmem:[#allocation4 + $0x170] sm:$0xff]
    %v6222 = vld [vmem:[#allocation4 + $0x178] sm:$0xff]
    %v6223 = vld [vmem:[#allocation4 + $0x180] sm:$0xff]
    %v6224 = vld [vmem:[#allocation4 + $0x188] sm:$0xff]
    %v6225 = vld [vmem:[#allocation4 + $0x190] sm:$0xff]
    %v6226 = vld [vmem:[#allocation4 + $0x198] sm:$0xff]
    %v6227 = vld [vmem:[#allocation4 + $0x1a0] sm:$0xff]
    %v6228 = vld [vmem:[#allocation4 + $0x1a8] sm:$0xff]
    %v6229 = vld [vmem:[#allocation4 + $0x1b0] sm:$0xff]
    %v6230 = vld [vmem:[#allocation4 + $0x1b8] sm:$0xff]
    %v6231 = vld [vmem:[#allocation4 + $0x1c0] sm:$0xff]
    %v6232 = vld [vmem:[#allocation4 + $0x1c8] sm:$0xff]
    %v6233 = vld [vmem:[#allocation4 + $0x1d0] sm:$0xff]
    %v6234 = vld [vmem:[#allocation4 + $0x1d8] sm:$0xff]
    %v6235 = vld [vmem:[#allocation4 + $0x1e0] sm:$0xff]
    %v6236 = vld [vmem:[#allocation4 + $0x1e8] sm:$0xff]
    %v6237 = vld [vmem:[#allocation4 + $0x1f0] sm:$0xff]
    %v6238 = vld [vmem:[#allocation4 + $0x1f8] sm:$0xff]
    %v6239 = vld [vmem:[#allocation4 + $0x200] sm:$0xff]
    %v6240 = vld [vmem:[#allocation4 + $0x208] sm:$0xff]
    %v6241 = vld [vmem:[#allocation4 + $0x210] sm:$0xff]
    %v6242 = vld [vmem:[#allocation4 + $0x218] sm:$0xff]
    %v6243 = vld [vmem:[#allocation4 + $0x220] sm:$0xff]
    %v6244 = vld [vmem:[#allocation4 + $0x228] sm:$0xff]
    %v6245 = vld [vmem:[#allocation4 + $0x230] sm:$0xff]
    %v6246 = vld [vmem:[#allocation4 + $0x238] sm:$0xff]
    %v6247 = vld [vmem:[#allocation4 + $0x240] sm:$0xff]
    %v6248 = vld [vmem:[#allocation4 + $0x248] sm:$0xff]
    %v6249 = vld [vmem:[#allocation4 + $0x250] sm:$0xff]
    %v6250 = vld [vmem:[#allocation4 + $0x258] sm:$0xff]
    %v6251 = vld [vmem:[#allocation4 + $0x260] sm:$0xff]
    %v6252 = vld [vmem:[#allocation4 + $0x268] sm:$0xff]
    %v6253 = vld [vmem:[#allocation4 + $0x270] sm:$0xff]
    %v6254 = vld [vmem:[#allocation4 + $0x278] sm:$0xff]
    %v6255 = vld [vmem:[#allocation4 + $0x280] sm:$0xff]
    %v6256 = vld [vmem:[#allocation4 + $0x288] sm:$0xff]
    %v6257 = vld [vmem:[#allocation4 + $0x290] sm:$0xff]
    %v6258 = vld [vmem:[#allocation4 + $0x298] sm:$0xff]
    %v6259 = vld [vmem:[#allocation4 + $0x2a0] sm:$0xff]
    %v6260 = vld [vmem:[#allocation4 + $0x2a8] sm:$0xff]
    %v6261 = vld [vmem:[#allocation4 + $0x2b0] sm:$0xff]
    %v6262 = vld [vmem:[#allocation4 + $0x2b8] sm:$0xff]
    %v6263 = vld [vmem:[#allocation4 + $0x2c0] sm:$0xff]
    %v6264 = vld [vmem:[#allocation4 + $0x2c8] sm:$0xff]
    %v6265 = vld [vmem:[#allocation4 + $0x2d0] sm:$0xff]
    %v6266 = vld [vmem:[#allocation4 + $0x2d8] sm:$0xff]
    %v6267 = vld [vmem:[#allocation4 + $0x2e0] sm:$0xff]
    %v6268 = vld [vmem:[#allocation4 + $0x2e8] sm:$0xff]
    %v6269 = vld [vmem:[#allocation4 + $0x2f0] sm:$0xff]
    %v6270 = vld [vmem:[#allocation4 + $0x2f8] sm:$0xff]
    %v6271 = vld [vmem:[%s11] sm:$0xff]
    %v6272 = vld [vmem:[%s11 + $0x8] sm:$0xff]
    %v6273 = vld [vmem:[%s11 + $0x10] sm:$0xff]
    %v6274 = vld [vmem:[%s11 + $0x18] sm:$0xff]
    %v6275 = vld [vmem:[%s11 + $0x20] sm:$0xff]
    %v6276 = vld [vmem:[%s11 + $0x28] sm:$0xff]
    %v6277 = vld [vmem:[%s11 + $0x30] sm:$0xff]
    %v6278 = vld [vmem:[%s11 + $0x38] sm:$0xff]
    %v6279 = vld [vmem:[%s11 + $0x40] sm:$0xff]
    %v6280 = vld [vmem:[%s11 + $0x48] sm:$0xff]
    %v6281 = vld [vmem:[%s11 + $0x50] sm:$0xff]
    %v6282 = vld [vmem:[%s11 + $0x58] sm:$0xff]
    %v6283 = vld [vmem:[%s11 + $0x60] sm:$0xff]
    %v6284 = vld [vmem:[%s11 + $0x68] sm:$0xff]
    %v6285 = vld [vmem:[%s11 + $0x70] sm:$0xff]
    %v6286 = vld [vmem:[%s11 + $0x78] sm:$0xff]
    %6288 = vset.pattern.permute.xlu0 0
    %6289 = vperm.xlu0 %6288, %v6271
    %v6290 = vpop.permute.xlu0 %6289
    %6293 = vset.pattern.permute.xlu0 0
    %6294 = vperm.xlu0 %6293, %v6272
    %v6295 = vpop.permute.xlu0 %6294
    %6298 = vset.pattern.permute.xlu0 0
    %6299 = vperm.xlu0 %6298, %v6273
    %v6300 = vpop.permute.xlu0 %6299
    %6303 = vset.pattern.permute.xlu0 0
    %6304 = vperm.xlu0 %6303, %v6274
    %v6305 = vpop.permute.xlu0 %6304
    %6308 = vset.pattern.permute.xlu0 0
    %6309 = vperm.xlu0 %6308, %v6275
    %v6310 = vpop.permute.xlu0 %6309
    %6313 = vset.pattern.permute.xlu0 0
    %6314 = vperm.xlu0 %6313, %v6276
    %v6315 = vpop.permute.xlu0 %6314
    %6318 = vset.pattern.permute.xlu0 0
    %6319 = vperm.xlu0 %6318, %v6277
    %v6320 = vpop.permute.xlu0 %6319
    %6323 = vset.pattern.permute.xlu0 0
    %6324 = vperm.xlu0 %6323, %v6278
    %v6325 = vpop.permute.xlu0 %6324
    %6328 = vset.pattern.permute.xlu0 0
    %6329 = vperm.xlu0 %6328, %v6279
    %v6330 = vpop.permute.xlu0 %6329
    %6333 = vset.pattern.permute.xlu0 0
    %6334 = vperm.xlu0 %6333, %v6280
    %v6335 = vpop.permute.xlu0 %6334
    %6338 = vset.pattern.permute.xlu0 0
    %6339 = vperm.xlu0 %6338, %v6281
    %v6340 = vpop.permute.xlu0 %6339
    %6343 = vset.pattern.permute.xlu0 0
    %6344 = vperm.xlu0 %6343, %v6282
    %v6345 = vpop.permute.xlu0 %6344
    %6348 = vset.pattern.permute.xlu0 0
    %6349 = vperm.xlu0 %6348, %v6283
    %v6350 = vpop.permute.xlu0 %6349
    %6353 = vset.pattern.permute.xlu0 0
    %6354 = vperm.xlu0 %6353, %v6284
    %v6355 = vpop.permute.xlu0 %6354
    %6358 = vset.pattern.permute.xlu0 0
    %6359 = vperm.xlu0 %6358, %v6285
    %v6360 = vpop.permute.xlu0 %6359
    %6363 = vset.pattern.permute.xlu0 0
    %6364 = vperm.xlu0 %6363, %v6286
    %v6365 = vpop.permute.xlu0 %6364
    %v6383 = vunpack.c.l.b16 %v6159
    %v6384 = vunpack.c.h.b16 %v6159
    %v6385 = vunpack.c.l.b16 %v6160
    %v6386 = vunpack.c.h.b16 %v6160
    %v6387 = vunpack.c.l.b16 %v6161
    %v6388 = vunpack.c.h.b16 %v6161
    %v6389 = vunpack.c.l.b16 %v6162
    %v6390 = vunpack.c.h.b16 %v6162
    %v6391 = vunpack.c.l.b16 %v6163
    %v6392 = vunpack.c.h.b16 %v6163
    %v6393 = vunpack.c.l.b16 %v6164
    %v6394 = vunpack.c.h.b16 %v6164
    %v6395 = vunpack.c.l.b16 %v6165
    %v6396 = vunpack.c.h.b16 %v6165
    %v6397 = vunpack.c.l.b16 %v6166
    %v6398 = vunpack.c.h.b16 %v6166
    %v6399 = vunpack.c.l.b16 %v6167
    %v6400 = vunpack.c.h.b16 %v6167
    %v6401 = vunpack.c.l.b16 %v6168
    %v6402 = vunpack.c.h.b16 %v6168
    %v6403 = vunpack.c.l.b16 %v6169
    %v6404 = vunpack.c.h.b16 %v6169
    %v6405 = vunpack.c.l.b16 %v6170
    %v6406 = vunpack.c.h.b16 %v6170
    %v6407 = vunpack.c.l.b16 %v6171
    %v6408 = vunpack.c.h.b16 %v6171
    %v6409 = vunpack.c.l.b16 %v6172
    %v6410 = vunpack.c.h.b16 %v6172
    %v6411 = vunpack.c.l.b16 %v6173
    %v6412 = vunpack.c.h.b16 %v6173
    %v6413 = vunpack.c.l.b16 %v6174
    %v6414 = vunpack.c.h.b16 %v6174
    %v6415 = vpack.c.b16 %v6385, %v6383
    %v6416 = vpack.c.b16 %v6386, %v6384
    %v6417 = vpack.c.b16 %v6389, %v6387
    %v6418 = vpack.c.b16 %v6390, %v6388
    %v6419 = vpack.c.b16 %v6393, %v6391
    %v6420 = vpack.c.b16 %v6394, %v6392
    %v6421 = vpack.c.b16 %v6397, %v6395
    %v6422 = vpack.c.b16 %v6398, %v6396
    %v6423 = vpack.c.b16 %v6401, %v6399
    %v6424 = vpack.c.b16 %v6402, %v6400
    %v6425 = vpack.c.b16 %v6405, %v6403
    %v6426 = vpack.c.b16 %v6406, %v6404
    %v6427 = vpack.c.b16 %v6409, %v6407
    %v6428 = vpack.c.b16 %v6410, %v6408
    %v6429 = vpack.c.b16 %v6413, %v6411
    %v6430 = vpack.c.b16 %v6414, %v6412
    %v6535 = vunpack.c.l.b16 %v6175
    %v6536 = vunpack.c.h.b16 %v6175
    %v6537 = vunpack.c.l.b16 %v6176
    %v6538 = vunpack.c.h.b16 %v6176
    %v6539 = vunpack.c.l.b16 %v6177
    %v6540 = vunpack.c.h.b16 %v6177
    %v6541 = vunpack.c.l.b16 %v6178
    %v6542 = vunpack.c.h.b16 %v6178
    %v6543 = vunpack.c.l.b16 %v6179
    %v6544 = vunpack.c.h.b16 %v6179
    %v6545 = vunpack.c.l.b16 %v6180
    %v6546 = vunpack.c.h.b16 %v6180
    %v6547 = vunpack.c.l.b16 %v6181
    %v6548 = vunpack.c.h.b16 %v6181
    %v6549 = vunpack.c.l.b16 %v6182
    %v6550 = vunpack.c.h.b16 %v6182
    %v6551 = vunpack.c.l.b16 %v6183
    %v6552 = vunpack.c.h.b16 %v6183
    %v6553 = vunpack.c.l.b16 %v6184
    %v6554 = vunpack.c.h.b16 %v6184
    %v6555 = vunpack.c.l.b16 %v6185
    %v6556 = vunpack.c.h.b16 %v6185
    %v6557 = vunpack.c.l.b16 %v6186
    %v6558 = vunpack.c.h.b16 %v6186
    %v6559 = vunpack.c.l.b16 %v6187
    %v6560 = vunpack.c.h.b16 %v6187
    %v6561 = vunpack.c.l.b16 %v6188
    %v6562 = vunpack.c.h.b16 %v6188
    %v6563 = vunpack.c.l.b16 %v6189
    %v6564 = vunpack.c.h.b16 %v6189
    %v6565 = vunpack.c.l.b16 %v6190
    %v6566 = vunpack.c.h.b16 %v6190
    %v6567 = vunpack.c.l.b16 %v6191
    %v6568 = vunpack.c.h.b16 %v6191
    %v6569 = vunpack.c.l.b16 %v6192
    %v6570 = vunpack.c.h.b16 %v6192
    %v6571 = vunpack.c.l.b16 %v6193
    %v6572 = vunpack.c.h.b16 %v6193
    %v6573 = vunpack.c.l.b16 %v6194
    %v6574 = vunpack.c.h.b16 %v6194
    %v6575 = vunpack.c.l.b16 %v6195
    %v6576 = vunpack.c.h.b16 %v6195
    %v6577 = vunpack.c.l.b16 %v6196
    %v6578 = vunpack.c.h.b16 %v6196
    %v6579 = vunpack.c.l.b16 %v6197
    %v6580 = vunpack.c.h.b16 %v6197
    %v6581 = vunpack.c.l.b16 %v6198
    %v6582 = vunpack.c.h.b16 %v6198
    %v6583 = vunpack.c.l.b16 %v6199
    %v6584 = vunpack.c.h.b16 %v6199
    %v6585 = vunpack.c.l.b16 %v6200
    %v6586 = vunpack.c.h.b16 %v6200
    %v6587 = vunpack.c.l.b16 %v6201
    %v6588 = vunpack.c.h.b16 %v6201
    %v6589 = vunpack.c.l.b16 %v6202
    %v6590 = vunpack.c.h.b16 %v6202
    %v6591 = vunpack.c.l.b16 %v6203
    %v6592 = vunpack.c.h.b16 %v6203
    %v6593 = vunpack.c.l.b16 %v6204
    %v6594 = vunpack.c.h.b16 %v6204
    %v6595 = vunpack.c.l.b16 %v6205
    %v6596 = vunpack.c.h.b16 %v6205
    %v6597 = vunpack.c.l.b16 %v6206
    %v6598 = vunpack.c.h.b16 %v6206
    %v6599 = vunpack.c.l.b16 %v6207
    %v6600 = vunpack.c.h.b16 %v6207
    %v6601 = vunpack.c.l.b16 %v6208
    %v6602 = vunpack.c.h.b16 %v6208
    %v6603 = vunpack.c.l.b16 %v6209
    %v6604 = vunpack.c.h.b16 %v6209
    %v6605 = vunpack.c.l.b16 %v6210
    %v6606 = vunpack.c.h.b16 %v6210
    %v6607 = vunpack.c.l.b16 %v6211
    %v6608 = vunpack.c.h.b16 %v6211
    %v6609 = vunpack.c.l.b16 %v6212
    %v6610 = vunpack.c.h.b16 %v6212
    %v6611 = vunpack.c.l.b16 %v6213
    %v6612 = vunpack.c.h.b16 %v6213
    %v6613 = vunpack.c.l.b16 %v6214
    %v6614 = vunpack.c.h.b16 %v6214
    %v6615 = vunpack.c.l.b16 %v6215
    %v6616 = vunpack.c.h.b16 %v6215
    %v6617 = vunpack.c.l.b16 %v6216
    %v6618 = vunpack.c.h.b16 %v6216
    %v6619 = vunpack.c.l.b16 %v6217
    %v6620 = vunpack.c.h.b16 %v6217
    %v6621 = vunpack.c.l.b16 %v6218
    %v6622 = vunpack.c.h.b16 %v6218
    %v6623 = vunpack.c.l.b16 %v6219
    %v6624 = vunpack.c.h.b16 %v6219
    %v6625 = vunpack.c.l.b16 %v6220
    %v6626 = vunpack.c.h.b16 %v6220
    %v6627 = vunpack.c.l.b16 %v6221
    %v6628 = vunpack.c.h.b16 %v6221
    %v6629 = vunpack.c.l.b16 %v6222
    %v6630 = vunpack.c.h.b16 %v6222
    %v6631 = vunpack.c.l.b16 %v6223
    %v6632 = vunpack.c.h.b16 %v6223
    %v6633 = vunpack.c.l.b16 %v6224
    %v6634 = vunpack.c.h.b16 %v6224
    %v6635 = vunpack.c.l.b16 %v6225
    %v6636 = vunpack.c.h.b16 %v6225
    %v6637 = vunpack.c.l.b16 %v6226
    %v6638 = vunpack.c.h.b16 %v6226
    %v6639 = vunpack.c.l.b16 %v6227
    %v6640 = vunpack.c.h.b16 %v6227
    %v6641 = vunpack.c.l.b16 %v6228
    %v6642 = vunpack.c.h.b16 %v6228
    %v6643 = vunpack.c.l.b16 %v6229
    %v6644 = vunpack.c.h.b16 %v6229
    %v6645 = vunpack.c.l.b16 %v6230
    %v6646 = vunpack.c.h.b16 %v6230
    %v6647 = vunpack.c.l.b16 %v6231
    %v6648 = vunpack.c.h.b16 %v6231
    %v6649 = vunpack.c.l.b16 %v6232
    %v6650 = vunpack.c.h.b16 %v6232
    %v6651 = vunpack.c.l.b16 %v6233
    %v6652 = vunpack.c.h.b16 %v6233
    %v6653 = vunpack.c.l.b16 %v6234
    %v6654 = vunpack.c.h.b16 %v6234
    %v6655 = vunpack.c.l.b16 %v6235
    %v6656 = vunpack.c.h.b16 %v6235
    %v6657 = vunpack.c.l.b16 %v6236
    %v6658 = vunpack.c.h.b16 %v6236
    %v6659 = vunpack.c.l.b16 %v6237
    %v6660 = vunpack.c.h.b16 %v6237
    %v6661 = vunpack.c.l.b16 %v6238
    %v6662 = vunpack.c.h.b16 %v6238
    %v6663 = vunpack.c.l.b16 %v6239
    %v6664 = vunpack.c.h.b16 %v6239
    %v6665 = vunpack.c.l.b16 %v6240
    %v6666 = vunpack.c.h.b16 %v6240
    %v6667 = vunpack.c.l.b16 %v6241
    %v6668 = vunpack.c.h.b16 %v6241
    %v6669 = vunpack.c.l.b16 %v6242
    %v6670 = vunpack.c.h.b16 %v6242
    %v6671 = vunpack.c.l.b16 %v6243
    %v6672 = vunpack.c.h.b16 %v6243
    %v6673 = vunpack.c.l.b16 %v6244
    %v6674 = vunpack.c.h.b16 %v6244
    %v6675 = vunpack.c.l.b16 %v6245
    %v6676 = vunpack.c.h.b16 %v6245
    %v6677 = vunpack.c.l.b16 %v6246
    %v6678 = vunpack.c.h.b16 %v6246
    %v6679 = vunpack.c.l.b16 %v6247
    %v6680 = vunpack.c.h.b16 %v6247
    %v6681 = vunpack.c.l.b16 %v6248
    %v6682 = vunpack.c.h.b16 %v6248
    %v6683 = vunpack.c.l.b16 %v6249
    %v6684 = vunpack.c.h.b16 %v6249
    %v6685 = vunpack.c.l.b16 %v6250
    %v6686 = vunpack.c.h.b16 %v6250
    %v6687 = vunpack.c.l.b16 %v6251
    %v6688 = vunpack.c.h.b16 %v6251
    %v6689 = vunpack.c.l.b16 %v6252
    %v6690 = vunpack.c.h.b16 %v6252
    %v6691 = vunpack.c.l.b16 %v6253
    %v6692 = vunpack.c.h.b16 %v6253
    %v6693 = vunpack.c.l.b16 %v6254
    %v6694 = vunpack.c.h.b16 %v6254
    %v6695 = vunpack.c.l.b16 %v6255
    %v6696 = vunpack.c.h.b16 %v6255
    %v6697 = vunpack.c.l.b16 %v6256
    %v6698 = vunpack.c.h.b16 %v6256
    %v6699 = vunpack.c.l.b16 %v6257
    %v6700 = vunpack.c.h.b16 %v6257
    %v6701 = vunpack.c.l.b16 %v6258
    %v6702 = vunpack.c.h.b16 %v6258
    %v6703 = vunpack.c.l.b16 %v6259
    %v6704 = vunpack.c.h.b16 %v6259
    %v6705 = vunpack.c.l.b16 %v6260
    %v6706 = vunpack.c.h.b16 %v6260
    %v6707 = vunpack.c.l.b16 %v6261
    %v6708 = vunpack.c.h.b16 %v6261
    %v6709 = vunpack.c.l.b16 %v6262
    %v6710 = vunpack.c.h.b16 %v6262
    %v6711 = vunpack.c.l.b16 %v6263
    %v6712 = vunpack.c.h.b16 %v6263
    %v6713 = vunpack.c.l.b16 %v6264
    %v6714 = vunpack.c.h.b16 %v6264
    %v6715 = vunpack.c.l.b16 %v6265
    %v6716 = vunpack.c.h.b16 %v6265
    %v6717 = vunpack.c.l.b16 %v6266
    %v6718 = vunpack.c.h.b16 %v6266
    %v6719 = vunpack.c.l.b16 %v6267
    %v6720 = vunpack.c.h.b16 %v6267
    %v6721 = vunpack.c.l.b16 %v6268
    %v6722 = vunpack.c.h.b16 %v6268
    %v6723 = vunpack.c.l.b16 %v6269
    %v6724 = vunpack.c.h.b16 %v6269
    %v6725 = vunpack.c.l.b16 %v6270
    %v6726 = vunpack.c.h.b16 %v6270
    %v6727 = vpack.c.b16 %v6543, %v6535
    %v6728 = vpack.c.b16 %v6544, %v6536
    %v6729 = vpack.c.b16 %v6545, %v6537
    %v6730 = vpack.c.b16 %v6546, %v6538
    %v6731 = vpack.c.b16 %v6547, %v6539
    %v6732 = vpack.c.b16 %v6548, %v6540
    %v6733 = vpack.c.b16 %v6549, %v6541
    %v6734 = vpack.c.b16 %v6550, %v6542
    %v6735 = vpack.c.b16 %v6559, %v6551
    %v6736 = vpack.c.b16 %v6560, %v6552
    %v6737 = vpack.c.b16 %v6561, %v6553
    %v6738 = vpack.c.b16 %v6562, %v6554
    %v6739 = vpack.c.b16 %v6563, %v6555
    %v6740 = vpack.c.b16 %v6564, %v6556
    %v6741 = vpack.c.b16 %v6565, %v6557
    %v6742 = vpack.c.b16 %v6566, %v6558
    %v6743 = vpack.c.b16 %v6575, %v6567
    %v6744 = vpack.c.b16 %v6576, %v6568
    %v6745 = vpack.c.b16 %v6577, %v6569
    %v6746 = vpack.c.b16 %v6578, %v6570
    %v6747 = vpack.c.b16 %v6579, %v6571
    %v6748 = vpack.c.b16 %v6580, %v6572
    %v6749 = vpack.c.b16 %v6581, %v6573
    %v6750 = vpack.c.b16 %v6582, %v6574
    %v6751 = vpack.c.b16 %v6591, %v6583
    %v6752 = vpack.c.b16 %v6592, %v6584
    %v6753 = vpack.c.b16 %v6593, %v6585
    %v6754 = vpack.c.b16 %v6594, %v6586
    %v6755 = vpack.c.b16 %v6595, %v6587
    %v6756 = vpack.c.b16 %v6596, %v6588
    %v6757 = vpack.c.b16 %v6597, %v6589
    %v6758 = vpack.c.b16 %v6598, %v6590
    %v6759 = vpack.c.b16 %v6607, %v6599
    %v6760 = vpack.c.b16 %v6608, %v6600
    %v6761 = vpack.c.b16 %v6609, %v6601
    %v6762 = vpack.c.b16 %v6610, %v6602
    %v6763 = vpack.c.b16 %v6611, %v6603
    %v6764 = vpack.c.b16 %v6612, %v6604
    %v6765 = vpack.c.b16 %v6613, %v6605
    %v6766 = vpack.c.b16 %v6614, %v6606
    %v6767 = vpack.c.b16 %v6623, %v6615
    %v6768 = vpack.c.b16 %v6624, %v6616
    %v6769 = vpack.c.b16 %v6625, %v6617
    %v6770 = vpack.c.b16 %v6626, %v6618
    %v6771 = vpack.c.b16 %v6627, %v6619
    %v6772 = vpack.c.b16 %v6628, %v6620
    %v6773 = vpack.c.b16 %v6629, %v6621
    %v6774 = vpack.c.b16 %v6630, %v6622
    %v6775 = vpack.c.b16 %v6639, %v6631
    %v6776 = vpack.c.b16 %v6640, %v6632
    %v6777 = vpack.c.b16 %v6641, %v6633
    %v6778 = vpack.c.b16 %v6642, %v6634
    %v6779 = vpack.c.b16 %v6643, %v6635
    %v6780 = vpack.c.b16 %v6644, %v6636
    %v6781 = vpack.c.b16 %v6645, %v6637
    %v6782 = vpack.c.b16 %v6646, %v6638
    %v6783 = vpack.c.b16 %v6655, %v6647
    %v6784 = vpack.c.b16 %v6656, %v6648
    %v6785 = vpack.c.b16 %v6657, %v6649
    %v6786 = vpack.c.b16 %v6658, %v6650
    %v6787 = vpack.c.b16 %v6659, %v6651
    %v6788 = vpack.c.b16 %v6660, %v6652
    %v6789 = vpack.c.b16 %v6661, %v6653
    %v6790 = vpack.c.b16 %v6662, %v6654
    %v6791 = vpack.c.b16 %v6671, %v6663
    %v6792 = vpack.c.b16 %v6672, %v6664
    %v6793 = vpack.c.b16 %v6673, %v6665
    %v6794 = vpack.c.b16 %v6674, %v6666
    %v6795 = vpack.c.b16 %v6675, %v6667
    %v6796 = vpack.c.b16 %v6676, %v6668
    %v6797 = vpack.c.b16 %v6677, %v6669
    %v6798 = vpack.c.b16 %v6678, %v6670
    %v6799 = vpack.c.b16 %v6687, %v6679
    %v6800 = vpack.c.b16 %v6688, %v6680
    %v6801 = vpack.c.b16 %v6689, %v6681
    %v6802 = vpack.c.b16 %v6690, %v6682
    %v6803 = vpack.c.b16 %v6691, %v6683
    %v6804 = vpack.c.b16 %v6692, %v6684
    %v6805 = vpack.c.b16 %v6693, %v6685
    %v6806 = vpack.c.b16 %v6694, %v6686
    %v6807 = vpack.c.b16 %v6703, %v6695
    %v6808 = vpack.c.b16 %v6704, %v6696
    %v6809 = vpack.c.b16 %v6705, %v6697
    %v6810 = vpack.c.b16 %v6706, %v6698
    %v6811 = vpack.c.b16 %v6707, %v6699
    %v6812 = vpack.c.b16 %v6708, %v6700
    %v6813 = vpack.c.b16 %v6709, %v6701
    %v6814 = vpack.c.b16 %v6710, %v6702
    %v6815 = vpack.c.b16 %v6719, %v6711
    %v6816 = vpack.c.b16 %v6720, %v6712
    %v6817 = vpack.c.b16 %v6721, %v6713
    %v6818 = vpack.c.b16 %v6722, %v6714
    %v6819 = vpack.c.b16 %v6723, %v6715
    %v6820 = vpack.c.b16 %v6724, %v6716
    %v6821 = vpack.c.b16 %v6725, %v6717
    %v6822 = vpack.c.b16 %v6726, %v6718
    %vm6919 = vcmask 523264
    %v6921 = vsel %vm6919, %v6416, 0
    %v6924 = vsel %vm6919, %v6418, 0
    %v6927 = vsel %vm6919, %v6420, 0
    %v6930 = vsel %vm6919, %v6422, 0
    %v6933 = vsel %vm6919, %v6424, 0
    %v6936 = vsel %vm6919, %v6426, 0
    %v6939 = vsel %vm6919, %v6428, 0
    %v6942 = vsel %vm6919, %v6430, 0
    %6944 = vmatprep.subr.bf16.mxu0 %v6784
    %6945 = vmatpush1.bf16.msra.mxu0 %v6783
    %6946 = vmatprep.subr.bf16.mxu0 %v6776
    %6947 = vmatpush1.bf16.msra.mxu0 %v6775
    %6948 = vmatprep.subr.bf16.mxu0 %v6768
    %6949 = vmatpush1.bf16.msra.mxu0 %v6767
    %6950 = vmatprep.subr.bf16.mxu0 %v6760
    %6951 = vmatpush1.bf16.msra.mxu0 %v6759
    %6952 = vmatprep.subr.bf16.mxu0 %v6752
    %6953 = vmatpush1.bf16.msra.mxu0 %v6751
    %6954 = vmatprep.subr.bf16.mxu0 %v6744
    %6955 = vmatpush1.bf16.msra.mxu0 %v6743
    %6956 = vmatprep.subr.bf16.mxu0 %v6736
    %6957 = vmatpush1.bf16.msra.mxu0 %v6735
    %6958 = vmatprep.subr.bf16.mxu0 %v6728
    %6959 = vmatpush1.bf16.msra.mxu0 %v6727
    %6960 = vmatprep.subr.bf16.mxu0 0
    %6961 = vmatpush2.bf16.msra.mxu0 0
    %6962 = vmatprep.subr.bf16.mxu0 0
    %6963 = vmatpush2.bf16.msra.mxu0 0
    %6964 = vmatprep.subr.bf16.mxu0 0
    %6965 = vmatpush2.bf16.msra.mxu0 0
    %6966 = vmatprep.subr.bf16.mxu0 0
    %6967 = vmatpush2.bf16.msra.mxu0 0
    %6968 = vmatprep.subr.bf16.mxu0 %v6816
    %6969 = vmatpush2.bf16.msra.mxu0 %v6815
    %6970 = vmatprep.subr.bf16.mxu0 %v6808
    %6971 = vmatpush2.bf16.msra.mxu0 %v6807
    %6972 = vmatprep.subr.bf16.mxu0 %v6800
    %6973 = vmatpush2.bf16.msra.mxu0 %v6799
    %6974 = vmatprep.subr.bf16.mxu0 %v6792
    %6975 = vmatpush2.bf16.msra.mxu0 %v6791
    %6976 = vmatprep.mubr.bf16.mxu0 %v6921
    %6977 = vmatmul.mubr.bf16.gmra.mxu0 %v6415
    %v6978 = vpop.f32.mrf.mxu0
    %v6979 = vadd.f32 %v6290, %v6978
    %v6980 = vpop.f32.mrf.mxu0
    %v6981 = vadd.f32 %v6290, %v6980
    %v6982 = vpop.f32.mrf.mxu0
    %v6983 = vadd.f32 %v6295, %v6982
    %v6984 = vpop.f32.mrf.mxu0
    %v6985 = vadd.f32 %v6295, %v6984
    %6986 = vmatprep.mubr.bf16.mxu0 %v6924
    %6987 = vmatmul.mubr.bf16.gmra.mxu0 %v6417
    %v6988 = vpop.f32.mrf.mxu0
    %v6989 = vadd.f32 %v6300, %v6988
    %v6990 = vpop.f32.mrf.mxu0
    %v6991 = vadd.f32 %v6300, %v6990
    %v6992 = vpop.f32.mrf.mxu0
    %v6993 = vadd.f32 %v6305, %v6992
    %v6994 = vpop.f32.mrf.mxu0
    %v6995 = vadd.f32 %v6305, %v6994
    %6996 = vmatprep.mubr.bf16.mxu0 %v6927
    %6997 = vmatmul.mubr.bf16.gmra.mxu0 %v6419
    %v6998 = vpop.f32.mrf.mxu0
    %v6999 = vadd.f32 %v6310, %v6998
    %v7000 = vpop.f32.mrf.mxu0
    %v7001 = vadd.f32 %v6310, %v7000
    %v7002 = vpop.f32.mrf.mxu0
    %v7003 = vadd.f32 %v6315, %v7002
    %v7004 = vpop.f32.mrf.mxu0
    %v7005 = vadd.f32 %v6315, %v7004
    %7006 = vmatprep.mubr.bf16.mxu0 %v6930
    %7007 = vmatmul.mubr.bf16.gmra.mxu0 %v6421
    %v7008 = vpop.f32.mrf.mxu0
    %v7009 = vadd.f32 %v6320, %v7008
    %v7010 = vpop.f32.mrf.mxu0
    %v7011 = vadd.f32 %v6320, %v7010
    %v7012 = vpop.f32.mrf.mxu0
    %v7013 = vadd.f32 %v6325, %v7012
    %v7014 = vpop.f32.mrf.mxu0
    %v7015 = vadd.f32 %v6325, %v7014
    %7016 = vmatprep.mubr.bf16.mxu0 %v6933
    %7017 = vmatmul.mubr.bf16.gmra.mxu0 %v6423
    %v7018 = vpop.f32.mrf.mxu0
    %v7019 = vadd.f32 %v6330, %v7018
    %v7020 = vpop.f32.mrf.mxu0
    %v7021 = vadd.f32 %v6330, %v7020
    %v7022 = vpop.f32.mrf.mxu0
    %v7023 = vadd.f32 %v6335, %v7022
    %v7024 = vpop.f32.mrf.mxu0
    %v7025 = vadd.f32 %v6335, %v7024
    %7026 = vmatprep.mubr.bf16.mxu0 %v6936
    %7027 = vmatmul.mubr.bf16.gmra.mxu0 %v6425
    %v7028 = vpop.f32.mrf.mxu0
    %v7029 = vadd.f32 %v6340, %v7028
    %v7030 = vpop.f32.mrf.mxu0
    %v7031 = vadd.f32 %v6340, %v7030
    %v7032 = vpop.f32.mrf.mxu0
    %v7033 = vadd.f32 %v6345, %v7032
    %v7034 = vpop.f32.mrf.mxu0
    %v7035 = vadd.f32 %v6345, %v7034
    %7036 = vmatprep.mubr.bf16.mxu0 %v6939
    %7037 = vmatmul.mubr.bf16.gmra.mxu0 %v6427
    %v7038 = vpop.f32.mrf.mxu0
    %v7039 = vadd.f32 %v6350, %v7038
    %v7040 = vpop.f32.mrf.mxu0
    %v7041 = vadd.f32 %v6350, %v7040
    %v7042 = vpop.f32.mrf.mxu0
    %v7043 = vadd.f32 %v6355, %v7042
    %v7044 = vpop.f32.mrf.mxu0
    %v7045 = vadd.f32 %v6355, %v7044
    %7046 = vmatprep.mubr.bf16.mxu0 %v6942
    %7047 = vmatmul.mubr.bf16.gmra.mxu0 %v6429
    %v7048 = vpop.f32.mrf.mxu0
    %v7049 = vadd.f32 %v6360, %v7048
    %v7050 = vpop.f32.mrf.mxu0
    %v7051 = vadd.f32 %v6360, %v7050
    %v7052 = vpop.f32.mrf.mxu0
    %v7053 = vadd.f32 %v6365, %v7052
    %v7054 = vpop.f32.mrf.mxu0
    %v7055 = vadd.f32 %v6365, %v7054
    %7056 = vdwg.mxu0
    %7057 = vmatprep.subr.bf16.mxu0 %v6786
    %7058 = vmatpush1.bf16.msra.mxu0 %v6785
    %7059 = vmatprep.subr.bf16.mxu0 %v6778
    %7060 = vmatpush1.bf16.msra.mxu0 %v6777
    %7061 = vmatprep.subr.bf16.mxu0 %v6770
    %7062 = vmatpush1.bf16.msra.mxu0 %v6769
    %7063 = vmatprep.subr.bf16.mxu0 %v6762
    %7064 = vmatpush1.bf16.msra.mxu0 %v6761
    %7065 = vmatprep.subr.bf16.mxu0 %v6754
    %7066 = vmatpush1.bf16.msra.mxu0 %v6753
    %7067 = vmatprep.subr.bf16.mxu0 %v6746
    %7068 = vmatpush1.bf16.msra.mxu0 %v6745
    %7069 = vmatprep.subr.bf16.mxu0 %v6738
    %7070 = vmatpush1.bf16.msra.mxu0 %v6737
    %7071 = vmatprep.subr.bf16.mxu0 %v6730
    %7072 = vmatpush1.bf16.msra.mxu0 %v6729
    %7073 = vmatprep.subr.bf16.mxu0 0
    %7074 = vmatpush2.bf16.msra.mxu0 0
    %7075 = vmatprep.subr.bf16.mxu0 0
    %7076 = vmatpush2.bf16.msra.mxu0 0
    %7077 = vmatprep.subr.bf16.mxu0 0
    %7078 = vmatpush2.bf16.msra.mxu0 0
    %7079 = vmatprep.subr.bf16.mxu0 0
    %7080 = vmatpush2.bf16.msra.mxu0 0
    %7081 = vmatprep.subr.bf16.mxu0 %v6818
    %7082 = vmatpush2.bf16.msra.mxu0 %v6817
    %7083 = vmatprep.subr.bf16.mxu0 %v6810
    %7084 = vmatpush2.bf16.msra.mxu0 %v6809
    %7085 = vmatprep.subr.bf16.mxu0 %v6802
    %7086 = vmatpush2.bf16.msra.mxu0 %v6801
    %7087 = vmatprep.subr.bf16.mxu0 %v6794
    %7088 = vmatpush2.bf16.msra.mxu0 %v6793
    %7089 = vmatprep.mubr.bf16.mxu0 %v6921
    %7090 = vmatmul.mubr.bf16.gmra.mxu0 %v6415
    %v7091 = vpop.f32.mrf.mxu0
    %v7092 = vadd.f32 %v6290, %v7091
    %v7093 = vpop.f32.mrf.mxu0
    %v7094 = vadd.f32 %v6290, %v7093
    %v7095 = vpop.f32.mrf.mxu0
    %v7096 = vadd.f32 %v6295, %v7095
    %v7097 = vpop.f32.mrf.mxu0
    %v7098 = vadd.f32 %v6295, %v7097
    %7099 = vmatprep.mubr.bf16.mxu0 %v6924
    %7100 = vmatmul.mubr.bf16.gmra.mxu0 %v6417
    %v7101 = vpop.f32.mrf.mxu0
    %v7102 = vadd.f32 %v6300, %v7101
    %v7103 = vpop.f32.mrf.mxu0
    %v7104 = vadd.f32 %v6300, %v7103
    %v7105 = vpop.f32.mrf.mxu0
    %v7106 = vadd.f32 %v6305, %v7105
    %v7107 = vpop.f32.mrf.mxu0
    %v7108 = vadd.f32 %v6305, %v7107
    %7109 = vmatprep.mubr.bf16.mxu0 %v6927
    %7110 = vmatmul.mubr.bf16.gmra.mxu0 %v6419
    %v7111 = vpop.f32.mrf.mxu0
    %v7112 = vadd.f32 %v6310, %v7111
    %v7113 = vpop.f32.mrf.mxu0
    %v7114 = vadd.f32 %v6310, %v7113
    %v7115 = vpop.f32.mrf.mxu0
    %v7116 = vadd.f32 %v6315, %v7115
    %v7117 = vpop.f32.mrf.mxu0
    %v7118 = vadd.f32 %v6315, %v7117
    %7119 = vmatprep.mubr.bf16.mxu0 %v6930
    %7120 = vmatmul.mubr.bf16.gmra.mxu0 %v6421
    %v7121 = vpop.f32.mrf.mxu0
    %v7122 = vadd.f32 %v6320, %v7121
    %v7123 = vpop.f32.mrf.mxu0
    %v7124 = vadd.f32 %v6320, %v7123
    %v7125 = vpop.f32.mrf.mxu0
    %v7126 = vadd.f32 %v6325, %v7125
    %v7127 = vpop.f32.mrf.mxu0
    %v7128 = vadd.f32 %v6325, %v7127
    %7129 = vmatprep.mubr.bf16.mxu0 %v6933
    %7130 = vmatmul.mubr.bf16.gmra.mxu0 %v6423
    %v7131 = vpop.f32.mrf.mxu0
    %v7132 = vadd.f32 %v6330, %v7131
    %v7133 = vpop.f32.mrf.mxu0
    %v7134 = vadd.f32 %v6330, %v7133
    %v7135 = vpop.f32.mrf.mxu0
    %v7136 = vadd.f32 %v6335, %v7135
    %v7137 = vpop.f32.mrf.mxu0
    %v7138 = vadd.f32 %v6335, %v7137
    %7139 = vmatprep.mubr.bf16.mxu0 %v6936
    %7140 = vmatmul.mubr.bf16.gmra.mxu0 %v6425
    %v7141 = vpop.f32.mrf.mxu0
    %v7142 = vadd.f32 %v6340, %v7141
    %v7143 = vpop.f32.mrf.mxu0
    %v7144 = vadd.f32 %v6340, %v7143
    %v7145 = vpop.f32.mrf.mxu0
    %v7146 = vadd.f32 %v6345, %v7145
    %v7147 = vpop.f32.mrf.mxu0
    %v7148 = vadd.f32 %v6345, %v7147
    %7149 = vmatprep.mubr.bf16.mxu0 %v6939
    %7150 = vmatmul.mubr.bf16.gmra.mxu0 %v6427
    %v7151 = vpop.f32.mrf.mxu0
    %v7152 = vadd.f32 %v6350, %v7151
    %v7153 = vpop.f32.mrf.mxu0
    %v7154 = vadd.f32 %v6350, %v7153
    %v7155 = vpop.f32.mrf.mxu0
    %v7156 = vadd.f32 %v6355, %v7155
    %v7157 = vpop.f32.mrf.mxu0
    %v7158 = vadd.f32 %v6355, %v7157
    %7159 = vmatprep.mubr.bf16.mxu0 %v6942
    %7160 = vmatmul.mubr.bf16.gmra.mxu0 %v6429
    %v7161 = vpop.f32.mrf.mxu0
    %v7162 = vadd.f32 %v6360, %v7161
    %v7163 = vpop.f32.mrf.mxu0
    %v7164 = vadd.f32 %v6360, %v7163
    %v7165 = vpop.f32.mrf.mxu0
    %v7166 = vadd.f32 %v6365, %v7165
    %v7167 = vpop.f32.mrf.mxu0
    %v7168 = vadd.f32 %v6365, %v7167
    %7169 = vdwg.mxu0
    %7170 = vmatprep.subr.bf16.mxu0 %v6788
    %7171 = vmatpush1.bf16.msra.mxu0 %v6787
    %7172 = vmatprep.subr.bf16.mxu0 %v6780
    %7173 = vmatpush1.bf16.msra.mxu0 %v6779
    %7174 = vmatprep.subr.bf16.mxu0 %v6772
    %7175 = vmatpush1.bf16.msra.mxu0 %v6771
    %7176 = vmatprep.subr.bf16.mxu0 %v6764
    %7177 = vmatpush1.bf16.msra.mxu0 %v6763
    %7178 = vmatprep.subr.bf16.mxu0 %v6756
    %7179 = vmatpush1.bf16.msra.mxu0 %v6755
    %7180 = vmatprep.subr.bf16.mxu0 %v6748
    %7181 = vmatpush1.bf16.msra.mxu0 %v6747
    %7182 = vmatprep.subr.bf16.mxu0 %v6740
    %7183 = vmatpush1.bf16.msra.mxu0 %v6739
    %7184 = vmatprep.subr.bf16.mxu0 %v6732
    %7185 = vmatpush1.bf16.msra.mxu0 %v6731
    %7186 = vmatprep.subr.bf16.mxu0 0
    %7187 = vmatpush2.bf16.msra.mxu0 0
    %7188 = vmatprep.subr.bf16.mxu0 0
    %7189 = vmatpush2.bf16.msra.mxu0 0
    %7190 = vmatprep.subr.bf16.mxu0 0
    %7191 = vmatpush2.bf16.msra.mxu0 0
    %7192 = vmatprep.subr.bf16.mxu0 0
    %7193 = vmatpush2.bf16.msra.mxu0 0
    %7194 = vmatprep.subr.bf16.mxu0 %v6820
    %7195 = vmatpush2.bf16.msra.mxu0 %v6819
    %7196 = vmatprep.subr.bf16.mxu0 %v6812
    %7197 = vmatpush2.bf16.msra.mxu0 %v6811
    %7198 = vmatprep.subr.bf16.mxu0 %v6804
    %7199 = vmatpush2.bf16.msra.mxu0 %v6803
    %7200 = vmatprep.subr.bf16.mxu0 %v6796
    %7201 = vmatpush2.bf16.msra.mxu0 %v6795
    %7202 = vmatprep.mubr.bf16.mxu0 %v6921
    %7203 = vmatmul.mubr.bf16.gmra.mxu0 %v6415
    %v7204 = vpop.f32.mrf.mxu0
    %v7205 = vadd.f32 %v6290, %v7204
    %v7206 = vpop.f32.mrf.mxu0
    %v7207 = vadd.f32 %v6290, %v7206
    %v7208 = vpop.f32.mrf.mxu0
    %v7209 = vadd.f32 %v6295, %v7208
    %v7210 = vpop.f32.mrf.mxu0
    %v7211 = vadd.f32 %v6295, %v7210
    %7212 = vmatprep.mubr.bf16.mxu0 %v6924
    %7213 = vmatmul.mubr.bf16.gmra.mxu0 %v6417
    %v7214 = vpop.f32.mrf.mxu0
    %v7215 = vadd.f32 %v6300, %v7214
    %v7216 = vpop.f32.mrf.mxu0
    %v7217 = vadd.f32 %v6300, %v7216
    %v7218 = vpop.f32.mrf.mxu0
    %v7219 = vadd.f32 %v6305, %v7218
    %v7220 = vpop.f32.mrf.mxu0
    %v7221 = vadd.f32 %v6305, %v7220
    %7222 = vmatprep.mubr.bf16.mxu0 %v6927
    %7223 = vmatmul.mubr.bf16.gmra.mxu0 %v6419
    %v7224 = vpop.f32.mrf.mxu0
    %v7225 = vadd.f32 %v6310, %v7224
    %v7226 = vpop.f32.mrf.mxu0
    %v7227 = vadd.f32 %v6310, %v7226
    %v7228 = vpop.f32.mrf.mxu0
    %v7229 = vadd.f32 %v6315, %v7228
    %v7230 = vpop.f32.mrf.mxu0
    %v7231 = vadd.f32 %v6315, %v7230
    %7232 = vmatprep.mubr.bf16.mxu0 %v6930
    %7233 = vmatmul.mubr.bf16.gmra.mxu0 %v6421
    %v7234 = vpop.f32.mrf.mxu0
    %v7235 = vadd.f32 %v6320, %v7234
    %v7236 = vpop.f32.mrf.mxu0
    %v7237 = vadd.f32 %v6320, %v7236
    %v7238 = vpop.f32.mrf.mxu0
    %v7239 = vadd.f32 %v6325, %v7238
    %v7240 = vpop.f32.mrf.mxu0
    %v7241 = vadd.f32 %v6325, %v7240
    %7242 = vmatprep.mubr.bf16.mxu0 %v6933
    %7243 = vmatmul.mubr.bf16.gmra.mxu0 %v6423
    %v7244 = vpop.f32.mrf.mxu0
    %v7245 = vadd.f32 %v6330, %v7244
    %v7246 = vpop.f32.mrf.mxu0
    %v7247 = vadd.f32 %v6330, %v7246
    %v7248 = vpop.f32.mrf.mxu0
    %v7249 = vadd.f32 %v6335, %v7248
    %v7250 = vpop.f32.mrf.mxu0
    %v7251 = vadd.f32 %v6335, %v7250
    %7252 = vmatprep.mubr.bf16.mxu0 %v6936
    %7253 = vmatmul.mubr.bf16.gmra.mxu0 %v6425
    %v7254 = vpop.f32.mrf.mxu0
    %v7255 = vadd.f32 %v6340, %v7254
    %v7256 = vpop.f32.mrf.mxu0
    %v7257 = vadd.f32 %v6340, %v7256
    %v7258 = vpop.f32.mrf.mxu0
    %v7259 = vadd.f32 %v6345, %v7258
    %v7260 = vpop.f32.mrf.mxu0
    %v7261 = vadd.f32 %v6345, %v7260
    %7262 = vmatprep.mubr.bf16.mxu0 %v6939
    %7263 = vmatmul.mubr.bf16.gmra.mxu0 %v6427
    %v7264 = vpop.f32.mrf.mxu0
    %v7265 = vadd.f32 %v6350, %v7264
    %v7266 = vpop.f32.mrf.mxu0
    %v7267 = vadd.f32 %v6350, %v7266
    %v7268 = vpop.f32.mrf.mxu0
    %v7269 = vadd.f32 %v6355, %v7268
    %v7270 = vpop.f32.mrf.mxu0
    %v7271 = vadd.f32 %v6355, %v7270
    %7272 = vmatprep.mubr.bf16.mxu0 %v6942
    %7273 = vmatmul.mubr.bf16.gmra.mxu0 %v6429
    %v7274 = vpop.f32.mrf.mxu0
    %v7275 = vadd.f32 %v6360, %v7274
    %v7276 = vpop.f32.mrf.mxu0
    %v7277 = vadd.f32 %v6360, %v7276
    %v7278 = vpop.f32.mrf.mxu0
    %v7279 = vadd.f32 %v6365, %v7278
    %v7280 = vpop.f32.mrf.mxu0
    %v7281 = vadd.f32 %v6365, %v7280
    %7282 = vdwg.mxu0
    %7283 = vmatprep.subr.bf16.mxu0 %v6790
    %7284 = vmatpush1.bf16.msra.mxu0 %v6789
    %7285 = vmatprep.subr.bf16.mxu0 %v6782
    %7286 = vmatpush1.bf16.msra.mxu0 %v6781
    %7287 = vmatprep.subr.bf16.mxu0 %v6774
    %7288 = vmatpush1.bf16.msra.mxu0 %v6773
    %7289 = vmatprep.subr.bf16.mxu0 %v6766
    %7290 = vmatpush1.bf16.msra.mxu0 %v6765
    %7291 = vmatprep.subr.bf16.mxu0 %v6758
    %7292 = vmatpush1.bf16.msra.mxu0 %v6757
    %7293 = vmatprep.subr.bf16.mxu0 %v6750
    %7294 = vmatpush1.bf16.msra.mxu0 %v6749
    %7295 = vmatprep.subr.bf16.mxu0 %v6742
    %7296 = vmatpush1.bf16.msra.mxu0 %v6741
    %7297 = vmatprep.subr.bf16.mxu0 %v6734
    %7298 = vmatpush1.bf16.msra.mxu0 %v6733
    %7299 = vmatprep.subr.bf16.mxu0 0
    %7300 = vmatpush2.bf16.msra.mxu0 0
    %7301 = vmatprep.subr.bf16.mxu0 0
    %7302 = vmatpush2.bf16.msra.mxu0 0
    %7303 = vmatprep.subr.bf16.mxu0 0
    %7304 = vmatpush2.bf16.msra.mxu0 0
    %7305 = vmatprep.subr.bf16.mxu0 0
    %7306 = vmatpush2.bf16.msra.mxu0 0
    %7307 = vmatprep.subr.bf16.mxu0 %v6822
    %7308 = vmatpush2.bf16.msra.mxu0 %v6821
    %7309 = vmatprep.subr.bf16.mxu0 %v6814
    %7310 = vmatpush2.bf16.msra.mxu0 %v6813
    %7311 = vmatprep.subr.bf16.mxu0 %v6806
    %7312 = vmatpush2.bf16.msra.mxu0 %v6805
    %7313 = vmatprep.subr.bf16.mxu0 %v6798
    %7314 = vmatpush2.bf16.msra.mxu0 %v6797
    %7315 = vmatprep.mubr.bf16.mxu0 %v6921
    %7316 = vmatmul.mubr.bf16.gmra.mxu0 %v6415
    %v7317 = vpop.f32.mrf.mxu0
    %v7318 = vadd.f32 %v6290, %v7317
    %v7319 = vpop.f32.mrf.mxu0
    %v7320 = vadd.f32 %v6290, %v7319
    %v7321 = vpop.f32.mrf.mxu0
    %v7322 = vadd.f32 %v6295, %v7321
    %v7323 = vpop.f32.mrf.mxu0
    %v7324 = vadd.f32 %v6295, %v7323
    %7325 = vmatprep.mubr.bf16.mxu0 %v6924
    %7326 = vmatmul.mubr.bf16.gmra.mxu0 %v6417
    %v7327 = vpop.f32.mrf.mxu0
    %v7328 = vadd.f32 %v6300, %v7327
    %v7329 = vpop.f32.mrf.mxu0
    %v7330 = vadd.f32 %v6300, %v7329
    %v7331 = vpop.f32.mrf.mxu0
    %v7332 = vadd.f32 %v6305, %v7331
    %v7333 = vpop.f32.mrf.mxu0
    %v7334 = vadd.f32 %v6305, %v7333
    %7335 = vmatprep.mubr.bf16.mxu0 %v6927
    %7336 = vmatmul.mubr.bf16.gmra.mxu0 %v6419
    %v7337 = vpop.f32.mrf.mxu0
    %v7338 = vadd.f32 %v6310, %v7337
    %v7339 = vpop.f32.mrf.mxu0
    %v7340 = vadd.f32 %v6310, %v7339
    %v7341 = vpop.f32.mrf.mxu0
    %v7342 = vadd.f32 %v6315, %v7341
    %v7343 = vpop.f32.mrf.mxu0
    %v7344 = vadd.f32 %v6315, %v7343
    %7345 = vmatprep.mubr.bf16.mxu0 %v6930
    %7346 = vmatmul.mubr.bf16.gmra.mxu0 %v6421
    %v7347 = vpop.f32.mrf.mxu0
    %v7348 = vadd.f32 %v6320, %v7347
    %v7349 = vpop.f32.mrf.mxu0
    %v7350 = vadd.f32 %v6320, %v7349
    %v7351 = vpop.f32.mrf.mxu0
    %v7352 = vadd.f32 %v6325, %v7351
    %v7353 = vpop.f32.mrf.mxu0
    %v7354 = vadd.f32 %v6325, %v7353
    %7355 = vmatprep.mubr.bf16.mxu0 %v6933
    %7356 = vmatmul.mubr.bf16.gmra.mxu0 %v6423
    %v7357 = vpop.f32.mrf.mxu0
    %v7358 = vadd.f32 %v6330, %v7357
    %v7359 = vpop.f32.mrf.mxu0
    %v7360 = vadd.f32 %v6330, %v7359
    %v7361 = vpop.f32.mrf.mxu0
    %v7362 = vadd.f32 %v6335, %v7361
    %v7363 = vpop.f32.mrf.mxu0
    %v7364 = vadd.f32 %v6335, %v7363
    %7365 = vmatprep.mubr.bf16.mxu0 %v6936
    %7366 = vmatmul.mubr.bf16.gmra.mxu0 %v6425
    %v7367 = vpop.f32.mrf.mxu0
    %v7368 = vadd.f32 %v6340, %v7367
    %v7369 = vpop.f32.mrf.mxu0
    %v7370 = vadd.f32 %v6340, %v7369
    %v7371 = vpop.f32.mrf.mxu0
    %v7372 = vadd.f32 %v6345, %v7371
    %v7373 = vpop.f32.mrf.mxu0
    %v7374 = vadd.f32 %v6345, %v7373
    %7375 = vmatprep.mubr.bf16.mxu0 %v6939
    %7376 = vmatmul.mubr.bf16.gmra.mxu0 %v6427
    %v7377 = vpop.f32.mrf.mxu0
    %v7378 = vadd.f32 %v6350, %v7377
    %v7379 = vpop.f32.mrf.mxu0
    %v7380 = vadd.f32 %v6350, %v7379
    %v7381 = vpop.f32.mrf.mxu0
    %v7382 = vadd.f32 %v6355, %v7381
    %v7383 = vpop.f32.mrf.mxu0
    %v7384 = vadd.f32 %v6355, %v7383
    %7385 = vmatprep.mubr.bf16.mxu0 %v6942
    %7386 = vmatmul.mubr.bf16.gmra.mxu0 %v6429
    %v7387 = vpop.f32.mrf.mxu0
    %v7388 = vadd.f32 %v6360, %v7387
    %v7389 = vpop.f32.mrf.mxu0
    %v7390 = vadd.f32 %v6360, %v7389
    %v7391 = vpop.f32.mrf.mxu0
    %v7392 = vadd.f32 %v6365, %v7391
    %v7393 = vpop.f32.mrf.mxu0
    %v7394 = vadd.f32 %v6365, %v7393
    %7395 = vdwg.mxu0
    %v7396 = vmax.f32 %v6979, 0.0
    %v7397 = vmax.f32 %v6981, 0.0
    %v7398 = vmax.f32 %v7092, 0.0
    %v7399 = vmax.f32 %v7094, 0.0
    %v7400 = vmax.f32 %v7205, 0.0
    %v7401 = vmax.f32 %v7207, 0.0
    %v7402 = vmax.f32 %v7318, 0.0
    %v7403 = vmax.f32 %v7320, 0.0
    %v7404 = vmax.f32 %v6983, 0.0
    %v7405 = vmax.f32 %v6985, 0.0
    %v7406 = vmax.f32 %v7096, 0.0
    %v7407 = vmax.f32 %v7098, 0.0
    %v7408 = vmax.f32 %v7209, 0.0
    %v7409 = vmax.f32 %v7211, 0.0
    %v7410 = vmax.f32 %v7322, 0.0
    %v7411 = vmax.f32 %v7324, 0.0
    %v7412 = vmax.f32 %v6989, 0.0
    %v7413 = vmax.f32 %v6991, 0.0
    %v7414 = vmax.f32 %v7102, 0.0
    %v7415 = vmax.f32 %v7104, 0.0
    %v7416 = vmax.f32 %v7215, 0.0
    %v7417 = vmax.f32 %v7217, 0.0
    %v7418 = vmax.f32 %v7328, 0.0
    %v7419 = vmax.f32 %v7330, 0.0
    %v7420 = vmax.f32 %v6993, 0.0
    %v7421 = vmax.f32 %v6995, 0.0
    %v7422 = vmax.f32 %v7106, 0.0
    %v7423 = vmax.f32 %v7108, 0.0
    %v7424 = vmax.f32 %v7219, 0.0
    %v7425 = vmax.f32 %v7221, 0.0
    %v7426 = vmax.f32 %v7332, 0.0
    %v7427 = vmax.f32 %v7334, 0.0
    %v7428 = vmax.f32 %v6999, 0.0
    %v7429 = vmax.f32 %v7001, 0.0
    %v7430 = vmax.f32 %v7112, 0.0
    %v7431 = vmax.f32 %v7114, 0.0
    %v7432 = vmax.f32 %v7225, 0.0
    %v7433 = vmax.f32 %v7227, 0.0
    %v7434 = vmax.f32 %v7338, 0.0
    %v7435 = vmax.f32 %v7340, 0.0
    %v7436 = vmax.f32 %v7003, 0.0
    %v7437 = vmax.f32 %v7005, 0.0
    %v7438 = vmax.f32 %v7116, 0.0
    %v7439 = vmax.f32 %v7118, 0.0
    %v7440 = vmax.f32 %v7229, 0.0
    %v7441 = vmax.f32 %v7231, 0.0
    %v7442 = vmax.f32 %v7342, 0.0
    %v7443 = vmax.f32 %v7344, 0.0
    %v7444 = vmax.f32 %v7009, 0.0
    %v7445 = vmax.f32 %v7011, 0.0
    %v7446 = vmax.f32 %v7122, 0.0
    %v7447 = vmax.f32 %v7124, 0.0
    %v7448 = vmax.f32 %v7235, 0.0
    %v7449 = vmax.f32 %v7237, 0.0
    %v7450 = vmax.f32 %v7348, 0.0
    %v7451 = vmax.f32 %v7350, 0.0
    %v7452 = vmax.f32 %v7013, 0.0
    %v7453 = vmax.f32 %v7015, 0.0
    %v7454 = vmax.f32 %v7126, 0.0
    %v7455 = vmax.f32 %v7128, 0.0
    %v7456 = vmax.f32 %v7239, 0.0
    %v7457 = vmax.f32 %v7241, 0.0
    %v7458 = vmax.f32 %v7352, 0.0
    %v7459 = vmax.f32 %v7354, 0.0
    %v7460 = vmax.f32 %v7019, 0.0
    %v7461 = vmax.f32 %v7021, 0.0
    %v7462 = vmax.f32 %v7132, 0.0
    %v7463 = vmax.f32 %v7134, 0.0
    %v7464 = vmax.f32 %v7245, 0.0
    %v7465 = vmax.f32 %v7247, 0.0
    %v7466 = vmax.f32 %v7358, 0.0
    %v7467 = vmax.f32 %v7360, 0.0
    %v7468 = vmax.f32 %v7023, 0.0
    %v7469 = vmax.f32 %v7025, 0.0
    %v7470 = vmax.f32 %v7136, 0.0
    %v7471 = vmax.f32 %v7138, 0.0
    %v7472 = vmax.f32 %v7249, 0.0
    %v7473 = vmax.f32 %v7251, 0.0
    %v7474 = vmax.f32 %v7362, 0.0
    %v7475 = vmax.f32 %v7364, 0.0
    %v7476 = vmax.f32 %v7029, 0.0
    %v7477 = vmax.f32 %v7031, 0.0
    %v7478 = vmax.f32 %v7142, 0.0
    %v7479 = vmax.f32 %v7144, 0.0
    %v7480 = vmax.f32 %v7255, 0.0
    %v7481 = vmax.f32 %v7257, 0.0
    %v7482 = vmax.f32 %v7368, 0.0
    %v7483 = vmax.f32 %v7370, 0.0
    %v7484 = vmax.f32 %v7033, 0.0
    %v7485 = vmax.f32 %v7035, 0.0
    %v7486 = vmax.f32 %v7146, 0.0
    %v7487 = vmax.f32 %v7148, 0.0
    %v7488 = vmax.f32 %v7259, 0.0
    %v7489 = vmax.f32 %v7261, 0.0
    %v7490 = vmax.f32 %v7372, 0.0
    %v7491 = vmax.f32 %v7374, 0.0
    %v7492 = vmax.f32 %v7039, 0.0
    %v7493 = vmax.f32 %v7041, 0.0
    %v7494 = vmax.f32 %v7152, 0.0
    %v7495 = vmax.f32 %v7154, 0.0
    %v7496 = vmax.f32 %v7265, 0.0
    %v7497 = vmax.f32 %v7267, 0.0
    %v7498 = vmax.f32 %v7378, 0.0
    %v7499 = vmax.f32 %v7380, 0.0
    %v7500 = vmax.f32 %v7043, 0.0
    %v7501 = vmax.f32 %v7045, 0.0
    %v7502 = vmax.f32 %v7156, 0.0
    %v7503 = vmax.f32 %v7158, 0.0
    %v7504 = vmax.f32 %v7269, 0.0
    %v7505 = vmax.f32 %v7271, 0.0
    %v7506 = vmax.f32 %v7382, 0.0
    %v7507 = vmax.f32 %v7384, 0.0
    %v7508 = vmax.f32 %v7049, 0.0
    %v7509 = vmax.f32 %v7051, 0.0
    %v7510 = vmax.f32 %v7162, 0.0
    %v7511 = vmax.f32 %v7164, 0.0
    %v7512 = vmax.f32 %v7275, 0.0
    %v7513 = vmax.f32 %v7277, 0.0
    %v7514 = vmax.f32 %v7388, 0.0
    %v7515 = vmax.f32 %v7390, 0.0
    %v7516 = vmax.f32 %v7053, 0.0
    %v7517 = vmax.f32 %v7055, 0.0
    %v7518 = vmax.f32 %v7166, 0.0
    %v7519 = vmax.f32 %v7168, 0.0
    %v7520 = vmax.f32 %v7279, 0.0
    %v7521 = vmax.f32 %v7281, 0.0
    %v7522 = vmax.f32 %v7392, 0.0
    %v7523 = vmax.f32 %v7394, 0.0
    %v7524 = vld [vmem:[%s12] sm:$0xff]
    %v7525 = vld [vmem:[%s12 + $0x8] sm:$0xff]
    %v7526 = vld [vmem:[%s12 + $0x10] sm:$0xff]
    %v7527 = vld [vmem:[%s12 + $0x18] sm:$0xff]
    %v7528 = vld [vmem:[%s12 + $0x20] sm:$0xff]
    %v7529 = vld [vmem:[%s12 + $0x28] sm:$0xff]
    %v7530 = vld [vmem:[%s12 + $0x30] sm:$0xff]
    %v7531 = vld [vmem:[%s12 + $0x38] sm:$0xff]
    %v7532 = vld [vmem:[%s12 + $0x40] sm:$0xff]
    %v7533 = vld [vmem:[%s12 + $0x48] sm:$0xff]
    %v7534 = vld [vmem:[%s12 + $0x50] sm:$0xff]
    %v7535 = vld [vmem:[%s12 + $0x58] sm:$0xff]
    %v7536 = vld [vmem:[%s12 + $0x60] sm:$0xff]
    %v7537 = vld [vmem:[%s12 + $0x68] sm:$0xff]
    %v7538 = vld [vmem:[%s12 + $0x70] sm:$0xff]
    %v7539 = vld [vmem:[%s12 + $0x78] sm:$0xff]
    %7541 = vset.pattern.permute.xlu0 0
    %7542 = vperm.xlu0 %7541, %v7524
    %v7543 = vpop.permute.xlu0 %7542
    %7546 = vset.pattern.permute.xlu0 0
    %7547 = vperm.xlu0 %7546, %v7525
    %v7548 = vpop.permute.xlu0 %7547
    %7551 = vset.pattern.permute.xlu0 0
    %7552 = vperm.xlu0 %7551, %v7526
    %v7553 = vpop.permute.xlu0 %7552
    %7556 = vset.pattern.permute.xlu0 0
    %7557 = vperm.xlu0 %7556, %v7527
    %v7558 = vpop.permute.xlu0 %7557
    %7561 = vset.pattern.permute.xlu0 0
    %7562 = vperm.xlu0 %7561, %v7528
    %v7563 = vpop.permute.xlu0 %7562
    %7566 = vset.pattern.permute.xlu0 0
    %7567 = vperm.xlu0 %7566, %v7529
    %v7568 = vpop.permute.xlu0 %7567
    %7571 = vset.pattern.permute.xlu0 0
    %7572 = vperm.xlu0 %7571, %v7530
    %v7573 = vpop.permute.xlu0 %7572
    %7576 = vset.pattern.permute.xlu0 0
    %7577 = vperm.xlu0 %7576, %v7531
    %v7578 = vpop.permute.xlu0 %7577
    %7581 = vset.pattern.permute.xlu0 0
    %7582 = vperm.xlu0 %7581, %v7532
    %v7583 = vpop.permute.xlu0 %7582
    %7586 = vset.pattern.permute.xlu0 0
    %7587 = vperm.xlu0 %7586, %v7533
    %v7588 = vpop.permute.xlu0 %7587
    %7591 = vset.pattern.permute.xlu0 0
    %7592 = vperm.xlu0 %7591, %v7534
    %v7593 = vpop.permute.xlu0 %7592
    %7596 = vset.pattern.permute.xlu0 0
    %7597 = vperm.xlu0 %7596, %v7535
    %v7598 = vpop.permute.xlu0 %7597
    %7601 = vset.pattern.permute.xlu0 0
    %7602 = vperm.xlu0 %7601, %v7536
    %v7603 = vpop.permute.xlu0 %7602
    %7606 = vset.pattern.permute.xlu0 0
    %7607 = vperm.xlu0 %7606, %v7537
    %v7608 = vpop.permute.xlu0 %7607
    %7611 = vset.pattern.permute.xlu0 0
    %7612 = vperm.xlu0 %7611, %v7538
    %v7613 = vpop.permute.xlu0 %7612
    %7616 = vset.pattern.permute.xlu0 0
    %7617 = vperm.xlu0 %7616, %v7539
    %v7618 = vpop.permute.xlu0 %7617
    %v7620 = vmul.f32 %v7396, %v7543
    %v7621 = vmul.f32 %v7397, %v7543
    %v7622 = vmul.f32 %v7398, %v7543
    %v7623 = vmul.f32 %v7399, %v7543
    %v7624 = vmul.f32 %v7400, %v7543
    %v7625 = vmul.f32 %v7401, %v7543
    %v7626 = vmul.f32 %v7402, %v7543
    %v7627 = vmul.f32 %v7403, %v7543
    %v7628 = vmul.f32 %v7404, %v7548
    %v7629 = vmul.f32 %v7405, %v7548
    %v7630 = vmul.f32 %v7406, %v7548
    %v7631 = vmul.f32 %v7407, %v7548
    %v7632 = vmul.f32 %v7408, %v7548
    %v7633 = vmul.f32 %v7409, %v7548
    %v7634 = vmul.f32 %v7410, %v7548
    %v7635 = vmul.f32 %v7411, %v7548
    %v7636 = vmul.f32 %v7412, %v7553
    %v7637 = vmul.f32 %v7413, %v7553
    %v7638 = vmul.f32 %v7414, %v7553
    %v7639 = vmul.f32 %v7415, %v7553
    %v7640 = vmul.f32 %v7416, %v7553
    %v7641 = vmul.f32 %v7417, %v7553
    %v7642 = vmul.f32 %v7418, %v7553
    %v7643 = vmul.f32 %v7419, %v7553
    %v7644 = vmul.f32 %v7420, %v7558
    %v7645 = vmul.f32 %v7421, %v7558
    %v7646 = vmul.f32 %v7422, %v7558
    %v7647 = vmul.f32 %v7423, %v7558
    %v7648 = vmul.f32 %v7424, %v7558
    %v7649 = vmul.f32 %v7425, %v7558
    %v7650 = vmul.f32 %v7426, %v7558
    %v7651 = vmul.f32 %v7427, %v7558
    %v7652 = vmul.f32 %v7428, %v7563
    %v7653 = vmul.f32 %v7429, %v7563
    %v7654 = vmul.f32 %v7430, %v7563
    %v7655 = vmul.f32 %v7431, %v7563
    %v7656 = vmul.f32 %v7432, %v7563
    %v7657 = vmul.f32 %v7433, %v7563
    %v7658 = vmul.f32 %v7434, %v7563
    %v7659 = vmul.f32 %v7435, %v7563
    %v7660 = vmul.f32 %v7436, %v7568
    %v7661 = vmul.f32 %v7437, %v7568
    %v7662 = vmul.f32 %v7438, %v7568
    %v7663 = vmul.f32 %v7439, %v7568
    %v7664 = vmul.f32 %v7440, %v7568
    %v7665 = vmul.f32 %v7441, %v7568
    %v7666 = vmul.f32 %v7442, %v7568
    %v7667 = vmul.f32 %v7443, %v7568
    %v7668 = vmul.f32 %v7444, %v7573
    %v7669 = vmul.f32 %v7445, %v7573
    %v7670 = vmul.f32 %v7446, %v7573
    %v7671 = vmul.f32 %v7447, %v7573
    %v7672 = vmul.f32 %v7448, %v7573
    %v7673 = vmul.f32 %v7449, %v7573
    %v7674 = vmul.f32 %v7450, %v7573
    %v7675 = vmul.f32 %v7451, %v7573
    %v7676 = vmul.f32 %v7452, %v7578
    %v7677 = vmul.f32 %v7453, %v7578
    %v7678 = vmul.f32 %v7454, %v7578
    %v7679 = vmul.f32 %v7455, %v7578
    %v7680 = vmul.f32 %v7456, %v7578
    %v7681 = vmul.f32 %v7457, %v7578
    %v7682 = vmul.f32 %v7458, %v7578
    %v7683 = vmul.f32 %v7459, %v7578
    %v7684 = vmul.f32 %v7460, %v7583
    %v7685 = vmul.f32 %v7461, %v7583
    %v7686 = vmul.f32 %v7462, %v7583
    %v7687 = vmul.f32 %v7463, %v7583
    %v7688 = vmul.f32 %v7464, %v7583
    %v7689 = vmul.f32 %v7465, %v7583
    %v7690 = vmul.f32 %v7466, %v7583
    %v7691 = vmul.f32 %v7467, %v7583
    %v7692 = vmul.f32 %v7468, %v7588
    %v7693 = vmul.f32 %v7469, %v7588
    %v7694 = vmul.f32 %v7470, %v7588
    %v7695 = vmul.f32 %v7471, %v7588
    %v7696 = vmul.f32 %v7472, %v7588
    %v7697 = vmul.f32 %v7473, %v7588
    %v7698 = vmul.f32 %v7474, %v7588
    %v7699 = vmul.f32 %v7475, %v7588
    %v7700 = vmul.f32 %v7476, %v7593
    %v7701 = vmul.f32 %v7477, %v7593
    %v7702 = vmul.f32 %v7478, %v7593
    %v7703 = vmul.f32 %v7479, %v7593
    %v7704 = vmul.f32 %v7480, %v7593
    %v7705 = vmul.f32 %v7481, %v7593
    %v7706 = vmul.f32 %v7482, %v7593
    %v7707 = vmul.f32 %v7483, %v7593
    %v7708 = vmul.f32 %v7484, %v7598
    %v7709 = vmul.f32 %v7485, %v7598
    %v7710 = vmul.f32 %v7486, %v7598
    %v7711 = vmul.f32 %v7487, %v7598
    %v7712 = vmul.f32 %v7488, %v7598
    %v7713 = vmul.f32 %v7489, %v7598
    %v7714 = vmul.f32 %v7490, %v7598
    %v7715 = vmul.f32 %v7491, %v7598
    %v7716 = vmul.f32 %v7492, %v7603
    %v7717 = vmul.f32 %v7493, %v7603
    %v7718 = vmul.f32 %v7494, %v7603
    %v7719 = vmul.f32 %v7495, %v7603
    %v7720 = vmul.f32 %v7496, %v7603
    %v7721 = vmul.f32 %v7497, %v7603
    %v7722 = vmul.f32 %v7498, %v7603
    %v7723 = vmul.f32 %v7499, %v7603
    %v7724 = vmul.f32 %v7500, %v7608
    %v7725 = vmul.f32 %v7501, %v7608
    %v7726 = vmul.f32 %v7502, %v7608
    %v7727 = vmul.f32 %v7503, %v7608
    %v7728 = vmul.f32 %v7504, %v7608
    %v7729 = vmul.f32 %v7505, %v7608
    %v7730 = vmul.f32 %v7506, %v7608
    %v7731 = vmul.f32 %v7507, %v7608
    %v7732 = vmul.f32 %v7508, %v7613
    %v7733 = vmul.f32 %v7509, %v7613
    %v7734 = vmul.f32 %v7510, %v7613
    %v7735 = vmul.f32 %v7511, %v7613
    %v7736 = vmul.f32 %v7512, %v7613
    %v7737 = vmul.f32 %v7513, %v7613
    %v7738 = vmul.f32 %v7514, %v7613
    %v7739 = vmul.f32 %v7515, %v7613
    %v7740 = vmul.f32 %v7516, %v7618
    %v7741 = vmul.f32 %v7517, %v7618
    %v7742 = vmul.f32 %v7518, %v7618
    %v7743 = vmul.f32 %v7519, %v7618
    %v7744 = vmul.f32 %v7520, %v7618
    %v7745 = vmul.f32 %v7521, %v7618
    %v7746 = vmul.f32 %v7522, %v7618
    %v7747 = vmul.f32 %v7523, %v7618
    %v7748 = vld [vmem:[%s13] sm:$0xff]
    %v7749 = vld [vmem:[%s13 + $0x8] sm:$0xff]
    %v7750 = vld [vmem:[%s13 + $0x10] sm:$0xff]
    %v7751 = vld [vmem:[%s13 + $0x18] sm:$0xff]
    %v7752 = vld [vmem:[%s13 + $0x20] sm:$0xff]
    %v7753 = vld [vmem:[%s13 + $0x28] sm:$0xff]
    %v7754 = vld [vmem:[%s13 + $0x30] sm:$0xff]
    %v7755 = vld [vmem:[%s13 + $0x38] sm:$0xff]
    %v7756 = vld [vmem:[%s13 + $0x40] sm:$0xff]
    %v7757 = vld [vmem:[%s13 + $0x48] sm:$0xff]
    %v7758 = vld [vmem:[%s13 + $0x50] sm:$0xff]
    %v7759 = vld [vmem:[%s13 + $0x58] sm:$0xff]
    %v7760 = vld [vmem:[%s13 + $0x60] sm:$0xff]
    %v7761 = vld [vmem:[%s13 + $0x68] sm:$0xff]
    %v7762 = vld [vmem:[%s13 + $0x70] sm:$0xff]
    %v7763 = vld [vmem:[%s13 + $0x78] sm:$0xff]
    %7765 = vset.pattern.permute.xlu0 0
    %7766 = vperm.xlu0 %7765, %v7748
    %v7767 = vpop.permute.xlu0 %7766
    %7770 = vset.pattern.permute.xlu0 0
    %7771 = vperm.xlu0 %7770, %v7749
    %v7772 = vpop.permute.xlu0 %7771
    %7775 = vset.pattern.permute.xlu0 0
    %7776 = vperm.xlu0 %7775, %v7750
    %v7777 = vpop.permute.xlu0 %7776
    %7780 = vset.pattern.permute.xlu0 0
    %7781 = vperm.xlu0 %7780, %v7751
    %v7782 = vpop.permute.xlu0 %7781
    %7785 = vset.pattern.permute.xlu0 0
    %7786 = vperm.xlu0 %7785, %v7752
    %v7787 = vpop.permute.xlu0 %7786
    %7790 = vset.pattern.permute.xlu0 0
    %7791 = vperm.xlu0 %7790, %v7753
    %v7792 = vpop.permute.xlu0 %7791
    %7795 = vset.pattern.permute.xlu0 0
    %7796 = vperm.xlu0 %7795, %v7754
    %v7797 = vpop.permute.xlu0 %7796
    %7800 = vset.pattern.permute.xlu0 0
    %7801 = vperm.xlu0 %7800, %v7755
    %v7802 = vpop.permute.xlu0 %7801
    %7805 = vset.pattern.permute.xlu0 0
    %7806 = vperm.xlu0 %7805, %v7756
    %v7807 = vpop.permute.xlu0 %7806
    %7810 = vset.pattern.permute.xlu0 0
    %7811 = vperm.xlu0 %7810, %v7757
    %v7812 = vpop.permute.xlu0 %7811
    %7815 = vset.pattern.permute.xlu0 0
    %7816 = vperm.xlu0 %7815, %v7758
    %v7817 = vpop.permute.xlu0 %7816
    %7820 = vset.pattern.permute.xlu0 0
    %7821 = vperm.xlu0 %7820, %v7759
    %v7822 = vpop.permute.xlu0 %7821
    %7825 = vset.pattern.permute.xlu0 0
    %7826 = vperm.xlu0 %7825, %v7760
    %v7827 = vpop.permute.xlu0 %7826
    %7830 = vset.pattern.permute.xlu0 0
    %7831 = vperm.xlu0 %7830, %v7761
    %v7832 = vpop.permute.xlu0 %7831
    %7835 = vset.pattern.permute.xlu0 0
    %7836 = vperm.xlu0 %7835, %v7762
    %v7837 = vpop.permute.xlu0 %7836
    %7840 = vset.pattern.permute.xlu0 0
    %7841 = vperm.xlu0 %7840, %v7763
    %v7842 = vpop.permute.xlu0 %7841
    %v7844 = vadd.f32 %v7620, %v7767
    %v7845 = vadd.f32 %v7621, %v7767
    %v7846 = vadd.f32 %v7622, %v7767
    %v7847 = vadd.f32 %v7623, %v7767
    %v7848 = vadd.f32 %v7624, %v7767
    %v7849 = vadd.f32 %v7625, %v7767
    %v7850 = vadd.f32 %v7626, %v7767
    %v7851 = vadd.f32 %v7627, %v7767
    %v7852 = vadd.f32 %v7628, %v7772
    %v7853 = vadd.f32 %v7629, %v7772
    %v7854 = vadd.f32 %v7630, %v7772
    %v7855 = vadd.f32 %v7631, %v7772
    %v7856 = vadd.f32 %v7632, %v7772
    %v7857 = vadd.f32 %v7633, %v7772
    %v7858 = vadd.f32 %v7634, %v7772
    %v7859 = vadd.f32 %v7635, %v7772
    %v7860 = vadd.f32 %v7636, %v7777
    %v7861 = vadd.f32 %v7637, %v7777
    %v7862 = vadd.f32 %v7638, %v7777
    %v7863 = vadd.f32 %v7639, %v7777
    %v7864 = vadd.f32 %v7640, %v7777
    %v7865 = vadd.f32 %v7641, %v7777
    %v7866 = vadd.f32 %v7642, %v7777
    %v7867 = vadd.f32 %v7643, %v7777
    %v7868 = vadd.f32 %v7644, %v7782
    %v7869 = vadd.f32 %v7645, %v7782
    %v7870 = vadd.f32 %v7646, %v7782
    %v7871 = vadd.f32 %v7647, %v7782
    %v7872 = vadd.f32 %v7648, %v7782
    %v7873 = vadd.f32 %v7649, %v7782
    %v7874 = vadd.f32 %v7650, %v7782
    %v7875 = vadd.f32 %v7651, %v7782
    %v7876 = vadd.f32 %v7652, %v7787
    %v7877 = vadd.f32 %v7653, %v7787
    %v7878 = vadd.f32 %v7654, %v7787
    %v7879 = vadd.f32 %v7655, %v7787
    %v7880 = vadd.f32 %v7656, %v7787
    %v7881 = vadd.f32 %v7657, %v7787
    %v7882 = vadd.f32 %v7658, %v7787
    %v7883 = vadd.f32 %v7659, %v7787
    %v7884 = vadd.f32 %v7660, %v7792
    %v7885 = vadd.f32 %v7661, %v7792
    %v7886 = vadd.f32 %v7662, %v7792
    %v7887 = vadd.f32 %v7663, %v7792
    %v7888 = vadd.f32 %v7664, %v7792
    %v7889 = vadd.f32 %v7665, %v7792
    %v7890 = vadd.f32 %v7666, %v7792
    %v7891 = vadd.f32 %v7667, %v7792
    %v7892 = vadd.f32 %v7668, %v7797
    %v7893 = vadd.f32 %v7669, %v7797
    %v7894 = vadd.f32 %v7670, %v7797
    %v7895 = vadd.f32 %v7671, %v7797
    %v7896 = vadd.f32 %v7672, %v7797
    %v7897 = vadd.f32 %v7673, %v7797
    %v7898 = vadd.f32 %v7674, %v7797
    %v7899 = vadd.f32 %v7675, %v7797
    %v7900 = vadd.f32 %v7676, %v7802
    %v7901 = vadd.f32 %v7677, %v7802
    %v7902 = vadd.f32 %v7678, %v7802
    %v7903 = vadd.f32 %v7679, %v7802
    %v7904 = vadd.f32 %v7680, %v7802
    %v7905 = vadd.f32 %v7681, %v7802
    %v7906 = vadd.f32 %v7682, %v7802
    %v7907 = vadd.f32 %v7683, %v7802
    %v7908 = vadd.f32 %v7684, %v7807
    %v7909 = vadd.f32 %v7685, %v7807
    %v7910 = vadd.f32 %v7686, %v7807
    %v7911 = vadd.f32 %v7687, %v7807
    %v7912 = vadd.f32 %v7688, %v7807
    %v7913 = vadd.f32 %v7689, %v7807
    %v7914 = vadd.f32 %v7690, %v7807
    %v7915 = vadd.f32 %v7691, %v7807
    %v7916 = vadd.f32 %v7692, %v7812
    %v7917 = vadd.f32 %v7693, %v7812
    %v7918 = vadd.f32 %v7694, %v7812
    %v7919 = vadd.f32 %v7695, %v7812
    %v7920 = vadd.f32 %v7696, %v7812
    %v7921 = vadd.f32 %v7697, %v7812
    %v7922 = vadd.f32 %v7698, %v7812
    %v7923 = vadd.f32 %v7699, %v7812
    %v7924 = vadd.f32 %v7700, %v7817
    %v7925 = vadd.f32 %v7701, %v7817
    %v7926 = vadd.f32 %v7702, %v7817
    %v7927 = vadd.f32 %v7703, %v7817
    %v7928 = vadd.f32 %v7704, %v7817
    %v7929 = vadd.f32 %v7705, %v7817
    %v7930 = vadd.f32 %v7706, %v7817
    %v7931 = vadd.f32 %v7707, %v7817
    %v7932 = vadd.f32 %v7708, %v7822
    %v7933 = vadd.f32 %v7709, %v7822
    %v7934 = vadd.f32 %v7710, %v7822
    %v7935 = vadd.f32 %v7711, %v7822
    %v7936 = vadd.f32 %v7712, %v7822
    %v7937 = vadd.f32 %v7713, %v7822
    %v7938 = vadd.f32 %v7714, %v7822
    %v7939 = vadd.f32 %v7715, %v7822
    %v7940 = vadd.f32 %v7716, %v7827
    %v7941 = vadd.f32 %v7717, %v7827
    %v7942 = vadd.f32 %v7718, %v7827
    %v7943 = vadd.f32 %v7719, %v7827
    %v7944 = vadd.f32 %v7720, %v7827
    %v7945 = vadd.f32 %v7721, %v7827
    %v7946 = vadd.f32 %v7722, %v7827
    %v7947 = vadd.f32 %v7723, %v7827
    %v7948 = vadd.f32 %v7724, %v7832
    %v7949 = vadd.f32 %v7725, %v7832
    %v7950 = vadd.f32 %v7726, %v7832
    %v7951 = vadd.f32 %v7727, %v7832
    %v7952 = vadd.f32 %v7728, %v7832
    %v7953 = vadd.f32 %v7729, %v7832
    %v7954 = vadd.f32 %v7730, %v7832
    %v7955 = vadd.f32 %v7731, %v7832
    %v7956 = vadd.f32 %v7732, %v7837
    %v7957 = vadd.f32 %v7733, %v7837
    %v7958 = vadd.f32 %v7734, %v7837
    %v7959 = vadd.f32 %v7735, %v7837
    %v7960 = vadd.f32 %v7736, %v7837
    %v7961 = vadd.f32 %v7737, %v7837
    %v7962 = vadd.f32 %v7738, %v7837
    %v7963 = vadd.f32 %v7739, %v7837
    %v7964 = vadd.f32 %v7740, %v7842
    %v7965 = vadd.f32 %v7741, %v7842
    %v7966 = vadd.f32 %v7742, %v7842
    %v7967 = vadd.f32 %v7743, %v7842
    %v7968 = vadd.f32 %v7744, %v7842
    %v7969 = vadd.f32 %v7745, %v7842
    %v7970 = vadd.f32 %v7746, %v7842
    %v7971 = vadd.f32 %v7747, %v7842
    %v7972 = vsel %vm1491, %v7844, 0.0
    %v7973 = vsel %vm1492, %v7845, 0.0
    %v7974 = vsel %vm1493, %v7846, 0.0
    %v7975 = vsel %vm1494, %v7847, 0.0
    %v7976 = vsel %vm1495, %v7848, 0.0
    %v7977 = vsel %vm1496, %v7849, 0.0
    %v7978 = vsel %vm1497, %v7850, 0.0
    %v7979 = vsel %vm1498, %v7851, 0.0
    %v7980 = vsel %vm1491, %v7852, 0.0
    %v7981 = vsel %vm1492, %v7853, 0.0
    %v7982 = vsel %vm1493, %v7854, 0.0
    %v7983 = vsel %vm1494, %v7855, 0.0
    %v7984 = vsel %vm1495, %v7856, 0.0
    %v7985 = vsel %vm1496, %v7857, 0.0
    %v7986 = vsel %vm1497, %v7858, 0.0
    %v7987 = vsel %vm1498, %v7859, 0.0
    %v7988 = vsel %vm1491, %v7860, 0.0
    %v7989 = vsel %vm1492, %v7861, 0.0
    %v7990 = vsel %vm1493, %v7862, 0.0
    %v7991 = vsel %vm1494, %v7863, 0.0
    %v7992 = vsel %vm1495, %v7864, 0.0
    %v7993 = vsel %vm1496, %v7865, 0.0
    %v7994 = vsel %vm1497, %v7866, 0.0
    %v7995 = vsel %vm1498, %v7867, 0.0
    %v7996 = vsel %vm1491, %v7868, 0.0
    %v7997 = vsel %vm1492, %v7869, 0.0
    %v7998 = vsel %vm1493, %v7870, 0.0
    %v7999 = vsel %vm1494, %v7871, 0.0
    %v8000 = vsel %vm1495, %v7872, 0.0
    %v8001 = vsel %vm1496, %v7873, 0.0
    %v8002 = vsel %vm1497, %v7874, 0.0
    %v8003 = vsel %vm1498, %v7875, 0.0
    %v8004 = vsel %vm1491, %v7876, 0.0
    %v8005 = vsel %vm1492, %v7877, 0.0
    %v8006 = vsel %vm1493, %v7878, 0.0
    %v8007 = vsel %vm1494, %v7879, 0.0
    %v8008 = vsel %vm1495, %v7880, 0.0
    %v8009 = vsel %vm1496, %v7881, 0.0
    %v8010 = vsel %vm1497, %v7882, 0.0
    %v8011 = vsel %vm1498, %v7883, 0.0
    %v8012 = vsel %vm1491, %v7884, 0.0
    %v8013 = vsel %vm1492, %v7885, 0.0
    %v8014 = vsel %vm1493, %v7886, 0.0
    %v8015 = vsel %vm1494, %v7887, 0.0
    %v8016 = vsel %vm1495, %v7888, 0.0
    %v8017 = vsel %vm1496, %v7889, 0.0
    %v8018 = vsel %vm1497, %v7890, 0.0
    %v8019 = vsel %vm1498, %v7891, 0.0
    %v8020 = vsel %vm1491, %v7892, 0.0
    %v8021 = vsel %vm1492, %v7893, 0.0
    %v8022 = vsel %vm1493, %v7894, 0.0
    %v8023 = vsel %vm1494, %v7895, 0.0
    %v8024 = vsel %vm1495, %v7896, 0.0
    %v8025 = vsel %vm1496, %v7897, 0.0
    %v8026 = vsel %vm1497, %v7898, 0.0
    %v8027 = vsel %vm1498, %v7899, 0.0
    %v8028 = vsel %vm1491, %v7900, 0.0
    %v8029 = vsel %vm1492, %v7901, 0.0
    %v8030 = vsel %vm1493, %v7902, 0.0
    %v8031 = vsel %vm1494, %v7903, 0.0
    %v8032 = vsel %vm1495, %v7904, 0.0
    %v8033 = vsel %vm1496, %v7905, 0.0
    %v8034 = vsel %vm1497, %v7906, 0.0
    %v8035 = vsel %vm1498, %v7907, 0.0
    %v8036 = vsel %vm1491, %v7908, 0.0
    %v8037 = vsel %vm1492, %v7909, 0.0
    %v8038 = vsel %vm1493, %v7910, 0.0
    %v8039 = vsel %vm1494, %v7911, 0.0
    %v8040 = vsel %vm1495, %v7912, 0.0
    %v8041 = vsel %vm1496, %v7913, 0.0
    %v8042 = vsel %vm1497, %v7914, 0.0
    %v8043 = vsel %vm1498, %v7915, 0.0
    %v8044 = vsel %vm1491, %v7916, 0.0
    %v8045 = vsel %vm1492, %v7917, 0.0
    %v8046 = vsel %vm1493, %v7918, 0.0
    %v8047 = vsel %vm1494, %v7919, 0.0
    %v8048 = vsel %vm1495, %v7920, 0.0
    %v8049 = vsel %vm1496, %v7921, 0.0
    %v8050 = vsel %vm1497, %v7922, 0.0
    %v8051 = vsel %vm1498, %v7923, 0.0
    %v8052 = vsel %vm1491, %v7924, 0.0
    %v8053 = vsel %vm1492, %v7925, 0.0
    %v8054 = vsel %vm1493, %v7926, 0.0
    %v8055 = vsel %vm1494, %v7927, 0.0
    %v8056 = vsel %vm1495, %v7928, 0.0
    %v8057 = vsel %vm1496, %v7929, 0.0
    %v8058 = vsel %vm1497, %v7930, 0.0
    %v8059 = vsel %vm1498, %v7931, 0.0
    %v8060 = vsel %vm1491, %v7932, 0.0
    %v8061 = vsel %vm1492, %v7933, 0.0
    %v8062 = vsel %vm1493, %v7934, 0.0
    %v8063 = vsel %vm1494, %v7935, 0.0
    %v8064 = vsel %vm1495, %v7936, 0.0
    %v8065 = vsel %vm1496, %v7937, 0.0
    %v8066 = vsel %vm1497, %v7938, 0.0
    %v8067 = vsel %vm1498, %v7939, 0.0
    %v8068 = vsel %vm1491, %v7940, 0.0
    %v8069 = vsel %vm1492, %v7941, 0.0
    %v8070 = vsel %vm1493, %v7942, 0.0
    %v8071 = vsel %vm1494, %v7943, 0.0
    %v8072 = vsel %vm1495, %v7944, 0.0
    %v8073 = vsel %vm1496, %v7945, 0.0
    %v8074 = vsel %vm1497, %v7946, 0.0
    %v8075 = vsel %vm1498, %v7947, 0.0
    %v8076 = vsel %vm1491, %v7948, 0.0
    %v8077 = vsel %vm1492, %v7949, 0.0
    %v8078 = vsel %vm1493, %v7950, 0.0
    %v8079 = vsel %vm1494, %v7951, 0.0
    %v8080 = vsel %vm1495, %v7952, 0.0
    %v8081 = vsel %vm1496, %v7953, 0.0
    %v8082 = vsel %vm1497, %v7954, 0.0
    %v8083 = vsel %vm1498, %v7955, 0.0
    %v8084 = vsel %vm1491, %v7956, 0.0
    %v8085 = vsel %vm1492, %v7957, 0.0
    %v8086 = vsel %vm1493, %v7958, 0.0
    %v8087 = vsel %vm1494, %v7959, 0.0
    %v8088 = vsel %vm1495, %v7960, 0.0
    %v8089 = vsel %vm1496, %v7961, 0.0
    %v8090 = vsel %vm1497, %v7962, 0.0
    %v8091 = vsel %vm1498, %v7963, 0.0
    %v8092 = vsel %vm1491, %v7964, 0.0
    %v8093 = vsel %vm1492, %v7965, 0.0
    %v8094 = vsel %vm1493, %v7966, 0.0
    %v8095 = vsel %vm1494, %v7967, 0.0
    %v8096 = vsel %vm1495, %v7968, 0.0
    %v8097 = vsel %vm1496, %v7969, 0.0
    %v8098 = vsel %vm1497, %v7970, 0.0
    %v8099 = vsel %vm1498, %v7971, 0.0
    %8100 = vadd.xlane.f32.xlu0 %v7972
    %v8101 = vpop.xlane.xlu0 %8100
    %8102 = vadd.xlane.f32.xlu0 %v7980
    %v8103 = vpop.xlane.xlu0 %8102
    %8104 = vadd.xlane.f32.xlu0 %v7988
    %v8105 = vpop.xlane.xlu0 %8104
    %8106 = vadd.xlane.f32.xlu0 %v7996
    %v8107 = vpop.xlane.xlu0 %8106
    %8108 = vadd.xlane.f32.xlu0 %v8004
    %v8109 = vpop.xlane.xlu0 %8108
    %8110 = vadd.xlane.f32.xlu0 %v8012
    %v8111 = vpop.xlane.xlu0 %8110
    %8112 = vadd.xlane.f32.xlu0 %v8020
    %v8113 = vpop.xlane.xlu0 %8112
    %8114 = vadd.xlane.f32.xlu0 %v8028
    %v8115 = vpop.xlane.xlu0 %8114
    %8116 = vadd.xlane.f32.xlu0 %v8036
    %v8117 = vpop.xlane.xlu0 %8116
    %8118 = vadd.xlane.f32.xlu0 %v8044
    %v8119 = vpop.xlane.xlu0 %8118
    %8120 = vadd.xlane.f32.xlu0 %v8052
    %v8121 = vpop.xlane.xlu0 %8120
    %8122 = vadd.xlane.f32.xlu0 %v8060
    %v8123 = vpop.xlane.xlu0 %8122
    %8124 = vadd.xlane.f32.xlu0 %v8068
    %v8125 = vpop.xlane.xlu0 %8124
    %8126 = vadd.xlane.f32.xlu0 %v8076
    %v8127 = vpop.xlane.xlu0 %8126
    %8128 = vadd.xlane.f32.xlu0 %v8084
    %v8129 = vpop.xlane.xlu0 %8128
    %8130 = vadd.xlane.f32.xlu0 %v8092
    %v8131 = vpop.xlane.xlu0 %8130
    %8132 = vadd.xlane.f32.xlu0 %v7973
    %v8133 = vpop.xlane.xlu0 %8132
    %8134 = vadd.xlane.f32.xlu0 %v7981
    %v8135 = vpop.xlane.xlu0 %8134
    %8136 = vadd.xlane.f32.xlu0 %v7989
    %v8137 = vpop.xlane.xlu0 %8136
    %8138 = vadd.xlane.f32.xlu0 %v7997
    %v8139 = vpop.xlane.xlu0 %8138
    %8140 = vadd.xlane.f32.xlu0 %v8005
    %v8141 = vpop.xlane.xlu0 %8140
    %8142 = vadd.xlane.f32.xlu0 %v8013
    %v8143 = vpop.xlane.xlu0 %8142
    %8144 = vadd.xlane.f32.xlu0 %v8021
    %v8145 = vpop.xlane.xlu0 %8144
    %8146 = vadd.xlane.f32.xlu0 %v8029
    %v8147 = vpop.xlane.xlu0 %8146
    %8148 = vadd.xlane.f32.xlu0 %v8037
    %v8149 = vpop.xlane.xlu0 %8148
    %8150 = vadd.xlane.f32.xlu0 %v8045
    %v8151 = vpop.xlane.xlu0 %8150
    %8152 = vadd.xlane.f32.xlu0 %v8053
    %v8153 = vpop.xlane.xlu0 %8152
    %8154 = vadd.xlane.f32.xlu0 %v8061
    %v8155 = vpop.xlane.xlu0 %8154
    %8156 = vadd.xlane.f32.xlu0 %v8069
    %v8157 = vpop.xlane.xlu0 %8156
    %8158 = vadd.xlane.f32.xlu0 %v8077
    %v8159 = vpop.xlane.xlu0 %8158
    %8160 = vadd.xlane.f32.xlu0 %v8085
    %v8161 = vpop.xlane.xlu0 %8160
    %8162 = vadd.xlane.f32.xlu0 %v8093
    %v8163 = vpop.xlane.xlu0 %8162
    %8164 = vadd.xlane.f32.xlu0 %v7974
    %v8165 = vpop.xlane.xlu0 %8164
    %8166 = vadd.xlane.f32.xlu0 %v7982
    %v8167 = vpop.xlane.xlu0 %8166
    %8168 = vadd.xlane.f32.xlu0 %v7990
    %v8169 = vpop.xlane.xlu0 %8168
    %8170 = vadd.xlane.f32.xlu0 %v7998
    %v8171 = vpop.xlane.xlu0 %8170
    %8172 = vadd.xlane.f32.xlu0 %v8006
    %v8173 = vpop.xlane.xlu0 %8172
    %8174 = vadd.xlane.f32.xlu0 %v8014
    %v8175 = vpop.xlane.xlu0 %8174
    %8176 = vadd.xlane.f32.xlu0 %v8022
    %v8177 = vpop.xlane.xlu0 %8176
    %8178 = vadd.xlane.f32.xlu0 %v8030
    %v8179 = vpop.xlane.xlu0 %8178
    %8180 = vadd.xlane.f32.xlu0 %v8038
    %v8181 = vpop.xlane.xlu0 %8180
    %8182 = vadd.xlane.f32.xlu0 %v8046
    %v8183 = vpop.xlane.xlu0 %8182
    %8184 = vadd.xlane.f32.xlu0 %v8054
    %v8185 = vpop.xlane.xlu0 %8184
    %8186 = vadd.xlane.f32.xlu0 %v8062
    %v8187 = vpop.xlane.xlu0 %8186
    %8188 = vadd.xlane.f32.xlu0 %v8070
    %v8189 = vpop.xlane.xlu0 %8188
    %8190 = vadd.xlane.f32.xlu0 %v8078
    %v8191 = vpop.xlane.xlu0 %8190
    %8192 = vadd.xlane.f32.xlu0 %v8086
    %v8193 = vpop.xlane.xlu0 %8192
    %8194 = vadd.xlane.f32.xlu0 %v8094
    %v8195 = vpop.xlane.xlu0 %8194
    %8196 = vadd.xlane.f32.xlu0 %v7975
    %v8197 = vpop.xlane.xlu0 %8196
    %8198 = vadd.xlane.f32.xlu0 %v7983
    %v8199 = vpop.xlane.xlu0 %8198
    %8200 = vadd.xlane.f32.xlu0 %v7991
    %v8201 = vpop.xlane.xlu0 %8200
    %8202 = vadd.xlane.f32.xlu0 %v7999
    %v8203 = vpop.xlane.xlu0 %8202
    %8204 = vadd.xlane.f32.xlu0 %v8007
    %v8205 = vpop.xlane.xlu0 %8204
    %8206 = vadd.xlane.f32.xlu0 %v8015
    %v8207 = vpop.xlane.xlu0 %8206
    %8208 = vadd.xlane.f32.xlu0 %v8023
    %v8209 = vpop.xlane.xlu0 %8208
    %8210 = vadd.xlane.f32.xlu0 %v8031
    %v8211 = vpop.xlane.xlu0 %8210
    %8212 = vadd.xlane.f32.xlu0 %v8039
    %v8213 = vpop.xlane.xlu0 %8212
    %8214 = vadd.xlane.f32.xlu0 %v8047
    %v8215 = vpop.xlane.xlu0 %8214
    %8216 = vadd.xlane.f32.xlu0 %v8055
    %v8217 = vpop.xlane.xlu0 %8216
    %8218 = vadd.xlane.f32.xlu0 %v8063
    %v8219 = vpop.xlane.xlu0 %8218
    %8220 = vadd.xlane.f32.xlu0 %v8071
    %v8221 = vpop.xlane.xlu0 %8220
    %8222 = vadd.xlane.f32.xlu0 %v8079
    %v8223 = vpop.xlane.xlu0 %8222
    %8224 = vadd.xlane.f32.xlu0 %v8087
    %v8225 = vpop.xlane.xlu0 %8224
    %8226 = vadd.xlane.f32.xlu0 %v8095
    %v8227 = vpop.xlane.xlu0 %8226
    %8228 = vadd.xlane.f32.xlu0 %v7976
    %v8229 = vpop.xlane.xlu0 %8228
    %8230 = vadd.xlane.f32.xlu0 %v7984
    %v8231 = vpop.xlane.xlu0 %8230
    %8232 = vadd.xlane.f32.xlu0 %v7992
    %v8233 = vpop.xlane.xlu0 %8232
    %8234 = vadd.xlane.f32.xlu0 %v8000
    %v8235 = vpop.xlane.xlu0 %8234
    %8236 = vadd.xlane.f32.xlu0 %v8008
    %v8237 = vpop.xlane.xlu0 %8236
    %8238 = vadd.xlane.f32.xlu0 %v8016
    %v8239 = vpop.xlane.xlu0 %8238
    %8240 = vadd.xlane.f32.xlu0 %v8024
    %v8241 = vpop.xlane.xlu0 %8240
    %8242 = vadd.xlane.f32.xlu0 %v8032
    %v8243 = vpop.xlane.xlu0 %8242
    %8244 = vadd.xlane.f32.xlu0 %v8040
    %v8245 = vpop.xlane.xlu0 %8244
    %8246 = vadd.xlane.f32.xlu0 %v8048
    %v8247 = vpop.xlane.xlu0 %8246
    %8248 = vadd.xlane.f32.xlu0 %v8056
    %v8249 = vpop.xlane.xlu0 %8248
    %8250 = vadd.xlane.f32.xlu0 %v8064
    %v8251 = vpop.xlane.xlu0 %8250
    %8252 = vadd.xlane.f32.xlu0 %v8072
    %v8253 = vpop.xlane.xlu0 %8252
    %8254 = vadd.xlane.f32.xlu0 %v8080
    %v8255 = vpop.xlane.xlu0 %8254
    %8256 = vadd.xlane.f32.xlu0 %v8088
    %v8257 = vpop.xlane.xlu0 %8256
    %8258 = vadd.xlane.f32.xlu0 %v8096
    %v8259 = vpop.xlane.xlu0 %8258
    %8260 = vadd.xlane.f32.xlu0 %v7977
    %v8261 = vpop.xlane.xlu0 %8260
    %8262 = vadd.xlane.f32.xlu0 %v7985
    %v8263 = vpop.xlane.xlu0 %8262
    %8264 = vadd.xlane.f32.xlu0 %v7993
    %v8265 = vpop.xlane.xlu0 %8264
    %8266 = vadd.xlane.f32.xlu0 %v8001
    %v8267 = vpop.xlane.xlu0 %8266
    %8268 = vadd.xlane.f32.xlu0 %v8009
    %v8269 = vpop.xlane.xlu0 %8268
    %8270 = vadd.xlane.f32.xlu0 %v8017
    %v8271 = vpop.xlane.xlu0 %8270
    %8272 = vadd.xlane.f32.xlu0 %v8025
    %v8273 = vpop.xlane.xlu0 %8272
    %8274 = vadd.xlane.f32.xlu0 %v8033
    %v8275 = vpop.xlane.xlu0 %8274
    %8276 = vadd.xlane.f32.xlu0 %v8041
    %v8277 = vpop.xlane.xlu0 %8276
    %8278 = vadd.xlane.f32.xlu0 %v8049
    %v8279 = vpop.xlane.xlu0 %8278
    %8280 = vadd.xlane.f32.xlu0 %v8057
    %v8281 = vpop.xlane.xlu0 %8280
    %8282 = vadd.xlane.f32.xlu0 %v8065
    %v8283 = vpop.xlane.xlu0 %8282
    %8284 = vadd.xlane.f32.xlu0 %v8073
    %v8285 = vpop.xlane.xlu0 %8284
    %8286 = vadd.xlane.f32.xlu0 %v8081
    %v8287 = vpop.xlane.xlu0 %8286
    %8288 = vadd.xlane.f32.xlu0 %v8089
    %v8289 = vpop.xlane.xlu0 %8288
    %8290 = vadd.xlane.f32.xlu0 %v8097
    %v8291 = vpop.xlane.xlu0 %8290
    %8292 = vadd.xlane.f32.xlu0 %v7978
    %v8293 = vpop.xlane.xlu0 %8292
    %8294 = vadd.xlane.f32.xlu0 %v7986
    %v8295 = vpop.xlane.xlu0 %8294
    %8296 = vadd.xlane.f32.xlu0 %v7994
    %v8297 = vpop.xlane.xlu0 %8296
    %8298 = vadd.xlane.f32.xlu0 %v8002
    %v8299 = vpop.xlane.xlu0 %8298
    %8300 = vadd.xlane.f32.xlu0 %v8010
    %v8301 = vpop.xlane.xlu0 %8300
    %8302 = vadd.xlane.f32.xlu0 %v8018
    %v8303 = vpop.xlane.xlu0 %8302
    %8304 = vadd.xlane.f32.xlu0 %v8026
    %v8305 = vpop.xlane.xlu0 %8304
    %8306 = vadd.xlane.f32.xlu0 %v8034
    %v8307 = vpop.xlane.xlu0 %8306
    %8308 = vadd.xlane.f32.xlu0 %v8042
    %v8309 = vpop.xlane.xlu0 %8308
    %8310 = vadd.xlane.f32.xlu0 %v8050
    %v8311 = vpop.xlane.xlu0 %8310
    %8312 = vadd.xlane.f32.xlu0 %v8058
    %v8313 = vpop.xlane.xlu0 %8312
    %8314 = vadd.xlane.f32.xlu0 %v8066
    %v8315 = vpop.xlane.xlu0 %8314
    %8316 = vadd.xlane.f32.xlu0 %v8074
    %v8317 = vpop.xlane.xlu0 %8316
    %8318 = vadd.xlane.f32.xlu0 %v8082
    %v8319 = vpop.xlane.xlu0 %8318
    %8320 = vadd.xlane.f32.xlu0 %v8090
    %v8321 = vpop.xlane.xlu0 %8320
    %8322 = vadd.xlane.f32.xlu0 %v8098
    %v8323 = vpop.xlane.xlu0 %8322
    %8324 = vadd.xlane.f32.xlu0 %v7979
    %v8325 = vpop.xlane.xlu0 %8324
    %8326 = vadd.xlane.f32.xlu0 %v7987
    %v8327 = vpop.xlane.xlu0 %8326
    %8328 = vadd.xlane.f32.xlu0 %v7995
    %v8329 = vpop.xlane.xlu0 %8328
    %8330 = vadd.xlane.f32.xlu0 %v8003
    %v8331 = vpop.xlane.xlu0 %8330
    %8332 = vadd.xlane.f32.xlu0 %v8011
    %v8333 = vpop.xlane.xlu0 %8332
    %8334 = vadd.xlane.f32.xlu0 %v8019
    %v8335 = vpop.xlane.xlu0 %8334
    %8336 = vadd.xlane.f32.xlu0 %v8027
    %v8337 = vpop.xlane.xlu0 %8336
    %8338 = vadd.xlane.f32.xlu0 %v8035
    %v8339 = vpop.xlane.xlu0 %8338
    %8340 = vadd.xlane.f32.xlu0 %v8043
    %v8341 = vpop.xlane.xlu0 %8340
    %8342 = vadd.xlane.f32.xlu0 %v8051
    %v8343 = vpop.xlane.xlu0 %8342
    %8344 = vadd.xlane.f32.xlu0 %v8059
    %v8345 = vpop.xlane.xlu0 %8344
    %8346 = vadd.xlane.f32.xlu0 %v8067
    %v8347 = vpop.xlane.xlu0 %8346
    %8348 = vadd.xlane.f32.xlu0 %v8075
    %v8349 = vpop.xlane.xlu0 %8348
    %8350 = vadd.xlane.f32.xlu0 %v8083
    %v8351 = vpop.xlane.xlu0 %8350
    %8352 = vadd.xlane.f32.xlu0 %v8091
    %v8353 = vpop.xlane.xlu0 %8352
    %8354 = vadd.xlane.f32.xlu0 %v8099
    %v8355 = vpop.xlane.xlu0 %8354
    %vm8356 = vcmask 7168
    %v8357 = vsel %vm8356, %v8101, %v8133
    %v8358 = vsel %vm8356, %v8103, %v8135
    %v8359 = vsel %vm8356, %v8105, %v8137
    %v8360 = vsel %vm8356, %v8107, %v8139
    %v8361 = vsel %vm8356, %v8109, %v8141
    %v8362 = vsel %vm8356, %v8111, %v8143
    %v8363 = vsel %vm8356, %v8113, %v8145
    %v8364 = vsel %vm8356, %v8115, %v8147
    %v8365 = vsel %vm8356, %v8117, %v8149
    %v8366 = vsel %vm8356, %v8119, %v8151
    %v8367 = vsel %vm8356, %v8121, %v8153
    %v8368 = vsel %vm8356, %v8123, %v8155
    %v8369 = vsel %vm8356, %v8125, %v8157
    %v8370 = vsel %vm8356, %v8127, %v8159
    %v8371 = vsel %vm8356, %v8129, %v8161
    %v8372 = vsel %vm8356, %v8131, %v8163
    %vm8373 = vcmask 15360
    %v8374 = vsel %vm8373, %v8357, %v8165
    %v8375 = vsel %vm8373, %v8358, %v8167
    %v8376 = vsel %vm8373, %v8359, %v8169
    %v8377 = vsel %vm8373, %v8360, %v8171
    %v8378 = vsel %vm8373, %v8361, %v8173
    %v8379 = vsel %vm8373, %v8362, %v8175
    %v8380 = vsel %vm8373, %v8363, %v8177
    %v8381 = vsel %vm8373, %v8364, %v8179
    %v8382 = vsel %vm8373, %v8365, %v8181
    %v8383 = vsel %vm8373, %v8366, %v8183
    %v8384 = vsel %vm8373, %v8367, %v8185
    %v8385 = vsel %vm8373, %v8368, %v8187
    %v8386 = vsel %vm8373, %v8369, %v8189
    %v8387 = vsel %vm8373, %v8370, %v8191
    %v8388 = vsel %vm8373, %v8371, %v8193
    %v8389 = vsel %vm8373, %v8372, %v8195
    %vm8390 = vcmask 23552
    %v8391 = vsel %vm8390, %v8374, %v8197
    %v8392 = vsel %vm8390, %v8375, %v8199
    %v8393 = vsel %vm8390, %v8376, %v8201
    %v8394 = vsel %vm8390, %v8377, %v8203
    %v8395 = vsel %vm8390, %v8378, %v8205
    %v8396 = vsel %vm8390, %v8379, %v8207
    %v8397 = vsel %vm8390, %v8380, %v8209
    %v8398 = vsel %vm8390, %v8381, %v8211
    %v8399 = vsel %vm8390, %v8382, %v8213
    %v8400 = vsel %vm8390, %v8383, %v8215
    %v8401 = vsel %vm8390, %v8384, %v8217
    %v8402 = vsel %vm8390, %v8385, %v8219
    %v8403 = vsel %vm8390, %v8386, %v8221
    %v8404 = vsel %vm8390, %v8387, %v8223
    %v8405 = vsel %vm8390, %v8388, %v8225
    %v8406 = vsel %vm8390, %v8389, %v8227
    %vm8407 = vcmask 31744
    %v8408 = vsel %vm8407, %v8391, %v8229
    %v8409 = vsel %vm8407, %v8392, %v8231
    %v8410 = vsel %vm8407, %v8393, %v8233
    %v8411 = vsel %vm8407, %v8394, %v8235
    %v8412 = vsel %vm8407, %v8395, %v8237
    %v8413 = vsel %vm8407, %v8396, %v8239
    %v8414 = vsel %vm8407, %v8397, %v8241
    %v8415 = vsel %vm8407, %v8398, %v8243
    %v8416 = vsel %vm8407, %v8399, %v8245
    %v8417 = vsel %vm8407, %v8400, %v8247
    %v8418 = vsel %vm8407, %v8401, %v8249
    %v8419 = vsel %vm8407, %v8402, %v8251
    %v8420 = vsel %vm8407, %v8403, %v8253
    %v8421 = vsel %vm8407, %v8404, %v8255
    %v8422 = vsel %vm8407, %v8405, %v8257
    %v8423 = vsel %vm8407, %v8406, %v8259
    %vm8424 = vcmask 39936
    %v8425 = vsel %vm8424, %v8408, %v8261
    %v8426 = vsel %vm8424, %v8409, %v8263
    %v8427 = vsel %vm8424, %v8410, %v8265
    %v8428 = vsel %vm8424, %v8411, %v8267
    %v8429 = vsel %vm8424, %v8412, %v8269
    %v8430 = vsel %vm8424, %v8413, %v8271
    %v8431 = vsel %vm8424, %v8414, %v8273
    %v8432 = vsel %vm8424, %v8415, %v8275
    %v8433 = vsel %vm8424, %v8416, %v8277
    %v8434 = vsel %vm8424, %v8417, %v8279
    %v8435 = vsel %vm8424, %v8418, %v8281
    %v8436 = vsel %vm8424, %v8419, %v8283
    %v8437 = vsel %vm8424, %v8420, %v8285
    %v8438 = vsel %vm8424, %v8421, %v8287
    %v8439 = vsel %vm8424, %v8422, %v8289
    %v8440 = vsel %vm8424, %v8423, %v8291
    %vm8441 = vcmask 48128
    %v8442 = vsel %vm8441, %v8425, %v8293
    %v8443 = vsel %vm8441, %v8426, %v8295
    %v8444 = vsel %vm8441, %v8427, %v8297
    %v8445 = vsel %vm8441, %v8428, %v8299
    %v8446 = vsel %vm8441, %v8429, %v8301
    %v8447 = vsel %vm8441, %v8430, %v8303
    %v8448 = vsel %vm8441, %v8431, %v8305
    %v8449 = vsel %vm8441, %v8432, %v8307
    %v8450 = vsel %vm8441, %v8433, %v8309
    %v8451 = vsel %vm8441, %v8434, %v8311
    %v8452 = vsel %vm8441, %v8435, %v8313
    %v8453 = vsel %vm8441, %v8436, %v8315
    %v8454 = vsel %vm8441, %v8437, %v8317
    %v8455 = vsel %vm8441, %v8438, %v8319
    %v8456 = vsel %vm8441, %v8439, %v8321
    %v8457 = vsel %vm8441, %v8440, %v8323
    %vm8458 = vcmask 56320
    %v8459 = vsel %vm8458, %v8442, %v8325
    %v8460 = vsel %vm8458, %v8443, %v8327
    %v8461 = vsel %vm8458, %v8444, %v8329
    %v8462 = vsel %vm8458, %v8445, %v8331
    %v8463 = vsel %vm8458, %v8446, %v8333
    %v8464 = vsel %vm8458, %v8447, %v8335
    %v8465 = vsel %vm8458, %v8448, %v8337
    %v8466 = vsel %vm8458, %v8449, %v8339
    %v8467 = vsel %vm8458, %v8450, %v8341
    %v8468 = vsel %vm8458, %v8451, %v8343
    %v8469 = vsel %vm8458, %v8452, %v8345
    %v8470 = vsel %vm8458, %v8453, %v8347
    %v8471 = vsel %vm8458, %v8454, %v8349
    %v8472 = vsel %vm8458, %v8455, %v8351
    %v8473 = vsel %vm8458, %v8456, %v8353
    %v8474 = vsel %vm8458, %v8457, %v8355
    %v8475 = vmul.f32 %v8459, 0.0625
    %v8476 = vmul.f32 %v8460, 0.0625
    %v8477 = vmul.f32 %v8461, 0.0625
    %v8478 = vmul.f32 %v8462, 0.0625
    %v8479 = vmul.f32 %v8463, 0.0625
    %v8480 = vmul.f32 %v8464, 0.0625
    %v8481 = vmul.f32 %v8465, 0.0625
    %v8482 = vmul.f32 %v8466, 0.0625
    %v8483 = vmul.f32 %v8467, 0.0625
    %v8484 = vmul.f32 %v8468, 0.0625
    %v8485 = vmul.f32 %v8469, 0.0625
    %v8486 = vmul.f32 %v8470, 0.0625
    %v8487 = vmul.f32 %v8471, 0.0625
    %v8488 = vmul.f32 %v8472, 0.0625
    %v8489 = vmul.f32 %v8473, 0.0625
    %v8490 = vmul.f32 %v8474, 0.0625
    %v8491 = vld [vmem:[%s14] sm:$0xff]
    %v8492 = vld [vmem:[%s14 + $0x8] sm:$0xff]
    %v8493 = vld [vmem:[%s14 + $0x10] sm:$0xff]
    %v8494 = vld [vmem:[%s14 + $0x18] sm:$0xff]
    %v8495 = vld [vmem:[%s14 + $0x20] sm:$0xff]
    %v8496 = vld [vmem:[%s14 + $0x28] sm:$0xff]
    %v8497 = vld [vmem:[%s14 + $0x30] sm:$0xff]
    %v8498 = vld [vmem:[%s14 + $0x38] sm:$0xff]
    %v8499 = vld [vmem:[%s14 + $0x40] sm:$0xff]
    %v8500 = vld [vmem:[%s14 + $0x48] sm:$0xff]
    %v8501 = vld [vmem:[%s14 + $0x50] sm:$0xff]
    %v8502 = vld [vmem:[%s14 + $0x58] sm:$0xff]
    %v8503 = vld [vmem:[%s14 + $0x60] sm:$0xff]
    %v8504 = vld [vmem:[%s14 + $0x68] sm:$0xff]
    %v8505 = vld [vmem:[%s14 + $0x70] sm:$0xff]
    %v8506 = vld [vmem:[%s14 + $0x78] sm:$0xff]
    %v8507 = vld [vmem:[%s14 + $0x80] sm:$0xff]
    %v8508 = vld [vmem:[%s14 + $0x88] sm:$0xff]
    %v8509 = vld [vmem:[%s14 + $0x90] sm:$0xff]
    %v8510 = vld [vmem:[%s14 + $0x98] sm:$0xff]
    %v8511 = vld [vmem:[%s14 + $0xa0] sm:$0xff]
    %v8512 = vld [vmem:[%s14 + $0xa8] sm:$0xff]
    %v8513 = vld [vmem:[%s14 + $0xb0] sm:$0xff]
    %v8514 = vld [vmem:[%s14 + $0xb8] sm:$0xff]
    %v8515 = vld [vmem:[%s14 + $0xc0] sm:$0xff]
    %v8516 = vld [vmem:[%s14 + $0xc8] sm:$0xff]
    %v8517 = vld [vmem:[%s14 + $0xd0] sm:$0xff]
    %v8518 = vld [vmem:[%s14 + $0xd8] sm:$0xff]
    %v8519 = vld [vmem:[%s14 + $0xe0] sm:$0xff]
    %v8520 = vld [vmem:[%s14 + $0xe8] sm:$0xff]
    %v8521 = vld [vmem:[%s14 + $0xf0] sm:$0xff]
    %v8522 = vld [vmem:[%s14 + $0xf8] sm:$0xff]
    %v8523 = vld [vmem:[%s15] sm:$0xff]
    %v8524 = vld [vmem:[%s15 + $0x8] sm:$0xff]
    %v8525 = vld [vmem:[%s15 + $0x10] sm:$0xff]
    %v8526 = vld [vmem:[%s15 + $0x18] sm:$0xff]
    %v8527 = vld [vmem:[%s15 + $0x20] sm:$0xff]
    %v8528 = vld [vmem:[%s15 + $0x28] sm:$0xff]
    %v8529 = vld [vmem:[%s15 + $0x30] sm:$0xff]
    %v8530 = vld [vmem:[%s15 + $0x38] sm:$0xff]
    %v8531 = vld [vmem:[%s15 + $0x40] sm:$0xff]
    %v8532 = vld [vmem:[%s15 + $0x48] sm:$0xff]
    %v8533 = vld [vmem:[%s15 + $0x50] sm:$0xff]
    %v8534 = vld [vmem:[%s15 + $0x58] sm:$0xff]
    %v8535 = vld [vmem:[%s15 + $0x60] sm:$0xff]
    %v8536 = vld [vmem:[%s15 + $0x68] sm:$0xff]
    %v8537 = vld [vmem:[%s15 + $0x70] sm:$0xff]
    %v8538 = vld [vmem:[%s15 + $0x78] sm:$0xff]
    %v8539 = vld [vmem:[%s15 + $0x80] sm:$0xff]
    %v8540 = vld [vmem:[%s15 + $0x88] sm:$0xff]
    %v8541 = vld [vmem:[%s15 + $0x90] sm:$0xff]
    %v8542 = vld [vmem:[%s15 + $0x98] sm:$0xff]
    %v8543 = vld [vmem:[%s15 + $0xa0] sm:$0xff]
    %v8544 = vld [vmem:[%s15 + $0xa8] sm:$0xff]
    %v8545 = vld [vmem:[%s15 + $0xb0] sm:$0xff]
    %v8546 = vld [vmem:[%s15 + $0xb8] sm:$0xff]
    %v8547 = vld [vmem:[%s15 + $0xc0] sm:$0xff]
    %v8548 = vld [vmem:[%s15 + $0xc8] sm:$0xff]
    %v8549 = vld [vmem:[%s15 + $0xd0] sm:$0xff]
    %v8550 = vld [vmem:[%s15 + $0xd8] sm:$0xff]
    %v8551 = vld [vmem:[%s15 + $0xe0] sm:$0xff]
    %v8552 = vld [vmem:[%s15 + $0xe8] sm:$0xff]
    %v8553 = vld [vmem:[%s15 + $0xf0] sm:$0xff]
    %v8554 = vld [vmem:[%s15 + $0xf8] sm:$0xff]
    %8556 = vset.pattern.permute.xlu0 0
    %8557 = vperm.xlu0 %8556, %v8523
    %v8558 = vpop.permute.xlu0 %8557
    %8561 = vset.pattern.permute.xlu0 0
    %8562 = vperm.xlu0 %8561, %v8524
    %v8563 = vpop.permute.xlu0 %8562
    %8566 = vset.pattern.permute.xlu0 0
    %8567 = vperm.xlu0 %8566, %v8525
    %v8568 = vpop.permute.xlu0 %8567
    %8571 = vset.pattern.permute.xlu0 0
    %8572 = vperm.xlu0 %8571, %v8526
    %v8573 = vpop.permute.xlu0 %8572
    %8576 = vset.pattern.permute.xlu0 0
    %8577 = vperm.xlu0 %8576, %v8527
    %v8578 = vpop.permute.xlu0 %8577
    %8581 = vset.pattern.permute.xlu0 0
    %8582 = vperm.xlu0 %8581, %v8528
    %v8583 = vpop.permute.xlu0 %8582
    %8586 = vset.pattern.permute.xlu0 0
    %8587 = vperm.xlu0 %8586, %v8529
    %v8588 = vpop.permute.xlu0 %8587
    %8591 = vset.pattern.permute.xlu0 0
    %8592 = vperm.xlu0 %8591, %v8530
    %v8593 = vpop.permute.xlu0 %8592
    %8596 = vset.pattern.permute.xlu0 0
    %8597 = vperm.xlu0 %8596, %v8531
    %v8598 = vpop.permute.xlu0 %8597
    %8601 = vset.pattern.permute.xlu0 0
    %8602 = vperm.xlu0 %8601, %v8532
    %v8603 = vpop.permute.xlu0 %8602
    %8606 = vset.pattern.permute.xlu0 0
    %8607 = vperm.xlu0 %8606, %v8533
    %v8608 = vpop.permute.xlu0 %8607
    %8611 = vset.pattern.permute.xlu0 0
    %8612 = vperm.xlu0 %8611, %v8534
    %v8613 = vpop.permute.xlu0 %8612
    %8616 = vset.pattern.permute.xlu0 0
    %8617 = vperm.xlu0 %8616, %v8535
    %v8618 = vpop.permute.xlu0 %8617
    %8621 = vset.pattern.permute.xlu0 0
    %8622 = vperm.xlu0 %8621, %v8536
    %v8623 = vpop.permute.xlu0 %8622
    %8626 = vset.pattern.permute.xlu0 0
    %8627 = vperm.xlu0 %8626, %v8537
    %v8628 = vpop.permute.xlu0 %8627
    %8631 = vset.pattern.permute.xlu0 0
    %8632 = vperm.xlu0 %8631, %v8538
    %v8633 = vpop.permute.xlu0 %8632
    %8636 = vset.pattern.permute.xlu0 0
    %8637 = vperm.xlu0 %8636, %v8539
    %v8638 = vpop.permute.xlu0 %8637
    %8641 = vset.pattern.permute.xlu0 0
    %8642 = vperm.xlu0 %8641, %v8540
    %v8643 = vpop.permute.xlu0 %8642
    %8646 = vset.pattern.permute.xlu0 0
    %8647 = vperm.xlu0 %8646, %v8541
    %v8648 = vpop.permute.xlu0 %8647
    %8651 = vset.pattern.permute.xlu0 0
    %8652 = vperm.xlu0 %8651, %v8542
    %v8653 = vpop.permute.xlu0 %8652
    %8656 = vset.pattern.permute.xlu0 0
    %8657 = vperm.xlu0 %8656, %v8543
    %v8658 = vpop.permute.xlu0 %8657
    %8661 = vset.pattern.permute.xlu0 0
    %8662 = vperm.xlu0 %8661, %v8544
    %v8663 = vpop.permute.xlu0 %8662
    %8666 = vset.pattern.permute.xlu0 0
    %8667 = vperm.xlu0 %8666, %v8545
    %v8668 = vpop.permute.xlu0 %8667
    %8671 = vset.pattern.permute.xlu0 0
    %8672 = vperm.xlu0 %8671, %v8546
    %v8673 = vpop.permute.xlu0 %8672
    %8676 = vset.pattern.permute.xlu0 0
    %8677 = vperm.xlu0 %8676, %v8547
    %v8678 = vpop.permute.xlu0 %8677
    %8681 = vset.pattern.permute.xlu0 0
    %8682 = vperm.xlu0 %8681, %v8548
    %v8683 = vpop.permute.xlu0 %8682
    %8686 = vset.pattern.permute.xlu0 0
    %8687 = vperm.xlu0 %8686, %v8549
    %v8688 = vpop.permute.xlu0 %8687
    %8691 = vset.pattern.permute.xlu0 0
    %8692 = vperm.xlu0 %8691, %v8550
    %v8693 = vpop.permute.xlu0 %8692
    %8696 = vset.pattern.permute.xlu0 0
    %8697 = vperm.xlu0 %8696, %v8551
    %v8698 = vpop.permute.xlu0 %8697
    %8701 = vset.pattern.permute.xlu0 0
    %8702 = vperm.xlu0 %8701, %v8552
    %v8703 = vpop.permute.xlu0 %8702
    %8706 = vset.pattern.permute.xlu0 0
    %8707 = vperm.xlu0 %8706, %v8553
    %v8708 = vpop.permute.xlu0 %8707
    %8711 = vset.pattern.permute.xlu0 0
    %8712 = vperm.xlu0 %8711, %v8554
    %v8713 = vpop.permute.xlu0 %8712
    %8715 = vmatprep.subr.mxu0 0.0
    %8716 = vmatpush1.msra.mxu0 %v8490
    %8717 = vmatprep.subr.mxu0 0.0
    %8718 = vmatpush1.msra.mxu0 %v8489
    %8719 = vmatprep.subr.mxu0 0.0
    %8720 = vmatpush1.msra.mxu0 %v8488
    %8721 = vmatprep.subr.mxu0 0.0
    %8722 = vmatpush1.msra.mxu0 %v8487
    %8723 = vmatprep.subr.mxu0 0.0
    %8724 = vmatpush1.msra.mxu0 %v8486
    %8725 = vmatprep.subr.mxu0 0.0
    %8726 = vmatpush1.msra.mxu0 %v8485
    %8727 = vmatprep.subr.mxu0 0.0
    %8728 = vmatpush1.msra.mxu0 %v8484
    %8729 = vmatprep.subr.mxu0 0.0
    %8730 = vmatpush1.msra.mxu0 %v8483
    %8731 = vmatprep.subr.mxu0 0.0
    %8732 = vmatpush1.msra.mxu0 %v8482
    %8733 = vmatprep.subr.mxu0 0.0
    %8734 = vmatpush1.msra.mxu0 %v8481
    %8735 = vmatprep.subr.mxu0 0.0
    %8736 = vmatpush1.msra.mxu0 %v8480
    %8737 = vmatprep.subr.mxu0 0.0
    %8738 = vmatpush1.msra.mxu0 %v8479
    %8739 = vmatprep.subr.mxu0 0.0
    %8740 = vmatpush1.msra.mxu0 %v8478
    %8741 = vmatprep.subr.mxu0 0.0
    %8742 = vmatpush1.msra.mxu0 %v8477
    %8743 = vmatprep.subr.mxu0 0.0
    %8744 = vmatpush1.msra.mxu0 %v8476
    %8745 = vmatprep.subr.mxu0 0.0
    %8746 = vmatpush1.msra.mxu0 %v8475
    %8747 = vmatprep.subr.mxu0 0.0
    %8748 = vmatpush2.msra.mxu0 0.0
    %8749 = vmatprep.subr.mxu0 0.0
    %8750 = vmatpush2.msra.mxu0 0.0
    %8751 = vmatprep.subr.mxu0 0.0
    %8752 = vmatpush2.msra.mxu0 0.0
    %8753 = vmatprep.subr.mxu0 0.0
    %8754 = vmatpush2.msra.mxu0 0.0
    %8755 = vmatprep.subr.mxu0 0.0
    %8756 = vmatpush2.msra.mxu0 0.0
    %8757 = vmatprep.subr.mxu0 0.0
    %8758 = vmatpush2.msra.mxu0 0.0
    %8759 = vmatprep.subr.mxu0 0.0
    %8760 = vmatpush2.msra.mxu0 0.0
    %8761 = vmatprep.subr.mxu0 0.0
    %8762 = vmatpush2.msra.mxu0 0.0
    %8763 = vmatprep.subr.mxu0 0.0
    %8764 = vmatpush2.msra.mxu0 0.0
    %8765 = vmatprep.subr.mxu0 0.0
    %8766 = vmatpush2.msra.mxu0 0.0
    %8767 = vmatprep.subr.mxu0 0.0
    %8768 = vmatpush2.msra.mxu0 0.0
    %8769 = vmatprep.subr.mxu0 0.0
    %8770 = vmatpush2.msra.mxu0 0.0
    %8771 = vmatprep.subr.mxu0 0.0
    %8772 = vmatpush2.msra.mxu0 0.0
    %8773 = vmatprep.subr.mxu0 0.0
    %8774 = vmatpush2.msra.mxu0 0.0
    %8775 = vmatprep.subr.mxu0 0.0
    %8776 = vmatpush2.msra.mxu0 0.0
    %8777 = vmatprep.subr.mxu0 0.0
    %8778 = vmatpush2.msra.mxu0 0.0
    %8779 = vmatprep.mubr.f32.mxu0 0.0
    %8780 = vmatmul.mubr.f32.gmra.mxu0 %v8491
    %v8781 = vpop.f32.mrf.mxu0
    %v8782 = vadd.f32 %v8558, %v8781
    %v8783 = vpop.f32.mrf.mxu0
    %8784 = vmatprep.mubr.f32.mxu0 0.0
    %8785 = vmatmul.mubr.f32.gmra.mxu0 %v8492
    %v8786 = vpop.f32.mrf.mxu0
    %v8787 = vadd.f32 %v8563, %v8786
    %v8788 = vpop.f32.mrf.mxu0
    %8789 = vmatprep.mubr.f32.mxu0 0.0
    %8790 = vmatmul.mubr.f32.gmra.mxu0 %v8493
    %v8791 = vpop.f32.mrf.mxu0
    %v8792 = vadd.f32 %v8568, %v8791
    %v8793 = vpop.f32.mrf.mxu0
    %8794 = vmatprep.mubr.f32.mxu0 0.0
    %8795 = vmatmul.mubr.f32.gmra.mxu0 %v8494
    %v8796 = vpop.f32.mrf.mxu0
    %v8797 = vadd.f32 %v8573, %v8796
    %v8798 = vpop.f32.mrf.mxu0
    %8799 = vmatprep.mubr.f32.mxu0 0.0
    %8800 = vmatmul.mubr.f32.gmra.mxu0 %v8495
    %v8801 = vpop.f32.mrf.mxu0
    %v8802 = vadd.f32 %v8578, %v8801
    %v8803 = vpop.f32.mrf.mxu0
    %8804 = vmatprep.mubr.f32.mxu0 0.0
    %8805 = vmatmul.mubr.f32.gmra.mxu0 %v8496
    %v8806 = vpop.f32.mrf.mxu0
    %v8807 = vadd.f32 %v8583, %v8806
    %v8808 = vpop.f32.mrf.mxu0
    %8809 = vmatprep.mubr.f32.mxu0 0.0
    %8810 = vmatmul.mubr.f32.gmra.mxu0 %v8497
    %v8811 = vpop.f32.mrf.mxu0
    %v8812 = vadd.f32 %v8588, %v8811
    %v8813 = vpop.f32.mrf.mxu0
    %8814 = vmatprep.mubr.f32.mxu0 0.0
    %8815 = vmatmul.mubr.f32.gmra.mxu0 %v8498
    %v8816 = vpop.f32.mrf.mxu0
    %v8817 = vadd.f32 %v8593, %v8816
    %v8818 = vpop.f32.mrf.mxu0
    %8819 = vmatprep.mubr.f32.mxu0 0.0
    %8820 = vmatmul.mubr.f32.gmra.mxu0 %v8499
    %v8821 = vpop.f32.mrf.mxu0
    %v8822 = vadd.f32 %v8598, %v8821
    %v8823 = vpop.f32.mrf.mxu0
    %8824 = vmatprep.mubr.f32.mxu0 0.0
    %8825 = vmatmul.mubr.f32.gmra.mxu0 %v8500
    %v8826 = vpop.f32.mrf.mxu0
    %v8827 = vadd.f32 %v8603, %v8826
    %v8828 = vpop.f32.mrf.mxu0
    %8829 = vmatprep.mubr.f32.mxu0 0.0
    %8830 = vmatmul.mubr.f32.gmra.mxu0 %v8501
    %v8831 = vpop.f32.mrf.mxu0
    %v8832 = vadd.f32 %v8608, %v8831
    %v8833 = vpop.f32.mrf.mxu0
    %8834 = vmatprep.mubr.f32.mxu0 0.0
    %8835 = vmatmul.mubr.f32.gmra.mxu0 %v8502
    %v8836 = vpop.f32.mrf.mxu0
    %v8837 = vadd.f32 %v8613, %v8836
    %v8838 = vpop.f32.mrf.mxu0
    %8839 = vmatprep.mubr.f32.mxu0 0.0
    %8840 = vmatmul.mubr.f32.gmra.mxu0 %v8503
    %v8841 = vpop.f32.mrf.mxu0
    %v8842 = vadd.f32 %v8618, %v8841
    %v8843 = vpop.f32.mrf.mxu0
    %8844 = vmatprep.mubr.f32.mxu0 0.0
    %8845 = vmatmul.mubr.f32.gmra.mxu0 %v8504
    %v8846 = vpop.f32.mrf.mxu0
    %v8847 = vadd.f32 %v8623, %v8846
    %v8848 = vpop.f32.mrf.mxu0
    %8849 = vmatprep.mubr.f32.mxu0 0.0
    %8850 = vmatmul.mubr.f32.gmra.mxu0 %v8505
    %v8851 = vpop.f32.mrf.mxu0
    %v8852 = vadd.f32 %v8628, %v8851
    %v8853 = vpop.f32.mrf.mxu0
    %8854 = vmatprep.mubr.f32.mxu0 0.0
    %8855 = vmatmul.mubr.f32.gmra.mxu0 %v8506
    %v8856 = vpop.f32.mrf.mxu0
    %v8857 = vadd.f32 %v8633, %v8856
    %v8858 = vpop.f32.mrf.mxu0
    %8859 = vmatprep.mubr.f32.mxu0 0.0
    %8860 = vmatmul.mubr.f32.gmra.mxu0 %v8507
    %v8861 = vpop.f32.mrf.mxu0
    %v8862 = vadd.f32 %v8638, %v8861
    %v8863 = vpop.f32.mrf.mxu0
    %8864 = vmatprep.mubr.f32.mxu0 0.0
    %8865 = vmatmul.mubr.f32.gmra.mxu0 %v8508
    %v8866 = vpop.f32.mrf.mxu0
    %v8867 = vadd.f32 %v8643, %v8866
    %v8868 = vpop.f32.mrf.mxu0
    %8869 = vmatprep.mubr.f32.mxu0 0.0
    %8870 = vmatmul.mubr.f32.gmra.mxu0 %v8509
    %v8871 = vpop.f32.mrf.mxu0
    %v8872 = vadd.f32 %v8648, %v8871
    %v8873 = vpop.f32.mrf.mxu0
    %8874 = vmatprep.mubr.f32.mxu0 0.0
    %8875 = vmatmul.mubr.f32.gmra.mxu0 %v8510
    %v8876 = vpop.f32.mrf.mxu0
    %v8877 = vadd.f32 %v8653, %v8876
    %v8878 = vpop.f32.mrf.mxu0
    %8879 = vmatprep.mubr.f32.mxu0 0.0
    %8880 = vmatmul.mubr.f32.gmra.mxu0 %v8511
    %v8881 = vpop.f32.mrf.mxu0
    %v8882 = vadd.f32 %v8658, %v8881
    %v8883 = vpop.f32.mrf.mxu0
    %8884 = vmatprep.mubr.f32.mxu0 0.0
    %8885 = vmatmul.mubr.f32.gmra.mxu0 %v8512
    %v8886 = vpop.f32.mrf.mxu0
    %v8887 = vadd.f32 %v8663, %v8886
    %v8888 = vpop.f32.mrf.mxu0
    %8889 = vmatprep.mubr.f32.mxu0 0.0
    %8890 = vmatmul.mubr.f32.gmra.mxu0 %v8513
    %v8891 = vpop.f32.mrf.mxu0
    %v8892 = vadd.f32 %v8668, %v8891
    %v8893 = vpop.f32.mrf.mxu0
    %8894 = vmatprep.mubr.f32.mxu0 0.0
    %8895 = vmatmul.mubr.f32.gmra.mxu0 %v8514
    %v8896 = vpop.f32.mrf.mxu0
    %v8897 = vadd.f32 %v8673, %v8896
    %v8898 = vpop.f32.mrf.mxu0
    %8899 = vmatprep.mubr.f32.mxu0 0.0
    %8900 = vmatmul.mubr.f32.gmra.mxu0 %v8515
    %v8901 = vpop.f32.mrf.mxu0
    %v8902 = vadd.f32 %v8678, %v8901
    %v8903 = vpop.f32.mrf.mxu0
    %8904 = vmatprep.mubr.f32.mxu0 0.0
    %8905 = vmatmul.mubr.f32.gmra.mxu0 %v8516
    %v8906 = vpop.f32.mrf.mxu0
    %v8907 = vadd.f32 %v8683, %v8906
    %v8908 = vpop.f32.mrf.mxu0
    %8909 = vmatprep.mubr.f32.mxu0 0.0
    %8910 = vmatmul.mubr.f32.gmra.mxu0 %v8517
    %v8911 = vpop.f32.mrf.mxu0
    %v8912 = vadd.f32 %v8688, %v8911
    %v8913 = vpop.f32.mrf.mxu0
    %8914 = vmatprep.mubr.f32.mxu0 0.0
    %8915 = vmatmul.mubr.f32.gmra.mxu0 %v8518
    %v8916 = vpop.f32.mrf.mxu0
    %v8917 = vadd.f32 %v8693, %v8916
    %v8918 = vpop.f32.mrf.mxu0
    %8919 = vmatprep.mubr.f32.mxu0 0.0
    %8920 = vmatmul.mubr.f32.gmra.mxu0 %v8519
    %v8921 = vpop.f32.mrf.mxu0
    %v8922 = vadd.f32 %v8698, %v8921
    %v8923 = vpop.f32.mrf.mxu0
    %8924 = vmatprep.mubr.f32.mxu0 0.0
    %8925 = vmatmul.mubr.f32.gmra.mxu0 %v8520
    %v8926 = vpop.f32.mrf.mxu0
    %v8927 = vadd.f32 %v8703, %v8926
    %v8928 = vpop.f32.mrf.mxu0
    %8929 = vmatprep.mubr.f32.mxu0 0.0
    %8930 = vmatmul.mubr.f32.gmra.mxu0 %v8521
    %v8931 = vpop.f32.mrf.mxu0
    %v8932 = vadd.f32 %v8708, %v8931
    %v8933 = vpop.f32.mrf.mxu0
    %8934 = vmatprep.mubr.f32.mxu0 0.0
    %8935 = vmatmul.mubr.f32.gmra.mxu0 %v8522
    %v8936 = vpop.f32.mrf.mxu0
    %v8937 = vadd.f32 %v8713, %v8936
    %v8938 = vpop.f32.mrf.mxu0
    %8939 = vdwg.mxu0
    %v8940 = vmax.f32 %v8782, 0.0
    %v8941 = vmax.f32 %v8787, 0.0
    %v8942 = vmax.f32 %v8792, 0.0
    %v8943 = vmax.f32 %v8797, 0.0
    %v8944 = vmax.f32 %v8802, 0.0
    %v8945 = vmax.f32 %v8807, 0.0
    %v8946 = vmax.f32 %v8812, 0.0
    %v8947 = vmax.f32 %v8817, 0.0
    %v8948 = vmax.f32 %v8822, 0.0
    %v8949 = vmax.f32 %v8827, 0.0
    %v8950 = vmax.f32 %v8832, 0.0
    %v8951 = vmax.f32 %v8837, 0.0
    %v8952 = vmax.f32 %v8842, 0.0
    %v8953 = vmax.f32 %v8847, 0.0
    %v8954 = vmax.f32 %v8852, 0.0
    %v8955 = vmax.f32 %v8857, 0.0
    %v8956 = vmax.f32 %v8862, 0.0
    %v8957 = vmax.f32 %v8867, 0.0
    %v8958 = vmax.f32 %v8872, 0.0
    %v8959 = vmax.f32 %v8877, 0.0
    %v8960 = vmax.f32 %v8882, 0.0
    %v8961 = vmax.f32 %v8887, 0.0
    %v8962 = vmax.f32 %v8892, 0.0
    %v8963 = vmax.f32 %v8897, 0.0
    %v8964 = vmax.f32 %v8902, 0.0
    %v8965 = vmax.f32 %v8907, 0.0
    %v8966 = vmax.f32 %v8912, 0.0
    %v8967 = vmax.f32 %v8917, 0.0
    %v8968 = vmax.f32 %v8922, 0.0
    %v8969 = vmax.f32 %v8927, 0.0
    %v8970 = vmax.f32 %v8932, 0.0
    %v8971 = vmax.f32 %v8937, 0.0
    %v8972 = vld [vmem:[%s16] sm:$0xff]
    %v8973 = vld [vmem:[%s16 + $0x8] sm:$0xff]
    %v8974 = vld [vmem:[%s16 + $0x10] sm:$0xff]
    %v8975 = vld [vmem:[%s16 + $0x18] sm:$0xff]
    %v8976 = vld [vmem:[%s16 + $0x20] sm:$0xff]
    %v8977 = vld [vmem:[%s16 + $0x28] sm:$0xff]
    %v8978 = vld [vmem:[%s16 + $0x30] sm:$0xff]
    %v8979 = vld [vmem:[%s16 + $0x38] sm:$0xff]
    %v8980 = vld [vmem:[%s16 + $0x40] sm:$0xff]
    %v8981 = vld [vmem:[%s16 + $0x48] sm:$0xff]
    %v8982 = vld [vmem:[%s16 + $0x50] sm:$0xff]
    %v8983 = vld [vmem:[%s16 + $0x58] sm:$0xff]
    %v8984 = vld [vmem:[%s16 + $0x60] sm:$0xff]
    %v8985 = vld [vmem:[%s16 + $0x68] sm:$0xff]
    %v8986 = vld [vmem:[%s16 + $0x70] sm:$0xff]
    %v8987 = vld [vmem:[%s16 + $0x78] sm:$0xff]
    %v8988 = vld [vmem:[%s16 + $0x80] sm:$0xff]
    %v8989 = vld [vmem:[%s16 + $0x88] sm:$0xff]
    %v8990 = vld [vmem:[%s16 + $0x90] sm:$0xff]
    %v8991 = vld [vmem:[%s16 + $0x98] sm:$0xff]
    %v8992 = vld [vmem:[%s16 + $0xa0] sm:$0xff]
    %v8993 = vld [vmem:[%s16 + $0xa8] sm:$0xff]
    %v8994 = vld [vmem:[%s16 + $0xb0] sm:$0xff]
    %v8995 = vld [vmem:[%s16 + $0xb8] sm:$0xff]
    %v8996 = vld [vmem:[%s16 + $0xc0] sm:$0xff]
    %v8997 = vld [vmem:[%s16 + $0xc8] sm:$0xff]
    %v8998 = vld [vmem:[%s16 + $0xd0] sm:$0xff]
    %v8999 = vld [vmem:[%s16 + $0xd8] sm:$0xff]
    %v9000 = vld [vmem:[%s16 + $0xe0] sm:$0xff]
    %v9001 = vld [vmem:[%s16 + $0xe8] sm:$0xff]
    %v9002 = vld [vmem:[%s16 + $0xf0] sm:$0xff]
    %v9003 = vld [vmem:[%s16 + $0xf8] sm:$0xff]
    %v9004 = vld [vmem:[%s17] sm:$0xff]
    %v9005 = vld [vmem:[%s17 + $0x8] sm:$0xff]
    %v9006 = vld [vmem:[%s17 + $0x10] sm:$0xff]
    %v9007 = vld [vmem:[%s17 + $0x18] sm:$0xff]
    %v9008 = vld [vmem:[%s17 + $0x20] sm:$0xff]
    %v9009 = vld [vmem:[%s17 + $0x28] sm:$0xff]
    %v9010 = vld [vmem:[%s17 + $0x30] sm:$0xff]
    %v9011 = vld [vmem:[%s17 + $0x38] sm:$0xff]
    %v9012 = vld [vmem:[%s17 + $0x40] sm:$0xff]
    %v9013 = vld [vmem:[%s17 + $0x48] sm:$0xff]
    %v9014 = vld [vmem:[%s17 + $0x50] sm:$0xff]
    %v9015 = vld [vmem:[%s17 + $0x58] sm:$0xff]
    %v9016 = vld [vmem:[%s17 + $0x60] sm:$0xff]
    %v9017 = vld [vmem:[%s17 + $0x68] sm:$0xff]
    %v9018 = vld [vmem:[%s17 + $0x70] sm:$0xff]
    %v9019 = vld [vmem:[%s17 + $0x78] sm:$0xff]
    %9021 = vset.pattern.permute.xlu0 0
    %9022 = vperm.xlu0 %9021, %v9004
    %v9023 = vpop.permute.xlu0 %9022
    %9026 = vset.pattern.permute.xlu0 0
    %9027 = vperm.xlu0 %9026, %v9005
    %v9028 = vpop.permute.xlu0 %9027
    %9031 = vset.pattern.permute.xlu0 0
    %9032 = vperm.xlu0 %9031, %v9006
    %v9033 = vpop.permute.xlu0 %9032
    %9036 = vset.pattern.permute.xlu0 0
    %9037 = vperm.xlu0 %9036, %v9007
    %v9038 = vpop.permute.xlu0 %9037
    %9041 = vset.pattern.permute.xlu0 0
    %9042 = vperm.xlu0 %9041, %v9008
    %v9043 = vpop.permute.xlu0 %9042
    %9046 = vset.pattern.permute.xlu0 0
    %9047 = vperm.xlu0 %9046, %v9009
    %v9048 = vpop.permute.xlu0 %9047
    %9051 = vset.pattern.permute.xlu0 0
    %9052 = vperm.xlu0 %9051, %v9010
    %v9053 = vpop.permute.xlu0 %9052
    %9056 = vset.pattern.permute.xlu0 0
    %9057 = vperm.xlu0 %9056, %v9011
    %v9058 = vpop.permute.xlu0 %9057
    %9061 = vset.pattern.permute.xlu0 0
    %9062 = vperm.xlu0 %9061, %v9012
    %v9063 = vpop.permute.xlu0 %9062
    %9066 = vset.pattern.permute.xlu0 0
    %9067 = vperm.xlu0 %9066, %v9013
    %v9068 = vpop.permute.xlu0 %9067
    %9071 = vset.pattern.permute.xlu0 0
    %9072 = vperm.xlu0 %9071, %v9014
    %v9073 = vpop.permute.xlu0 %9072
    %9076 = vset.pattern.permute.xlu0 0
    %9077 = vperm.xlu0 %9076, %v9015
    %v9078 = vpop.permute.xlu0 %9077
    %9081 = vset.pattern.permute.xlu0 0
    %9082 = vperm.xlu0 %9081, %v9016
    %v9083 = vpop.permute.xlu0 %9082
    %9086 = vset.pattern.permute.xlu0 0
    %9087 = vperm.xlu0 %9086, %v9017
    %v9088 = vpop.permute.xlu0 %9087
    %9091 = vset.pattern.permute.xlu0 0
    %9092 = vperm.xlu0 %9091, %v9018
    %v9093 = vpop.permute.xlu0 %9092
    %9096 = vset.pattern.permute.xlu0 0
    %9097 = vperm.xlu0 %9096, %v9019
    %v9098 = vpop.permute.xlu0 %9097
    %9100 = vmatprep.subr.mxu0 0.0
    %9101 = vmatpush1.msra.mxu0 %v8955
    %9102 = vmatprep.subr.mxu0 0.0
    %9103 = vmatpush1.msra.mxu0 %v8954
    %9104 = vmatprep.subr.mxu0 0.0
    %9105 = vmatpush1.msra.mxu0 %v8953
    %9106 = vmatprep.subr.mxu0 0.0
    %9107 = vmatpush1.msra.mxu0 %v8952
    %9108 = vmatprep.subr.mxu0 0.0
    %9109 = vmatpush1.msra.mxu0 %v8951
    %9110 = vmatprep.subr.mxu0 0.0
    %9111 = vmatpush1.msra.mxu0 %v8950
    %9112 = vmatprep.subr.mxu0 0.0
    %9113 = vmatpush1.msra.mxu0 %v8949
    %9114 = vmatprep.subr.mxu0 0.0
    %9115 = vmatpush1.msra.mxu0 %v8948
    %9116 = vmatprep.subr.mxu0 0.0
    %9117 = vmatpush1.msra.mxu0 %v8947
    %9118 = vmatprep.subr.mxu0 0.0
    %9119 = vmatpush1.msra.mxu0 %v8946
    %9120 = vmatprep.subr.mxu0 0.0
    %9121 = vmatpush1.msra.mxu0 %v8945
    %9122 = vmatprep.subr.mxu0 0.0
    %9123 = vmatpush1.msra.mxu0 %v8944
    %9124 = vmatprep.subr.mxu0 0.0
    %9125 = vmatpush1.msra.mxu0 %v8943
    %9126 = vmatprep.subr.mxu0 0.0
    %9127 = vmatpush1.msra.mxu0 %v8942
    %9128 = vmatprep.subr.mxu0 0.0
    %9129 = vmatpush1.msra.mxu0 %v8941
    %9130 = vmatprep.subr.mxu0 0.0
    %9131 = vmatpush1.msra.mxu0 %v8940
    %9132 = vmatprep.subr.mxu0 0.0
    %9133 = vmatpush2.msra.mxu0 %v8971
    %9134 = vmatprep.subr.mxu0 0.0
    %9135 = vmatpush2.msra.mxu0 %v8970
    %9136 = vmatprep.subr.mxu0 0.0
    %9137 = vmatpush2.msra.mxu0 %v8969
    %9138 = vmatprep.subr.mxu0 0.0
    %9139 = vmatpush2.msra.mxu0 %v8968
    %9140 = vmatprep.subr.mxu0 0.0
    %9141 = vmatpush2.msra.mxu0 %v8967
    %9142 = vmatprep.subr.mxu0 0.0
    %9143 = vmatpush2.msra.mxu0 %v8966
    %9144 = vmatprep.subr.mxu0 0.0
    %9145 = vmatpush2.msra.mxu0 %v8965
    %9146 = vmatprep.subr.mxu0 0.0
    %9147 = vmatpush2.msra.mxu0 %v8964
    %9148 = vmatprep.subr.mxu0 0.0
    %9149 = vmatpush2.msra.mxu0 %v8963
    %9150 = vmatprep.subr.mxu0 0.0
    %9151 = vmatpush2.msra.mxu0 %v8962
    %9152 = vmatprep.subr.mxu0 0.0
    %9153 = vmatpush2.msra.mxu0 %v8961
    %9154 = vmatprep.subr.mxu0 0.0
    %9155 = vmatpush2.msra.mxu0 %v8960
    %9156 = vmatprep.subr.mxu0 0.0
    %9157 = vmatpush2.msra.mxu0 %v8959
    %9158 = vmatprep.subr.mxu0 0.0
    %9159 = vmatpush2.msra.mxu0 %v8958
    %9160 = vmatprep.subr.mxu0 0.0
    %9161 = vmatpush2.msra.mxu0 %v8957
    %9162 = vmatprep.subr.mxu0 0.0
    %9163 = vmatpush2.msra.mxu0 %v8956
    %9164 = vmatprep.mubr.f32.mxu0 %v8973
    %9165 = vmatmul.mubr.f32.gmra.mxu0 %v8972
    %v9166 = vpop.f32.mrf.mxu0
    %v9167 = vadd.f32 %v9023, %v9166
    %v9168 = vpop.f32.mrf.mxu0
    %9169 = vmatprep.mubr.f32.mxu0 %v8975
    %9170 = vmatmul.mubr.f32.gmra.mxu0 %v8974
    %v9171 = vpop.f32.mrf.mxu0
    %v9172 = vadd.f32 %v9028, %v9171
    %v9173 = vpop.f32.mrf.mxu0
    %9174 = vmatprep.mubr.f32.mxu0 %v8977
    %9175 = vmatmul.mubr.f32.gmra.mxu0 %v8976
    %v9176 = vpop.f32.mrf.mxu0
    %v9177 = vadd.f32 %v9033, %v9176
    %v9178 = vpop.f32.mrf.mxu0
    %9179 = vmatprep.mubr.f32.mxu0 %v8979
    %9180 = vmatmul.mubr.f32.gmra.mxu0 %v8978
    %v9181 = vpop.f32.mrf.mxu0
    %v9182 = vadd.f32 %v9038, %v9181
    %v9183 = vpop.f32.mrf.mxu0
    %9184 = vmatprep.mubr.f32.mxu0 %v8981
    %9185 = vmatmul.mubr.f32.gmra.mxu0 %v8980
    %v9186 = vpop.f32.mrf.mxu0
    %v9187 = vadd.f32 %v9043, %v9186
    %v9188 = vpop.f32.mrf.mxu0
    %9189 = vmatprep.mubr.f32.mxu0 %v8983
    %9190 = vmatmul.mubr.f32.gmra.mxu0 %v8982
    %v9191 = vpop.f32.mrf.mxu0
    %v9192 = vadd.f32 %v9048, %v9191
    %v9193 = vpop.f32.mrf.mxu0
    %9194 = vmatprep.mubr.f32.mxu0 %v8985
    %9195 = vmatmul.mubr.f32.gmra.mxu0 %v8984
    %v9196 = vpop.f32.mrf.mxu0
    %v9197 = vadd.f32 %v9053, %v9196
    %v9198 = vpop.f32.mrf.mxu0
    %9199 = vmatprep.mubr.f32.mxu0 %v8987
    %9200 = vmatmul.mubr.f32.gmra.mxu0 %v8986
    %v9201 = vpop.f32.mrf.mxu0
    %v9202 = vadd.f32 %v9058, %v9201
    %v9203 = vpop.f32.mrf.mxu0
    %9204 = vmatprep.mubr.f32.mxu0 %v8989
    %9205 = vmatmul.mubr.f32.gmra.mxu0 %v8988
    %v9206 = vpop.f32.mrf.mxu0
    %v9207 = vadd.f32 %v9063, %v9206
    %v9208 = vpop.f32.mrf.mxu0
    %9209 = vmatprep.mubr.f32.mxu0 %v8991
    %9210 = vmatmul.mubr.f32.gmra.mxu0 %v8990
    %v9211 = vpop.f32.mrf.mxu0
    %v9212 = vadd.f32 %v9068, %v9211
    %v9213 = vpop.f32.mrf.mxu0
    %9214 = vmatprep.mubr.f32.mxu0 %v8993
    %9215 = vmatmul.mubr.f32.gmra.mxu0 %v8992
    %v9216 = vpop.f32.mrf.mxu0
    %v9217 = vadd.f32 %v9073, %v9216
    %v9218 = vpop.f32.mrf.mxu0
    %9219 = vmatprep.mubr.f32.mxu0 %v8995
    %9220 = vmatmul.mubr.f32.gmra.mxu0 %v8994
    %v9221 = vpop.f32.mrf.mxu0
    %v9222 = vadd.f32 %v9078, %v9221
    %v9223 = vpop.f32.mrf.mxu0
    %9224 = vmatprep.mubr.f32.mxu0 %v8997
    %9225 = vmatmul.mubr.f32.gmra.mxu0 %v8996
    %v9226 = vpop.f32.mrf.mxu0
    %v9227 = vadd.f32 %v9083, %v9226
    %v9228 = vpop.f32.mrf.mxu0
    %9229 = vmatprep.mubr.f32.mxu0 %v8999
    %9230 = vmatmul.mubr.f32.gmra.mxu0 %v8998
    %v9231 = vpop.f32.mrf.mxu0
    %v9232 = vadd.f32 %v9088, %v9231
    %v9233 = vpop.f32.mrf.mxu0
    %9234 = vmatprep.mubr.f32.mxu0 %v9001
    %9235 = vmatmul.mubr.f32.gmra.mxu0 %v9000
    %v9236 = vpop.f32.mrf.mxu0
    %v9237 = vadd.f32 %v9093, %v9236
    %v9238 = vpop.f32.mrf.mxu0
    %9239 = vmatprep.mubr.f32.mxu0 %v9003
    %9240 = vmatmul.mubr.f32.gmra.mxu0 %v9002
    %v9241 = vpop.f32.mrf.mxu0
    %v9242 = vadd.f32 %v9098, %v9241
    %v9243 = vpop.f32.mrf.mxu0
    %9244 = vdwg.mxu0
    %v9245 = vmax.f32 %v9167, 0.0
    %v9246 = vmax.f32 %v9172, 0.0
    %v9247 = vmax.f32 %v9177, 0.0
    %v9248 = vmax.f32 %v9182, 0.0
    %v9249 = vmax.f32 %v9187, 0.0
    %v9250 = vmax.f32 %v9192, 0.0
    %v9251 = vmax.f32 %v9197, 0.0
    %v9252 = vmax.f32 %v9202, 0.0
    %v9253 = vmax.f32 %v9207, 0.0
    %v9254 = vmax.f32 %v9212, 0.0
    %v9255 = vmax.f32 %v9217, 0.0
    %v9256 = vmax.f32 %v9222, 0.0
    %v9257 = vmax.f32 %v9227, 0.0
    %v9258 = vmax.f32 %v9232, 0.0
    %v9259 = vmax.f32 %v9237, 0.0
    %v9260 = vmax.f32 %v9242, 0.0
    %v9261 = vld [vmem:[%s18] sm:$0x3]
    %v9262 = vld [vmem:[%s19] sm:$0x3]
    %9264 = vset.pattern.permute.xlu0 0
    %9265 = vperm.xlu0 %9264, %v9262
    %v9266 = vpop.permute.xlu0 %9265
    %9268 = vmatprep.subr.mxu0 0.0
    %9269 = vmatpush1.msra.mxu0 %v9260
    %9270 = vmatprep.subr.mxu0 0.0
    %9271 = vmatpush1.msra.mxu0 %v9259
    %9272 = vmatprep.subr.mxu0 0.0
    %9273 = vmatpush1.msra.mxu0 %v9258
    %9274 = vmatprep.subr.mxu0 0.0
    %9275 = vmatpush1.msra.mxu0 %v9257
    %9276 = vmatprep.subr.mxu0 0.0
    %9277 = vmatpush1.msra.mxu0 %v9256
    %9278 = vmatprep.subr.mxu0 0.0
    %9279 = vmatpush1.msra.mxu0 %v9255
    %9280 = vmatprep.subr.mxu0 0.0
    %9281 = vmatpush1.msra.mxu0 %v9254
    %9282 = vmatprep.subr.mxu0 0.0
    %9283 = vmatpush1.msra.mxu0 %v9253
    %9284 = vmatprep.subr.mxu0 0.0
    %9285 = vmatpush1.msra.mxu0 %v9252
    %9286 = vmatprep.subr.mxu0 0.0
    %9287 = vmatpush1.msra.mxu0 %v9251
    %9288 = vmatprep.subr.mxu0 0.0
    %9289 = vmatpush1.msra.mxu0 %v9250
    %9290 = vmatprep.subr.mxu0 0.0
    %9291 = vmatpush1.msra.mxu0 %v9249
    %9292 = vmatprep.subr.mxu0 0.0
    %9293 = vmatpush1.msra.mxu0 %v9248
    %9294 = vmatprep.subr.mxu0 0.0
    %9295 = vmatpush1.msra.mxu0 %v9247
    %9296 = vmatprep.subr.mxu0 0.0
    %9297 = vmatpush1.msra.mxu0 %v9246
    %9298 = vmatprep.subr.mxu0 0.0
    %9299 = vmatpush1.msra.mxu0 %v9245
    %9300 = vmatprep.subr.mxu0 0.0
    %9301 = vmatpush2.msra.mxu0 0.0
    %9302 = vmatprep.subr.mxu0 0.0
    %9303 = vmatpush2.msra.mxu0 0.0
    %9304 = vmatprep.subr.mxu0 0.0
    %9305 = vmatpush2.msra.mxu0 0.0
    %9306 = vmatprep.subr.mxu0 0.0
    %9307 = vmatpush2.msra.mxu0 0.0
    %9308 = vmatprep.subr.mxu0 0.0
    %9309 = vmatpush2.msra.mxu0 0.0
    %9310 = vmatprep.subr.mxu0 0.0
    %9311 = vmatpush2.msra.mxu0 0.0
    %9312 = vmatprep.subr.mxu0 0.0
    %9313 = vmatpush2.msra.mxu0 0.0
    %9314 = vmatprep.subr.mxu0 0.0
    %9315 = vmatpush2.msra.mxu0 0.0
    %9316 = vmatprep.subr.mxu0 0.0
    %9317 = vmatpush2.msra.mxu0 0.0
    %9318 = vmatprep.subr.mxu0 0.0
    %9319 = vmatpush2.msra.mxu0 0.0
    %9320 = vmatprep.subr.mxu0 0.0
    %9321 = vmatpush2.msra.mxu0 0.0
    %9322 = vmatprep.subr.mxu0 0.0
    %9323 = vmatpush2.msra.mxu0 0.0
    %9324 = vmatprep.subr.mxu0 0.0
    %9325 = vmatpush2.msra.mxu0 0.0
    %9326 = vmatprep.subr.mxu0 0.0
    %9327 = vmatpush2.msra.mxu0 0.0
    %9328 = vmatprep.subr.mxu0 0.0
    %9329 = vmatpush2.msra.mxu0 0.0
    %9330 = vmatprep.subr.mxu0 0.0
    %9331 = vmatpush2.msra.mxu0 0.0
    %9332 = vmatprep.mubr.f32.mxu0 0.0
    %9333 = vmatmul.mubr.f32.gmra.mxu0 %v9261
    %v9334 = vpop.f32.mrf.mxu0
    %v9335 = vadd.f32 %v9266, %v9334
    %v9336 = vpop.f32.mrf.mxu0
    %9337 = vdwg.mxu0
    %vm9338 = vcmask 58368
    %9339 = vst.msk [vmem:[#allocation5] sm:$0x3] %vm9338, %v9335
    // Predicated region
    $region82: #{tpu_custom_call.1} parent=1 // pred_check
      _
    $region83: #{tpu_custom_call.1} parent=1 // pred_check_branch
      %9341 = sbr.rel (0) target = $region85
    $region84: #{tpu_custom_call.1} parent=1 // pred_region
      %s9343 = ssub.s32 32, 32
      %9344 = vsyncadd [#allocation6], %s9343
      %s9346 = sshll.u32 [#allocation5], 4
      %s9347 = int_to_ptr.vmem [resolvable:$true] %s9346
      %9349 = dma.vmem_to_hbm [thread:$0]  %s9347, 32, %s20, [#allocation6]
    $region85: #{tpu_custom_call.1} parent=1 // pred_fallthru
      _
    // Predicated region
    $region86: #{tpu_custom_call.1} parent=1 // pred_check
      _
    $region87: #{tpu_custom_call.1} parent=1 // pred_check_branch
      %9351 = sbr.rel (0) target = $region89
    $region88: #{tpu_custom_call.1} parent=1 // pred_region
      %9352 = dma.done [#allocation6], 32
    $region89: #{tpu_custom_call.1} parent=1 // pred_fallthru
      _
    %9353 = vsyncpa [#allocation6], 1

</llo_original>
